<compile_context>
chip_gen: v7x
topology: tpu7x:2x2x1
jax: 0.10.0
libtpu: 0.0.40
codegen_flags: <defaults>
</compile_context>

<pallas_src>
import functools

import jax
import jax.numpy as jnp
from jax import lax
from jax.experimental import pallas as pl
from jax.experimental.pallas import tpu as pltpu

BN_EPS = 1e-5


# ------------------------------ kernel helpers -------------------------------

def _bn_train(y, gamma, beta):
    # Training-mode batch norm over axis 0 (biased variance), single pass.
    m = jnp.mean(y, axis=0, keepdims=True)
    v = jnp.maximum(jnp.mean(y * y, axis=0, keepdims=True) - m * m, 0.0)
    return (y - m) * lax.rsqrt(v + BN_EPS) * gamma + beta


# -------------------------------- Pallas kernels -----------------------------

def fc_fused_kernel(x_ref, w1_ref, g1_ref, t1_ref, w2_ref, g2_ref, t2_ref, o_ref):
    # x:(B,Fin) f32, w1:(Fin,H1) bf16, w2:(H1,tile) bf16, bn params:(1,*) f32.
    # Pre-BN linear biases omitted: a per-feature constant added before
    # training-mode BN cancels exactly (mean removes it, variance unchanged).
    # fc1 is recomputed per column tile so the grid stays "parallel"-safe.
    h = jnp.dot(x_ref[...].astype(jnp.bfloat16), w1_ref[...],
                preferred_element_type=jnp.float32)
    h = jnp.maximum(_bn_train(h, g1_ref[...], t1_ref[...]), 0.0)
    y = jnp.dot(h.astype(jnp.bfloat16), w2_ref[...],
                preferred_element_type=jnp.float32)
    y = jnp.maximum(_bn_train(y, g2_ref[...], t2_ref[...]), 0.0)
    o_ref[...] = y.astype(o_ref.dtype)


def deconv1_kernel(xp_ref, w_ref, g_ref, t_ref, o_ref):
    # xp:(B,Hi+2,Wi+2,Cin) bf16  zero-padded (NOT dilated) NHWC input
    # w :(9*Cin, 4*Cout)   bf16  block weight: rows = 3x3 shifted windows x Cin,
    #                            cols = output phase (2*rh+rw) x Cout, unused blocks 0.
    # g/t:(1, 4*Cout)      f32   BN2d gamma/beta, phase-replicated.
    # o :(B,Hi,Wi,4*Cout)  bf16  phases stacked on the channel axis (lane-dense 256).
    B, Hp, Wp, Cin = xp_ref.shape
    Hi, Wi = Hp - 2, Wp - 2
    C4 = w_ref.shape[1]
    Cout = C4 // 4                      # power of two (64) -> '&' modulo trick below
    npix = B * Hi * Wi
    xp = xp_ref[...]
    # 9 distinct shifted windows, each sliced once (128-lane-aligned pieces).
    win = [xp[:, sh:sh + Hi, sw:sw + Wi, :].reshape(npix, Cin)
           for sh in range(3) for sw in range(3)]
    patch = jnp.concatenate(win, axis=1)                       # (npix, 9*Cin)
    y = jnp.dot(patch, w_ref[...],
                preferred_element_type=jnp.float32)            # (npix, 4*Cout)
    # BatchNorm2d training stats per channel, pooled over N*H*W *and* the 4 phases.
    # Columns are (phase, channel); pool across phases with a {0,1} matmul
    # P[i,j] = 1 iff i == j (mod Cout) -- this also re-replicates the pooled stats
    # across the phase copies, so no lane tiling / unaligned concat is needed.
    # (Conv bias omitted: a per-channel constant cancels under training-mode BN.)
    r = lax.broadcasted_iota(jnp.int32, (C4, C4), 0)
    c = lax.broadcasted_iota(jnp.int32, (C4, C4), 1)
    P = jnp.where((r & (Cout - 1)) == (c & (Cout - 1)), 1.0, 0.0)
    cnt = 4.0 * npix
    s = jnp.dot(jnp.sum(y, axis=0, keepdims=True), P,
                preferred_element_type=jnp.float32)
    s2 = jnp.dot(jnp.sum(y * y, axis=0, keepdims=True), P,
                 preferred_element_type=jnp.float32)
    m = s / cnt
    v = jnp.maximum(s2 / cnt - m * m, 0.0)
    scale = lax.rsqrt(v + BN_EPS) * g_ref[...]
    shift = t_ref[...] - m * scale
    out = jnp.maximum(y * scale + shift, 0.0)
    o_ref[...] = out.reshape(B, Hi, Wi, C4).astype(o_ref.dtype)


def deconv2_kernel(xp_ref, w_ref, b_ref, o_ref):
    # xp:(B,Hi+2,Wi+2,Cin) bf16; w:(4*Cout, 9*Cin) bf16 block weight (transposed
    # contraction); b:(4*Cout,1) f32 phase-replicated bias.
    # o :(4*Cout, B*Hi*Wi) f32 -- spatial on the lane axis => lane-dense stores.
    B, Hp, Wp, Cin = xp_ref.shape
    Hi, Wi = Hp - 2, Wp - 2
    npix = B * Hi * Wi
    xp = xp_ref[...]
    # 9 distinct windows, transposed ONCE each and shared by all 4 phases.
    win_t = [xp[:, sh:sh + Hi, sw:sw + Wi, :].reshape(npix, Cin).T
             for sh in range(3) for sw in range(3)]
    patch_t = jnp.concatenate(win_t, axis=0)                   # (9*Cin, npix)
    acc = jnp.dot(w_ref[...], patch_t,
                  preferred_element_type=jnp.float32)          # (4*Cout, npix)
    o_ref[...] = jnp.tanh(acc + b_ref[...])


# --------------------------------- wrappers ----------------------------------

def _vmem():
    return pl.BlockSpec(memory_space=pltpu.MemorySpace.VMEM)


def _pick_tile(F2, cap=1024):
    # Largest multiple-of-128 divisor of F2 <= cap, preferring >=2 grid steps so
    # megacore (v7x) and double-buffered w2 streaming are actually exercised.
    cap = min(cap, F2 // 2) if F2 >= 256 else F2
    best = None
    t = 128
    while t <= min(cap, F2):
        if F2 % t == 0:
            best = t
        t += 128
    return best if best is not None else F2


def fc_fused(x, w1, g1, t1, w2, g2, t2):
    B, Fin = x.shape
    H1 = w1.shape[1]
    F2 = w2.shape[1]
    tile_n = _pick_tile(F2)
    full = lambda j: (0, 0)
    col = lambda j: (0, j)
    return pl.pallas_call(
        fc_fused_kernel,
        out_shape=jax.ShapeDtypeStruct((B, F2), jnp.bfloat16),
        grid=(F2 // tile_n,),
        in_specs=[
            pl.BlockSpec((B, Fin), full),
            pl.BlockSpec((Fin, H1), full),
            pl.BlockSpec((1, H1), full),
            pl.BlockSpec((1, H1), full),
            pl.BlockSpec((H1, tile_n), col),
            pl.BlockSpec((1, tile_n), col),
            pl.BlockSpec((1, tile_n), col),
        ],
        out_specs=pl.BlockSpec((B, tile_n), col),
        compiler_params=pltpu.CompilerParams(
            dimension_semantics=("parallel",)),
    )(x, w1, g1.reshape(1, H1), t1.reshape(1, H1),
      w2, g2.reshape(1, F2), t2.reshape(1, F2))


def deconv1(xp, w_blk, g4, t4):
    # Single invocation: BN2d needs full (N,H,W) batch stats in one place.
    B, Hp, Wp, _ = xp.shape
    Hi, Wi = Hp - 2, Wp - 2
    C4 = w_blk.shape[1]
    assert (C4 // 4) & (C4 // 4 - 1) == 0  # Cout power of two (module uses 64)
    return pl.pallas_call(
        deconv1_kernel,
        out_shape=jax.ShapeDtypeStruct((B, Hi, Wi, C4), jnp.bfloat16),
        in_specs=[_vmem()] * 4,
        out_specs=_vmem(),
    )(xp, w_blk, g4.reshape(1, C4), t4.reshape(1, C4))


def deconv2(xp, w_blk_t, b4):
    B, Hp, Wp, _ = xp.shape
    Hi, Wi = Hp - 2, Wp - 2
    C4 = w_blk_t.shape[0]
    return pl.pallas_call(
        deconv2_kernel,
        out_shape=jax.ShapeDtypeStruct((C4, B * Hi * Wi), jnp.float32),
        in_specs=[_vmem()] * 3,
        out_specs=_vmem(),
    )(xp, w_blk_t, b4.reshape(C4, 1))


# ----------------------------------- glue ------------------------------------

def _pad1(x):
    # 1-pixel zero halo (tiny XLA op, KB of traffic).
    return jnp.pad(x, ((0, 0), (1, 1), (1, 1), (0, 0)))


def _phases_to_nhwc(ph):
    # (B,Hi,Wi,4*C) phase-stacked channels -> (B,2Hi,2Wi,C).  KB-sized reshuffle.
    B, Hi, Wi, C4 = ph.shape
    C = C4 // 4
    ph = ph.reshape(B, Hi, Wi, 2, 2, C)
    ph = jnp.transpose(ph, (0, 1, 3, 2, 4, 5))
    return ph.reshape(B, 2 * Hi, 2 * Wi, C)


def _phases_to_nchw(ph, B, Hi, Wi):
    # (4*Cout, B*Hi*Wi) -> (B, Cout, 2Hi, 2Wi)  (PyTorch output layout).
    C = ph.shape[0] // 4
    ph = ph.reshape(2, 2, C, B, Hi, Wi)
    ph = jnp.transpose(ph, (3, 2, 4, 0, 5, 1))
    return ph.reshape(B, C, 2 * Hi, 2 * Wi)


def generator_forward(params, z, cont_code, dist_code, *, input_size, output_dim):
    x = jnp.concatenate([z, cont_code, dist_code], axis=1)
    B = x.shape[0]
    s4 = input_size // 4
    h = fc_fused(x, params["w1"], params["g1"], params["beta1"],
                 params["w2"], params["g2"], params["beta2"])
    # fc2 columns were pre-permuted to NHWC order -> this reshape is contiguous.
    h = h.reshape(B, s4, s4, 128)
    ph1 = deconv1(_pad1(h), params["wblk1"], params["g4"], params["beta4"])
    d1 = _phases_to_nhwc(ph1)                         # (B, 2*s4, 2*s4, 64) bf16
    ph2 = deconv2(_pad1(d1), params["wblk2_t"], params["cb2_4"])
    out = _phases_to_nchw(ph2, B, 2 * s4, 2 * s4)     # (B, output_dim, 4*s4, 4*s4)
    return out


# ------------------------------ parameter setup ------------------------------

def _block_weight(wt):
    # PyTorch ConvTranspose2d weight (Cin, Cout, 4, 4) -> block weight
    # (9*Cin, 4*Cout): rows = shifted window (sh,sw in 0..2) x Cin, cols = output
    # phase p=2*rh+rw x Cout.  Output phase (oh=2i+rh, ow=2j+rw) sees taps
    # (dh,dw) via kernel element (3-rh-2dh, 3-rw-2dw) at window (rh+dh, rw+dw);
    # unused (window, phase) blocks are zero so ONE matmul emits all 4 phases.
    Cin, Cout = wt.shape[0], wt.shape[1]
    blk = jnp.zeros((9 * Cin, 4 * Cout), jnp.float32)
    for rh in range(2):
        for rw in range(2):
            p = 2 * rh + rw
            for dh in range(2):
                for dw in range(2):
                    sh, sw = rh + dh, rw + dw
                    r0 = (sh * 3 + sw) * Cin
                    c0 = p * Cout
                    blk = blk.at[r0:r0 + Cin, c0:c0 + Cout].set(
                        wt[:, :, 3 - rh - 2 * dh, 3 - rw - 2 * dw])
    return blk


def _nhwc_permute_cols(w, s4):
    # PyTorch fc2 feature order is (c, ih, iw) -> permute columns to (ih, iw, c)
    # so the fc output is already the NHWC deconv input (no transpose glue).
    H1, F2 = w.shape
    return w.reshape(H1, 128, s4, s4).transpose(0, 2, 3, 1).reshape(H1, F2)


def _nhwc_permute_vec(v, s4):
    return v.reshape(128, s4, s4).transpose(1, 2, 0).reshape(-1)


def init_torch_params(key, in_features, input_size, output_dim):
    # Mirrors initialize_weights(): Linear/conv W ~ N(0, 0.02), biases 0,
    # BN gamma ~ N(1, 0.02), BN beta 0.  Stored in PyTorch-style layouts.
    s4 = input_size // 4
    f2 = 128 * s4 * s4
    std = 0.02
    ks = jax.random.split(key, 8)
    return dict(
        w1=std * jax.random.normal(ks[0], (in_features, 1024), jnp.float32),
        b1=jnp.zeros((1024,), jnp.float32),
        g1=1.0 + std * jax.random.normal(ks[1], (1024,), jnp.float32),
        beta1=jnp.zeros((1024,), jnp.float32),
        w2=std * jax.random.normal(ks[2], (1024, f2), jnp.float32),
        b2=jnp.zeros((f2,), jnp.float32),
        g2=1.0 + std * jax.random.normal(ks[3], (f2,), jnp.float32),
        beta2=jnp.zeros((f2,), jnp.float32),
        wt1=std * jax.random.normal(ks[4], (128, 64, 4, 4), jnp.float32),
        cb1=jnp.zeros((64,), jnp.float32),
        cg1=1.0 + std * jax.random.normal(ks[5], (64,), jnp.float32),
        cbeta1=jnp.zeros((64,), jnp.float32),
        wt2=std * jax.random.normal(ks[6], (64, output_dim, 4, 4), jnp.float32),
        cb2=jnp.zeros((output_dim,), jnp.float32),
    )


def pack_params(tp, input_size):
    # Kernel-friendly params.  Pre-BN biases (b1, b2, cb1) are NOT packed: a
    # per-feature constant added before training-mode BN cancels exactly.
    s4 = input_size // 4
    cout2 = tp["cb2"].shape[0]
    return dict(
        w1=tp["w1"].astype(jnp.bfloat16),
        g1=tp["g1"],
        beta1=tp["beta1"],
        w2=_nhwc_permute_cols(tp["w2"], s4).astype(jnp.bfloat16),
        g2=_nhwc_permute_vec(tp["g2"], s4),
        beta2=_nhwc_permute_vec(tp["beta2"], s4),
        wblk1=_block_weight(tp["wt1"]).astype(jnp.bfloat16),          # (1152, 256)
        g4=jnp.tile(tp["cg1"].reshape(1, 64), (1, 4)).reshape(-1),    # (256,)
        beta4=jnp.tile(tp["cbeta1"].reshape(1, 64), (1, 4)).reshape(-1),
        wblk2_t=_block_weight(tp["wt2"]).T.astype(jnp.bfloat16),      # (4*out, 576)
        cb2_4=jnp.tile(tp["cb2"].reshape(1, cout2), (4, 1)).reshape(-1),
    )


# --------------------------- pure-XLA reference ------------------------------

def _bn1d_ref(y, g, b):
    m = y.mean(axis=0)
    v = y.var(axis=0)
    return (y - m) / jnp.sqrt(v + BN_EPS) * g + b


def _bn2d_ref(y, g, b):
    m = y.mean(axis=(0, 1, 2), keepdims=True)
    v = y.var(axis=(0, 1, 2), keepdims=True)
    return (y - m) / jnp.sqrt(v + BN_EPS) * g + b


def _conv_transpose_ref(x_nhwc, w_pt, b):
    # PyTorch ConvTranspose2d(k=4, s=2, p=1) == input dilated by 2, padded by 2,
    # cross-correlated with the spatially flipped, IO-swapped kernel.
    w = jnp.transpose(jnp.flip(w_pt, axis=(2, 3)), (2, 3, 0, 1))  # HWIO
    y = lax.conv_general_dilated(
        x_nhwc, w, window_strides=(1, 1), padding=((2, 2), (2, 2)),
        lhs_dilation=(2, 2), dimension_numbers=("NHWC", "HWIO", "NHWC"),
        preferred_element_type=jnp.float32)
    return y + b.reshape(1, 1, 1, -1)


def reference_forward(tp, z, cont_code, dist_code, *, input_size):
    x = jnp.concatenate([z, cont_code, dist_code], axis=1)
    B = x.shape[0]
    s4 = input_size // 4
    h = x @ tp["w1"] + tp["b1"]
    h = jax.nn.relu(_bn1d_ref(h, tp["g1"], tp["beta1"]))
    h = h @ tp["w2"] + tp["b2"]
    h = jax.nn.relu(_bn1d_ref(h, tp["g2"], tp["beta2"]))
    h = h.reshape(B, 128, s4, s4).transpose(0, 2, 3, 1)     # NCHW -> NHWC
    y = _conv_transpose_ref(h, tp["wt1"], tp["cb1"])
    y = jax.nn.relu(_bn2d_ref(y, tp["cg1"], tp["cbeta1"]))
    y = _conv_transpose_ref(y, tp["wt2"], tp["cb2"])
    return jnp.tanh(y).transpose(0, 3, 1, 2)                # NHWC -> NCHW


# ------------------------------------ main ------------------------------------

if __name__ == "__main__":
    batch = 4                 # >=2 required by BatchNorm training stats
    input_dim = 32
    len_discrete_code = 10
    len_continuous_code = 2
    input_size = 16
    output_dim = 1

    key = jax.random.PRNGKey(0)
    kz, kc, kd, kp = jax.random.split(key, 4)
    z = jax.random.normal(kz, (batch, input_dim), jnp.float32)
    cont_code = jax.random.normal(kc, (batch, len_continuous_code), jnp.float32)
    dist_code = jax.nn.one_hot(
        jax.random.randint(kd, (batch,), 0, len_discrete_code),
        len_discrete_code, dtype=jnp.float32)

    tp = init_torch_params(
        kp, input_dim + len_discrete_code + len_continuous_code,
        input_size, output_dim)
    params = pack_params(tp, input_size)

    fwd = jax.jit(functools.partial(
        generator_forward, input_size=input_size, output_dim=output_dim))
    out = jax.block_until_ready(fwd(params, z, cont_code, dist_code))

    assert out.shape == (batch, output_dim, input_size, input_size), out.shape
    assert bool(jnp.all(jnp.isfinite(out)))

    # Numerical parity vs pure-XLA reference (bf16 matmuls in the kernels ->
    # loose tolerance; a wrong phase/column mapping would be off by O(0.3)).
    ref = reference_forward(tp, z, cont_code, dist_code, input_size=input_size)
    err = float(jnp.max(jnp.abs(out.astype(jnp.float32) - ref)))
    assert err < 0.1, f"max abs diff vs reference = {err}"

    print("KERNEL_OK")
</pallas_src>

<mosaic_0001>
module attributes {stable_mosaic.version = 11 : i64} {
  func.func @fc_fused_kernel(%arg0: i32, %arg1: memref<4x44xf32, #tpu.memory_space<vmem>>, %arg2: memref<44x1024xbf16, #tpu.memory_space<vmem>>, %arg3: memref<1x1024xf32, #tpu.memory_space<vmem>>, %arg4: memref<1x1024xf32, #tpu.memory_space<vmem>>, %arg5: memref<1024x1024xbf16, #tpu.memory_space<vmem>>, %arg6: memref<1x1024xf32, #tpu.memory_space<vmem>>, %arg7: memref<1x1024xf32, #tpu.memory_space<vmem>>, %arg8: memref<4x1024xbf16, #tpu.memory_space<vmem>>) attributes {dimension_semantics = [#tpu.dimension_semantics<parallel>], iteration_bounds = array<i64: 2>, scalar_prefetch = 0 : i64, scratch_operands = 0 : i64, tpu.core_type = #tpu.core_type<tc>, window_params = [{pipeline_mode = #tpu.pipeline_mode<synchronous>, transform_indices = @transform_0, window_bounds = array<i64: 4, 44>}, {pipeline_mode = #tpu.pipeline_mode<synchronous>, transform_indices = @transform_1, window_bounds = array<i64: 44, 1024>}, {pipeline_mode = #tpu.pipeline_mode<synchronous>, transform_indices = @transform_2, window_bounds = array<i64: 1, 1024>}, {pipeline_mode = #tpu.pipeline_mode<synchronous>, transform_indices = @transform_3, window_bounds = array<i64: 1, 1024>}, {transform_indices = @transform_4, window_bounds = array<i64: 1024, 1024>}, {transform_indices = @transform_5, window_bounds = array<i64: 1, 1024>}, {transform_indices = @transform_6, window_bounds = array<i64: 1, 1024>}, {transform_indices = @transform_7, window_bounds = array<i64: 4, 1024>}]} {
    %c0 = arith.constant 0 : index
    %c0_0 = arith.constant 0 : index
    %0 = vector.load %arg1[%c0, %c0_0] : memref<4x44xf32, #tpu.memory_space<vmem>>, vector<4x44xf32>
    %1 = arith.truncf %0 : vector<4x44xf32> to vector<4x44xbf16>
    %c0_1 = arith.constant 0 : index
    %c0_2 = arith.constant 0 : index
    %2 = vector.load %arg2[%c0_1, %c0_2] : memref<44x1024xbf16, #tpu.memory_space<vmem>>, vector<44x1024xbf16>
    %cst = arith.constant dense<0.000000e+00> : vector<4x1024xf32>
    %3 = tpu.matmul %1, %2, %cst {dimension_numbers = #tpu.dot_dimension_numbers<[1], [0], [0], [1], [0, 0, 1, 1], [], []>} : vector<4x44xbf16>, vector<44x1024xbf16>, vector<4x1024xf32> -> vector<4x1024xf32>
    %c0_3 = arith.constant 0 : index
    %c0_4 = arith.constant 0 : index
    %4 = vector.load %arg3[%c0_3, %c0_4] : memref<1x1024xf32, #tpu.memory_space<vmem>>, vector<1x1024xf32>
    %c0_5 = arith.constant 0 : index
    %c0_6 = arith.constant 0 : index
    %5 = vector.load %arg4[%c0_5, %c0_6] : memref<1x1024xf32, #tpu.memory_space<vmem>>, vector<1x1024xf32>
    %cst_7 = arith.constant dense<0.000000e+00> : vector<1024xf32>
    %6 = vector.multi_reduction <add>, %3, %cst_7 [0] : vector<4x1024xf32> to vector<1024xf32>
    %7 = vector.shape_cast %6 : vector<1024xf32> to vector<1x1024xf32>
    %cst_8 = arith.constant 4.000000e+00 : f32
    %8 = vector.broadcast %cst_8 : f32 to vector<1x1024xf32>
    %9 = arith.divf %7, %8 : vector<1x1024xf32>
    %10 = arith.mulf %3, %3 : vector<4x1024xf32>
    %cst_9 = arith.constant dense<0.000000e+00> : vector<1024xf32>
    %11 = vector.multi_reduction <add>, %10, %cst_9 [0] : vector<4x1024xf32> to vector<1024xf32>
    %12 = vector.shape_cast %11 : vector<1024xf32> to vector<1x1024xf32>
    %cst_10 = arith.constant 4.000000e+00 : f32
    %13 = vector.broadcast %cst_10 : f32 to vector<1x1024xf32>
    %14 = arith.divf %12, %13 : vector<1x1024xf32>
    %15 = arith.mulf %9, %9 : vector<1x1024xf32>
    %16 = arith.subf %14, %15 : vector<1x1024xf32>
    %cst_11 = arith.constant 0.000000e+00 : f32
    %17 = vector.broadcast %cst_11 : f32 to vector<1x1024xf32>
    %18 = arith.maximumf %16, %17 : vector<1x1024xf32>
    %19 = vector.broadcast %9 : vector<1x1024xf32> to vector<4x1024xf32>
    %20 = arith.subf %3, %19 : vector<4x1024xf32>
    %cst_12 = arith.constant 9.99999974E-6 : f32
    %21 = vector.broadcast %cst_12 : f32 to vector<1x1024xf32>
    %22 = arith.addf %18, %21 : vector<1x1024xf32>
    %23 = math.rsqrt %22 : vector<1x1024xf32>
    %24 = vector.broadcast %23 : vector<1x1024xf32> to vector<4x1024xf32>
    %25 = arith.mulf %20, %24 : vector<4x1024xf32>
    %26 = vector.broadcast %4 : vector<1x1024xf32> to vector<4x1024xf32>
    %27 = arith.mulf %25, %26 : vector<4x1024xf32>
    %28 = vector.broadcast %5 : vector<1x1024xf32> to vector<4x1024xf32>
    %29 = arith.addf %27, %28 : vector<4x1024xf32>
    %cst_13 = arith.constant 0.000000e+00 : f32
    %30 = vector.broadcast %cst_13 : f32 to vector<4x1024xf32>
    %31 = arith.maximumf %29, %30 : vector<4x1024xf32>
    %32 = arith.truncf %31 : vector<4x1024xf32> to vector<4x1024xbf16>
    %c0_14 = arith.constant 0 : index
    %c0_15 = arith.constant 0 : index
    %33 = vector.load %arg5[%c0_14, %c0_15] : memref<1024x1024xbf16, #tpu.memory_space<vmem>>, vector<1024x1024xbf16>
    %cst_16 = arith.constant dense<0.000000e+00> : vector<4x1024xf32>
    %34 = tpu.matmul %32, %33, %cst_16 {dimension_numbers = #tpu.dot_dimension_numbers<[1], [0], [0], [1], [0, 0, 1, 1], [], []>} : vector<4x1024xbf16>, vector<1024x1024xbf16>, vector<4x1024xf32> -> vector<4x1024xf32>
    %c0_17 = arith.constant 0 : index
    %c0_18 = arith.constant 0 : index
    %35 = vector.load %arg6[%c0_17, %c0_18] : memref<1x1024xf32, #tpu.memory_space<vmem>>, vector<1x1024xf32>
    %c0_19 = arith.constant 0 : index
    %c0_20 = arith.constant 0 : index
    %36 = vector.load %arg7[%c0_19, %c0_20] : memref<1x1024xf32, #tpu.memory_space<vmem>>, vector<1x1024xf32>
    %cst_21 = arith.constant dense<0.000000e+00> : vector<1024xf32>
    %37 = vector.multi_reduction <add>, %34, %cst_21 [0] : vector<4x1024xf32> to vector<1024xf32>
    %38 = vector.shape_cast %37 : vector<1024xf32> to vector<1x1024xf32>
    %cst_22 = arith.constant 4.000000e+00 : f32
    %39 = vector.broadcast %cst_22 : f32 to vector<1x1024xf32>
    %40 = arith.divf %38, %39 : vector<1x1024xf32>
    %41 = arith.mulf %34, %34 : vector<4x1024xf32>
    %cst_23 = arith.constant dense<0.000000e+00> : vector<1024xf32>
    %42 = vector.multi_reduction <add>, %41, %cst_23 [0] : vector<4x1024xf32> to vector<1024xf32>
    %43 = vector.shape_cast %42 : vector<1024xf32> to vector<1x1024xf32>
    %cst_24 = arith.constant 4.000000e+00 : f32
    %44 = vector.broadcast %cst_24 : f32 to vector<1x1024xf32>
    %45 = arith.divf %43, %44 : vector<1x1024xf32>
    %46 = arith.mulf %40, %40 : vector<1x1024xf32>
    %47 = arith.subf %45, %46 : vector<1x1024xf32>
    %cst_25 = arith.constant 0.000000e+00 : f32
    %48 = vector.broadcast %cst_25 : f32 to vector<1x1024xf32>
    %49 = arith.maximumf %47, %48 : vector<1x1024xf32>
    %50 = vector.broadcast %40 : vector<1x1024xf32> to vector<4x1024xf32>
    %51 = arith.subf %34, %50 : vector<4x1024xf32>
    %cst_26 = arith.constant 9.99999974E-6 : f32
    %52 = vector.broadcast %cst_26 : f32 to vector<1x1024xf32>
    %53 = arith.addf %49, %52 : vector<1x1024xf32>
    %54 = math.rsqrt %53 : vector<1x1024xf32>
    %55 = vector.broadcast %54 : vector<1x1024xf32> to vector<4x1024xf32>
    %56 = arith.mulf %51, %55 : vector<4x1024xf32>
    %57 = vector.broadcast %35 : vector<1x1024xf32> to vector<4x1024xf32>
    %58 = arith.mulf %56, %57 : vector<4x1024xf32>
    %59 = vector.broadcast %36 : vector<1x1024xf32> to vector<4x1024xf32>
    %60 = arith.addf %58, %59 : vector<4x1024xf32>
    %cst_27 = arith.constant 0.000000e+00 : f32
    %61 = vector.broadcast %cst_27 : f32 to vector<4x1024xf32>
    %62 = arith.maximumf %60, %61 : vector<4x1024xf32>
    %63 = arith.truncf %62 : vector<4x1024xf32> to vector<4x1024xbf16>
    %c0_28 = arith.constant 0 : index
    %c0_29 = arith.constant 0 : index
    %64 = vector.load %arg8[%c0_28, %c0_29] : memref<4x1024xbf16, #tpu.memory_space<vmem>>, vector<4x1024xbf16>
    tpu.vector_store %arg8[%c0_28, %c0_29], %63 {strides = array<i32>} : memref<4x1024xbf16, #tpu.memory_space<vmem>>, vector<4x1024xbf16>,
    return
  }
  func.func @transform_0(%arg0: i32) -> (i32, i32) {
    %c0_i32 = arith.constant 0 : i32
    %c0_i32_0 = arith.constant 0 : i32
    %c0_i32_1 = arith.constant 0 : i32
    return %c0_i32, %c0_i32_0 : i32, i32
  }
  func.func @transform_1(%arg0: i32) -> (i32, i32) {
    %c0_i32 = arith.constant 0 : i32
    %c0_i32_0 = arith.constant 0 : i32
    %c0_i32_1 = arith.constant 0 : i32
    return %c0_i32, %c0_i32_0 : i32, i32
  }
  func.func @transform_2(%arg0: i32) -> (i32, i32) {
    %c0_i32 = arith.constant 0 : i32
    %c0_i32_0 = arith.constant 0 : i32
    %c0_i32_1 = arith.constant 0 : i32
    return %c0_i32, %c0_i32_0 : i32, i32
  }
  func.func @transform_3(%arg0: i32) -> (i32, i32) {
    %c0_i32 = arith.constant 0 : i32
    %c0_i32_0 = arith.constant 0 : i32
    %c0_i32_1 = arith.constant 0 : i32
    return %c0_i32, %c0_i32_0 : i32, i32
  }
  func.func @transform_4(%arg0: i32) -> (i32, i32) {
    %c0_i32 = arith.constant 0 : i32
    %c0_i32_0 = arith.constant 0 : i32
    return %c0_i32, %arg0 : i32, i32
  }
  func.func @transform_5(%arg0: i32) -> (i32, i32) {
    %c0_i32 = arith.constant 0 : i32
    %c0_i32_0 = arith.constant 0 : i32
    return %c0_i32, %arg0 : i32, i32
  }
  func.func @transform_6(%arg0: i32) -> (i32, i32) {
    %c0_i32 = arith.constant 0 : i32
    %c0_i32_0 = arith.constant 0 : i32
    return %c0_i32, %arg0 : i32, i32
  }
  func.func @transform_7(%arg0: i32) -> (i32, i32) {
    %c0_i32 = arith.constant 0 : i32
    %c0_i32_0 = arith.constant 0 : i32
    return %c0_i32, %arg0 : i32, i32
  }
}

module attributes {stable_mosaic.version = 11 : i64} {
  func.func @deconv1_kernel(%arg0: memref<4x6x6x128xbf16, #tpu.memory_space<vmem>>, %arg1: memref<1152x256xbf16, #tpu.memory_space<vmem>>, %arg2: memref<1x256xf32, #tpu.memory_space<vmem>>, %arg3: memref<1x256xf32, #tpu.memory_space<vmem>>, %arg4: memref<4x4x4x256xbf16, #tpu.memory_space<vmem>>) attributes {dimension_semantics = [], scalar_prefetch = 0 : i64, scratch_operands = 0 : i64, tpu.core_type = #tpu.core_type<tc>} {
    %c0 = arith.constant 0 : index
    %c0_0 = arith.constant 0 : index
    %c0_1 = arith.constant 0 : index
    %c0_2 = arith.constant 0 : index
    %0 = vector.load %arg0[%c0, %c0_0, %c0_1, %c0_2] : memref<4x6x6x128xbf16, #tpu.memory_space<vmem>>, vector<4x6x6x128xbf16>
    %1 = vector.extract_strided_slice %0 {offsets = [0, 0, 0, 0], sizes = [4, 4, 4, 128], strides = [1, 1, 1, 1]} : vector<4x6x6x128xbf16> to vector<4x4x4x128xbf16>
    %2 = vector.shape_cast %1 : vector<4x4x4x128xbf16> to vector<64x128xbf16>
    %3 = vector.extract_strided_slice %0 {offsets = [0, 0, 1, 0], sizes = [4, 4, 4, 128], strides = [1, 1, 1, 1]} : vector<4x6x6x128xbf16> to vector<4x4x4x128xbf16>
    %4 = vector.shape_cast %3 : vector<4x4x4x128xbf16> to vector<64x128xbf16>
    %5 = vector.extract_strided_slice %0 {offsets = [0, 0, 2, 0], sizes = [4, 4, 4, 128], strides = [1, 1, 1, 1]} : vector<4x6x6x128xbf16> to vector<4x4x4x128xbf16>
    %6 = vector.shape_cast %5 : vector<4x4x4x128xbf16> to vector<64x128xbf16>
    %7 = vector.extract_strided_slice %0 {offsets = [0, 1, 0, 0], sizes = [4, 4, 4, 128], strides = [1, 1, 1, 1]} : vector<4x6x6x128xbf16> to vector<4x4x4x128xbf16>
    %8 = vector.shape_cast %7 : vector<4x4x4x128xbf16> to vector<64x128xbf16>
    %9 = vector.extract_strided_slice %0 {offsets = [0, 1, 1, 0], sizes = [4, 4, 4, 128], strides = [1, 1, 1, 1]} : vector<4x6x6x128xbf16> to vector<4x4x4x128xbf16>
    %10 = vector.shape_cast %9 : vector<4x4x4x128xbf16> to vector<64x128xbf16>
    %11 = vector.extract_strided_slice %0 {offsets = [0, 1, 2, 0], sizes = [4, 4, 4, 128], strides = [1, 1, 1, 1]} : vector<4x6x6x128xbf16> to vector<4x4x4x128xbf16>
    %12 = vector.shape_cast %11 : vector<4x4x4x128xbf16> to vector<64x128xbf16>
    %13 = vector.extract_strided_slice %0 {offsets = [0, 2, 0, 0], sizes = [4, 4, 4, 128], strides = [1, 1, 1, 1]} : vector<4x6x6x128xbf16> to vector<4x4x4x128xbf16>
    %14 = vector.shape_cast %13 : vector<4x4x4x128xbf16> to vector<64x128xbf16>
    %15 = vector.extract_strided_slice %0 {offsets = [0, 2, 1, 0], sizes = [4, 4, 4, 128], strides = [1, 1, 1, 1]} : vector<4x6x6x128xbf16> to vector<4x4x4x128xbf16>
    %16 = vector.shape_cast %15 : vector<4x4x4x128xbf16> to vector<64x128xbf16>
    %17 = vector.extract_strided_slice %0 {offsets = [0, 2, 2, 0], sizes = [4, 4, 4, 128], strides = [1, 1, 1, 1]} : vector<4x6x6x128xbf16> to vector<4x4x4x128xbf16>
    %18 = vector.shape_cast %17 : vector<4x4x4x128xbf16> to vector<64x128xbf16>
    %19 = tpu.concatenate %2, %4, %6, %8, %10, %12, %14, %16, %18 in 1 : vector<64x128xbf16>, vector<64x128xbf16>, vector<64x128xbf16>, vector<64x128xbf16>, vector<64x128xbf16>, vector<64x128xbf16>, vector<64x128xbf16>, vector<64x128xbf16>, vector<64x128xbf16> -> vector<64x1152xbf16>
    %c0_3 = arith.constant 0 : index
    %c0_4 = arith.constant 0 : index
    %20 = vector.load %arg1[%c0_3, %c0_4] : memref<1152x256xbf16, #tpu.memory_space<vmem>>, vector<1152x256xbf16>
    %cst = arith.constant dense<0.000000e+00> : vector<64x256xf32>
    %21 = tpu.matmul %19, %20, %cst {dimension_numbers = #tpu.dot_dimension_numbers<[1], [0], [0], [1], [0, 0, 1, 1], [], []>} : vector<64x1152xbf16>, vector<1152x256xbf16>, vector<64x256xf32> -> vector<64x256xf32>
    %22 = tpu.iota {dimensions = array<i32: 0>} : vector<256x256xi32>
    %23 = tpu.iota {dimensions = array<i32: 1>} : vector<256x256xi32>
    %c63_i32 = arith.constant 63 : i32
    %24 = vector.broadcast %c63_i32 : i32 to vector<256x256xi32>
    %25 = arith.andi %22, %24 : vector<256x256xi32>
    %c63_i32_5 = arith.constant 63 : i32
    %26 = vector.broadcast %c63_i32_5 : i32 to vector<256x256xi32>
    %27 = arith.andi %23, %26 : vector<256x256xi32>
    %28 = arith.cmpi eq, %25, %27 : vector<256x256xi32>
    %cst_6 = arith.constant 1.000000e+00 : f32
    %cst_7 = arith.constant 0.000000e+00 : f32
    %29 = vector.broadcast %cst_6 : f32 to vector<256x256xf32>
    %30 = vector.broadcast %cst_7 : f32 to vector<256x256xf32>
    %31 = arith.select %28, %29, %30 : vector<256x256xi1>, vector<256x256xf32>
    %cst_8 = arith.constant dense<0.000000e+00> : vector<256xf32>
    %32 = vector.multi_reduction <add>, %21, %cst_8 [0] : vector<64x256xf32> to vector<256xf32>
    %33 = vector.shape_cast %32 : vector<256xf32> to vector<1x256xf32>
    %cst_9 = arith.constant dense<0.000000e+00> : vector<1x256xf32>
    %34 = tpu.matmul %33, %31, %cst_9 {dimension_numbers = #tpu.dot_dimension_numbers<[1], [0], [0], [1], [0, 0, 1, 1], [], []>} : vector<1x256xf32>, vector<256x256xf32>, vector<1x256xf32> -> vector<1x256xf32>
    %35 = arith.mulf %21, %21 : vector<64x256xf32>
    %cst_10 = arith.constant dense<0.000000e+00> : vector<256xf32>
    %36 = vector.multi_reduction <add>, %35, %cst_10 [0] : vector<64x256xf32> to vector<256xf32>
    %37 = vector.shape_cast %36 : vector<256xf32> to vector<1x256xf32>
    %cst_11 = arith.constant dense<0.000000e+00> : vector<1x256xf32>
    %38 = tpu.matmul %37, %31, %cst_11 {dimension_numbers = #tpu.dot_dimension_numbers<[1], [0], [0], [1], [0, 0, 1, 1], [], []>} : vector<1x256xf32>, vector<256x256xf32>, vector<1x256xf32> -> vector<1x256xf32>
    %cst_12 = arith.constant 2.560000e+02 : f32
    %39 = vector.broadcast %cst_12 : f32 to vector<1x256xf32>
    %40 = arith.divf %34, %39 : vector<1x256xf32>
    %cst_13 = arith.constant 2.560000e+02 : f32
    %41 = vector.broadcast %cst_13 : f32 to vector<1x256xf32>
    %42 = arith.divf %38, %41 : vector<1x256xf32>
    %43 = arith.mulf %40, %40 : vector<1x256xf32>
    %44 = arith.subf %42, %43 : vector<1x256xf32>
    %cst_14 = arith.constant 0.000000e+00 : f32
    %45 = vector.broadcast %cst_14 : f32 to vector<1x256xf32>
    %46 = arith.maximumf %44, %45 : vector<1x256xf32>
    %cst_15 = arith.constant 9.99999974E-6 : f32
    %47 = vector.broadcast %cst_15 : f32 to vector<1x256xf32>
    %48 = arith.addf %46, %47 : vector<1x256xf32>
    %49 = math.rsqrt %48 : vector<1x256xf32>
    %c0_16 = arith.constant 0 : index
    %c0_17 = arith.constant 0 : index
    %50 = vector.load %arg2[%c0_16, %c0_17] : memref<1x256xf32, #tpu.memory_space<vmem>>, vector<1x256xf32>
    %51 = arith.mulf %49, %50 : vector<1x256xf32>
    %c0_18 = arith.constant 0 : index
    %c0_19 = arith.constant 0 : index
    %52 = vector.load %arg3[%c0_18, %c0_19] : memref<1x256xf32, #tpu.memory_space<vmem>>, vector<1x256xf32>
    %53 = arith.mulf %40, %51 : vector<1x256xf32>
    %54 = arith.subf %52, %53 : vector<1x256xf32>
    %55 = vector.broadcast %51 : vector<1x256xf32> to vector<64x256xf32>
    %56 = arith.mulf %21, %55 : vector<64x256xf32>
    %57 = vector.broadcast %54 : vector<1x256xf32> to vector<64x256xf32>
    %58 = arith.addf %56, %57 : vector<64x256xf32>
    %cst_20 = arith.constant 0.000000e+00 : f32
    %59 = vector.broadcast %cst_20 : f32 to vector<64x256xf32>
    %60 = arith.maximumf %58, %59 : vector<64x256xf32>
    %61 = vector.shape_cast %60 : vector<64x256xf32> to vector<4x4x4x256xf32>
    %62 = arith.truncf %61 : vector<4x4x4x256xf32> to vector<4x4x4x256xbf16>
    %c0_21 = arith.constant 0 : index
    %c0_22 = arith.constant 0 : index
    %c0_23 = arith.constant 0 : index
    %c0_24 = arith.constant 0 : index
    %63 = vector.load %arg4[%c0_21, %c0_22, %c0_23, %c0_24] : memref<4x4x4x256xbf16, #tpu.memory_space<vmem>>, vector<4x4x4x256xbf16>
    tpu.vector_store %arg4[%c0_21, %c0_22, %c0_23, %c0_24], %62 {strides = array<i32>} : memref<4x4x4x256xbf16, #tpu.memory_space<vmem>>, vector<4x4x4x256xbf16>,
    return
  }
}

module attributes {stable_mosaic.version = 11 : i64} {
  func.func @deconv2_kernel(%arg0: memref<4x10x10x64xbf16, #tpu.memory_space<vmem>>, %arg1: memref<4x576xbf16, #tpu.memory_space<vmem>>, %arg2: memref<4x1xf32, #tpu.memory_space<vmem>>, %arg3: memref<4x256xf32, #tpu.memory_space<vmem>>) attributes {dimension_semantics = [], scalar_prefetch = 0 : i64, scratch_operands = 0 : i64, tpu.core_type = #tpu.core_type<tc>} {
    %c0 = arith.constant 0 : index
    %c0_0 = arith.constant 0 : index
    %c0_1 = arith.constant 0 : index
    %c0_2 = arith.constant 0 : index
    %0 = vector.load %arg0[%c0, %c0_0, %c0_1, %c0_2] : memref<4x10x10x64xbf16, #tpu.memory_space<vmem>>, vector<4x10x10x64xbf16>
    %1 = vector.extract_strided_slice %0 {offsets = [0, 0, 0, 0], sizes = [4, 8, 8, 64], strides = [1, 1, 1, 1]} : vector<4x10x10x64xbf16> to vector<4x8x8x64xbf16>
    %2 = vector.shape_cast %1 : vector<4x8x8x64xbf16> to vector<256x64xbf16>
    %3 = tpu.transpose %2, [1, 0] : vector<256x64xbf16> -> vector<64x256xbf16>
    %4 = vector.extract_strided_slice %0 {offsets = [0, 0, 1, 0], sizes = [4, 8, 8, 64], strides = [1, 1, 1, 1]} : vector<4x10x10x64xbf16> to vector<4x8x8x64xbf16>
    %5 = vector.shape_cast %4 : vector<4x8x8x64xbf16> to vector<256x64xbf16>
    %6 = tpu.transpose %5, [1, 0] : vector<256x64xbf16> -> vector<64x256xbf16>
    %7 = vector.extract_strided_slice %0 {offsets = [0, 0, 2, 0], sizes = [4, 8, 8, 64], strides = [1, 1, 1, 1]} : vector<4x10x10x64xbf16> to vector<4x8x8x64xbf16>
    %8 = vector.shape_cast %7 : vector<4x8x8x64xbf16> to vector<256x64xbf16>
    %9 = tpu.transpose %8, [1, 0] : vector<256x64xbf16> -> vector<64x256xbf16>
    %10 = vector.extract_strided_slice %0 {offsets = [0, 1, 0, 0], sizes = [4, 8, 8, 64], strides = [1, 1, 1, 1]} : vector<4x10x10x64xbf16> to vector<4x8x8x64xbf16>
    %11 = vector.shape_cast %10 : vector<4x8x8x64xbf16> to vector<256x64xbf16>
    %12 = tpu.transpose %11, [1, 0] : vector<256x64xbf16> -> vector<64x256xbf16>
    %13 = vector.extract_strided_slice %0 {offsets = [0, 1, 1, 0], sizes = [4, 8, 8, 64], strides = [1, 1, 1, 1]} : vector<4x10x10x64xbf16> to vector<4x8x8x64xbf16>
    %14 = vector.shape_cast %13 : vector<4x8x8x64xbf16> to vector<256x64xbf16>
    %15 = tpu.transpose %14, [1, 0] : vector<256x64xbf16> -> vector<64x256xbf16>
    %16 = vector.extract_strided_slice %0 {offsets = [0, 1, 2, 0], sizes = [4, 8, 8, 64], strides = [1, 1, 1, 1]} : vector<4x10x10x64xbf16> to vector<4x8x8x64xbf16>
    %17 = vector.shape_cast %16 : vector<4x8x8x64xbf16> to vector<256x64xbf16>
    %18 = tpu.transpose %17, [1, 0] : vector<256x64xbf16> -> vector<64x256xbf16>
    %19 = vector.extract_strided_slice %0 {offsets = [0, 2, 0, 0], sizes = [4, 8, 8, 64], strides = [1, 1, 1, 1]} : vector<4x10x10x64xbf16> to vector<4x8x8x64xbf16>
    %20 = vector.shape_cast %19 : vector<4x8x8x64xbf16> to vector<256x64xbf16>
    %21 = tpu.transpose %20, [1, 0] : vector<256x64xbf16> -> vector<64x256xbf16>
    %22 = vector.extract_strided_slice %0 {offsets = [0, 2, 1, 0], sizes = [4, 8, 8, 64], strides = [1, 1, 1, 1]} : vector<4x10x10x64xbf16> to vector<4x8x8x64xbf16>
    %23 = vector.shape_cast %22 : vector<4x8x8x64xbf16> to vector<256x64xbf16>
    %24 = tpu.transpose %23, [1, 0] : vector<256x64xbf16> -> vector<64x256xbf16>
    %25 = vector.extract_strided_slice %0 {offsets = [0, 2, 2, 0], sizes = [4, 8, 8, 64], strides = [1, 1, 1, 1]} : vector<4x10x10x64xbf16> to vector<4x8x8x64xbf16>
    %26 = vector.shape_cast %25 : vector<4x8x8x64xbf16> to vector<256x64xbf16>
    %27 = tpu.transpose %26, [1, 0] : vector<256x64xbf16> -> vector<64x256xbf16>
    %28 = tpu.concatenate %3, %6, %9, %12, %15, %18, %21, %24, %27 in 0 : vector<64x256xbf16>, vector<64x256xbf16>, vector<64x256xbf16>, vector<64x256xbf16>, vector<64x256xbf16>, vector<64x256xbf16>, vector<64x256xbf16>, vector<64x256xbf16>, vector<64x256xbf16> -> vector<576x256xbf16>
    %c0_3 = arith.constant 0 : index
    %c0_4 = arith.constant 0 : index
    %29 = vector.load %arg1[%c0_3, %c0_4] : memref<4x576xbf16, #tpu.memory_space<vmem>>, vector<4x576xbf16>
    %cst = arith.constant dense<0.000000e+00> : vector<4x256xf32>
    %30 = tpu.matmul %29, %28, %cst {dimension_numbers = #tpu.dot_dimension_numbers<[1], [0], [0], [1], [0, 0, 1, 1], [], []>} : vector<4x576xbf16>, vector<576x256xbf16>, vector<4x256xf32> -> vector<4x256xf32>
    %c0_5 = arith.constant 0 : index
    %c0_6 = arith.constant 0 : index
    %31 = vector.load %arg2[%c0_5, %c0_6] : memref<4x1xf32, #tpu.memory_space<vmem>>, vector<4x1xf32>
    %32 = vector.broadcast %31 : vector<4x1xf32> to vector<4x256xf32>
    %33 = arith.addf %30, %32 : vector<4x256xf32>
    %34 = math.tanh %33 : vector<4x256xf32>
    %c0_7 = arith.constant 0 : index
    %c0_8 = arith.constant 0 : index
    %35 = vector.load %arg3[%c0_7, %c0_8] : memref<4x256xf32, #tpu.memory_space<vmem>>, vector<4x256xf32>
    tpu.vector_store %arg3[%c0_7, %c0_8], %34 {strides = array<i32>} : memref<4x256xf32, #tpu.memory_space<vmem>>, vector<4x256xf32>,
    return
  }
}

</mosaic_0001>

<llo_original>
// kernel: generator_forward.4
$region0: #{generator_forward.4}
  #allocation0 [shape = 'u32[]', space=smem, size = 0x4, offset = 0x4, fixed_abs, tag = 'smem constant byte address 0x4 - core index']
  #allocation1 [shape = 'u32[144,128]{1,0:T(1,128)}', space=vmem, size = 0x12000, scoped, tag = 'internal scratch']
  %s0 = inlined_call_operand.vmem [shape: bf16[4,6,6,128], index: 0, kind: input, shape index: {}]
  %s1 = inlined_call_operand.vmem [shape: bf16[1152,256], index: 1, kind: input, shape index: {}]
  %s2 = inlined_call_operand.vmem [shape: f32[1,256], index: 2, kind: input, shape index: {}]
  %s3 = inlined_call_operand.vmem [shape: f32[1,256], index: 3, kind: input, shape index: {}]
  %s4 = inlined_call_operand.vmem [shape: bf16[4,4,4,256], index: 4, kind: output, shape index: {}]
  %s5 = sld [smem:[#allocation0]]
  $region26: #{generator_forward.4} parent=0
    _
  %s7 = ssub.s32 1, %s5
  %s8 = scalar_select 0, %s7, %s5
  // Predicated region
  $region2: #{generator_forward.4} parent=0 // pred_check
    _
  $region3: #{generator_forward.4} parent=0 // pred_check_branch
    %10 = sbr.rel (0) target = $region5
  $region4: #{generator_forward.4} parent=0 // pred_region
    _
  $region5: #{generator_forward.4} parent=0 // pred_fallthru
    _
  // Predicated region
  $region6: #{generator_forward.4} parent=0 // pred_check
    _
  $region7: #{generator_forward.4} parent=0 // pred_check_branch
    %12 = sbr.rel (0) target = $region9
  $region8: #{generator_forward.4} parent=0 // pred_region
    _
  $region9: #{generator_forward.4} parent=0 // pred_fallthru
    _
  // Predicated region
  $region10: #{generator_forward.4} parent=0 // pred_check
    _
  $region11: #{generator_forward.4} parent=0 // pred_check_branch
    %14 = sbr.rel (0) target = $region13
  $region12: #{generator_forward.4} parent=0 // pred_region
    _
  $region13: #{generator_forward.4} parent=0 // pred_fallthru
    _
  // Predicated region
  $region14: #{generator_forward.4} parent=0 // pred_check
    _
  $region15: #{generator_forward.4} parent=0 // pred_check_branch
    %16 = sbr.rel (0) target = $region17
  $region16: #{generator_forward.4} parent=0 // pred_region
    _
  $region17: #{generator_forward.4} parent=0 // pred_fallthru
    _
  %v18 = vld [vmem:[%s0] sm:$0x7]
  %v19 = vld [vmem:[%s0 + $0x4] sm:$0x7]
  %v20 = vld [vmem:[%s0 + $0x8] sm:$0x7]
  %v21 = vld [vmem:[%s0 + $0xc] sm:$0x7]
  %v22 = vld [vmem:[%s0 + $0x10] sm:$0x7]
  %v23 = vld [vmem:[%s0 + $0x14] sm:$0x7]
  %v24 = vld [vmem:[%s0 + $0x18] sm:$0x7]
  %v25 = vld [vmem:[%s0 + $0x1c] sm:$0x7]
  %v26 = vld [vmem:[%s0 + $0x20] sm:$0x7]
  %v27 = vld [vmem:[%s0 + $0x24] sm:$0x7]
  %v28 = vld [vmem:[%s0 + $0x28] sm:$0x7]
  %v29 = vld [vmem:[%s0 + $0x2c] sm:$0x7]
  %v30 = vld [vmem:[%s0 + $0x30] sm:$0x7]
  %v31 = vld [vmem:[%s0 + $0x34] sm:$0x7]
  %v32 = vld [vmem:[%s0 + $0x38] sm:$0x7]
  %v33 = vld [vmem:[%s0 + $0x3c] sm:$0x7]
  %v34 = vld [vmem:[%s0 + $0x40] sm:$0x7]
  %v35 = vld [vmem:[%s0 + $0x44] sm:$0x7]
  %v36 = vld [vmem:[%s0 + $0x48] sm:$0x7]
  %v37 = vld [vmem:[%s0 + $0x4c] sm:$0x7]
  %v38 = vld [vmem:[%s0 + $0x50] sm:$0x7]
  %v39 = vld [vmem:[%s0 + $0x54] sm:$0x7]
  %v40 = vld [vmem:[%s0 + $0x58] sm:$0x7]
  %v41 = vld [vmem:[%s0 + $0x5c] sm:$0x7]
  %v59 = vunpack.c.l.s4 1983009808
  %v60 = vunpack.c.0.s8 %v59
  %v61 = vlaneseq
  %v62 = vshrl.u32 %v61, 7
  %v63 = vsub.s32 %v60, %v62
  %v64 = vrot.slane %v18, %v63
  %v65 = vcombine.high %v64, %v64
  %v67 = vunpack.c.l.s4 1983009808
  %v68 = vunpack.c.0.s8 %v67
  %v69 = vlaneseq
  %v70 = vshrl.u32 %v69, 7
  %v71 = vsub.s32 %v68, %v70
  %v72 = vrot.slane %v19, %v71
  %v73 = vcombine.high %v72, %v72
  %v75 = vunpack.c.l.s4 1983009808
  %v76 = vunpack.c.0.s8 %v75
  %v77 = vlaneseq
  %v78 = vshrl.u32 %v77, 7
  %v79 = vsub.s32 %v76, %v78
  %v80 = vrot.slane %v20, %v79
  %v81 = vcombine.high %v80, %v80
  %v83 = vunpack.c.l.s4 1983009808
  %v84 = vunpack.c.0.s8 %v83
  %v85 = vlaneseq
  %v86 = vshrl.u32 %v85, 7
  %v87 = vsub.s32 %v84, %v86
  %v88 = vrot.slane %v21, %v87
  %v89 = vcombine.high %v88, %v88
  %v91 = vunpack.c.l.s4 1983009808
  %v92 = vunpack.c.0.s8 %v91
  %v93 = vlaneseq
  %v94 = vshrl.u32 %v93, 7
  %v95 = vsub.s32 %v92, %v94
  %v96 = vrot.slane %v24, %v95
  %v97 = vcombine.high %v96, %v96
  %v99 = vunpack.c.l.s4 1983009808
  %v100 = vunpack.c.0.s8 %v99
  %v101 = vlaneseq
  %v102 = vshrl.u32 %v101, 7
  %v103 = vsub.s32 %v100, %v102
  %v104 = vrot.slane %v25, %v103
  %v105 = vcombine.high %v104, %v104
  %v107 = vunpack.c.l.s4 1983009808
  %v108 = vunpack.c.0.s8 %v107
  %v109 = vlaneseq
  %v110 = vshrl.u32 %v109, 7
  %v111 = vsub.s32 %v108, %v110
  %v112 = vrot.slane %v26, %v111
  %v113 = vcombine.high %v112, %v112
  %v115 = vunpack.c.l.s4 1983009808
  %v116 = vunpack.c.0.s8 %v115
  %v117 = vlaneseq
  %v118 = vshrl.u32 %v117, 7
  %v119 = vsub.s32 %v116, %v118
  %v120 = vrot.slane %v27, %v119
  %v121 = vcombine.high %v120, %v120
  %v123 = vunpack.c.l.s4 1983009808
  %v124 = vunpack.c.0.s8 %v123
  %v125 = vlaneseq
  %v126 = vshrl.u32 %v125, 7
  %v127 = vsub.s32 %v124, %v126
  %v128 = vrot.slane %v30, %v127
  %v129 = vcombine.high %v128, %v128
  %v131 = vunpack.c.l.s4 1983009808
  %v132 = vunpack.c.0.s8 %v131
  %v133 = vlaneseq
  %v134 = vshrl.u32 %v133, 7
  %v135 = vsub.s32 %v132, %v134
  %v136 = vrot.slane %v31, %v135
  %v137 = vcombine.high %v136, %v136
  %v139 = vunpack.c.l.s4 1983009808
  %v140 = vunpack.c.0.s8 %v139
  %v141 = vlaneseq
  %v142 = vshrl.u32 %v141, 7
  %v143 = vsub.s32 %v140, %v142
  %v144 = vrot.slane %v32, %v143
  %v145 = vcombine.high %v144, %v144
  %v147 = vunpack.c.l.s4 1983009808
  %v148 = vunpack.c.0.s8 %v147
  %v149 = vlaneseq
  %v150 = vshrl.u32 %v149, 7
  %v151 = vsub.s32 %v148, %v150
  %v152 = vrot.slane %v33, %v151
  %v153 = vcombine.high %v152, %v152
  %v155 = vunpack.c.l.s4 1983009808
  %v156 = vunpack.c.0.s8 %v155
  %v157 = vlaneseq
  %v158 = vshrl.u32 %v157, 7
  %v159 = vsub.s32 %v156, %v158
  %v160 = vrot.slane %v36, %v159
  %v161 = vcombine.high %v160, %v160
  %v163 = vunpack.c.l.s4 1983009808
  %v164 = vunpack.c.0.s8 %v163
  %v165 = vlaneseq
  %v166 = vshrl.u32 %v165, 7
  %v167 = vsub.s32 %v164, %v166
  %v168 = vrot.slane %v37, %v167
  %v169 = vcombine.high %v168, %v168
  %v171 = vunpack.c.l.s4 1983009808
  %v172 = vunpack.c.0.s8 %v171
  %v173 = vlaneseq
  %v174 = vshrl.u32 %v173, 7
  %v175 = vsub.s32 %v172, %v174
  %v176 = vrot.slane %v38, %v175
  %v177 = vcombine.high %v176, %v176
  %v179 = vunpack.c.l.s4 1983009808
  %v180 = vunpack.c.0.s8 %v179
  %v181 = vlaneseq
  %v182 = vshrl.u32 %v181, 7
  %v183 = vsub.s32 %v180, %v182
  %v184 = vrot.slane %v39, %v183
  %v185 = vcombine.high %v184, %v184
  %vm186 = vsmask.f32 1280
  %vm187 = vsmask.f32 3336
  %vm188 = vmor %vm186, %vm187
  %vm189 = vsmask.f32 5392
  %vm190 = vmor %vm188, %vm189
  %vm191 = vsmask.f32 7448
  %vm192 = vmor %vm190, %vm191
  %v194 = vshrl.u32 %v64, 16
  %v196 = vrot.slane %v194, 6
  %v197 = vshll.u32 %v64, 16
  %v199 = vrot.slane %v197, 7
  %v200 = vor.u32 %v196, %v199
  %v201 = vrot.slane %v200, 2
  %v203 = vshll.u32 %v65, 16
  %v205 = vrot.slane %v203, 7
  %v206 = vsel %vm192, %v201, %v205
  %v208 = vshrl.u32 %v72, 16
  %v210 = vrot.slane %v208, 6
  %v211 = vshll.u32 %v72, 16
  %v213 = vrot.slane %v211, 7
  %v214 = vor.u32 %v210, %v213
  %v215 = vrot.slane %v214, 2
  %v217 = vshll.u32 %v73, 16
  %v219 = vrot.slane %v217, 7
  %v220 = vsel %vm192, %v215, %v219
  %v222 = vshrl.u32 %v80, 16
  %v224 = vrot.slane %v222, 6
  %v225 = vshll.u32 %v80, 16
  %v227 = vrot.slane %v225, 7
  %v228 = vor.u32 %v224, %v227
  %v229 = vrot.slane %v228, 2
  %v231 = vshll.u32 %v81, 16
  %v233 = vrot.slane %v231, 7
  %v234 = vsel %vm192, %v229, %v233
  %v236 = vshrl.u32 %v88, 16
  %v238 = vrot.slane %v236, 6
  %v239 = vshll.u32 %v88, 16
  %v241 = vrot.slane %v239, 7
  %v242 = vor.u32 %v238, %v241
  %v243 = vrot.slane %v242, 2
  %v245 = vshll.u32 %v89, 16
  %v247 = vrot.slane %v245, 7
  %v248 = vsel %vm192, %v243, %v247
  %v250 = vshrl.u32 %v96, 16
  %v252 = vrot.slane %v250, 6
  %v253 = vshll.u32 %v96, 16
  %v255 = vrot.slane %v253, 7
  %v256 = vor.u32 %v252, %v255
  %v257 = vrot.slane %v256, 2
  %v259 = vshll.u32 %v97, 16
  %v261 = vrot.slane %v259, 7
  %v262 = vsel %vm192, %v257, %v261
  %v264 = vshrl.u32 %v104, 16
  %v266 = vrot.slane %v264, 6
  %v267 = vshll.u32 %v104, 16
  %v269 = vrot.slane %v267, 7
  %v270 = vor.u32 %v266, %v269
  %v271 = vrot.slane %v270, 2
  %v273 = vshll.u32 %v105, 16
  %v275 = vrot.slane %v273, 7
  %v276 = vsel %vm192, %v271, %v275
  %v278 = vshrl.u32 %v112, 16
  %v280 = vrot.slane %v278, 6
  %v281 = vshll.u32 %v112, 16
  %v283 = vrot.slane %v281, 7
  %v284 = vor.u32 %v280, %v283
  %v285 = vrot.slane %v284, 2
  %v287 = vshll.u32 %v113, 16
  %v289 = vrot.slane %v287, 7
  %v290 = vsel %vm192, %v285, %v289
  %v292 = vshrl.u32 %v120, 16
  %v294 = vrot.slane %v292, 6
  %v295 = vshll.u32 %v120, 16
  %v297 = vrot.slane %v295, 7
  %v298 = vor.u32 %v294, %v297
  %v299 = vrot.slane %v298, 2
  %v301 = vshll.u32 %v121, 16
  %v303 = vrot.slane %v301, 7
  %v304 = vsel %vm192, %v299, %v303
  %v306 = vshrl.u32 %v128, 16
  %v308 = vrot.slane %v306, 6
  %v309 = vshll.u32 %v128, 16
  %v311 = vrot.slane %v309, 7
  %v312 = vor.u32 %v308, %v311
  %v313 = vrot.slane %v312, 2
  %v315 = vshll.u32 %v129, 16
  %v317 = vrot.slane %v315, 7
  %v318 = vsel %vm192, %v313, %v317
  %v320 = vshrl.u32 %v136, 16
  %v322 = vrot.slane %v320, 6
  %v323 = vshll.u32 %v136, 16
  %v325 = vrot.slane %v323, 7
  %v326 = vor.u32 %v322, %v325
  %v327 = vrot.slane %v326, 2
  %v329 = vshll.u32 %v137, 16
  %v331 = vrot.slane %v329, 7
  %v332 = vsel %vm192, %v327, %v331
  %v334 = vshrl.u32 %v144, 16
  %v336 = vrot.slane %v334, 6
  %v337 = vshll.u32 %v144, 16
  %v339 = vrot.slane %v337, 7
  %v340 = vor.u32 %v336, %v339
  %v341 = vrot.slane %v340, 2
  %v343 = vshll.u32 %v145, 16
  %v345 = vrot.slane %v343, 7
  %v346 = vsel %vm192, %v341, %v345
  %v348 = vshrl.u32 %v152, 16
  %v350 = vrot.slane %v348, 6
  %v351 = vshll.u32 %v152, 16
  %v353 = vrot.slane %v351, 7
  %v354 = vor.u32 %v350, %v353
  %v355 = vrot.slane %v354, 2
  %v357 = vshll.u32 %v153, 16
  %v359 = vrot.slane %v357, 7
  %v360 = vsel %vm192, %v355, %v359
  %v362 = vshrl.u32 %v160, 16
  %v364 = vrot.slane %v362, 6
  %v365 = vshll.u32 %v160, 16
  %v367 = vrot.slane %v365, 7
  %v368 = vor.u32 %v364, %v367
  %v369 = vrot.slane %v368, 2
  %v371 = vshll.u32 %v161, 16
  %v373 = vrot.slane %v371, 7
  %v374 = vsel %vm192, %v369, %v373
  %v376 = vshrl.u32 %v168, 16
  %v378 = vrot.slane %v376, 6
  %v379 = vshll.u32 %v168, 16
  %v381 = vrot.slane %v379, 7
  %v382 = vor.u32 %v378, %v381
  %v383 = vrot.slane %v382, 2
  %v385 = vshll.u32 %v169, 16
  %v387 = vrot.slane %v385, 7
  %v388 = vsel %vm192, %v383, %v387
  %v390 = vshrl.u32 %v176, 16
  %v392 = vrot.slane %v390, 6
  %v393 = vshll.u32 %v176, 16
  %v395 = vrot.slane %v393, 7
  %v396 = vor.u32 %v392, %v395
  %v397 = vrot.slane %v396, 2
  %v399 = vshll.u32 %v177, 16
  %v401 = vrot.slane %v399, 7
  %v402 = vsel %vm192, %v397, %v401
  %v404 = vshrl.u32 %v184, 16
  %v406 = vrot.slane %v404, 6
  %v407 = vshll.u32 %v184, 16
  %v409 = vrot.slane %v407, 7
  %v410 = vor.u32 %v406, %v409
  %v411 = vrot.slane %v410, 2
  %v413 = vshll.u32 %v185, 16
  %v415 = vrot.slane %v413, 7
  %v416 = vsel %vm192, %v411, %v415
  %vm417 = vcmask 1040384
  %vm418 = vcmask 1042434
  %vm419 = vmor %vm417, %vm418
  %vm420 = vcmask 1044484
  %vm421 = vmor %vm419, %vm420
  %vm422 = vcmask 1046534
  %vm423 = vmor %vm421, %vm422
  %v424 = vrot.slane %v64, 7
  %v425 = vrot.slane %v424, 2
  %v426 = vrot.slane %v65, 7
  %v427 = vsel %vm423, %v425, %v426
  %v428 = vrot.slane %v72, 7
  %v429 = vrot.slane %v428, 2
  %v430 = vrot.slane %v73, 7
  %v431 = vsel %vm423, %v429, %v430
  %v432 = vrot.slane %v80, 7
  %v433 = vrot.slane %v432, 2
  %v434 = vrot.slane %v81, 7
  %v435 = vsel %vm423, %v433, %v434
  %v436 = vrot.slane %v88, 7
  %v437 = vrot.slane %v436, 2
  %v438 = vrot.slane %v89, 7
  %v439 = vsel %vm423, %v437, %v438
  %v440 = vrot.slane %v96, 7
  %v441 = vrot.slane %v440, 2
  %v442 = vrot.slane %v97, 7
  %v443 = vsel %vm423, %v441, %v442
  %v444 = vrot.slane %v104, 7
  %v445 = vrot.slane %v444, 2
  %v446 = vrot.slane %v105, 7
  %v447 = vsel %vm423, %v445, %v446
  %v448 = vrot.slane %v112, 7
  %v449 = vrot.slane %v448, 2
  %v450 = vrot.slane %v113, 7
  %v451 = vsel %vm423, %v449, %v450
  %v452 = vrot.slane %v120, 7
  %v453 = vrot.slane %v452, 2
  %v454 = vrot.slane %v121, 7
  %v455 = vsel %vm423, %v453, %v454
  %v456 = vrot.slane %v128, 7
  %v457 = vrot.slane %v456, 2
  %v458 = vrot.slane %v129, 7
  %v459 = vsel %vm423, %v457, %v458
  %v460 = vrot.slane %v136, 7
  %v461 = vrot.slane %v460, 2
  %v462 = vrot.slane %v137, 7
  %v463 = vsel %vm423, %v461, %v462
  %v464 = vrot.slane %v144, 7
  %v465 = vrot.slane %v464, 2
  %v466 = vrot.slane %v145, 7
  %v467 = vsel %vm423, %v465, %v466
  %v468 = vrot.slane %v152, 7
  %v469 = vrot.slane %v468, 2
  %v470 = vrot.slane %v153, 7
  %v471 = vsel %vm423, %v469, %v470
  %v472 = vrot.slane %v160, 7
  %v473 = vrot.slane %v472, 2
  %v474 = vrot.slane %v161, 7
  %v475 = vsel %vm423, %v473, %v474
  %v476 = vrot.slane %v168, 7
  %v477 = vrot.slane %v476, 2
  %v478 = vrot.slane %v169, 7
  %v479 = vsel %vm423, %v477, %v478
  %v480 = vrot.slane %v176, 7
  %v481 = vrot.slane %v480, 2
  %v482 = vrot.slane %v177, 7
  %v483 = vsel %vm423, %v481, %v482
  %v484 = vrot.slane %v184, 7
  %v485 = vrot.slane %v484, 2
  %v486 = vrot.slane %v185, 7
  %v487 = vsel %vm423, %v485, %v486
  %v493 = vunpack.c.l.s4 1983009808
  %v494 = vunpack.c.0.s8 %v493
  %v495 = vlaneseq
  %v496 = vshrl.u32 %v495, 7
  %v497 = vsub.s32 %v494, %v496
  %v498 = vrot.slane %v22, %v497
  %v499 = vcombine.high %v498, %v498
  %v501 = vunpack.c.l.s4 1983009808
  %v502 = vunpack.c.0.s8 %v501
  %v503 = vlaneseq
  %v504 = vshrl.u32 %v503, 7
  %v505 = vsub.s32 %v502, %v504
  %v506 = vrot.slane %v28, %v505
  %v507 = vcombine.high %v506, %v506
  %v509 = vunpack.c.l.s4 1983009808
  %v510 = vunpack.c.0.s8 %v509
  %v511 = vlaneseq
  %v512 = vshrl.u32 %v511, 7
  %v513 = vsub.s32 %v510, %v512
  %v514 = vrot.slane %v34, %v513
  %v515 = vcombine.high %v514, %v514
  %v517 = vunpack.c.l.s4 1983009808
  %v518 = vunpack.c.0.s8 %v517
  %v519 = vlaneseq
  %v520 = vshrl.u32 %v519, 7
  %v521 = vsub.s32 %v518, %v520
  %v522 = vrot.slane %v40, %v521
  %v523 = vcombine.high %v522, %v522
  %v525 = vshrl.u32 %v498, 16
  %v527 = vrot.slane %v525, 6
  %v528 = vshll.u32 %v498, 16
  %v530 = vrot.slane %v528, 7
  %v531 = vor.u32 %v527, %v530
  %v532 = vrot.slane %v531, 2
  %v534 = vshll.u32 %v499, 16
  %v536 = vrot.slane %v534, 7
  %v537 = vsel %vm192, %v532, %v536
  %v539 = vshrl.u32 %v506, 16
  %v541 = vrot.slane %v539, 6
  %v542 = vshll.u32 %v506, 16
  %v544 = vrot.slane %v542, 7
  %v545 = vor.u32 %v541, %v544
  %v546 = vrot.slane %v545, 2
  %v548 = vshll.u32 %v507, 16
  %v550 = vrot.slane %v548, 7
  %v551 = vsel %vm192, %v546, %v550
  %v553 = vshrl.u32 %v514, 16
  %v555 = vrot.slane %v553, 6
  %v556 = vshll.u32 %v514, 16
  %v558 = vrot.slane %v556, 7
  %v559 = vor.u32 %v555, %v558
  %v560 = vrot.slane %v559, 2
  %v562 = vshll.u32 %v515, 16
  %v564 = vrot.slane %v562, 7
  %v565 = vsel %vm192, %v560, %v564
  %v567 = vshrl.u32 %v522, 16
  %v569 = vrot.slane %v567, 6
  %v570 = vshll.u32 %v522, 16
  %v572 = vrot.slane %v570, 7
  %v573 = vor.u32 %v569, %v572
  %v574 = vrot.slane %v573, 2
  %v576 = vshll.u32 %v523, 16
  %v578 = vrot.slane %v576, 7
  %v579 = vsel %vm192, %v574, %v578
  %v580 = vrot.slane %v498, 7
  %v581 = vrot.slane %v580, 2
  %v582 = vrot.slane %v499, 7
  %v583 = vsel %vm423, %v581, %v582
  %v584 = vrot.slane %v506, 7
  %v585 = vrot.slane %v584, 2
  %v586 = vrot.slane %v507, 7
  %v587 = vsel %vm423, %v585, %v586
  %v588 = vrot.slane %v514, 7
  %v589 = vrot.slane %v588, 2
  %v590 = vrot.slane %v515, 7
  %v591 = vsel %vm423, %v589, %v590
  %v592 = vrot.slane %v522, 7
  %v593 = vrot.slane %v592, 2
  %v594 = vrot.slane %v523, 7
  %v595 = vsel %vm423, %v593, %v594
  %v601 = vunpack.c.l.s4 1983009808
  %v602 = vunpack.c.0.s8 %v601
  %v603 = vlaneseq
  %v604 = vshrl.u32 %v603, 7
  %v605 = vsub.s32 %v602, %v604
  %v606 = vrot.slane %v23, %v605
  %v607 = vcombine.high %v606, %v606
  %v609 = vunpack.c.l.s4 1983009808
  %v610 = vunpack.c.0.s8 %v609
  %v611 = vlaneseq
  %v612 = vshrl.u32 %v611, 7
  %v613 = vsub.s32 %v610, %v612
  %v614 = vrot.slane %v29, %v613
  %v615 = vcombine.high %v614, %v614
  %v617 = vunpack.c.l.s4 1983009808
  %v618 = vunpack.c.0.s8 %v617
  %v619 = vlaneseq
  %v620 = vshrl.u32 %v619, 7
  %v621 = vsub.s32 %v618, %v620
  %v622 = vrot.slane %v35, %v621
  %v623 = vcombine.high %v622, %v622
  %v625 = vunpack.c.l.s4 1983009808
  %v626 = vunpack.c.0.s8 %v625
  %v627 = vlaneseq
  %v628 = vshrl.u32 %v627, 7
  %v629 = vsub.s32 %v626, %v628
  %v630 = vrot.slane %v41, %v629
  %v631 = vcombine.high %v630, %v630
  %v633 = vshrl.u32 %v606, 16
  %v635 = vrot.slane %v633, 6
  %v636 = vshll.u32 %v606, 16
  %v638 = vrot.slane %v636, 7
  %v639 = vor.u32 %v635, %v638
  %v640 = vrot.slane %v639, 2
  %v642 = vshll.u32 %v607, 16
  %v644 = vrot.slane %v642, 7
  %v645 = vsel %vm192, %v640, %v644
  %v647 = vshrl.u32 %v614, 16
  %v649 = vrot.slane %v647, 6
  %v650 = vshll.u32 %v614, 16
  %v652 = vrot.slane %v650, 7
  %v653 = vor.u32 %v649, %v652
  %v654 = vrot.slane %v653, 2
  %v656 = vshll.u32 %v615, 16
  %v658 = vrot.slane %v656, 7
  %v659 = vsel %vm192, %v654, %v658
  %v661 = vshrl.u32 %v622, 16
  %v663 = vrot.slane %v661, 6
  %v664 = vshll.u32 %v622, 16
  %v666 = vrot.slane %v664, 7
  %v667 = vor.u32 %v663, %v666
  %v668 = vrot.slane %v667, 2
  %v670 = vshll.u32 %v623, 16
  %v672 = vrot.slane %v670, 7
  %v673 = vsel %vm192, %v668, %v672
  %v675 = vshrl.u32 %v630, 16
  %v677 = vrot.slane %v675, 6
  %v678 = vshll.u32 %v630, 16
  %v680 = vrot.slane %v678, 7
  %v681 = vor.u32 %v677, %v680
  %v682 = vrot.slane %v681, 2
  %v684 = vshll.u32 %v631, 16
  %v686 = vrot.slane %v684, 7
  %v687 = vsel %vm192, %v682, %v686
  %v688 = vrot.slane %v606, 7
  %v689 = vrot.slane %v688, 2
  %v690 = vrot.slane %v607, 7
  %v691 = vsel %vm423, %v689, %v690
  %v692 = vrot.slane %v614, 7
  %v693 = vrot.slane %v692, 2
  %v694 = vrot.slane %v615, 7
  %v695 = vsel %vm423, %v693, %v694
  %v696 = vrot.slane %v622, 7
  %v697 = vrot.slane %v696, 2
  %v698 = vrot.slane %v623, 7
  %v699 = vsel %vm423, %v697, %v698
  %v700 = vrot.slane %v630, 7
  %v701 = vrot.slane %v700, 2
  %v702 = vrot.slane %v631, 7
  %v703 = vsel %vm423, %v701, %v702
  %v704 = vcombine.low %v18, %v19
  %v705 = vcombine.low %v20, %v21
  %v707 = vunpack.c.l.s4 1983009808
  %v708 = vunpack.c.0.s8 %v707
  %v709 = vlaneseq
  %v710 = vshrl.u32 %v709, 7
  %v711 = vsub.s32 %v708, %v710
  %v712 = vrot.slane %v704, %v711
  %v714 = vunpack.c.l.s4 1983009808
  %v715 = vunpack.c.0.s8 %v714
  %v716 = vlaneseq
  %v717 = vshrl.u32 %v716, 7
  %v718 = vsub.s32 %v715, %v717
  %v719 = vrot.slane %v705, %v718
  %v720 = vcombine.low %v712, %v719
  %v721 = vcombine.low %v24, %v25
  %v722 = vcombine.low %v26, %v27
  %v724 = vunpack.c.l.s4 1983009808
  %v725 = vunpack.c.0.s8 %v724
  %v726 = vlaneseq
  %v727 = vshrl.u32 %v726, 7
  %v728 = vsub.s32 %v725, %v727
  %v729 = vrot.slane %v721, %v728
  %v731 = vunpack.c.l.s4 1983009808
  %v732 = vunpack.c.0.s8 %v731
  %v733 = vlaneseq
  %v734 = vshrl.u32 %v733, 7
  %v735 = vsub.s32 %v732, %v734
  %v736 = vrot.slane %v722, %v735
  %v737 = vcombine.low %v729, %v736
  %v738 = vcombine.low %v30, %v31
  %v739 = vcombine.low %v32, %v33
  %v741 = vunpack.c.l.s4 1983009808
  %v742 = vunpack.c.0.s8 %v741
  %v743 = vlaneseq
  %v744 = vshrl.u32 %v743, 7
  %v745 = vsub.s32 %v742, %v744
  %v746 = vrot.slane %v738, %v745
  %v748 = vunpack.c.l.s4 1983009808
  %v749 = vunpack.c.0.s8 %v748
  %v750 = vlaneseq
  %v751 = vshrl.u32 %v750, 7
  %v752 = vsub.s32 %v749, %v751
  %v753 = vrot.slane %v739, %v752
  %v754 = vcombine.low %v746, %v753
  %v755 = vcombine.low %v36, %v37
  %v756 = vcombine.low %v38, %v39
  %v758 = vunpack.c.l.s4 1983009808
  %v759 = vunpack.c.0.s8 %v758
  %v760 = vlaneseq
  %v761 = vshrl.u32 %v760, 7
  %v762 = vsub.s32 %v759, %v761
  %v763 = vrot.slane %v755, %v762
  %v765 = vunpack.c.l.s4 1983009808
  %v766 = vunpack.c.0.s8 %v765
  %v767 = vlaneseq
  %v768 = vshrl.u32 %v767, 7
  %v769 = vsub.s32 %v766, %v768
  %v770 = vrot.slane %v756, %v769
  %v771 = vcombine.low %v763, %v770
  %v776 = vcombine.low %v206, %v220
  %v777 = vcombine.low %v234, %v248
  %v779 = vunpack.c.l.s4 1983009808
  %v780 = vunpack.c.0.s8 %v779
  %v781 = vlaneseq
  %v782 = vshrl.u32 %v781, 7
  %v783 = vsub.s32 %v780, %v782
  %v784 = vrot.slane %v776, %v783
  %v786 = vunpack.c.l.s4 1983009808
  %v787 = vunpack.c.0.s8 %v786
  %v788 = vlaneseq
  %v789 = vshrl.u32 %v788, 7
  %v790 = vsub.s32 %v787, %v789
  %v791 = vrot.slane %v777, %v790
  %v792 = vcombine.low %v784, %v791
  %v793 = vcombine.low %v262, %v276
  %v794 = vcombine.low %v290, %v304
  %v796 = vunpack.c.l.s4 1983009808
  %v797 = vunpack.c.0.s8 %v796
  %v798 = vlaneseq
  %v799 = vshrl.u32 %v798, 7
  %v800 = vsub.s32 %v797, %v799
  %v801 = vrot.slane %v793, %v800
  %v803 = vunpack.c.l.s4 1983009808
  %v804 = vunpack.c.0.s8 %v803
  %v805 = vlaneseq
  %v806 = vshrl.u32 %v805, 7
  %v807 = vsub.s32 %v804, %v806
  %v808 = vrot.slane %v794, %v807
  %v809 = vcombine.low %v801, %v808
  %v810 = vcombine.low %v318, %v332
  %v811 = vcombine.low %v346, %v360
  %v813 = vunpack.c.l.s4 1983009808
  %v814 = vunpack.c.0.s8 %v813
  %v815 = vlaneseq
  %v816 = vshrl.u32 %v815, 7
  %v817 = vsub.s32 %v814, %v816
  %v818 = vrot.slane %v810, %v817
  %v820 = vunpack.c.l.s4 1983009808
  %v821 = vunpack.c.0.s8 %v820
  %v822 = vlaneseq
  %v823 = vshrl.u32 %v822, 7
  %v824 = vsub.s32 %v821, %v823
  %v825 = vrot.slane %v811, %v824
  %v826 = vcombine.low %v818, %v825
  %v827 = vcombine.low %v374, %v388
  %v828 = vcombine.low %v402, %v416
  %v830 = vunpack.c.l.s4 1983009808
  %v831 = vunpack.c.0.s8 %v830
  %v832 = vlaneseq
  %v833 = vshrl.u32 %v832, 7
  %v834 = vsub.s32 %v831, %v833
  %v835 = vrot.slane %v827, %v834
  %v837 = vunpack.c.l.s4 1983009808
  %v838 = vunpack.c.0.s8 %v837
  %v839 = vlaneseq
  %v840 = vshrl.u32 %v839, 7
  %v841 = vsub.s32 %v838, %v840
  %v842 = vrot.slane %v828, %v841
  %v843 = vcombine.low %v835, %v842
  %v848 = vcombine.low %v427, %v431
  %v849 = vcombine.low %v435, %v439
  %v851 = vunpack.c.l.s4 1983009808
  %v852 = vunpack.c.0.s8 %v851
  %v853 = vlaneseq
  %v854 = vshrl.u32 %v853, 7
  %v855 = vsub.s32 %v852, %v854
  %v856 = vrot.slane %v848, %v855
  %v858 = vunpack.c.l.s4 1983009808
  %v859 = vunpack.c.0.s8 %v858
  %v860 = vlaneseq
  %v861 = vshrl.u32 %v860, 7
  %v862 = vsub.s32 %v859, %v861
  %v863 = vrot.slane %v849, %v862
  %v864 = vcombine.low %v856, %v863
  %v865 = vcombine.low %v443, %v447
  %v866 = vcombine.low %v451, %v455
  %v868 = vunpack.c.l.s4 1983009808
  %v869 = vunpack.c.0.s8 %v868
  %v870 = vlaneseq
  %v871 = vshrl.u32 %v870, 7
  %v872 = vsub.s32 %v869, %v871
  %v873 = vrot.slane %v865, %v872
  %v875 = vunpack.c.l.s4 1983009808
  %v876 = vunpack.c.0.s8 %v875
  %v877 = vlaneseq
  %v878 = vshrl.u32 %v877, 7
  %v879 = vsub.s32 %v876, %v878
  %v880 = vrot.slane %v866, %v879
  %v881 = vcombine.low %v873, %v880
  %v882 = vcombine.low %v459, %v463
  %v883 = vcombine.low %v467, %v471
  %v885 = vunpack.c.l.s4 1983009808
  %v886 = vunpack.c.0.s8 %v885
  %v887 = vlaneseq
  %v888 = vshrl.u32 %v887, 7
  %v889 = vsub.s32 %v886, %v888
  %v890 = vrot.slane %v882, %v889
  %v892 = vunpack.c.l.s4 1983009808
  %v893 = vunpack.c.0.s8 %v892
  %v894 = vlaneseq
  %v895 = vshrl.u32 %v894, 7
  %v896 = vsub.s32 %v893, %v895
  %v897 = vrot.slane %v883, %v896
  %v898 = vcombine.low %v890, %v897
  %v899 = vcombine.low %v475, %v479
  %v900 = vcombine.low %v483, %v487
  %v902 = vunpack.c.l.s4 1983009808
  %v903 = vunpack.c.0.s8 %v902
  %v904 = vlaneseq
  %v905 = vshrl.u32 %v904, 7
  %v906 = vsub.s32 %v903, %v905
  %v907 = vrot.slane %v899, %v906
  %v909 = vunpack.c.l.s4 1983009808
  %v910 = vunpack.c.0.s8 %v909
  %v911 = vlaneseq
  %v912 = vshrl.u32 %v911, 7
  %v913 = vsub.s32 %v910, %v912
  %v914 = vrot.slane %v900, %v913
  %v915 = vcombine.low %v907, %v914
  %v920 = vcombine.low %v19, %v20
  %v921 = vcombine.low %v21, %v22
  %v923 = vunpack.c.l.s4 1983009808
  %v924 = vunpack.c.0.s8 %v923
  %v925 = vlaneseq
  %v926 = vshrl.u32 %v925, 7
  %v927 = vsub.s32 %v924, %v926
  %v928 = vrot.slane %v920, %v927
  %v930 = vunpack.c.l.s4 1983009808
  %v931 = vunpack.c.0.s8 %v930
  %v932 = vlaneseq
  %v933 = vshrl.u32 %v932, 7
  %v934 = vsub.s32 %v931, %v933
  %v935 = vrot.slane %v921, %v934
  %v936 = vcombine.low %v928, %v935
  %v937 = vcombine.low %v25, %v26
  %v938 = vcombine.low %v27, %v28
  %v940 = vunpack.c.l.s4 1983009808
  %v941 = vunpack.c.0.s8 %v940
  %v942 = vlaneseq
  %v943 = vshrl.u32 %v942, 7
  %v944 = vsub.s32 %v941, %v943
  %v945 = vrot.slane %v937, %v944
  %v947 = vunpack.c.l.s4 1983009808
  %v948 = vunpack.c.0.s8 %v947
  %v949 = vlaneseq
  %v950 = vshrl.u32 %v949, 7
  %v951 = vsub.s32 %v948, %v950
  %v952 = vrot.slane %v938, %v951
  %v953 = vcombine.low %v945, %v952
  %v954 = vcombine.low %v31, %v32
  %v955 = vcombine.low %v33, %v34
  %v957 = vunpack.c.l.s4 1983009808
  %v958 = vunpack.c.0.s8 %v957
  %v959 = vlaneseq
  %v960 = vshrl.u32 %v959, 7
  %v961 = vsub.s32 %v958, %v960
  %v962 = vrot.slane %v954, %v961
  %v964 = vunpack.c.l.s4 1983009808
  %v965 = vunpack.c.0.s8 %v964
  %v966 = vlaneseq
  %v967 = vshrl.u32 %v966, 7
  %v968 = vsub.s32 %v965, %v967
  %v969 = vrot.slane %v955, %v968
  %v970 = vcombine.low %v962, %v969
  %v971 = vcombine.low %v37, %v38
  %v972 = vcombine.low %v39, %v40
  %v974 = vunpack.c.l.s4 1983009808
  %v975 = vunpack.c.0.s8 %v974
  %v976 = vlaneseq
  %v977 = vshrl.u32 %v976, 7
  %v978 = vsub.s32 %v975, %v977
  %v979 = vrot.slane %v971, %v978
  %v981 = vunpack.c.l.s4 1983009808
  %v982 = vunpack.c.0.s8 %v981
  %v983 = vlaneseq
  %v984 = vshrl.u32 %v983, 7
  %v985 = vsub.s32 %v982, %v984
  %v986 = vrot.slane %v972, %v985
  %v987 = vcombine.low %v979, %v986
  %v992 = vcombine.low %v220, %v234
  %v993 = vcombine.low %v248, %v537
  %v995 = vunpack.c.l.s4 1983009808
  %v996 = vunpack.c.0.s8 %v995
  %v997 = vlaneseq
  %v998 = vshrl.u32 %v997, 7
  %v999 = vsub.s32 %v996, %v998
  %v1000 = vrot.slane %v992, %v999
  %v1002 = vunpack.c.l.s4 1983009808
  %v1003 = vunpack.c.0.s8 %v1002
  %v1004 = vlaneseq
  %v1005 = vshrl.u32 %v1004, 7
  %v1006 = vsub.s32 %v1003, %v1005
  %v1007 = vrot.slane %v993, %v1006
  %v1008 = vcombine.low %v1000, %v1007
  %v1009 = vcombine.low %v276, %v290
  %v1010 = vcombine.low %v304, %v551
  %v1012 = vunpack.c.l.s4 1983009808
  %v1013 = vunpack.c.0.s8 %v1012
  %v1014 = vlaneseq
  %v1015 = vshrl.u32 %v1014, 7
  %v1016 = vsub.s32 %v1013, %v1015
  %v1017 = vrot.slane %v1009, %v1016
  %v1019 = vunpack.c.l.s4 1983009808
  %v1020 = vunpack.c.0.s8 %v1019
  %v1021 = vlaneseq
  %v1022 = vshrl.u32 %v1021, 7
  %v1023 = vsub.s32 %v1020, %v1022
  %v1024 = vrot.slane %v1010, %v1023
  %v1025 = vcombine.low %v1017, %v1024
  %v1026 = vcombine.low %v332, %v346
  %v1027 = vcombine.low %v360, %v565
  %v1029 = vunpack.c.l.s4 1983009808
  %v1030 = vunpack.c.0.s8 %v1029
  %v1031 = vlaneseq
  %v1032 = vshrl.u32 %v1031, 7
  %v1033 = vsub.s32 %v1030, %v1032
  %v1034 = vrot.slane %v1026, %v1033
  %v1036 = vunpack.c.l.s4 1983009808
  %v1037 = vunpack.c.0.s8 %v1036
  %v1038 = vlaneseq
  %v1039 = vshrl.u32 %v1038, 7
  %v1040 = vsub.s32 %v1037, %v1039
  %v1041 = vrot.slane %v1027, %v1040
  %v1042 = vcombine.low %v1034, %v1041
  %v1043 = vcombine.low %v388, %v402
  %v1044 = vcombine.low %v416, %v579
  %v1046 = vunpack.c.l.s4 1983009808
  %v1047 = vunpack.c.0.s8 %v1046
  %v1048 = vlaneseq
  %v1049 = vshrl.u32 %v1048, 7
  %v1050 = vsub.s32 %v1047, %v1049
  %v1051 = vrot.slane %v1043, %v1050
  %v1053 = vunpack.c.l.s4 1983009808
  %v1054 = vunpack.c.0.s8 %v1053
  %v1055 = vlaneseq
  %v1056 = vshrl.u32 %v1055, 7
  %v1057 = vsub.s32 %v1054, %v1056
  %v1058 = vrot.slane %v1044, %v1057
  %v1059 = vcombine.low %v1051, %v1058
  %v1064 = vcombine.low %v431, %v435
  %v1065 = vcombine.low %v439, %v583
  %v1067 = vunpack.c.l.s4 1983009808
  %v1068 = vunpack.c.0.s8 %v1067
  %v1069 = vlaneseq
  %v1070 = vshrl.u32 %v1069, 7
  %v1071 = vsub.s32 %v1068, %v1070
  %v1072 = vrot.slane %v1064, %v1071
  %v1074 = vunpack.c.l.s4 1983009808
  %v1075 = vunpack.c.0.s8 %v1074
  %v1076 = vlaneseq
  %v1077 = vshrl.u32 %v1076, 7
  %v1078 = vsub.s32 %v1075, %v1077
  %v1079 = vrot.slane %v1065, %v1078
  %v1080 = vcombine.low %v1072, %v1079
  %v1081 = vcombine.low %v447, %v451
  %v1082 = vcombine.low %v455, %v587
  %v1084 = vunpack.c.l.s4 1983009808
  %v1085 = vunpack.c.0.s8 %v1084
  %v1086 = vlaneseq
  %v1087 = vshrl.u32 %v1086, 7
  %v1088 = vsub.s32 %v1085, %v1087
  %v1089 = vrot.slane %v1081, %v1088
  %v1091 = vunpack.c.l.s4 1983009808
  %v1092 = vunpack.c.0.s8 %v1091
  %v1093 = vlaneseq
  %v1094 = vshrl.u32 %v1093, 7
  %v1095 = vsub.s32 %v1092, %v1094
  %v1096 = vrot.slane %v1082, %v1095
  %v1097 = vcombine.low %v1089, %v1096
  %v1098 = vcombine.low %v463, %v467
  %v1099 = vcombine.low %v471, %v591
  %v1101 = vunpack.c.l.s4 1983009808
  %v1102 = vunpack.c.0.s8 %v1101
  %v1103 = vlaneseq
  %v1104 = vshrl.u32 %v1103, 7
  %v1105 = vsub.s32 %v1102, %v1104
  %v1106 = vrot.slane %v1098, %v1105
  %v1108 = vunpack.c.l.s4 1983009808
  %v1109 = vunpack.c.0.s8 %v1108
  %v1110 = vlaneseq
  %v1111 = vshrl.u32 %v1110, 7
  %v1112 = vsub.s32 %v1109, %v1111
  %v1113 = vrot.slane %v1099, %v1112
  %v1114 = vcombine.low %v1106, %v1113
  %v1115 = vcombine.low %v479, %v483
  %v1116 = vcombine.low %v487, %v595
  %v1118 = vunpack.c.l.s4 1983009808
  %v1119 = vunpack.c.0.s8 %v1118
  %v1120 = vlaneseq
  %v1121 = vshrl.u32 %v1120, 7
  %v1122 = vsub.s32 %v1119, %v1121
  %v1123 = vrot.slane %v1115, %v1122
  %v1125 = vunpack.c.l.s4 1983009808
  %v1126 = vunpack.c.0.s8 %v1125
  %v1127 = vlaneseq
  %v1128 = vshrl.u32 %v1127, 7
  %v1129 = vsub.s32 %v1126, %v1128
  %v1130 = vrot.slane %v1116, %v1129
  %v1131 = vcombine.low %v1123, %v1130
  %v1136 = vcombine.low %v22, %v23
  %v1138 = vunpack.c.l.s4 1983009808
  %v1139 = vunpack.c.0.s8 %v1138
  %v1140 = vlaneseq
  %v1141 = vshrl.u32 %v1140, 7
  %v1142 = vsub.s32 %v1139, %v1141
  %v1143 = vrot.slane %v1136, %v1142
  %v1144 = vcombine.low %v719, %v1143
  %v1145 = vcombine.low %v28, %v29
  %v1147 = vunpack.c.l.s4 1983009808
  %v1148 = vunpack.c.0.s8 %v1147
  %v1149 = vlaneseq
  %v1150 = vshrl.u32 %v1149, 7
  %v1151 = vsub.s32 %v1148, %v1150
  %v1152 = vrot.slane %v1145, %v1151
  %v1153 = vcombine.low %v736, %v1152
  %v1154 = vcombine.low %v34, %v35
  %v1156 = vunpack.c.l.s4 1983009808
  %v1157 = vunpack.c.0.s8 %v1156
  %v1158 = vlaneseq
  %v1159 = vshrl.u32 %v1158, 7
  %v1160 = vsub.s32 %v1157, %v1159
  %v1161 = vrot.slane %v1154, %v1160
  %v1162 = vcombine.low %v753, %v1161
  %v1163 = vcombine.low %v40, %v41
  %v1165 = vunpack.c.l.s4 1983009808
  %v1166 = vunpack.c.0.s8 %v1165
  %v1167 = vlaneseq
  %v1168 = vshrl.u32 %v1167, 7
  %v1169 = vsub.s32 %v1166, %v1168
  %v1170 = vrot.slane %v1163, %v1169
  %v1171 = vcombine.low %v770, %v1170
  %v1176 = vcombine.low %v537, %v645
  %v1178 = vunpack.c.l.s4 1983009808
  %v1179 = vunpack.c.0.s8 %v1178
  %v1180 = vlaneseq
  %v1181 = vshrl.u32 %v1180, 7
  %v1182 = vsub.s32 %v1179, %v1181
  %v1183 = vrot.slane %v1176, %v1182
  %v1184 = vcombine.low %v791, %v1183
  %v1185 = vcombine.low %v551, %v659
  %v1187 = vunpack.c.l.s4 1983009808
  %v1188 = vunpack.c.0.s8 %v1187
  %v1189 = vlaneseq
  %v1190 = vshrl.u32 %v1189, 7
  %v1191 = vsub.s32 %v1188, %v1190
  %v1192 = vrot.slane %v1185, %v1191
  %v1193 = vcombine.low %v808, %v1192
  %v1194 = vcombine.low %v565, %v673
  %v1196 = vunpack.c.l.s4 1983009808
  %v1197 = vunpack.c.0.s8 %v1196
  %v1198 = vlaneseq
  %v1199 = vshrl.u32 %v1198, 7
  %v1200 = vsub.s32 %v1197, %v1199
  %v1201 = vrot.slane %v1194, %v1200
  %v1202 = vcombine.low %v825, %v1201
  %v1203 = vcombine.low %v579, %v687
  %v1205 = vunpack.c.l.s4 1983009808
  %v1206 = vunpack.c.0.s8 %v1205
  %v1207 = vlaneseq
  %v1208 = vshrl.u32 %v1207, 7
  %v1209 = vsub.s32 %v1206, %v1208
  %v1210 = vrot.slane %v1203, %v1209
  %v1211 = vcombine.low %v842, %v1210
  %v1216 = vcombine.low %v583, %v691
  %v1218 = vunpack.c.l.s4 1983009808
  %v1219 = vunpack.c.0.s8 %v1218
  %v1220 = vlaneseq
  %v1221 = vshrl.u32 %v1220, 7
  %v1222 = vsub.s32 %v1219, %v1221
  %v1223 = vrot.slane %v1216, %v1222
  %v1224 = vcombine.low %v863, %v1223
  %v1225 = vcombine.low %v587, %v695
  %v1227 = vunpack.c.l.s4 1983009808
  %v1228 = vunpack.c.0.s8 %v1227
  %v1229 = vlaneseq
  %v1230 = vshrl.u32 %v1229, 7
  %v1231 = vsub.s32 %v1228, %v1230
  %v1232 = vrot.slane %v1225, %v1231
  %v1233 = vcombine.low %v880, %v1232
  %v1234 = vcombine.low %v591, %v699
  %v1236 = vunpack.c.l.s4 1983009808
  %v1237 = vunpack.c.0.s8 %v1236
  %v1238 = vlaneseq
  %v1239 = vshrl.u32 %v1238, 7
  %v1240 = vsub.s32 %v1237, %v1239
  %v1241 = vrot.slane %v1234, %v1240
  %v1242 = vcombine.low %v897, %v1241
  %v1243 = vcombine.low %v595, %v703
  %v1245 = vunpack.c.l.s4 1983009808
  %v1246 = vunpack.c.0.s8 %v1245
  %v1247 = vlaneseq
  %v1248 = vshrl.u32 %v1247, 7
  %v1249 = vsub.s32 %v1246, %v1248
  %v1250 = vrot.slane %v1243, %v1249
  %v1251 = vcombine.low %v914, %v1250
  %v1256 = vld [vmem:[%s1] sm:$0xff]
  %v1257 = vld [vmem:[%s1 + $0x8] sm:$0xff]
  %v1258 = vld [vmem:[%s1 + $0x10] sm:$0xff]
  %v1259 = vld [vmem:[%s1 + $0x18] sm:$0xff]
  %v1260 = vld [vmem:[%s1 + $0x20] sm:$0xff]
  %v1261 = vld [vmem:[%s1 + $0x28] sm:$0xff]
  %v1262 = vld [vmem:[%s1 + $0x30] sm:$0xff]
  %v1263 = vld [vmem:[%s1 + $0x38] sm:$0xff]
  %v1264 = vld [vmem:[%s1 + $0x40] sm:$0xff]
  %v1265 = vld [vmem:[%s1 + $0x48] sm:$0xff]
  %v1266 = vld [vmem:[%s1 + $0x50] sm:$0xff]
  %v1267 = vld [vmem:[%s1 + $0x58] sm:$0xff]
  %v1268 = vld [vmem:[%s1 + $0x60] sm:$0xff]
  %v1269 = vld [vmem:[%s1 + $0x68] sm:$0xff]
  %v1270 = vld [vmem:[%s1 + $0x70] sm:$0xff]
  %v1271 = vld [vmem:[%s1 + $0x78] sm:$0xff]
  %v1272 = vld [vmem:[%s1 + $0x80] sm:$0xff]
  %v1273 = vld [vmem:[%s1 + $0x88] sm:$0xff]
  %v1274 = vld [vmem:[%s1 + $0x90] sm:$0xff]
  %v1275 = vld [vmem:[%s1 + $0x98] sm:$0xff]
  %v1276 = vld [vmem:[%s1 + $0xa0] sm:$0xff]
  %v1277 = vld [vmem:[%s1 + $0xa8] sm:$0xff]
  %v1278 = vld [vmem:[%s1 + $0xb0] sm:$0xff]
  %v1279 = vld [vmem:[%s1 + $0xb8] sm:$0xff]
  %v1280 = vld [vmem:[%s1 + $0xc0] sm:$0xff]
  %v1281 = vld [vmem:[%s1 + $0xc8] sm:$0xff]
  %v1282 = vld [vmem:[%s1 + $0xd0] sm:$0xff]
  %v1283 = vld [vmem:[%s1 + $0xd8] sm:$0xff]
  %v1284 = vld [vmem:[%s1 + $0xe0] sm:$0xff]
  %v1285 = vld [vmem:[%s1 + $0xe8] sm:$0xff]
  %v1286 = vld [vmem:[%s1 + $0xf0] sm:$0xff]
  %v1287 = vld [vmem:[%s1 + $0xf8] sm:$0xff]
  %v1288 = vld [vmem:[%s1 + $0x100] sm:$0xff]
  %v1289 = vld [vmem:[%s1 + $0x108] sm:$0xff]
  %v1290 = vld [vmem:[%s1 + $0x110] sm:$0xff]
  %v1291 = vld [vmem:[%s1 + $0x118] sm:$0xff]
  %v1292 = vld [vmem:[%s1 + $0x120] sm:$0xff]
  %v1293 = vld [vmem:[%s1 + $0x128] sm:$0xff]
  %v1294 = vld [vmem:[%s1 + $0x130] sm:$0xff]
  %v1295 = vld [vmem:[%s1 + $0x138] sm:$0xff]
  %v1296 = vld [vmem:[%s1 + $0x140] sm:$0xff]
  %v1297 = vld [vmem:[%s1 + $0x148] sm:$0xff]
  %v1298 = vld [vmem:[%s1 + $0x150] sm:$0xff]
  %v1299 = vld [vmem:[%s1 + $0x158] sm:$0xff]
  %v1300 = vld [vmem:[%s1 + $0x160] sm:$0xff]
  %v1301 = vld [vmem:[%s1 + $0x168] sm:$0xff]
  %v1302 = vld [vmem:[%s1 + $0x170] sm:$0xff]
  %v1303 = vld [vmem:[%s1 + $0x178] sm:$0xff]
  %v1304 = vld [vmem:[%s1 + $0x180] sm:$0xff]
  %v1305 = vld [vmem:[%s1 + $0x188] sm:$0xff]
  %v1306 = vld [vmem:[%s1 + $0x190] sm:$0xff]
  %v1307 = vld [vmem:[%s1 + $0x198] sm:$0xff]
  %v1308 = vld [vmem:[%s1 + $0x1a0] sm:$0xff]
  %v1309 = vld [vmem:[%s1 + $0x1a8] sm:$0xff]
  %v1310 = vld [vmem:[%s1 + $0x1b0] sm:$0xff]
  %v1311 = vld [vmem:[%s1 + $0x1b8] sm:$0xff]
  %v1312 = vld [vmem:[%s1 + $0x1c0] sm:$0xff]
  %v1313 = vld [vmem:[%s1 + $0x1c8] sm:$0xff]
  %v1314 = vld [vmem:[%s1 + $0x1d0] sm:$0xff]
  %v1315 = vld [vmem:[%s1 + $0x1d8] sm:$0xff]
  %v1316 = vld [vmem:[%s1 + $0x1e0] sm:$0xff]
  %v1317 = vld [vmem:[%s1 + $0x1e8] sm:$0xff]
  %v1318 = vld [vmem:[%s1 + $0x1f0] sm:$0xff]
  %v1319 = vld [vmem:[%s1 + $0x1f8] sm:$0xff]
  %v1320 = vld [vmem:[%s1 + $0x200] sm:$0xff]
  %v1321 = vld [vmem:[%s1 + $0x208] sm:$0xff]
  %v1322 = vld [vmem:[%s1 + $0x210] sm:$0xff]
  %v1323 = vld [vmem:[%s1 + $0x218] sm:$0xff]
  %v1324 = vld [vmem:[%s1 + $0x220] sm:$0xff]
  %v1325 = vld [vmem:[%s1 + $0x228] sm:$0xff]
  %v1326 = vld [vmem:[%s1 + $0x230] sm:$0xff]
  %v1327 = vld [vmem:[%s1 + $0x238] sm:$0xff]
  %v1328 = vld [vmem:[%s1 + $0x240] sm:$0xff]
  %v1329 = vld [vmem:[%s1 + $0x248] sm:$0xff]
  %v1330 = vld [vmem:[%s1 + $0x250] sm:$0xff]
  %v1331 = vld [vmem:[%s1 + $0x258] sm:$0xff]
  %v1332 = vld [vmem:[%s1 + $0x260] sm:$0xff]
  %v1333 = vld [vmem:[%s1 + $0x268] sm:$0xff]
  %v1334 = vld [vmem:[%s1 + $0x270] sm:$0xff]
  %v1335 = vld [vmem:[%s1 + $0x278] sm:$0xff]
  %v1336 = vld [vmem:[%s1 + $0x280] sm:$0xff]
  %v1337 = vld [vmem:[%s1 + $0x288] sm:$0xff]
  %v1338 = vld [vmem:[%s1 + $0x290] sm:$0xff]
  %v1339 = vld [vmem:[%s1 + $0x298] sm:$0xff]
  %v1340 = vld [vmem:[%s1 + $0x2a0] sm:$0xff]
  %v1341 = vld [vmem:[%s1 + $0x2a8] sm:$0xff]
  %v1342 = vld [vmem:[%s1 + $0x2b0] sm:$0xff]
  %v1343 = vld [vmem:[%s1 + $0x2b8] sm:$0xff]
  %v1344 = vld [vmem:[%s1 + $0x2c0] sm:$0xff]
  %v1345 = vld [vmem:[%s1 + $0x2c8] sm:$0xff]
  %v1346 = vld [vmem:[%s1 + $0x2d0] sm:$0xff]
  %v1347 = vld [vmem:[%s1 + $0x2d8] sm:$0xff]
  %v1348 = vld [vmem:[%s1 + $0x2e0] sm:$0xff]
  %v1349 = vld [vmem:[%s1 + $0x2e8] sm:$0xff]
  %v1350 = vld [vmem:[%s1 + $0x2f0] sm:$0xff]
  %v1351 = vld [vmem:[%s1 + $0x2f8] sm:$0xff]
  %v1352 = vld [vmem:[%s1 + $0x300] sm:$0xff]
  %v1353 = vld [vmem:[%s1 + $0x308] sm:$0xff]
  %v1354 = vld [vmem:[%s1 + $0x310] sm:$0xff]
  %v1355 = vld [vmem:[%s1 + $0x318] sm:$0xff]
  %v1356 = vld [vmem:[%s1 + $0x320] sm:$0xff]
  %v1357 = vld [vmem:[%s1 + $0x328] sm:$0xff]
  %v1358 = vld [vmem:[%s1 + $0x330] sm:$0xff]
  %v1359 = vld [vmem:[%s1 + $0x338] sm:$0xff]
  %v1360 = vld [vmem:[%s1 + $0x340] sm:$0xff]
  %v1361 = vld [vmem:[%s1 + $0x348] sm:$0xff]
  %v1362 = vld [vmem:[%s1 + $0x350] sm:$0xff]
  %v1363 = vld [vmem:[%s1 + $0x358] sm:$0xff]
  %v1364 = vld [vmem:[%s1 + $0x360] sm:$0xff]
  %v1365 = vld [vmem:[%s1 + $0x368] sm:$0xff]
  %v1366 = vld [vmem:[%s1 + $0x370] sm:$0xff]
  %v1367 = vld [vmem:[%s1 + $0x378] sm:$0xff]
  %v1368 = vld [vmem:[%s1 + $0x380] sm:$0xff]
  %v1369 = vld [vmem:[%s1 + $0x388] sm:$0xff]
  %v1370 = vld [vmem:[%s1 + $0x390] sm:$0xff]
  %v1371 = vld [vmem:[%s1 + $0x398] sm:$0xff]
  %v1372 = vld [vmem:[%s1 + $0x3a0] sm:$0xff]
  %v1373 = vld [vmem:[%s1 + $0x3a8] sm:$0xff]
  %v1374 = vld [vmem:[%s1 + $0x3b0] sm:$0xff]
  %v1375 = vld [vmem:[%s1 + $0x3b8] sm:$0xff]
  %v1376 = vld [vmem:[%s1 + $0x3c0] sm:$0xff]
  %v1377 = vld [vmem:[%s1 + $0x3c8] sm:$0xff]
  %v1378 = vld [vmem:[%s1 + $0x3d0] sm:$0xff]
  %v1379 = vld [vmem:[%s1 + $0x3d8] sm:$0xff]
  %v1380 = vld [vmem:[%s1 + $0x3e0] sm:$0xff]
  %v1381 = vld [vmem:[%s1 + $0x3e8] sm:$0xff]
  %v1382 = vld [vmem:[%s1 + $0x3f0] sm:$0xff]
  %v1383 = vld [vmem:[%s1 + $0x3f8] sm:$0xff]
  %v1384 = vld [vmem:[%s1 + $0x400] sm:$0xff]
  %v1385 = vld [vmem:[%s1 + $0x408] sm:$0xff]
  %v1386 = vld [vmem:[%s1 + $0x410] sm:$0xff]
  %v1387 = vld [vmem:[%s1 + $0x418] sm:$0xff]
  %v1388 = vld [vmem:[%s1 + $0x420] sm:$0xff]
  %v1389 = vld [vmem:[%s1 + $0x428] sm:$0xff]
  %v1390 = vld [vmem:[%s1 + $0x430] sm:$0xff]
  %v1391 = vld [vmem:[%s1 + $0x438] sm:$0xff]
  %v1392 = vld [vmem:[%s1 + $0x440] sm:$0xff]
  %v1393 = vld [vmem:[%s1 + $0x448] sm:$0xff]
  %v1394 = vld [vmem:[%s1 + $0x450] sm:$0xff]
  %v1395 = vld [vmem:[%s1 + $0x458] sm:$0xff]
  %v1396 = vld [vmem:[%s1 + $0x460] sm:$0xff]
  %v1397 = vld [vmem:[%s1 + $0x468] sm:$0xff]
  %v1398 = vld [vmem:[%s1 + $0x470] sm:$0xff]
  %v1399 = vld [vmem:[%s1 + $0x478] sm:$0xff]
  %v1544 = vunpack.c.l.b16 %v1256
  %v1545 = vunpack.c.h.b16 %v1256
  %v1546 = vunpack.c.l.b16 %v1257
  %v1547 = vunpack.c.h.b16 %v1257
  %v1548 = vunpack.c.l.b16 %v1258
  %v1549 = vunpack.c.h.b16 %v1258
  %v1550 = vunpack.c.l.b16 %v1259
  %v1551 = vunpack.c.h.b16 %v1259
  %v1552 = vunpack.c.l.b16 %v1260
  %v1553 = vunpack.c.h.b16 %v1260
  %v1554 = vunpack.c.l.b16 %v1261
  %v1555 = vunpack.c.h.b16 %v1261
  %v1556 = vunpack.c.l.b16 %v1262
  %v1557 = vunpack.c.h.b16 %v1262
  %v1558 = vunpack.c.l.b16 %v1263
  %v1559 = vunpack.c.h.b16 %v1263
  %v1560 = vunpack.c.l.b16 %v1264
  %v1561 = vunpack.c.h.b16 %v1264
  %v1562 = vunpack.c.l.b16 %v1265
  %v1563 = vunpack.c.h.b16 %v1265
  %v1564 = vunpack.c.l.b16 %v1266
  %v1565 = vunpack.c.h.b16 %v1266
  %v1566 = vunpack.c.l.b16 %v1267
  %v1567 = vunpack.c.h.b16 %v1267
  %v1568 = vunpack.c.l.b16 %v1268
  %v1569 = vunpack.c.h.b16 %v1268
  %v1570 = vunpack.c.l.b16 %v1269
  %v1571 = vunpack.c.h.b16 %v1269
  %v1572 = vunpack.c.l.b16 %v1270
  %v1573 = vunpack.c.h.b16 %v1270
  %v1574 = vunpack.c.l.b16 %v1271
  %v1575 = vunpack.c.h.b16 %v1271
  %v1576 = vunpack.c.l.b16 %v1272
  %v1577 = vunpack.c.h.b16 %v1272
  %v1578 = vunpack.c.l.b16 %v1273
  %v1579 = vunpack.c.h.b16 %v1273
  %v1580 = vunpack.c.l.b16 %v1274
  %v1581 = vunpack.c.h.b16 %v1274
  %v1582 = vunpack.c.l.b16 %v1275
  %v1583 = vunpack.c.h.b16 %v1275
  %v1584 = vunpack.c.l.b16 %v1276
  %v1585 = vunpack.c.h.b16 %v1276
  %v1586 = vunpack.c.l.b16 %v1277
  %v1587 = vunpack.c.h.b16 %v1277
  %v1588 = vunpack.c.l.b16 %v1278
  %v1589 = vunpack.c.h.b16 %v1278
  %v1590 = vunpack.c.l.b16 %v1279
  %v1591 = vunpack.c.h.b16 %v1279
  %v1592 = vunpack.c.l.b16 %v1280
  %v1593 = vunpack.c.h.b16 %v1280
  %v1594 = vunpack.c.l.b16 %v1281
  %v1595 = vunpack.c.h.b16 %v1281
  %v1596 = vunpack.c.l.b16 %v1282
  %v1597 = vunpack.c.h.b16 %v1282
  %v1598 = vunpack.c.l.b16 %v1283
  %v1599 = vunpack.c.h.b16 %v1283
  %v1600 = vunpack.c.l.b16 %v1284
  %v1601 = vunpack.c.h.b16 %v1284
  %v1602 = vunpack.c.l.b16 %v1285
  %v1603 = vunpack.c.h.b16 %v1285
  %v1604 = vunpack.c.l.b16 %v1286
  %v1605 = vunpack.c.h.b16 %v1286
  %v1606 = vunpack.c.l.b16 %v1287
  %v1607 = vunpack.c.h.b16 %v1287
  %v1608 = vunpack.c.l.b16 %v1288
  %v1609 = vunpack.c.h.b16 %v1288
  %v1610 = vunpack.c.l.b16 %v1289
  %v1611 = vunpack.c.h.b16 %v1289
  %v1612 = vunpack.c.l.b16 %v1290
  %v1613 = vunpack.c.h.b16 %v1290
  %v1614 = vunpack.c.l.b16 %v1291
  %v1615 = vunpack.c.h.b16 %v1291
  %v1616 = vunpack.c.l.b16 %v1292
  %v1617 = vunpack.c.h.b16 %v1292
  %v1618 = vunpack.c.l.b16 %v1293
  %v1619 = vunpack.c.h.b16 %v1293
  %v1620 = vunpack.c.l.b16 %v1294
  %v1621 = vunpack.c.h.b16 %v1294
  %v1622 = vunpack.c.l.b16 %v1295
  %v1623 = vunpack.c.h.b16 %v1295
  %v1624 = vunpack.c.l.b16 %v1296
  %v1625 = vunpack.c.h.b16 %v1296
  %v1626 = vunpack.c.l.b16 %v1297
  %v1627 = vunpack.c.h.b16 %v1297
  %v1628 = vunpack.c.l.b16 %v1298
  %v1629 = vunpack.c.h.b16 %v1298
  %v1630 = vunpack.c.l.b16 %v1299
  %v1631 = vunpack.c.h.b16 %v1299
  %v1632 = vunpack.c.l.b16 %v1300
  %v1633 = vunpack.c.h.b16 %v1300
  %v1634 = vunpack.c.l.b16 %v1301
  %v1635 = vunpack.c.h.b16 %v1301
  %v1636 = vunpack.c.l.b16 %v1302
  %v1637 = vunpack.c.h.b16 %v1302
  %v1638 = vunpack.c.l.b16 %v1303
  %v1639 = vunpack.c.h.b16 %v1303
  %v1640 = vunpack.c.l.b16 %v1304
  %v1641 = vunpack.c.h.b16 %v1304
  %v1642 = vunpack.c.l.b16 %v1305
  %v1643 = vunpack.c.h.b16 %v1305
  %v1644 = vunpack.c.l.b16 %v1306
  %v1645 = vunpack.c.h.b16 %v1306
  %v1646 = vunpack.c.l.b16 %v1307
  %v1647 = vunpack.c.h.b16 %v1307
  %v1648 = vunpack.c.l.b16 %v1308
  %v1649 = vunpack.c.h.b16 %v1308
  %v1650 = vunpack.c.l.b16 %v1309
  %v1651 = vunpack.c.h.b16 %v1309
  %v1652 = vunpack.c.l.b16 %v1310
  %v1653 = vunpack.c.h.b16 %v1310
  %v1654 = vunpack.c.l.b16 %v1311
  %v1655 = vunpack.c.h.b16 %v1311
  %v1656 = vunpack.c.l.b16 %v1312
  %v1657 = vunpack.c.h.b16 %v1312
  %v1658 = vunpack.c.l.b16 %v1313
  %v1659 = vunpack.c.h.b16 %v1313
  %v1660 = vunpack.c.l.b16 %v1314
  %v1661 = vunpack.c.h.b16 %v1314
  %v1662 = vunpack.c.l.b16 %v1315
  %v1663 = vunpack.c.h.b16 %v1315
  %v1664 = vunpack.c.l.b16 %v1316
  %v1665 = vunpack.c.h.b16 %v1316
  %v1666 = vunpack.c.l.b16 %v1317
  %v1667 = vunpack.c.h.b16 %v1317
  %v1668 = vunpack.c.l.b16 %v1318
  %v1669 = vunpack.c.h.b16 %v1318
  %v1670 = vunpack.c.l.b16 %v1319
  %v1671 = vunpack.c.h.b16 %v1319
  %v1672 = vunpack.c.l.b16 %v1320
  %v1673 = vunpack.c.h.b16 %v1320
  %v1674 = vunpack.c.l.b16 %v1321
  %v1675 = vunpack.c.h.b16 %v1321
  %v1676 = vunpack.c.l.b16 %v1322
  %v1677 = vunpack.c.h.b16 %v1322
  %v1678 = vunpack.c.l.b16 %v1323
  %v1679 = vunpack.c.h.b16 %v1323
  %v1680 = vunpack.c.l.b16 %v1324
  %v1681 = vunpack.c.h.b16 %v1324
  %v1682 = vunpack.c.l.b16 %v1325
  %v1683 = vunpack.c.h.b16 %v1325
  %v1684 = vunpack.c.l.b16 %v1326
  %v1685 = vunpack.c.h.b16 %v1326
  %v1686 = vunpack.c.l.b16 %v1327
  %v1687 = vunpack.c.h.b16 %v1327
  %v1688 = vunpack.c.l.b16 %v1328
  %v1689 = vunpack.c.h.b16 %v1328
  %v1690 = vunpack.c.l.b16 %v1329
  %v1691 = vunpack.c.h.b16 %v1329
  %v1692 = vunpack.c.l.b16 %v1330
  %v1693 = vunpack.c.h.b16 %v1330
  %v1694 = vunpack.c.l.b16 %v1331
  %v1695 = vunpack.c.h.b16 %v1331
  %v1696 = vunpack.c.l.b16 %v1332
  %v1697 = vunpack.c.h.b16 %v1332
  %v1698 = vunpack.c.l.b16 %v1333
  %v1699 = vunpack.c.h.b16 %v1333
  %v1700 = vunpack.c.l.b16 %v1334
  %v1701 = vunpack.c.h.b16 %v1334
  %v1702 = vunpack.c.l.b16 %v1335
  %v1703 = vunpack.c.h.b16 %v1335
  %v1704 = vunpack.c.l.b16 %v1336
  %v1705 = vunpack.c.h.b16 %v1336
  %v1706 = vunpack.c.l.b16 %v1337
  %v1707 = vunpack.c.h.b16 %v1337
  %v1708 = vunpack.c.l.b16 %v1338
  %v1709 = vunpack.c.h.b16 %v1338
  %v1710 = vunpack.c.l.b16 %v1339
  %v1711 = vunpack.c.h.b16 %v1339
  %v1712 = vunpack.c.l.b16 %v1340
  %v1713 = vunpack.c.h.b16 %v1340
  %v1714 = vunpack.c.l.b16 %v1341
  %v1715 = vunpack.c.h.b16 %v1341
  %v1716 = vunpack.c.l.b16 %v1342
  %v1717 = vunpack.c.h.b16 %v1342
  %v1718 = vunpack.c.l.b16 %v1343
  %v1719 = vunpack.c.h.b16 %v1343
  %v1720 = vunpack.c.l.b16 %v1344
  %v1721 = vunpack.c.h.b16 %v1344
  %v1722 = vunpack.c.l.b16 %v1345
  %v1723 = vunpack.c.h.b16 %v1345
  %v1724 = vunpack.c.l.b16 %v1346
  %v1725 = vunpack.c.h.b16 %v1346
  %v1726 = vunpack.c.l.b16 %v1347
  %v1727 = vunpack.c.h.b16 %v1347
  %v1728 = vunpack.c.l.b16 %v1348
  %v1729 = vunpack.c.h.b16 %v1348
  %v1730 = vunpack.c.l.b16 %v1349
  %v1731 = vunpack.c.h.b16 %v1349
  %v1732 = vunpack.c.l.b16 %v1350
  %v1733 = vunpack.c.h.b16 %v1350
  %v1734 = vunpack.c.l.b16 %v1351
  %v1735 = vunpack.c.h.b16 %v1351
  %v1736 = vunpack.c.l.b16 %v1352
  %v1737 = vunpack.c.h.b16 %v1352
  %v1738 = vunpack.c.l.b16 %v1353
  %v1739 = vunpack.c.h.b16 %v1353
  %v1740 = vunpack.c.l.b16 %v1354
  %v1741 = vunpack.c.h.b16 %v1354
  %v1742 = vunpack.c.l.b16 %v1355
  %v1743 = vunpack.c.h.b16 %v1355
  %v1744 = vunpack.c.l.b16 %v1356
  %v1745 = vunpack.c.h.b16 %v1356
  %v1746 = vunpack.c.l.b16 %v1357
  %v1747 = vunpack.c.h.b16 %v1357
  %v1748 = vunpack.c.l.b16 %v1358
  %v1749 = vunpack.c.h.b16 %v1358
  %v1750 = vunpack.c.l.b16 %v1359
  %v1751 = vunpack.c.h.b16 %v1359
  %v1752 = vunpack.c.l.b16 %v1360
  %v1753 = vunpack.c.h.b16 %v1360
  %v1754 = vunpack.c.l.b16 %v1361
  %v1755 = vunpack.c.h.b16 %v1361
  %v1756 = vunpack.c.l.b16 %v1362
  %v1757 = vunpack.c.h.b16 %v1362
  %v1758 = vunpack.c.l.b16 %v1363
  %v1759 = vunpack.c.h.b16 %v1363
  %v1760 = vunpack.c.l.b16 %v1364
  %v1761 = vunpack.c.h.b16 %v1364
  %v1762 = vunpack.c.l.b16 %v1365
  %v1763 = vunpack.c.h.b16 %v1365
  %v1764 = vunpack.c.l.b16 %v1366
  %v1765 = vunpack.c.h.b16 %v1366
  %v1766 = vunpack.c.l.b16 %v1367
  %v1767 = vunpack.c.h.b16 %v1367
  %v1768 = vunpack.c.l.b16 %v1368
  %v1769 = vunpack.c.h.b16 %v1368
  %v1770 = vunpack.c.l.b16 %v1369
  %v1771 = vunpack.c.h.b16 %v1369
  %v1772 = vunpack.c.l.b16 %v1370
  %v1773 = vunpack.c.h.b16 %v1370
  %v1774 = vunpack.c.l.b16 %v1371
  %v1775 = vunpack.c.h.b16 %v1371
  %v1776 = vunpack.c.l.b16 %v1372
  %v1777 = vunpack.c.h.b16 %v1372
  %v1778 = vunpack.c.l.b16 %v1373
  %v1779 = vunpack.c.h.b16 %v1373
  %v1780 = vunpack.c.l.b16 %v1374
  %v1781 = vunpack.c.h.b16 %v1374
  %v1782 = vunpack.c.l.b16 %v1375
  %v1783 = vunpack.c.h.b16 %v1375
  %v1784 = vunpack.c.l.b16 %v1376
  %v1785 = vunpack.c.h.b16 %v1376
  %v1786 = vunpack.c.l.b16 %v1377
  %v1787 = vunpack.c.h.b16 %v1377
  %v1788 = vunpack.c.l.b16 %v1378
  %v1789 = vunpack.c.h.b16 %v1378
  %v1790 = vunpack.c.l.b16 %v1379
  %v1791 = vunpack.c.h.b16 %v1379
  %v1792 = vunpack.c.l.b16 %v1380
  %v1793 = vunpack.c.h.b16 %v1380
  %v1794 = vunpack.c.l.b16 %v1381
  %v1795 = vunpack.c.h.b16 %v1381
  %v1796 = vunpack.c.l.b16 %v1382
  %v1797 = vunpack.c.h.b16 %v1382
  %v1798 = vunpack.c.l.b16 %v1383
  %v1799 = vunpack.c.h.b16 %v1383
  %v1800 = vunpack.c.l.b16 %v1384
  %v1801 = vunpack.c.h.b16 %v1384
  %v1802 = vunpack.c.l.b16 %v1385
  %v1803 = vunpack.c.h.b16 %v1385
  %v1804 = vunpack.c.l.b16 %v1386
  %v1805 = vunpack.c.h.b16 %v1386
  %v1806 = vunpack.c.l.b16 %v1387
  %v1807 = vunpack.c.h.b16 %v1387
  %v1808 = vunpack.c.l.b16 %v1388
  %v1809 = vunpack.c.h.b16 %v1388
  %v1810 = vunpack.c.l.b16 %v1389
  %v1811 = vunpack.c.h.b16 %v1389
  %v1812 = vunpack.c.l.b16 %v1390
  %v1813 = vunpack.c.h.b16 %v1390
  %v1814 = vunpack.c.l.b16 %v1391
  %v1815 = vunpack.c.h.b16 %v1391
  %v1816 = vunpack.c.l.b16 %v1392
  %v1817 = vunpack.c.h.b16 %v1392
  %v1818 = vunpack.c.l.b16 %v1393
  %v1819 = vunpack.c.h.b16 %v1393
  %v1820 = vunpack.c.l.b16 %v1394
  %v1821 = vunpack.c.h.b16 %v1394
  %v1822 = vunpack.c.l.b16 %v1395
  %v1823 = vunpack.c.h.b16 %v1395
  %v1824 = vunpack.c.l.b16 %v1396
  %v1825 = vunpack.c.h.b16 %v1396
  %v1826 = vunpack.c.l.b16 %v1397
  %v1827 = vunpack.c.h.b16 %v1397
  %v1828 = vunpack.c.l.b16 %v1398
  %v1829 = vunpack.c.h.b16 %v1398
  %v1830 = vunpack.c.l.b16 %v1399
  %v1831 = vunpack.c.h.b16 %v1399
  %v1832 = vpack.c.b16 %v1546, %v1544
  %v1833 = vpack.c.b16 %v1547, %v1545
  %v1834 = vpack.c.b16 %v1550, %v1548
  %v1835 = vpack.c.b16 %v1551, %v1549
  %v1836 = vpack.c.b16 %v1554, %v1552
  %v1837 = vpack.c.b16 %v1555, %v1553
  %v1838 = vpack.c.b16 %v1558, %v1556
  %v1839 = vpack.c.b16 %v1559, %v1557
  %v1840 = vpack.c.b16 %v1562, %v1560
  %v1841 = vpack.c.b16 %v1563, %v1561
  %v1842 = vpack.c.b16 %v1566, %v1564
  %v1843 = vpack.c.b16 %v1567, %v1565
  %v1844 = vpack.c.b16 %v1570, %v1568
  %v1845 = vpack.c.b16 %v1571, %v1569
  %v1846 = vpack.c.b16 %v1574, %v1572
  %v1847 = vpack.c.b16 %v1575, %v1573
  %v1848 = vpack.c.b16 %v1578, %v1576
  %v1849 = vpack.c.b16 %v1579, %v1577
  %v1850 = vpack.c.b16 %v1582, %v1580
  %v1851 = vpack.c.b16 %v1583, %v1581
  %v1852 = vpack.c.b16 %v1586, %v1584
  %v1853 = vpack.c.b16 %v1587, %v1585
  %v1854 = vpack.c.b16 %v1590, %v1588
  %v1855 = vpack.c.b16 %v1591, %v1589
  %v1856 = vpack.c.b16 %v1594, %v1592
  %v1857 = vpack.c.b16 %v1595, %v1593
  %v1858 = vpack.c.b16 %v1598, %v1596
  %v1859 = vpack.c.b16 %v1599, %v1597
  %v1860 = vpack.c.b16 %v1602, %v1600
  %v1861 = vpack.c.b16 %v1603, %v1601
  %v1862 = vpack.c.b16 %v1606, %v1604
  %v1863 = vpack.c.b16 %v1607, %v1605
  %v1864 = vpack.c.b16 %v1610, %v1608
  %v1865 = vpack.c.b16 %v1611, %v1609
  %v1866 = vpack.c.b16 %v1614, %v1612
  %v1867 = vpack.c.b16 %v1615, %v1613
  %v1868 = vpack.c.b16 %v1618, %v1616
  %v1869 = vpack.c.b16 %v1619, %v1617
  %v1870 = vpack.c.b16 %v1622, %v1620
  %v1871 = vpack.c.b16 %v1623, %v1621
  %v1872 = vpack.c.b16 %v1626, %v1624
  %v1873 = vpack.c.b16 %v1627, %v1625
  %v1874 = vpack.c.b16 %v1630, %v1628
  %v1875 = vpack.c.b16 %v1631, %v1629
  %v1876 = vpack.c.b16 %v1634, %v1632
  %v1877 = vpack.c.b16 %v1635, %v1633
  %v1878 = vpack.c.b16 %v1638, %v1636
  %v1879 = vpack.c.b16 %v1639, %v1637
  %v1880 = vpack.c.b16 %v1642, %v1640
  %v1881 = vpack.c.b16 %v1643, %v1641
  %v1882 = vpack.c.b16 %v1646, %v1644
  %v1883 = vpack.c.b16 %v1647, %v1645
  %v1884 = vpack.c.b16 %v1650, %v1648
  %v1885 = vpack.c.b16 %v1651, %v1649
  %v1886 = vpack.c.b16 %v1654, %v1652
  %v1887 = vpack.c.b16 %v1655, %v1653
  %v1888 = vpack.c.b16 %v1658, %v1656
  %v1889 = vpack.c.b16 %v1659, %v1657
  %v1890 = vpack.c.b16 %v1662, %v1660
  %v1891 = vpack.c.b16 %v1663, %v1661
  %v1892 = vpack.c.b16 %v1666, %v1664
  %v1893 = vpack.c.b16 %v1667, %v1665
  %v1894 = vpack.c.b16 %v1670, %v1668
  %v1895 = vpack.c.b16 %v1671, %v1669
  %v1896 = vpack.c.b16 %v1674, %v1672
  %v1897 = vpack.c.b16 %v1675, %v1673
  %v1898 = vpack.c.b16 %v1678, %v1676
  %v1899 = vpack.c.b16 %v1679, %v1677
  %v1900 = vpack.c.b16 %v1682, %v1680
  %v1901 = vpack.c.b16 %v1683, %v1681
  %v1902 = vpack.c.b16 %v1686, %v1684
  %v1903 = vpack.c.b16 %v1687, %v1685
  %v1904 = vpack.c.b16 %v1690, %v1688
  %v1905 = vpack.c.b16 %v1691, %v1689
  %v1906 = vpack.c.b16 %v1694, %v1692
  %v1907 = vpack.c.b16 %v1695, %v1693
  %v1908 = vpack.c.b16 %v1698, %v1696
  %v1909 = vpack.c.b16 %v1699, %v1697
  %v1910 = vpack.c.b16 %v1702, %v1700
  %v1911 = vpack.c.b16 %v1703, %v1701
  %v1912 = vpack.c.b16 %v1706, %v1704
  %v1913 = vpack.c.b16 %v1707, %v1705
  %v1914 = vpack.c.b16 %v1710, %v1708
  %v1915 = vpack.c.b16 %v1711, %v1709
  %v1916 = vpack.c.b16 %v1714, %v1712
  %v1917 = vpack.c.b16 %v1715, %v1713
  %v1918 = vpack.c.b16 %v1718, %v1716
  %v1919 = vpack.c.b16 %v1719, %v1717
  %v1920 = vpack.c.b16 %v1722, %v1720
  %v1921 = vpack.c.b16 %v1723, %v1721
  %v1922 = vpack.c.b16 %v1726, %v1724
  %v1923 = vpack.c.b16 %v1727, %v1725
  %v1924 = vpack.c.b16 %v1730, %v1728
  %v1925 = vpack.c.b16 %v1731, %v1729
  %v1926 = vpack.c.b16 %v1734, %v1732
  %v1927 = vpack.c.b16 %v1735, %v1733
  %v1928 = vpack.c.b16 %v1738, %v1736
  %v1929 = vpack.c.b16 %v1739, %v1737
  %v1930 = vpack.c.b16 %v1742, %v1740
  %v1931 = vpack.c.b16 %v1743, %v1741
  %v1932 = vpack.c.b16 %v1746, %v1744
  %v1933 = vpack.c.b16 %v1747, %v1745
  %v1934 = vpack.c.b16 %v1750, %v1748
  %v1935 = vpack.c.b16 %v1751, %v1749
  %v1936 = vpack.c.b16 %v1754, %v1752
  %v1937 = vpack.c.b16 %v1755, %v1753
  %v1938 = vpack.c.b16 %v1758, %v1756
  %v1939 = vpack.c.b16 %v1759, %v1757
  %v1940 = vpack.c.b16 %v1762, %v1760
  %v1941 = vpack.c.b16 %v1763, %v1761
  %v1942 = vpack.c.b16 %v1766, %v1764
  %v1943 = vpack.c.b16 %v1767, %v1765
  %v1944 = vpack.c.b16 %v1770, %v1768
  %v1945 = vpack.c.b16 %v1771, %v1769
  %v1946 = vpack.c.b16 %v1774, %v1772
  %v1947 = vpack.c.b16 %v1775, %v1773
  %v1948 = vpack.c.b16 %v1778, %v1776
  %v1949 = vpack.c.b16 %v1779, %v1777
  %v1950 = vpack.c.b16 %v1782, %v1780
  %v1951 = vpack.c.b16 %v1783, %v1781
  %v1952 = vpack.c.b16 %v1786, %v1784
  %v1953 = vpack.c.b16 %v1787, %v1785
  %v1954 = vpack.c.b16 %v1790, %v1788
  %v1955 = vpack.c.b16 %v1791, %v1789
  %v1956 = vpack.c.b16 %v1794, %v1792
  %v1957 = vpack.c.b16 %v1795, %v1793
  %v1958 = vpack.c.b16 %v1798, %v1796
  %v1959 = vpack.c.b16 %v1799, %v1797
  %v1960 = vpack.c.b16 %v1802, %v1800
  %v1961 = vpack.c.b16 %v1803, %v1801
  %v1962 = vpack.c.b16 %v1806, %v1804
  %v1963 = vpack.c.b16 %v1807, %v1805
  %v1964 = vpack.c.b16 %v1810, %v1808
  %v1965 = vpack.c.b16 %v1811, %v1809
  %v1966 = vpack.c.b16 %v1814, %v1812
  %v1967 = vpack.c.b16 %v1815, %v1813
  %v1968 = vpack.c.b16 %v1818, %v1816
  %v1969 = vpack.c.b16 %v1819, %v1817
  %v1970 = vpack.c.b16 %v1822, %v1820
  %v1971 = vpack.c.b16 %v1823, %v1821
  %v1972 = vpack.c.b16 %v1826, %v1824
  %v1973 = vpack.c.b16 %v1827, %v1825
  %v1974 = vpack.c.b16 %v1830, %v1828
  %v1975 = vpack.c.b16 %v1831, %v1829
  %2120 = vmatprep.subr.bf16.mxu0 %v1833
  %2121 = vmatpush1.bf16.msra.mxu0 %v1832
  %2122 = vmatprep.subr.bf16.mxu0 %v1835
  %2123 = vmatpush1.bf16.msra.mxu0 %v1834
  %2124 = vmatprep.subr.bf16.mxu0 %v1837
  %2125 = vmatpush1.bf16.msra.mxu0 %v1836
  %2126 = vmatprep.subr.bf16.mxu0 %v1839
  %2127 = vmatpush1.bf16.msra.mxu0 %v1838
  %2128 = vmatprep.subr.bf16.mxu0 %v1841
  %2129 = vmatpush1.bf16.msra.mxu0 %v1840
  %2130 = vmatprep.subr.bf16.mxu0 %v1843
  %2131 = vmatpush1.bf16.msra.mxu0 %v1842
  %2132 = vmatprep.subr.bf16.mxu0 %v1845
  %2133 = vmatpush1.bf16.msra.mxu0 %v1844
  %2134 = vmatprep.subr.bf16.mxu0 %v1847
  %2135 = vmatpush1.bf16.msra.mxu0 %v1846
  %2136 = vmatprep.subr.bf16.mxu0 %v1849
  %2137 = vmatpush1.bf16.msra.mxu0 %v1848
  %2138 = vmatprep.subr.bf16.mxu0 %v1851
  %2139 = vmatpush1.bf16.msra.mxu0 %v1850
  %2140 = vmatprep.subr.bf16.mxu0 %v1853
  %2141 = vmatpush1.bf16.msra.mxu0 %v1852
  %2142 = vmatprep.subr.bf16.mxu0 %v1855
  %2143 = vmatpush1.bf16.msra.mxu0 %v1854
  %2144 = vmatprep.subr.bf16.mxu0 %v1857
  %2145 = vmatpush1.bf16.msra.mxu0 %v1856
  %2146 = vmatprep.subr.bf16.mxu0 %v1859
  %2147 = vmatpush1.bf16.msra.mxu0 %v1858
  %2148 = vmatprep.subr.bf16.mxu0 %v1861
  %2149 = vmatpush1.bf16.msra.mxu0 %v1860
  %2150 = vmatprep.subr.bf16.mxu0 %v1863
  %2151 = vmatpush1.bf16.msra.mxu0 %v1862
  %2152 = vmatprep.mubr.bf16.mxu0 %v792
  %2153 = vmatmul.mubr.bf16.gmra.mrb[0].mxu0 %v720
  %v2154 = vpop.f32.mrb[0].mxu0
  %v2155 = vadd.f32 0.0, %v2154
  %v2156 = vpop.f32.mrb[0].mxu0
  %v2157 = vadd.f32 0.0, %v2156
  %v2158 = vpop.f32.mrb[0].mxu0
  %v2159 = vadd.f32 0.0, %v2158
  %v2160 = vpop.f32.mrb[0].mxu0
  %v2161 = vadd.f32 0.0, %v2160
  %2162 = vmatprep.mubr.bf16.mxu0 %v809
  %2163 = vmatmul.mubr.bf16.gmra.mrb[0].mxu0 %v737
  %v2164 = vpop.f32.mrb[0].mxu0
  %v2165 = vadd.f32 0.0, %v2164
  %v2166 = vpop.f32.mrb[0].mxu0
  %v2167 = vadd.f32 0.0, %v2166
  %v2168 = vpop.f32.mrb[0].mxu0
  %v2169 = vadd.f32 0.0, %v2168
  %v2170 = vpop.f32.mrb[0].mxu0
  %v2171 = vadd.f32 0.0, %v2170
  %2172 = vmatprep.mubr.bf16.mxu0 %v826
  %2173 = vmatmul.mubr.bf16.gmra.mrb[0].mxu0 %v754
  %v2174 = vpop.f32.mrb[0].mxu0
  %v2175 = vadd.f32 0.0, %v2174
  %v2176 = vpop.f32.mrb[0].mxu0
  %v2177 = vadd.f32 0.0, %v2176
  %v2178 = vpop.f32.mrb[0].mxu0
  %v2179 = vadd.f32 0.0, %v2178
  %v2180 = vpop.f32.mrb[0].mxu0
  %v2181 = vadd.f32 0.0, %v2180
  %2182 = vmatprep.mubr.bf16.mxu0 %v843
  %2183 = vmatmul.mubr.bf16.gmra.mrb[0].mxu0 %v771
  %v2184 = vpop.f32.mrb[0].mxu0
  %v2185 = vadd.f32 0.0, %v2184
  %v2186 = vpop.f32.mrb[0].mxu0
  %v2187 = vadd.f32 0.0, %v2186
  %v2188 = vpop.f32.mrb[0].mxu0
  %v2189 = vadd.f32 0.0, %v2188
  %v2190 = vpop.f32.mrb[0].mxu0
  %v2191 = vadd.f32 0.0, %v2190
  %2192 = vdwg.mxu0
  %2193 = vmatprep.subr.bf16.mxu0 %v1865
  %2194 = vmatpush1.bf16.msra.mxu0 %v1864
  %2195 = vmatprep.subr.bf16.mxu0 %v1867
  %2196 = vmatpush1.bf16.msra.mxu0 %v1866
  %2197 = vmatprep.subr.bf16.mxu0 %v1869
  %2198 = vmatpush1.bf16.msra.mxu0 %v1868
  %2199 = vmatprep.subr.bf16.mxu0 %v1871
  %2200 = vmatpush1.bf16.msra.mxu0 %v1870
  %2201 = vmatprep.subr.bf16.mxu0 %v1873
  %2202 = vmatpush1.bf16.msra.mxu0 %v1872
  %2203 = vmatprep.subr.bf16.mxu0 %v1875
  %2204 = vmatpush1.bf16.msra.mxu0 %v1874
  %2205 = vmatprep.subr.bf16.mxu0 %v1877
  %2206 = vmatpush1.bf16.msra.mxu0 %v1876
  %2207 = vmatprep.subr.bf16.mxu0 %v1879
  %2208 = vmatpush1.bf16.msra.mxu0 %v1878
  %2209 = vmatprep.subr.bf16.mxu0 %v1881
  %2210 = vmatpush1.bf16.msra.mxu0 %v1880
  %2211 = vmatprep.subr.bf16.mxu0 %v1883
  %2212 = vmatpush1.bf16.msra.mxu0 %v1882
  %2213 = vmatprep.subr.bf16.mxu0 %v1885
  %2214 = vmatpush1.bf16.msra.mxu0 %v1884
  %2215 = vmatprep.subr.bf16.mxu0 %v1887
  %2216 = vmatpush1.bf16.msra.mxu0 %v1886
  %2217 = vmatprep.subr.bf16.mxu0 %v1889
  %2218 = vmatpush1.bf16.msra.mxu0 %v1888
  %2219 = vmatprep.subr.bf16.mxu0 %v1891
  %2220 = vmatpush1.bf16.msra.mxu0 %v1890
  %2221 = vmatprep.subr.bf16.mxu0 %v1893
  %2222 = vmatpush1.bf16.msra.mxu0 %v1892
  %2223 = vmatprep.subr.bf16.mxu0 %v1895
  %2224 = vmatpush1.bf16.msra.mxu0 %v1894
  %2225 = vmatprep.mubr.bf16.mxu0 %v936
  %2226 = vmatmul.mubr.bf16.gmra.mrb[0].mxu0 %v864
  %v2227 = vpop.f32.mrb[0].mxu0
  %v2228 = vadd.f32 %v2155, %v2227
  %v2229 = vpop.f32.mrb[0].mxu0
  %v2230 = vadd.f32 %v2157, %v2229
  %v2231 = vpop.f32.mrb[0].mxu0
  %v2232 = vadd.f32 %v2159, %v2231
  %v2233 = vpop.f32.mrb[0].mxu0
  %v2234 = vadd.f32 %v2161, %v2233
  %2235 = vmatprep.mubr.bf16.mxu0 %v953
  %2236 = vmatmul.mubr.bf16.gmra.mrb[0].mxu0 %v881
  %v2237 = vpop.f32.mrb[0].mxu0
  %v2238 = vadd.f32 %v2165, %v2237
  %v2239 = vpop.f32.mrb[0].mxu0
  %v2240 = vadd.f32 %v2167, %v2239
  %v2241 = vpop.f32.mrb[0].mxu0
  %v2242 = vadd.f32 %v2169, %v2241
  %v2243 = vpop.f32.mrb[0].mxu0
  %v2244 = vadd.f32 %v2171, %v2243
  %2245 = vmatprep.mubr.bf16.mxu0 %v970
  %2246 = vmatmul.mubr.bf16.gmra.mrb[0].mxu0 %v898
  %v2247 = vpop.f32.mrb[0].mxu0
  %v2248 = vadd.f32 %v2175, %v2247
  %v2249 = vpop.f32.mrb[0].mxu0
  %v2250 = vadd.f32 %v2177, %v2249
  %v2251 = vpop.f32.mrb[0].mxu0
  %v2252 = vadd.f32 %v2179, %v2251
  %v2253 = vpop.f32.mrb[0].mxu0
  %v2254 = vadd.f32 %v2181, %v2253
  %2255 = vmatprep.mubr.bf16.mxu0 %v987
  %2256 = vmatmul.mubr.bf16.gmra.mrb[0].mxu0 %v915
  %v2257 = vpop.f32.mrb[0].mxu0
  %v2258 = vadd.f32 %v2185, %v2257
  %v2259 = vpop.f32.mrb[0].mxu0
  %v2260 = vadd.f32 %v2187, %v2259
  %v2261 = vpop.f32.mrb[0].mxu0
  %v2262 = vadd.f32 %v2189, %v2261
  %v2263 = vpop.f32.mrb[0].mxu0
  %v2264 = vadd.f32 %v2191, %v2263
  %2265 = vdwg.mxu0
  %2266 = vmatprep.subr.bf16.mxu0 %v1897
  %2267 = vmatpush1.bf16.msra.mxu0 %v1896
  %2268 = vmatprep.subr.bf16.mxu0 %v1899
  %2269 = vmatpush1.bf16.msra.mxu0 %v1898
  %2270 = vmatprep.subr.bf16.mxu0 %v1901
  %2271 = vmatpush1.bf16.msra.mxu0 %v1900
  %2272 = vmatprep.subr.bf16.mxu0 %v1903
  %2273 = vmatpush1.bf16.msra.mxu0 %v1902
  %2274 = vmatprep.subr.bf16.mxu0 %v1905
  %2275 = vmatpush1.bf16.msra.mxu0 %v1904
  %2276 = vmatprep.subr.bf16.mxu0 %v1907
  %2277 = vmatpush1.bf16.msra.mxu0 %v1906
  %2278 = vmatprep.subr.bf16.mxu0 %v1909
  %2279 = vmatpush1.bf16.msra.mxu0 %v1908
  %2280 = vmatprep.subr.bf16.mxu0 %v1911
  %2281 = vmatpush1.bf16.msra.mxu0 %v1910
  %2282 = vmatprep.subr.bf16.mxu0 %v1913
  %2283 = vmatpush1.bf16.msra.mxu0 %v1912
  %2284 = vmatprep.subr.bf16.mxu0 %v1915
  %2285 = vmatpush1.bf16.msra.mxu0 %v1914
  %2286 = vmatprep.subr.bf16.mxu0 %v1917
  %2287 = vmatpush1.bf16.msra.mxu0 %v1916
  %2288 = vmatprep.subr.bf16.mxu0 %v1919
  %2289 = vmatpush1.bf16.msra.mxu0 %v1918
  %2290 = vmatprep.subr.bf16.mxu0 %v1921
  %2291 = vmatpush1.bf16.msra.mxu0 %v1920
  %2292 = vmatprep.subr.bf16.mxu0 %v1923
  %2293 = vmatpush1.bf16.msra.mxu0 %v1922
  %2294 = vmatprep.subr.bf16.mxu0 %v1925
  %2295 = vmatpush1.bf16.msra.mxu0 %v1924
  %2296 = vmatprep.subr.bf16.mxu0 %v1927
  %2297 = vmatpush1.bf16.msra.mxu0 %v1926
  %2298 = vmatprep.mubr.bf16.mxu0 %v1080
  %2299 = vmatmul.mubr.bf16.gmra.mrb[0].mxu0 %v1008
  %v2300 = vpop.f32.mrb[0].mxu0
  %v2301 = vadd.f32 %v2228, %v2300
  %v2302 = vpop.f32.mrb[0].mxu0
  %v2303 = vadd.f32 %v2230, %v2302
  %v2304 = vpop.f32.mrb[0].mxu0
  %v2305 = vadd.f32 %v2232, %v2304
  %v2306 = vpop.f32.mrb[0].mxu0
  %v2307 = vadd.f32 %v2234, %v2306
  %2308 = vmatprep.mubr.bf16.mxu0 %v1097
  %2309 = vmatmul.mubr.bf16.gmra.mrb[0].mxu0 %v1025
  %v2310 = vpop.f32.mrb[0].mxu0
  %v2311 = vadd.f32 %v2238, %v2310
  %v2312 = vpop.f32.mrb[0].mxu0
  %v2313 = vadd.f32 %v2240, %v2312
  %v2314 = vpop.f32.mrb[0].mxu0
  %v2315 = vadd.f32 %v2242, %v2314
  %v2316 = vpop.f32.mrb[0].mxu0
  %v2317 = vadd.f32 %v2244, %v2316
  %2318 = vmatprep.mubr.bf16.mxu0 %v1114
  %2319 = vmatmul.mubr.bf16.gmra.mrb[0].mxu0 %v1042
  %v2320 = vpop.f32.mrb[0].mxu0
  %v2321 = vadd.f32 %v2248, %v2320
  %v2322 = vpop.f32.mrb[0].mxu0
  %v2323 = vadd.f32 %v2250, %v2322
  %v2324 = vpop.f32.mrb[0].mxu0
  %v2325 = vadd.f32 %v2252, %v2324
  %v2326 = vpop.f32.mrb[0].mxu0
  %v2327 = vadd.f32 %v2254, %v2326
  %2328 = vmatprep.mubr.bf16.mxu0 %v1131
  %2329 = vmatmul.mubr.bf16.gmra.mrb[0].mxu0 %v1059
  %v2330 = vpop.f32.mrb[0].mxu0
  %v2331 = vadd.f32 %v2258, %v2330
  %v2332 = vpop.f32.mrb[0].mxu0
  %v2333 = vadd.f32 %v2260, %v2332
  %v2334 = vpop.f32.mrb[0].mxu0
  %v2335 = vadd.f32 %v2262, %v2334
  %v2336 = vpop.f32.mrb[0].mxu0
  %v2337 = vadd.f32 %v2264, %v2336
  %2338 = vdwg.mxu0
  %2339 = vmatprep.subr.bf16.mxu0 %v1929
  %2340 = vmatpush1.bf16.msra.mxu0 %v1928
  %2341 = vmatprep.subr.bf16.mxu0 %v1931
  %2342 = vmatpush1.bf16.msra.mxu0 %v1930
  %2343 = vmatprep.subr.bf16.mxu0 %v1933
  %2344 = vmatpush1.bf16.msra.mxu0 %v1932
  %2345 = vmatprep.subr.bf16.mxu0 %v1935
  %2346 = vmatpush1.bf16.msra.mxu0 %v1934
  %2347 = vmatprep.subr.bf16.mxu0 %v1937
  %2348 = vmatpush1.bf16.msra.mxu0 %v1936
  %2349 = vmatprep.subr.bf16.mxu0 %v1939
  %2350 = vmatpush1.bf16.msra.mxu0 %v1938
  %2351 = vmatprep.subr.bf16.mxu0 %v1941
  %2352 = vmatpush1.bf16.msra.mxu0 %v1940
  %2353 = vmatprep.subr.bf16.mxu0 %v1943
  %2354 = vmatpush1.bf16.msra.mxu0 %v1942
  %2355 = vmatprep.subr.bf16.mxu0 %v1945
  %2356 = vmatpush1.bf16.msra.mxu0 %v1944
  %2357 = vmatprep.subr.bf16.mxu0 %v1947
  %2358 = vmatpush1.bf16.msra.mxu0 %v1946
  %2359 = vmatprep.subr.bf16.mxu0 %v1949
  %2360 = vmatpush1.bf16.msra.mxu0 %v1948
  %2361 = vmatprep.subr.bf16.mxu0 %v1951
  %2362 = vmatpush1.bf16.msra.mxu0 %v1950
  %2363 = vmatprep.subr.bf16.mxu0 %v1953
  %2364 = vmatpush1.bf16.msra.mxu0 %v1952
  %2365 = vmatprep.subr.bf16.mxu0 %v1955
  %2366 = vmatpush1.bf16.msra.mxu0 %v1954
  %2367 = vmatprep.subr.bf16.mxu0 %v1957
  %2368 = vmatpush1.bf16.msra.mxu0 %v1956
  %2369 = vmatprep.subr.bf16.mxu0 %v1959
  %2370 = vmatpush1.bf16.msra.mxu0 %v1958
  %2371 = vmatprep.mubr.bf16.mxu0 %v1184
  %2372 = vmatmul.mubr.bf16.gmra.mrb[0].mxu0 %v1144
  %v2373 = vpop.f32.mrb[0].mxu0
  %v2374 = vadd.f32 %v2301, %v2373
  %v2375 = vpop.f32.mrb[0].mxu0
  %v2376 = vadd.f32 %v2303, %v2375
  %v2377 = vpop.f32.mrb[0].mxu0
  %v2378 = vadd.f32 %v2305, %v2377
  %v2379 = vpop.f32.mrb[0].mxu0
  %v2380 = vadd.f32 %v2307, %v2379
  %2381 = vmatprep.mubr.bf16.mxu0 %v1193
  %2382 = vmatmul.mubr.bf16.gmra.mrb[0].mxu0 %v1153
  %v2383 = vpop.f32.mrb[0].mxu0
  %v2384 = vadd.f32 %v2311, %v2383
  %v2385 = vpop.f32.mrb[0].mxu0
  %v2386 = vadd.f32 %v2313, %v2385
  %v2387 = vpop.f32.mrb[0].mxu0
  %v2388 = vadd.f32 %v2315, %v2387
  %v2389 = vpop.f32.mrb[0].mxu0
  %v2390 = vadd.f32 %v2317, %v2389
  %2391 = vmatprep.mubr.bf16.mxu0 %v1202
  %2392 = vmatmul.mubr.bf16.gmra.mrb[0].mxu0 %v1162
  %v2393 = vpop.f32.mrb[0].mxu0
  %v2394 = vadd.f32 %v2321, %v2393
  %v2395 = vpop.f32.mrb[0].mxu0
  %v2396 = vadd.f32 %v2323, %v2395
  %v2397 = vpop.f32.mrb[0].mxu0
  %v2398 = vadd.f32 %v2325, %v2397
  %v2399 = vpop.f32.mrb[0].mxu0
  %v2400 = vadd.f32 %v2327, %v2399
  %2401 = vmatprep.mubr.bf16.mxu0 %v1211
  %2402 = vmatmul.mubr.bf16.gmra.mrb[0].mxu0 %v1171
  %v2403 = vpop.f32.mrb[0].mxu0
  %v2404 = vadd.f32 %v2331, %v2403
  %v2405 = vpop.f32.mrb[0].mxu0
  %v2406 = vadd.f32 %v2333, %v2405
  %v2407 = vpop.f32.mrb[0].mxu0
  %v2408 = vadd.f32 %v2335, %v2407
  %v2409 = vpop.f32.mrb[0].mxu0
  %v2410 = vadd.f32 %v2337, %v2409
  %2411 = vdwg.mxu0
  %2412 = vmatprep.subr.bf16.mxu0 %v1961
  %2413 = vmatpush1.bf16.msra.mxu0 %v1960
  %2414 = vmatprep.subr.bf16.mxu0 %v1963
  %2415 = vmatpush1.bf16.msra.mxu0 %v1962
  %2416 = vmatprep.subr.bf16.mxu0 %v1965
  %2417 = vmatpush1.bf16.msra.mxu0 %v1964
  %2418 = vmatprep.subr.bf16.mxu0 %v1967
  %2419 = vmatpush1.bf16.msra.mxu0 %v1966
  %2420 = vmatprep.subr.bf16.mxu0 %v1969
  %2421 = vmatpush1.bf16.msra.mxu0 %v1968
  %2422 = vmatprep.subr.bf16.mxu0 %v1971
  %2423 = vmatpush1.bf16.msra.mxu0 %v1970
  %2424 = vmatprep.subr.bf16.mxu0 %v1973
  %2425 = vmatpush1.bf16.msra.mxu0 %v1972
  %2426 = vmatprep.subr.bf16.mxu0 %v1975
  %2427 = vmatpush1.bf16.msra.mxu0 %v1974
  %2428 = vmatprep.subr.bf16.mxu0 0
  %2429 = vmatpush1.bf16.msra.mxu0 0
  %2430 = vmatprep.subr.bf16.mxu0 0
  %2431 = vmatpush1.bf16.msra.mxu0 0
  %2432 = vmatprep.subr.bf16.mxu0 0
  %2433 = vmatpush1.bf16.msra.mxu0 0
  %2434 = vmatprep.subr.bf16.mxu0 0
  %2435 = vmatpush1.bf16.msra.mxu0 0
  %2436 = vmatprep.subr.bf16.mxu0 0
  %2437 = vmatpush1.bf16.msra.mxu0 0
  %2438 = vmatprep.subr.bf16.mxu0 0
  %2439 = vmatpush1.bf16.msra.mxu0 0
  %2440 = vmatprep.subr.bf16.mxu0 0
  %2441 = vmatpush1.bf16.msra.mxu0 0
  %2442 = vmatprep.subr.bf16.mxu0 0
  %2443 = vmatpush1.bf16.msra.mxu0 0
  %2444 = vmatprep.mubr.bf16.mxu0 0
  %2445 = vmatmul.mubr.bf16.gmra.mrb[0].mxu0 %v1224
  %v2446 = vpop.f32.mrb[0].mxu0
  %v2447 = vadd.f32 %v2374, %v2446
  %v2448 = vpop.f32.mrb[0].mxu0
  %v2449 = vadd.f32 %v2376, %v2448
  %v2450 = vpop.f32.mrb[0].mxu0
  %v2451 = vadd.f32 %v2378, %v2450
  %v2452 = vpop.f32.mrb[0].mxu0
  %v2453 = vadd.f32 %v2380, %v2452
  %2454 = vmatprep.mubr.bf16.mxu0 0
  %2455 = vmatmul.mubr.bf16.gmra.mrb[0].mxu0 %v1233
  %v2456 = vpop.f32.mrb[0].mxu0
  %v2457 = vadd.f32 %v2384, %v2456
  %v2458 = vpop.f32.mrb[0].mxu0
  %v2459 = vadd.f32 %v2386, %v2458
  %v2460 = vpop.f32.mrb[0].mxu0
  %v2461 = vadd.f32 %v2388, %v2460
  %v2462 = vpop.f32.mrb[0].mxu0
  %v2463 = vadd.f32 %v2390, %v2462
  %2464 = vmatprep.mubr.bf16.mxu0 0
  %2465 = vmatmul.mubr.bf16.gmra.mrb[0].mxu0 %v1242
  %v2466 = vpop.f32.mrb[0].mxu0
  %v2467 = vadd.f32 %v2394, %v2466
  %v2468 = vpop.f32.mrb[0].mxu0
  %v2469 = vadd.f32 %v2396, %v2468
  %v2470 = vpop.f32.mrb[0].mxu0
  %v2471 = vadd.f32 %v2398, %v2470
  %v2472 = vpop.f32.mrb[0].mxu0
  %v2473 = vadd.f32 %v2400, %v2472
  %2474 = vmatprep.mubr.bf16.mxu0 0
  %2475 = vmatmul.mubr.bf16.gmra.mrb[0].mxu0 %v1251
  %v2476 = vpop.f32.mrb[0].mxu0
  %v2477 = vadd.f32 %v2404, %v2476
  %v2478 = vpop.f32.mrb[0].mxu0
  %v2479 = vadd.f32 %v2406, %v2478
  %v2480 = vpop.f32.mrb[0].mxu0
  %v2481 = vadd.f32 %v2408, %v2480
  %v2482 = vpop.f32.mrb[0].mxu0
  %v2483 = vadd.f32 %v2410, %v2482
  %2484 = vdwg.mxu0
  %v2485 = vlaneseq
  %v2486 = vshrl.u32 %v2485, 7
  %v2487 = vadd.s32 %v2486, 8
  %v2488 = vadd.s32 %v2486, 16
  %v2489 = vadd.s32 %v2486, 24
  %v2490 = vadd.s32 %v2486, 32
  %v2491 = vadd.s32 %v2486, 40
  %v2492 = vadd.s32 %v2486, 48
  %v2493 = vadd.s32 %v2486, 56
  %v2494 = vadd.s32 %v2486, 64
  %v2495 = vadd.s32 %v2486, 72
  %v2496 = vadd.s32 %v2486, 80
  %v2497 = vadd.s32 %v2486, 88
  %v2498 = vadd.s32 %v2486, 96
  %v2499 = vadd.s32 %v2486, 104
  %v2500 = vadd.s32 %v2486, 112
  %v2501 = vadd.s32 %v2486, 120
  %v2502 = vadd.s32 %v2486, 128
  %v2503 = vadd.s32 %v2486, 136
  %v2504 = vadd.s32 %v2486, 144
  %v2505 = vadd.s32 %v2486, 152
  %v2506 = vadd.s32 %v2486, 160
  %v2507 = vadd.s32 %v2486, 168
  %v2508 = vadd.s32 %v2486, 176
  %v2509 = vadd.s32 %v2486, 184
  %v2510 = vadd.s32 %v2486, 192
  %v2511 = vadd.s32 %v2486, 200
  %v2512 = vadd.s32 %v2486, 208
  %v2513 = vadd.s32 %v2486, 216
  %v2514 = vadd.s32 %v2486, 224
  %v2515 = vadd.s32 %v2486, 232
  %v2516 = vadd.s32 %v2486, 240
  %v2517 = vadd.s32 %v2486, 248
  %v2518 = vlaneseq
  %v2519 = vand.u32 %v2518, 127
  %v2520 = vadd.s32 %v2519, 128
  %v2521 = vand.u32 %v2486, 63
  %v2522 = vand.u32 %v2487, 63
  %v2523 = vand.u32 %v2488, 63
  %v2524 = vand.u32 %v2489, 63
  %v2525 = vand.u32 %v2490, 63
  %v2526 = vand.u32 %v2491, 63
  %v2527 = vand.u32 %v2492, 63
  %v2528 = vand.u32 %v2493, 63
  %v2529 = vand.u32 %v2494, 63
  %v2530 = vand.u32 %v2495, 63
  %v2531 = vand.u32 %v2496, 63
  %v2532 = vand.u32 %v2497, 63
  %v2533 = vand.u32 %v2498, 63
  %v2534 = vand.u32 %v2499, 63
  %v2535 = vand.u32 %v2500, 63
  %v2536 = vand.u32 %v2501, 63
  %v2537 = vand.u32 %v2502, 63
  %v2538 = vand.u32 %v2503, 63
  %v2539 = vand.u32 %v2504, 63
  %v2540 = vand.u32 %v2505, 63
  %v2541 = vand.u32 %v2506, 63
  %v2542 = vand.u32 %v2507, 63
  %v2543 = vand.u32 %v2508, 63
  %v2544 = vand.u32 %v2509, 63
  %v2545 = vand.u32 %v2510, 63
  %v2546 = vand.u32 %v2511, 63
  %v2547 = vand.u32 %v2512, 63
  %v2548 = vand.u32 %v2513, 63
  %v2549 = vand.u32 %v2514, 63
  %v2550 = vand.u32 %v2515, 63
  %v2551 = vand.u32 %v2516, 63
  %v2552 = vand.u32 %v2517, 63
  %v2553 = vand.u32 %v2519, 63
  %v2554 = vand.u32 %v2520, 63
  %vm2555 = vcmp.eq.s32.totalorder %v2521, %v2553
  %vm2556 = vcmp.eq.s32.totalorder %v2521, %v2554
  %vm2557 = vcmp.eq.s32.totalorder %v2522, %v2553
  %vm2558 = vcmp.eq.s32.totalorder %v2522, %v2554
  %vm2559 = vcmp.eq.s32.totalorder %v2523, %v2553
  %vm2560 = vcmp.eq.s32.totalorder %v2523, %v2554
  %vm2561 = vcmp.eq.s32.totalorder %v2524, %v2553
  %vm2562 = vcmp.eq.s32.totalorder %v2524, %v2554
  %vm2563 = vcmp.eq.s32.totalorder %v2525, %v2553
  %vm2564 = vcmp.eq.s32.totalorder %v2525, %v2554
  %vm2565 = vcmp.eq.s32.totalorder %v2526, %v2553
  %vm2566 = vcmp.eq.s32.totalorder %v2526, %v2554
  %vm2567 = vcmp.eq.s32.totalorder %v2527, %v2553
  %vm2568 = vcmp.eq.s32.totalorder %v2527, %v2554
  %vm2569 = vcmp.eq.s32.totalorder %v2528, %v2553
  %vm2570 = vcmp.eq.s32.totalorder %v2528, %v2554
  %vm2571 = vcmp.eq.s32.totalorder %v2529, %v2553
  %vm2572 = vcmp.eq.s32.totalorder %v2529, %v2554
  %vm2573 = vcmp.eq.s32.totalorder %v2530, %v2553
  %vm2574 = vcmp.eq.s32.totalorder %v2530, %v2554
  %vm2575 = vcmp.eq.s32.totalorder %v2531, %v2553
  %vm2576 = vcmp.eq.s32.totalorder %v2531, %v2554
  %vm2577 = vcmp.eq.s32.totalorder %v2532, %v2553
  %vm2578 = vcmp.eq.s32.totalorder %v2532, %v2554
  %vm2579 = vcmp.eq.s32.totalorder %v2533, %v2553
  %vm2580 = vcmp.eq.s32.totalorder %v2533, %v2554
  %vm2581 = vcmp.eq.s32.totalorder %v2534, %v2553
  %vm2582 = vcmp.eq.s32.totalorder %v2534, %v2554
  %vm2583 = vcmp.eq.s32.totalorder %v2535, %v2553
  %vm2584 = vcmp.eq.s32.totalorder %v2535, %v2554
  %vm2585 = vcmp.eq.s32.totalorder %v2536, %v2553
  %vm2586 = vcmp.eq.s32.totalorder %v2536, %v2554
  %vm2587 = vcmp.eq.s32.totalorder %v2537, %v2553
  %vm2588 = vcmp.eq.s32.totalorder %v2537, %v2554
  %vm2589 = vcmp.eq.s32.totalorder %v2538, %v2553
  %vm2590 = vcmp.eq.s32.totalorder %v2538, %v2554
  %vm2591 = vcmp.eq.s32.totalorder %v2539, %v2553
  %vm2592 = vcmp.eq.s32.totalorder %v2539, %v2554
  %vm2593 = vcmp.eq.s32.totalorder %v2540, %v2553
  %vm2594 = vcmp.eq.s32.totalorder %v2540, %v2554
  %vm2595 = vcmp.eq.s32.totalorder %v2541, %v2553
  %vm2596 = vcmp.eq.s32.totalorder %v2541, %v2554
  %vm2597 = vcmp.eq.s32.totalorder %v2542, %v2553
  %vm2598 = vcmp.eq.s32.totalorder %v2542, %v2554
  %vm2599 = vcmp.eq.s32.totalorder %v2543, %v2553
  %vm2600 = vcmp.eq.s32.totalorder %v2543, %v2554
  %vm2601 = vcmp.eq.s32.totalorder %v2544, %v2553
  %vm2602 = vcmp.eq.s32.totalorder %v2544, %v2554
  %vm2603 = vcmp.eq.s32.totalorder %v2545, %v2553
  %vm2604 = vcmp.eq.s32.totalorder %v2545, %v2554
  %vm2605 = vcmp.eq.s32.totalorder %v2546, %v2553
  %vm2606 = vcmp.eq.s32.totalorder %v2546, %v2554
  %vm2607 = vcmp.eq.s32.totalorder %v2547, %v2553
  %vm2608 = vcmp.eq.s32.totalorder %v2547, %v2554
  %vm2609 = vcmp.eq.s32.totalorder %v2548, %v2553
  %vm2610 = vcmp.eq.s32.totalorder %v2548, %v2554
  %vm2611 = vcmp.eq.s32.totalorder %v2549, %v2553
  %vm2612 = vcmp.eq.s32.totalorder %v2549, %v2554
  %vm2613 = vcmp.eq.s32.totalorder %v2550, %v2553
  %vm2614 = vcmp.eq.s32.totalorder %v2550, %v2554
  %vm2615 = vcmp.eq.s32.totalorder %v2551, %v2553
  %vm2616 = vcmp.eq.s32.totalorder %v2551, %v2554
  %vm2617 = vcmp.eq.s32.totalorder %v2552, %v2553
  %vm2618 = vcmp.eq.s32.totalorder %v2552, %v2554
  %v2619 = vsel %vm2555, 1.0, 0.0
  %v2620 = vsel %vm2556, 1.0, 0.0
  %v2621 = vsel %vm2557, 1.0, 0.0
  %v2622 = vsel %vm2558, 1.0, 0.0
  %v2623 = vsel %vm2559, 1.0, 0.0
  %v2624 = vsel %vm2560, 1.0, 0.0
  %v2625 = vsel %vm2561, 1.0, 0.0
  %v2626 = vsel %vm2562, 1.0, 0.0
  %v2627 = vsel %vm2563, 1.0, 0.0
  %v2628 = vsel %vm2564, 1.0, 0.0
  %v2629 = vsel %vm2565, 1.0, 0.0
  %v2630 = vsel %vm2566, 1.0, 0.0
  %v2631 = vsel %vm2567, 1.0, 0.0
  %v2632 = vsel %vm2568, 1.0, 0.0
  %v2633 = vsel %vm2569, 1.0, 0.0
  %v2634 = vsel %vm2570, 1.0, 0.0
  %v2635 = vsel %vm2571, 1.0, 0.0
  %v2636 = vsel %vm2572, 1.0, 0.0
  %v2637 = vsel %vm2573, 1.0, 0.0
  %v2638 = vsel %vm2574, 1.0, 0.0
  %v2639 = vsel %vm2575, 1.0, 0.0
  %v2640 = vsel %vm2576, 1.0, 0.0
  %v2641 = vsel %vm2577, 1.0, 0.0
  %v2642 = vsel %vm2578, 1.0, 0.0
  %v2643 = vsel %vm2579, 1.0, 0.0
  %v2644 = vsel %vm2580, 1.0, 0.0
  %v2645 = vsel %vm2581, 1.0, 0.0
  %v2646 = vsel %vm2582, 1.0, 0.0
  %v2647 = vsel %vm2583, 1.0, 0.0
  %v2648 = vsel %vm2584, 1.0, 0.0
  %v2649 = vsel %vm2585, 1.0, 0.0
  %v2650 = vsel %vm2586, 1.0, 0.0
  %v2651 = vsel %vm2587, 1.0, 0.0
  %v2652 = vsel %vm2588, 1.0, 0.0
  %v2653 = vsel %vm2589, 1.0, 0.0
  %v2654 = vsel %vm2590, 1.0, 0.0
  %v2655 = vsel %vm2591, 1.0, 0.0
  %v2656 = vsel %vm2592, 1.0, 0.0
  %v2657 = vsel %vm2593, 1.0, 0.0
  %v2658 = vsel %vm2594, 1.0, 0.0
  %v2659 = vsel %vm2595, 1.0, 0.0
  %v2660 = vsel %vm2596, 1.0, 0.0
  %v2661 = vsel %vm2597, 1.0, 0.0
  %v2662 = vsel %vm2598, 1.0, 0.0
  %v2663 = vsel %vm2599, 1.0, 0.0
  %v2664 = vsel %vm2600, 1.0, 0.0
  %v2665 = vsel %vm2601, 1.0, 0.0
  %v2666 = vsel %vm2602, 1.0, 0.0
  %v2667 = vsel %vm2603, 1.0, 0.0
  %v2668 = vsel %vm2604, 1.0, 0.0
  %v2669 = vsel %vm2605, 1.0, 0.0
  %v2670 = vsel %vm2606, 1.0, 0.0
  %v2671 = vsel %vm2607, 1.0, 0.0
  %v2672 = vsel %vm2608, 1.0, 0.0
  %v2673 = vsel %vm2609, 1.0, 0.0
  %v2674 = vsel %vm2610, 1.0, 0.0
  %v2675 = vsel %vm2611, 1.0, 0.0
  %v2676 = vsel %vm2612, 1.0, 0.0
  %v2677 = vsel %vm2613, 1.0, 0.0
  %v2678 = vsel %vm2614, 1.0, 0.0
  %v2679 = vsel %vm2615, 1.0, 0.0
  %v2680 = vsel %vm2616, 1.0, 0.0
  %v2681 = vsel %vm2617, 1.0, 0.0
  %v2682 = vsel %vm2618, 1.0, 0.0
  %v2683 = vadd.f32 %v2447, %v2451
  %v2684 = vadd.f32 %v2683, %v2457
  %v2685 = vadd.f32 %v2684, %v2461
  %v2686 = vadd.f32 %v2685, %v2467
  %v2687 = vadd.f32 %v2686, %v2471
  %v2688 = vadd.f32 %v2687, %v2477
  %v2689 = vadd.f32 %v2688, %v2481
  %v2690 = vrot.slane %v2689, 4
  %v2691 = vadd.f32 %v2689, %v2690
  %v2692 = vrot.slane %v2691, 2
  %v2693 = vadd.f32 %v2691, %v2692
  %v2694 = vrot.slane %v2693, 1
  %v2695 = vadd.f32 %v2693, %v2694
  %v2696 = vadd.f32 %v2449, %v2453
  %v2697 = vadd.f32 %v2696, %v2459
  %v2698 = vadd.f32 %v2697, %v2463
  %v2699 = vadd.f32 %v2698, %v2469
  %v2700 = vadd.f32 %v2699, %v2473
  %v2701 = vadd.f32 %v2700, %v2479
  %v2702 = vadd.f32 %v2701, %v2483
  %v2703 = vrot.slane %v2702, 4
  %v2704 = vadd.f32 %v2702, %v2703
  %v2705 = vrot.slane %v2704, 2
  %v2706 = vadd.f32 %v2704, %v2705
  %v2707 = vrot.slane %v2706, 1
  %v2708 = vadd.f32 %v2706, %v2707
  %2709 = vmatprep.subr.mxu0 %v2620
  %2710 = vmatpush1.msra.mxu0 %v2619
  %2711 = vmatprep.subr.mxu0 %v2622
  %2712 = vmatpush1.msra.mxu0 %v2621
  %2713 = vmatprep.subr.mxu0 %v2624
  %2714 = vmatpush1.msra.mxu0 %v2623
  %2715 = vmatprep.subr.mxu0 %v2626
  %2716 = vmatpush1.msra.mxu0 %v2625
  %2717 = vmatprep.subr.mxu0 %v2628
  %2718 = vmatpush1.msra.mxu0 %v2627
  %2719 = vmatprep.subr.mxu0 %v2630
  %2720 = vmatpush1.msra.mxu0 %v2629
  %2721 = vmatprep.subr.mxu0 %v2632
  %2722 = vmatpush1.msra.mxu0 %v2631
  %2723 = vmatprep.subr.mxu0 %v2634
  %2724 = vmatpush1.msra.mxu0 %v2633
  %2725 = vmatprep.subr.mxu0 %v2636
  %2726 = vmatpush1.msra.mxu0 %v2635
  %2727 = vmatprep.subr.mxu0 %v2638
  %2728 = vmatpush1.msra.mxu0 %v2637
  %2729 = vmatprep.subr.mxu0 %v2640
  %2730 = vmatpush1.msra.mxu0 %v2639
  %2731 = vmatprep.subr.mxu0 %v2642
  %2732 = vmatpush1.msra.mxu0 %v2641
  %2733 = vmatprep.subr.mxu0 %v2644
  %2734 = vmatpush1.msra.mxu0 %v2643
  %2735 = vmatprep.subr.mxu0 %v2646
  %2736 = vmatpush1.msra.mxu0 %v2645
  %2737 = vmatprep.subr.mxu0 %v2648
  %2738 = vmatpush1.msra.mxu0 %v2647
  %2739 = vmatprep.subr.mxu0 %v2650
  %2740 = vmatpush1.msra.mxu0 %v2649
  %2741 = vmatprep.subr.mxu0 %v2652
  %2742 = vmatpush1.msra.mxu0 %v2651
  %2743 = vmatprep.subr.mxu0 %v2654
  %2744 = vmatpush1.msra.mxu0 %v2653
  %2745 = vmatprep.subr.mxu0 %v2656
  %2746 = vmatpush1.msra.mxu0 %v2655
  %2747 = vmatprep.subr.mxu0 %v2658
  %2748 = vmatpush1.msra.mxu0 %v2657
  %2749 = vmatprep.subr.mxu0 %v2660
  %2750 = vmatpush1.msra.mxu0 %v2659
  %2751 = vmatprep.subr.mxu0 %v2662
  %2752 = vmatpush1.msra.mxu0 %v2661
  %2753 = vmatprep.subr.mxu0 %v2664
  %2754 = vmatpush1.msra.mxu0 %v2663
  %2755 = vmatprep.subr.mxu0 %v2666
  %2756 = vmatpush1.msra.mxu0 %v2665
  %2757 = vmatprep.subr.mxu0 %v2668
  %2758 = vmatpush1.msra.mxu0 %v2667
  %2759 = vmatprep.subr.mxu0 %v2670
  %2760 = vmatpush1.msra.mxu0 %v2669
  %2761 = vmatprep.subr.mxu0 %v2672
  %2762 = vmatpush1.msra.mxu0 %v2671
  %2763 = vmatprep.subr.mxu0 %v2674
  %2764 = vmatpush1.msra.mxu0 %v2673
  %2765 = vmatprep.subr.mxu0 %v2676
  %2766 = vmatpush1.msra.mxu0 %v2675
  %2767 = vmatprep.subr.mxu0 %v2678
  %2768 = vmatpush1.msra.mxu0 %v2677
  %2769 = vmatprep.subr.mxu0 %v2680
  %2770 = vmatpush1.msra.mxu0 %v2679
  %2771 = vmatprep.subr.mxu0 %v2682
  %2772 = vmatpush1.msra.mxu0 %v2681
  %2773 = vmatprep.mubr.f32.mxu0 %v2708
  %2774 = vmatmul.mubr.f32.gmra.mrb[0].mxu0 %v2695
  %v2775 = vpop.f32.mrb[0].mxu0
  %v2776 = vadd.f32 0.0, %v2775
  %v2777 = vpop.f32.mrb[0].mxu0
  %v2778 = vadd.f32 0.0, %v2777
  %2779 = vdwg.mxu0
  %v2780 = vmul.f32 %v2447, %v2447
  %v2781 = vmul.f32 %v2449, %v2449
  %v2782 = vmul.f32 %v2451, %v2451
  %v2783 = vmul.f32 %v2453, %v2453
  %v2784 = vmul.f32 %v2457, %v2457
  %v2785 = vmul.f32 %v2459, %v2459
  %v2786 = vmul.f32 %v2461, %v2461
  %v2787 = vmul.f32 %v2463, %v2463
  %v2788 = vmul.f32 %v2467, %v2467
  %v2789 = vmul.f32 %v2469, %v2469
  %v2790 = vmul.f32 %v2471, %v2471
  %v2791 = vmul.f32 %v2473, %v2473
  %v2792 = vmul.f32 %v2477, %v2477
  %v2793 = vmul.f32 %v2479, %v2479
  %v2794 = vmul.f32 %v2481, %v2481
  %v2795 = vmul.f32 %v2483, %v2483
  %v2796 = vadd.f32 %v2780, %v2782
  %v2797 = vadd.f32 %v2796, %v2784
  %v2798 = vadd.f32 %v2797, %v2786
  %v2799 = vadd.f32 %v2798, %v2788
  %v2800 = vadd.f32 %v2799, %v2790
  %v2801 = vadd.f32 %v2800, %v2792
  %v2802 = vadd.f32 %v2801, %v2794
  %v2803 = vrot.slane %v2802, 4
  %v2804 = vadd.f32 %v2802, %v2803
  %v2805 = vrot.slane %v2804, 2
  %v2806 = vadd.f32 %v2804, %v2805
  %v2807 = vrot.slane %v2806, 1
  %v2808 = vadd.f32 %v2806, %v2807
  %v2809 = vadd.f32 %v2781, %v2783
  %v2810 = vadd.f32 %v2809, %v2785
  %v2811 = vadd.f32 %v2810, %v2787
  %v2812 = vadd.f32 %v2811, %v2789
  %v2813 = vadd.f32 %v2812, %v2791
  %v2814 = vadd.f32 %v2813, %v2793
  %v2815 = vadd.f32 %v2814, %v2795
  %v2816 = vrot.slane %v2815, 4
  %v2817 = vadd.f32 %v2815, %v2816
  %v2818 = vrot.slane %v2817, 2
  %v2819 = vadd.f32 %v2817, %v2818
  %v2820 = vrot.slane %v2819, 1
  %v2821 = vadd.f32 %v2819, %v2820
  %2822 = vmatprep.subr.mxu0 %v2620
  %2823 = vmatpush1.msra.mxu0 %v2619
  %2824 = vmatprep.subr.mxu0 %v2622
  %2825 = vmatpush1.msra.mxu0 %v2621
  %2826 = vmatprep.subr.mxu0 %v2624
  %2827 = vmatpush1.msra.mxu0 %v2623
  %2828 = vmatprep.subr.mxu0 %v2626
  %2829 = vmatpush1.msra.mxu0 %v2625
  %2830 = vmatprep.subr.mxu0 %v2628
  %2831 = vmatpush1.msra.mxu0 %v2627
  %2832 = vmatprep.subr.mxu0 %v2630
  %2833 = vmatpush1.msra.mxu0 %v2629
  %2834 = vmatprep.subr.mxu0 %v2632
  %2835 = vmatpush1.msra.mxu0 %v2631
  %2836 = vmatprep.subr.mxu0 %v2634
  %2837 = vmatpush1.msra.mxu0 %v2633
  %2838 = vmatprep.subr.mxu0 %v2636
  %2839 = vmatpush1.msra.mxu0 %v2635
  %2840 = vmatprep.subr.mxu0 %v2638
  %2841 = vmatpush1.msra.mxu0 %v2637
  %2842 = vmatprep.subr.mxu0 %v2640
  %2843 = vmatpush1.msra.mxu0 %v2639
  %2844 = vmatprep.subr.mxu0 %v2642
  %2845 = vmatpush1.msra.mxu0 %v2641
  %2846 = vmatprep.subr.mxu0 %v2644
  %2847 = vmatpush1.msra.mxu0 %v2643
  %2848 = vmatprep.subr.mxu0 %v2646
  %2849 = vmatpush1.msra.mxu0 %v2645
  %2850 = vmatprep.subr.mxu0 %v2648
  %2851 = vmatpush1.msra.mxu0 %v2647
  %2852 = vmatprep.subr.mxu0 %v2650
  %2853 = vmatpush1.msra.mxu0 %v2649
  %2854 = vmatprep.subr.mxu0 %v2652
  %2855 = vmatpush1.msra.mxu0 %v2651
  %2856 = vmatprep.subr.mxu0 %v2654
  %2857 = vmatpush1.msra.mxu0 %v2653
  %2858 = vmatprep.subr.mxu0 %v2656
  %2859 = vmatpush1.msra.mxu0 %v2655
  %2860 = vmatprep.subr.mxu0 %v2658
  %2861 = vmatpush1.msra.mxu0 %v2657
  %2862 = vmatprep.subr.mxu0 %v2660
  %2863 = vmatpush1.msra.mxu0 %v2659
  %2864 = vmatprep.subr.mxu0 %v2662
  %2865 = vmatpush1.msra.mxu0 %v2661
  %2866 = vmatprep.subr.mxu0 %v2664
  %2867 = vmatpush1.msra.mxu0 %v2663
  %2868 = vmatprep.subr.mxu0 %v2666
  %2869 = vmatpush1.msra.mxu0 %v2665
  %2870 = vmatprep.subr.mxu0 %v2668
  %2871 = vmatpush1.msra.mxu0 %v2667
  %2872 = vmatprep.subr.mxu0 %v2670
  %2873 = vmatpush1.msra.mxu0 %v2669
  %2874 = vmatprep.subr.mxu0 %v2672
  %2875 = vmatpush1.msra.mxu0 %v2671
  %2876 = vmatprep.subr.mxu0 %v2674
  %2877 = vmatpush1.msra.mxu0 %v2673
  %2878 = vmatprep.subr.mxu0 %v2676
  %2879 = vmatpush1.msra.mxu0 %v2675
  %2880 = vmatprep.subr.mxu0 %v2678
  %2881 = vmatpush1.msra.mxu0 %v2677
  %2882 = vmatprep.subr.mxu0 %v2680
  %2883 = vmatpush1.msra.mxu0 %v2679
  %2884 = vmatprep.subr.mxu0 %v2682
  %2885 = vmatpush1.msra.mxu0 %v2681
  %2886 = vmatprep.mubr.f32.mxu0 %v2821
  %2887 = vmatmul.mubr.f32.gmra.mrb[0].mxu0 %v2808
  %v2888 = vpop.f32.mrb[0].mxu0
  %v2889 = vadd.f32 0.0, %v2888
  %v2890 = vpop.f32.mrb[0].mxu0
  %v2891 = vadd.f32 0.0, %v2890
  %2892 = vdwg.mxu0
  %v2893 = vrcp.pop 256.0
  %v2894 = vmul.f32 %v2776, %v2893
  %v2895 = vmul.f32 %v2778, %v2893
  %v2896 = vmul.f32 %v2889, %v2893
  %v2897 = vmul.f32 %v2891, %v2893
  %v2898 = vmul.f32 %v2894, %v2894
  %v2899 = vmul.f32 %v2895, %v2895
  %v2900 = vsub.f32 %v2896, %v2898
  %v2901 = vsub.f32 %v2897, %v2899
  %v2902 = vmax.f32 %v2900, 0.0
  %v2903 = vmax.f32 %v2901, 0.0
  %v2904 = vadd.f32 %v2902, 1e-05
  %v2905 = vadd.f32 %v2903, 1e-05
  %v2906 = vrsqrt.pop %v2904
  %v2907 = vrsqrt.pop %v2905
  %v2908 = vld [vmem:[%s2] sm:$0x3]
  %v2910 = vlaneseq
  %v2911 = vshrl.u32 %v2910, 7
  %v2912 = vsub.s32 0, %v2911
  %v2913 = vrot.slane %v2908, %v2912
  %v2914 = vlaneseq
  %v2915 = vshrl.u32 %v2914, 7
  %v2916 = vsub.s32 1, %v2915
  %v2917 = vrot.slane %v2908, %v2916
  %v2920 = vmul.f32 %v2906, %v2913
  %v2921 = vmul.f32 %v2907, %v2917
  %v2922 = vld [vmem:[%s3] sm:$0x3]
  %v2923 = vmul.f32 %v2894, %v2920
  %v2924 = vmul.f32 %v2895, %v2921
  %v2927 = vcombine.low %v2923, %v2924
  %v2929 = vunpack.c.l.s4 1966171168
  %v2930 = vunpack.c.0.s8 %v2929
  %v2931 = vlaneseq
  %v2932 = vshrl.u32 %v2931, 7
  %v2933 = vsub.s32 %v2930, %v2932
  %v2934 = vrot.slane %v2927, %v2933
  %v2936 = vunpack.c.l.s4 1966171168
  %v2937 = vunpack.c.0.s8 %v2936
  %v2938 = vlaneseq
  %v2939 = vshrl.u32 %v2938, 7
  %v2940 = vsub.s32 %v2937, %v2939
  %v2941 = vrot.slane %v2934, %v2940
  %v2943 = vsub.f32 %v2922, %v2941
  %v2944 = vlaneseq
  %v2945 = vshrl.u32 %v2944, 7
  %v2946 = vsub.s32 0, %v2945
  %v2947 = vrot.slane %v2920, %v2946
  %v2948 = vlaneseq
  %v2949 = vshrl.u32 %v2948, 7
  %v2950 = vsub.s32 0, %v2949
  %v2951 = vrot.slane %v2921, %v2950
  %v2952 = vmul.f32 %v2447, %v2947
  %v2953 = vmul.f32 %v2449, %v2951
  %v2954 = vmul.f32 %v2451, %v2947
  %v2955 = vmul.f32 %v2453, %v2951
  %v2956 = vmul.f32 %v2457, %v2947
  %v2957 = vmul.f32 %v2459, %v2951
  %v2958 = vmul.f32 %v2461, %v2947
  %v2959 = vmul.f32 %v2463, %v2951
  %v2960 = vmul.f32 %v2467, %v2947
  %v2961 = vmul.f32 %v2469, %v2951
  %v2962 = vmul.f32 %v2471, %v2947
  %v2963 = vmul.f32 %v2473, %v2951
  %v2964 = vmul.f32 %v2477, %v2947
  %v2965 = vmul.f32 %v2479, %v2951
  %v2966 = vmul.f32 %v2481, %v2947
  %v2967 = vmul.f32 %v2483, %v2951
  %v2969 = vlaneseq
  %v2970 = vshrl.u32 %v2969, 7
  %v2971 = vsub.s32 0, %v2970
  %v2972 = vrot.slane %v2943, %v2971
  %v2973 = vlaneseq
  %v2974 = vshrl.u32 %v2973, 7
  %v2975 = vsub.s32 1, %v2974
  %v2976 = vrot.slane %v2943, %v2975
  %v2979 = vadd.f32 %v2952, %v2972
  %v2980 = vadd.f32 %v2953, %v2976
  %v2981 = vadd.f32 %v2954, %v2972
  %v2982 = vadd.f32 %v2955, %v2976
  %v2983 = vadd.f32 %v2956, %v2972
  %v2984 = vadd.f32 %v2957, %v2976
  %v2985 = vadd.f32 %v2958, %v2972
  %v2986 = vadd.f32 %v2959, %v2976
  %v2987 = vadd.f32 %v2960, %v2972
  %v2988 = vadd.f32 %v2961, %v2976
  %v2989 = vadd.f32 %v2962, %v2972
  %v2990 = vadd.f32 %v2963, %v2976
  %v2991 = vadd.f32 %v2964, %v2972
  %v2992 = vadd.f32 %v2965, %v2976
  %v2993 = vadd.f32 %v2966, %v2972
  %v2994 = vadd.f32 %v2967, %v2976
  %v2995 = vmax.f32 %v2979, 0.0
  %v2996 = vmax.f32 %v2980, 0.0
  %v2997 = vmax.f32 %v2981, 0.0
  %v2998 = vmax.f32 %v2982, 0.0
  %v2999 = vmax.f32 %v2983, 0.0
  %v3000 = vmax.f32 %v2984, 0.0
  %v3001 = vmax.f32 %v2985, 0.0
  %v3002 = vmax.f32 %v2986, 0.0
  %v3003 = vmax.f32 %v2987, 0.0
  %v3004 = vmax.f32 %v2988, 0.0
  %v3005 = vmax.f32 %v2989, 0.0
  %v3006 = vmax.f32 %v2990, 0.0
  %v3007 = vmax.f32 %v2991, 0.0
  %v3008 = vmax.f32 %v2992, 0.0
  %v3009 = vmax.f32 %v2993, 0.0
  %v3010 = vmax.f32 %v2994, 0.0
  %v3027 = vcombine.low %v2995, %v2996
  %v3028 = vcombine.high %v2995, %v2996
  %v3029 = vcombine.low %v2997, %v2998
  %v3030 = vcombine.high %v2997, %v2998
  %v3031 = vcombine.low %v2999, %v3000
  %v3032 = vcombine.high %v2999, %v3000
  %v3033 = vcombine.low %v3001, %v3002
  %v3034 = vcombine.high %v3001, %v3002
  %v3035 = vcombine.low %v3003, %v3004
  %v3036 = vcombine.high %v3003, %v3004
  %v3037 = vcombine.low %v3005, %v3006
  %v3038 = vcombine.high %v3005, %v3006
  %v3039 = vcombine.low %v3007, %v3008
  %v3040 = vcombine.high %v3007, %v3008
  %v3041 = vcombine.low %v3009, %v3010
  %v3042 = vcombine.high %v3009, %v3010
  %v3059 = vcombine.high %v3027, %v3027
  %v3060 = vcombine.high %v3028, %v3028
  %v3061 = vcombine.high %v3029, %v3029
  %v3062 = vcombine.high %v3030, %v3030
  %v3063 = vcombine.high %v3031, %v3031
  %v3064 = vcombine.high %v3032, %v3032
  %v3065 = vcombine.high %v3033, %v3033
  %v3066 = vcombine.high %v3034, %v3034
  %v3067 = vcombine.high %v3035, %v3035
  %v3068 = vcombine.high %v3036, %v3036
  %v3069 = vcombine.high %v3037, %v3037
  %v3070 = vcombine.high %v3038, %v3038
  %v3071 = vcombine.high %v3039, %v3039
  %v3072 = vcombine.high %v3040, %v3040
  %v3073 = vcombine.high %v3041, %v3041
  %v3074 = vcombine.high %v3042, %v3042
  %v3091 = vpack.c.bf16 %v3027, %v3027
  %v3092 = vpack.c.bf16 %v3059, %v3059
  %v3093 = vpack.c.bf16 %v3028, %v3028
  %v3094 = vpack.c.bf16 %v3060, %v3060
  %v3095 = vpack.c.bf16 %v3029, %v3029
  %v3096 = vpack.c.bf16 %v3061, %v3061
  %v3097 = vpack.c.bf16 %v3030, %v3030
  %v3098 = vpack.c.bf16 %v3062, %v3062
  %v3099 = vpack.c.bf16 %v3031, %v3031
  %v3100 = vpack.c.bf16 %v3063, %v3063
  %v3101 = vpack.c.bf16 %v3032, %v3032
  %v3102 = vpack.c.bf16 %v3064, %v3064
  %v3103 = vpack.c.bf16 %v3033, %v3033
  %v3104 = vpack.c.bf16 %v3065, %v3065
  %v3105 = vpack.c.bf16 %v3034, %v3034
  %v3106 = vpack.c.bf16 %v3066, %v3066
  %v3107 = vpack.c.bf16 %v3035, %v3035
  %v3108 = vpack.c.bf16 %v3067, %v3067
  %v3109 = vpack.c.bf16 %v3036, %v3036
  %v3110 = vpack.c.bf16 %v3068, %v3068
  %v3111 = vpack.c.bf16 %v3037, %v3037
  %v3112 = vpack.c.bf16 %v3069, %v3069
  %v3113 = vpack.c.bf16 %v3038, %v3038
  %v3114 = vpack.c.bf16 %v3070, %v3070
  %v3115 = vpack.c.bf16 %v3039, %v3039
  %v3116 = vpack.c.bf16 %v3071, %v3071
  %v3117 = vpack.c.bf16 %v3040, %v3040
  %v3118 = vpack.c.bf16 %v3072, %v3072
  %v3119 = vpack.c.bf16 %v3041, %v3041
  %v3120 = vpack.c.bf16 %v3073, %v3073
  %v3121 = vpack.c.bf16 %v3042, %v3042
  %v3122 = vpack.c.bf16 %v3074, %v3074
  %v3155 = vcombine.low %v3091, %v3092
  %v3157 = vunpack.c.l.s4 1983009808
  %v3158 = vunpack.c.0.s8 %v3157
  %v3159 = vlaneseq
  %v3160 = vshrl.u32 %v3159, 7
  %v3161 = vsub.s32 %v3158, %v3160
  %v3162 = vrot.slane %v3155, %v3161
  %v3163 = vcombine.low %v3093, %v3094
  %v3165 = vunpack.c.l.s4 1983009808
  %v3166 = vunpack.c.0.s8 %v3165
  %v3167 = vlaneseq
  %v3168 = vshrl.u32 %v3167, 7
  %v3169 = vsub.s32 %v3166, %v3168
  %v3170 = vrot.slane %v3163, %v3169
  %v3171 = vcombine.low %v3095, %v3096
  %v3173 = vunpack.c.l.s4 1983009808
  %v3174 = vunpack.c.0.s8 %v3173
  %v3175 = vlaneseq
  %v3176 = vshrl.u32 %v3175, 7
  %v3177 = vsub.s32 %v3174, %v3176
  %v3178 = vrot.slane %v3171, %v3177
  %v3179 = vcombine.low %v3097, %v3098
  %v3181 = vunpack.c.l.s4 1983009808
  %v3182 = vunpack.c.0.s8 %v3181
  %v3183 = vlaneseq
  %v3184 = vshrl.u32 %v3183, 7
  %v3185 = vsub.s32 %v3182, %v3184
  %v3186 = vrot.slane %v3179, %v3185
  %v3187 = vcombine.low %v3099, %v3100
  %v3189 = vunpack.c.l.s4 1983009808
  %v3190 = vunpack.c.0.s8 %v3189
  %v3191 = vlaneseq
  %v3192 = vshrl.u32 %v3191, 7
  %v3193 = vsub.s32 %v3190, %v3192
  %v3194 = vrot.slane %v3187, %v3193
  %v3195 = vcombine.low %v3101, %v3102
  %v3197 = vunpack.c.l.s4 1983009808
  %v3198 = vunpack.c.0.s8 %v3197
  %v3199 = vlaneseq
  %v3200 = vshrl.u32 %v3199, 7
  %v3201 = vsub.s32 %v3198, %v3200
  %v3202 = vrot.slane %v3195, %v3201
  %v3203 = vcombine.low %v3103, %v3104
  %v3205 = vunpack.c.l.s4 1983009808
  %v3206 = vunpack.c.0.s8 %v3205
  %v3207 = vlaneseq
  %v3208 = vshrl.u32 %v3207, 7
  %v3209 = vsub.s32 %v3206, %v3208
  %v3210 = vrot.slane %v3203, %v3209
  %v3211 = vcombine.low %v3105, %v3106
  %v3213 = vunpack.c.l.s4 1983009808
  %v3214 = vunpack.c.0.s8 %v3213
  %v3215 = vlaneseq
  %v3216 = vshrl.u32 %v3215, 7
  %v3217 = vsub.s32 %v3214, %v3216
  %v3218 = vrot.slane %v3211, %v3217
  %v3219 = vcombine.low %v3107, %v3108
  %v3221 = vunpack.c.l.s4 1983009808
  %v3222 = vunpack.c.0.s8 %v3221
  %v3223 = vlaneseq
  %v3224 = vshrl.u32 %v3223, 7
  %v3225 = vsub.s32 %v3222, %v3224
  %v3226 = vrot.slane %v3219, %v3225
  %v3227 = vcombine.low %v3109, %v3110
  %v3229 = vunpack.c.l.s4 1983009808
  %v3230 = vunpack.c.0.s8 %v3229
  %v3231 = vlaneseq
  %v3232 = vshrl.u32 %v3231, 7
  %v3233 = vsub.s32 %v3230, %v3232
  %v3234 = vrot.slane %v3227, %v3233
  %v3235 = vcombine.low %v3111, %v3112
  %v3237 = vunpack.c.l.s4 1983009808
  %v3238 = vunpack.c.0.s8 %v3237
  %v3239 = vlaneseq
  %v3240 = vshrl.u32 %v3239, 7
  %v3241 = vsub.s32 %v3238, %v3240
  %v3242 = vrot.slane %v3235, %v3241
  %v3243 = vcombine.low %v3113, %v3114
  %v3245 = vunpack.c.l.s4 1983009808
  %v3246 = vunpack.c.0.s8 %v3245
  %v3247 = vlaneseq
  %v3248 = vshrl.u32 %v3247, 7
  %v3249 = vsub.s32 %v3246, %v3248
  %v3250 = vrot.slane %v3243, %v3249
  %v3251 = vcombine.low %v3115, %v3116
  %v3253 = vunpack.c.l.s4 1983009808
  %v3254 = vunpack.c.0.s8 %v3253
  %v3255 = vlaneseq
  %v3256 = vshrl.u32 %v3255, 7
  %v3257 = vsub.s32 %v3254, %v3256
  %v3258 = vrot.slane %v3251, %v3257
  %v3259 = vcombine.low %v3117, %v3118
  %v3261 = vunpack.c.l.s4 1983009808
  %v3262 = vunpack.c.0.s8 %v3261
  %v3263 = vlaneseq
  %v3264 = vshrl.u32 %v3263, 7
  %v3265 = vsub.s32 %v3262, %v3264
  %v3266 = vrot.slane %v3259, %v3265
  %v3267 = vcombine.low %v3119, %v3120
  %v3269 = vunpack.c.l.s4 1983009808
  %v3270 = vunpack.c.0.s8 %v3269
  %v3271 = vlaneseq
  %v3272 = vshrl.u32 %v3271, 7
  %v3273 = vsub.s32 %v3270, %v3272
  %v3274 = vrot.slane %v3267, %v3273
  %v3275 = vcombine.low %v3121, %v3122
  %v3277 = vunpack.c.l.s4 1983009808
  %v3278 = vunpack.c.0.s8 %v3277
  %v3279 = vlaneseq
  %v3280 = vshrl.u32 %v3279, 7
  %v3281 = vsub.s32 %v3278, %v3280
  %v3282 = vrot.slane %v3275, %v3281
  %3299 = vst [vmem:[%s4] sm:$0xf] %v3162
  %3300 = vst [vmem:[%s4 + $0x4] sm:$0xf] %v3170
  %3301 = vst [vmem:[%s4 + $0x8] sm:$0xf] %v3178
  %3302 = vst [vmem:[%s4 + $0xc] sm:$0xf] %v3186
  %3303 = vst [vmem:[%s4 + $0x10] sm:$0xf] %v3194
  %3304 = vst [vmem:[%s4 + $0x14] sm:$0xf] %v3202
  %3305 = vst [vmem:[%s4 + $0x18] sm:$0xf] %v3210
  %3306 = vst [vmem:[%s4 + $0x1c] sm:$0xf] %v3218
  %3307 = vst [vmem:[%s4 + $0x20] sm:$0xf] %v3226
  %3308 = vst [vmem:[%s4 + $0x24] sm:$0xf] %v3234
  %3309 = vst [vmem:[%s4 + $0x28] sm:$0xf] %v3242
  %3310 = vst [vmem:[%s4 + $0x2c] sm:$0xf] %v3250
  %3311 = vst [vmem:[%s4 + $0x30] sm:$0xf] %v3258
  %3312 = vst [vmem:[%s4 + $0x34] sm:$0xf] %v3266
  %3313 = vst [vmem:[%s4 + $0x38] sm:$0xf] %v3274
  %3314 = vst [vmem:[%s4 + $0x3c] sm:$0xf] %v3282
  // Predicated region
  $region18: #{generator_forward.4} parent=0 // pred_check
    _
  $region19: #{generator_forward.4} parent=0 // pred_check_branch
    %3316 = sbr.rel (0) target = $region21
  $region20: #{generator_forward.4} parent=0 // pred_region
    _
  $region21: #{generator_forward.4} parent=0 // pred_fallthru
    _
  // Predicated region
  $region22: #{generator_forward.4} parent=0 // pred_check
    _
  $region23: #{generator_forward.4} parent=0 // pred_check_branch
    %3318 = sbr.rel (0) target = $region25
  $region24: #{generator_forward.4} parent=0 // pred_region
    _
  $region25: #{generator_forward.4} parent=0 // pred_fallthru
    _

// kernel: generator_forward.5
$region0: #{generator_forward.5}
  #allocation0 [shape = 'u32[]', space=smem, size = 0x4, offset = 0x4, fixed_abs, tag = 'smem constant byte address 0x4 - core index']
  #allocation1 [shape = 'u32[144,128]{1,0:T(1,128)}', space=vmem, size = 0x12000, scoped, tag = 'internal scratch']
  %s0 = inlined_call_operand.vmem [shape: bf16[4,10,10,64], index: 0, kind: input, shape index: {}]
  %s1 = inlined_call_operand.vmem [shape: bf16[4,576], index: 1, kind: input, shape index: {}]
  %s2 = inlined_call_operand.vmem [shape: f32[4,1], index: 2, kind: input, shape index: {}]
  %s3 = inlined_call_operand.vmem [shape: f32[4,256], index: 3, kind: output, shape index: {}]
  %s4 = sld [smem:[#allocation0]]
  $region22: #{generator_forward.5} parent=0
    _
  %s6 = ssub.s32 1, %s4
  %s7 = scalar_select 0, %s6, %s4
  // Predicated region
  $region2: #{generator_forward.5} parent=0 // pred_check
    _
  $region3: #{generator_forward.5} parent=0 // pred_check_branch
    %9 = sbr.rel (0) target = $region5
  $region4: #{generator_forward.5} parent=0 // pred_region
    _
  $region5: #{generator_forward.5} parent=0 // pred_fallthru
    _
  // Predicated region
  $region6: #{generator_forward.5} parent=0 // pred_check
    _
  $region7: #{generator_forward.5} parent=0 // pred_check_branch
    %11 = sbr.rel (0) target = $region9
  $region8: #{generator_forward.5} parent=0 // pred_region
    _
  $region9: #{generator_forward.5} parent=0 // pred_fallthru
    _
  // Predicated region
  $region10: #{generator_forward.5} parent=0 // pred_check
    _
  $region11: #{generator_forward.5} parent=0 // pred_check_branch
    %13 = sbr.rel (0) target = $region13
  $region12: #{generator_forward.5} parent=0 // pred_region
    _
  $region13: #{generator_forward.5} parent=0 // pred_fallthru
    _
  %v15 = vld [vmem:[%s0] sm:$0xf]
  %v16 = vld [vmem:[%s0 + $0x4] sm:$0x1]
  %v17 = vld [vmem:[%s0 + $0x8] sm:$0xf]
  %v18 = vld [vmem:[%s0 + $0xc] sm:$0x1]
  %v19 = vld [vmem:[%s0 + $0x10] sm:$0xf]
  %v20 = vld [vmem:[%s0 + $0x14] sm:$0x1]
  %v21 = vld [vmem:[%s0 + $0x18] sm:$0xf]
  %v22 = vld [vmem:[%s0 + $0x1c] sm:$0x1]
  %v23 = vld [vmem:[%s0 + $0x20] sm:$0xf]
  %v24 = vld [vmem:[%s0 + $0x24] sm:$0x1]
  %v25 = vld [vmem:[%s0 + $0x28] sm:$0xf]
  %v26 = vld [vmem:[%s0 + $0x2c] sm:$0x1]
  %v27 = vld [vmem:[%s0 + $0x30] sm:$0xf]
  %v28 = vld [vmem:[%s0 + $0x34] sm:$0x1]
  %v29 = vld [vmem:[%s0 + $0x38] sm:$0xf]
  %v30 = vld [vmem:[%s0 + $0x3c] sm:$0x1]
  %v31 = vld [vmem:[%s0 + $0x40] sm:$0xf]
  %v32 = vld [vmem:[%s0 + $0x44] sm:$0x1]
  %v33 = vld [vmem:[%s0 + $0x48] sm:$0xf]
  %v34 = vld [vmem:[%s0 + $0x4c] sm:$0x1]
  %v35 = vld [vmem:[%s0 + $0x50] sm:$0xf]
  %v36 = vld [vmem:[%s0 + $0x54] sm:$0x1]
  %v37 = vld [vmem:[%s0 + $0x58] sm:$0xf]
  %v38 = vld [vmem:[%s0 + $0x5c] sm:$0x1]
  %v39 = vld [vmem:[%s0 + $0x60] sm:$0xf]
  %v40 = vld [vmem:[%s0 + $0x64] sm:$0x1]
  %v41 = vld [vmem:[%s0 + $0x68] sm:$0xf]
  %v42 = vld [vmem:[%s0 + $0x6c] sm:$0x1]
  %v43 = vld [vmem:[%s0 + $0x70] sm:$0xf]
  %v44 = vld [vmem:[%s0 + $0x74] sm:$0x1]
  %v45 = vld [vmem:[%s0 + $0x78] sm:$0xf]
  %v46 = vld [vmem:[%s0 + $0x7c] sm:$0x1]
  %v47 = vld [vmem:[%s0 + $0x80] sm:$0xf]
  %v48 = vld [vmem:[%s0 + $0x84] sm:$0x1]
  %v49 = vld [vmem:[%s0 + $0x88] sm:$0xf]
  %v50 = vld [vmem:[%s0 + $0x8c] sm:$0x1]
  %v51 = vld [vmem:[%s0 + $0x90] sm:$0xf]
  %v52 = vld [vmem:[%s0 + $0x94] sm:$0x1]
  %v53 = vld [vmem:[%s0 + $0x98] sm:$0xf]
  %v54 = vld [vmem:[%s0 + $0x9c] sm:$0x1]
  %v55 = vld [vmem:[%s0 + $0xa0] sm:$0xf]
  %v56 = vld [vmem:[%s0 + $0xa4] sm:$0x1]
  %v57 = vld [vmem:[%s0 + $0xa8] sm:$0xf]
  %v58 = vld [vmem:[%s0 + $0xac] sm:$0x1]
  %v59 = vld [vmem:[%s0 + $0xb0] sm:$0xf]
  %v60 = vld [vmem:[%s0 + $0xb4] sm:$0x1]
  %v61 = vld [vmem:[%s0 + $0xb8] sm:$0xf]
  %v62 = vld [vmem:[%s0 + $0xbc] sm:$0x1]
  %v63 = vld [vmem:[%s0 + $0xc0] sm:$0xf]
  %v64 = vld [vmem:[%s0 + $0xc4] sm:$0x1]
  %v65 = vld [vmem:[%s0 + $0xc8] sm:$0xf]
  %v66 = vld [vmem:[%s0 + $0xcc] sm:$0x1]
  %v67 = vld [vmem:[%s0 + $0xd0] sm:$0xf]
  %v68 = vld [vmem:[%s0 + $0xd4] sm:$0x1]
  %v69 = vld [vmem:[%s0 + $0xd8] sm:$0xf]
  %v70 = vld [vmem:[%s0 + $0xdc] sm:$0x1]
  %v71 = vld [vmem:[%s0 + $0xe0] sm:$0xf]
  %v72 = vld [vmem:[%s0 + $0xe4] sm:$0x1]
  %v73 = vld [vmem:[%s0 + $0xe8] sm:$0xf]
  %v74 = vld [vmem:[%s0 + $0xec] sm:$0x1]
  %v75 = vld [vmem:[%s0 + $0xf0] sm:$0xf]
  %v76 = vld [vmem:[%s0 + $0xf4] sm:$0x1]
  %v77 = vld [vmem:[%s0 + $0xf8] sm:$0xf]
  %v78 = vld [vmem:[%s0 + $0xfc] sm:$0x1]
  %v79 = vld [vmem:[%s0 + $0x100] sm:$0xf]
  %v80 = vld [vmem:[%s0 + $0x104] sm:$0x1]
  %v81 = vld [vmem:[%s0 + $0x108] sm:$0xf]
  %v82 = vld [vmem:[%s0 + $0x10c] sm:$0x1]
  %v83 = vld [vmem:[%s0 + $0x110] sm:$0xf]
  %v84 = vld [vmem:[%s0 + $0x114] sm:$0x1]
  %v85 = vld [vmem:[%s0 + $0x118] sm:$0xf]
  %v86 = vld [vmem:[%s0 + $0x11c] sm:$0x1]
  %v87 = vld [vmem:[%s0 + $0x120] sm:$0xf]
  %v88 = vld [vmem:[%s0 + $0x124] sm:$0x1]
  %v89 = vld [vmem:[%s0 + $0x128] sm:$0xf]
  %v90 = vld [vmem:[%s0 + $0x12c] sm:$0x1]
  %v91 = vld [vmem:[%s0 + $0x130] sm:$0xf]
  %v92 = vld [vmem:[%s0 + $0x134] sm:$0x1]
  %v93 = vld [vmem:[%s0 + $0x138] sm:$0xf]
  %v94 = vld [vmem:[%s0 + $0x13c] sm:$0x1]
  %v127 = vunpack.c.l.b16 %v15
  %v128 = vunpack.c.l.b16 %v17
  %v129 = vunpack.c.l.b16 %v19
  %v130 = vunpack.c.l.b16 %v21
  %v131 = vunpack.c.l.b16 %v23
  %v132 = vunpack.c.l.b16 %v25
  %v133 = vunpack.c.l.b16 %v27
  %v134 = vunpack.c.l.b16 %v29
  %v135 = vunpack.c.l.b16 %v35
  %v136 = vunpack.c.l.b16 %v37
  %v137 = vunpack.c.l.b16 %v39
  %v138 = vunpack.c.l.b16 %v41
  %v139 = vunpack.c.l.b16 %v43
  %v140 = vunpack.c.l.b16 %v45
  %v141 = vunpack.c.l.b16 %v47
  %v142 = vunpack.c.l.b16 %v49
  %v143 = vunpack.c.l.b16 %v55
  %v144 = vunpack.c.l.b16 %v57
  %v145 = vunpack.c.l.b16 %v59
  %v146 = vunpack.c.l.b16 %v61
  %v147 = vunpack.c.l.b16 %v63
  %v148 = vunpack.c.l.b16 %v65
  %v149 = vunpack.c.l.b16 %v67
  %v150 = vunpack.c.l.b16 %v69
  %v151 = vunpack.c.l.b16 %v75
  %v152 = vunpack.c.l.b16 %v77
  %v153 = vunpack.c.l.b16 %v79
  %v154 = vunpack.c.l.b16 %v81
  %v155 = vunpack.c.l.b16 %v83
  %v156 = vunpack.c.l.b16 %v85
  %v157 = vunpack.c.l.b16 %v87
  %v158 = vunpack.c.l.b16 %v89
  %v159 = vpack.c.b16 %v128, %v127
  %v160 = vpack.c.b16 %v130, %v129
  %v161 = vpack.c.b16 %v132, %v131
  %v162 = vpack.c.b16 %v134, %v133
  %v163 = vpack.c.b16 %v136, %v135
  %v164 = vpack.c.b16 %v138, %v137
  %v165 = vpack.c.b16 %v140, %v139
  %v166 = vpack.c.b16 %v142, %v141
  %v167 = vpack.c.b16 %v144, %v143
  %v168 = vpack.c.b16 %v146, %v145
  %v169 = vpack.c.b16 %v148, %v147
  %v170 = vpack.c.b16 %v150, %v149
  %v171 = vpack.c.b16 %v152, %v151
  %v172 = vpack.c.b16 %v154, %v153
  %v173 = vpack.c.b16 %v156, %v155
  %v174 = vpack.c.b16 %v158, %v157
  %191 = vxpose.xlu0.c.b16.start [1/8] %v159, 128
  %192 = vxpose.xlu0.c.b16.cont [2/8] %v160, 128
  %193 = vxpose.xlu0.c.b16.cont [3/8] %v161, 128
  %194 = vxpose.xlu0.c.b16.cont [4/8] %v162, 128
  %195 = vxpose.xlu0.c.b16.cont [5/8] %v163, 128
  %196 = vxpose.xlu0.c.b16.cont [6/8] %v164, 128
  %197 = vxpose.xlu0.c.b16.cont [7/8] %v165, 128
  %198 = vxpose.xlu0.c.b16.end [8/8] %v166, 128
  %v199 = vpop.trf.xlu0
  %v200 = vpop.trf.xlu0
  %v201 = vpop.trf.xlu0
  %v202 = vpop.trf.xlu0
  %v203 = vpop.trf.xlu0
  %v204 = vpop.trf.xlu0
  %v205 = vpop.trf.xlu0
  %v206 = vpop.trf.xlu0
  %207 = vxpose.xlu0.c.b16.start [1/8] %v167, 128
  %208 = vxpose.xlu0.c.b16.cont [2/8] %v168, 128
  %209 = vxpose.xlu0.c.b16.cont [3/8] %v169, 128
  %210 = vxpose.xlu0.c.b16.cont [4/8] %v170, 128
  %211 = vxpose.xlu0.c.b16.cont [5/8] %v171, 128
  %212 = vxpose.xlu0.c.b16.cont [6/8] %v172, 128
  %213 = vxpose.xlu0.c.b16.cont [7/8] %v173, 128
  %214 = vxpose.xlu0.c.b16.end [8/8] %v174, 128
  %v215 = vpop.trf.xlu0
  %v216 = vpop.trf.xlu0
  %v217 = vpop.trf.xlu0
  %v218 = vpop.trf.xlu0
  %v219 = vpop.trf.xlu0
  %v220 = vpop.trf.xlu0
  %v221 = vpop.trf.xlu0
  %v222 = vpop.trf.xlu0
  %vm223 = vsmask.f32 3328
  %vm224 = vsmask.f32 7440
  %vm225 = vmor %vm223, %vm224
  %v227 = vshrl.u32 %v15, 16
  %v229 = vrot.slane %v227, 4
  %v230 = vshll.u32 %v15, 16
  %v232 = vrot.slane %v230, 5
  %v233 = vor.u32 %v229, %v232
  %v234 = vrot.slane %v233, 4
  %v236 = vshll.u32 %v16, 16
  %v238 = vrot.slane %v236, 5
  %v239 = vsel %vm225, %v234, %v238
  %v241 = vshrl.u32 %v17, 16
  %v243 = vrot.slane %v241, 4
  %v244 = vshll.u32 %v17, 16
  %v246 = vrot.slane %v244, 5
  %v247 = vor.u32 %v243, %v246
  %v248 = vrot.slane %v247, 4
  %v250 = vshll.u32 %v18, 16
  %v252 = vrot.slane %v250, 5
  %v253 = vsel %vm225, %v248, %v252
  %v255 = vshrl.u32 %v19, 16
  %v257 = vrot.slane %v255, 4
  %v258 = vshll.u32 %v19, 16
  %v260 = vrot.slane %v258, 5
  %v261 = vor.u32 %v257, %v260
  %v262 = vrot.slane %v261, 4
  %v264 = vshll.u32 %v20, 16
  %v266 = vrot.slane %v264, 5
  %v267 = vsel %vm225, %v262, %v266
  %v269 = vshrl.u32 %v21, 16
  %v271 = vrot.slane %v269, 4
  %v272 = vshll.u32 %v21, 16
  %v274 = vrot.slane %v272, 5
  %v275 = vor.u32 %v271, %v274
  %v276 = vrot.slane %v275, 4
  %v278 = vshll.u32 %v22, 16
  %v280 = vrot.slane %v278, 5
  %v281 = vsel %vm225, %v276, %v280
  %v283 = vshrl.u32 %v23, 16
  %v285 = vrot.slane %v283, 4
  %v286 = vshll.u32 %v23, 16
  %v288 = vrot.slane %v286, 5
  %v289 = vor.u32 %v285, %v288
  %v290 = vrot.slane %v289, 4
  %v292 = vshll.u32 %v24, 16
  %v294 = vrot.slane %v292, 5
  %v295 = vsel %vm225, %v290, %v294
  %v297 = vshrl.u32 %v25, 16
  %v299 = vrot.slane %v297, 4
  %v300 = vshll.u32 %v25, 16
  %v302 = vrot.slane %v300, 5
  %v303 = vor.u32 %v299, %v302
  %v304 = vrot.slane %v303, 4
  %v306 = vshll.u32 %v26, 16
  %v308 = vrot.slane %v306, 5
  %v309 = vsel %vm225, %v304, %v308
  %v311 = vshrl.u32 %v27, 16
  %v313 = vrot.slane %v311, 4
  %v314 = vshll.u32 %v27, 16
  %v316 = vrot.slane %v314, 5
  %v317 = vor.u32 %v313, %v316
  %v318 = vrot.slane %v317, 4
  %v320 = vshll.u32 %v28, 16
  %v322 = vrot.slane %v320, 5
  %v323 = vsel %vm225, %v318, %v322
  %v325 = vshrl.u32 %v29, 16
  %v327 = vrot.slane %v325, 4
  %v328 = vshll.u32 %v29, 16
  %v330 = vrot.slane %v328, 5
  %v331 = vor.u32 %v327, %v330
  %v332 = vrot.slane %v331, 4
  %v334 = vshll.u32 %v30, 16
  %v336 = vrot.slane %v334, 5
  %v337 = vsel %vm225, %v332, %v336
  %v339 = vshrl.u32 %v35, 16
  %v341 = vrot.slane %v339, 4
  %v342 = vshll.u32 %v35, 16
  %v344 = vrot.slane %v342, 5
  %v345 = vor.u32 %v341, %v344
  %v346 = vrot.slane %v345, 4
  %v348 = vshll.u32 %v36, 16
  %v350 = vrot.slane %v348, 5
  %v351 = vsel %vm225, %v346, %v350
  %v353 = vshrl.u32 %v37, 16
  %v355 = vrot.slane %v353, 4
  %v356 = vshll.u32 %v37, 16
  %v358 = vrot.slane %v356, 5
  %v359 = vor.u32 %v355, %v358
  %v360 = vrot.slane %v359, 4
  %v362 = vshll.u32 %v38, 16
  %v364 = vrot.slane %v362, 5
  %v365 = vsel %vm225, %v360, %v364
  %v367 = vshrl.u32 %v39, 16
  %v369 = vrot.slane %v367, 4
  %v370 = vshll.u32 %v39, 16
  %v372 = vrot.slane %v370, 5
  %v373 = vor.u32 %v369, %v372
  %v374 = vrot.slane %v373, 4
  %v376 = vshll.u32 %v40, 16
  %v378 = vrot.slane %v376, 5
  %v379 = vsel %vm225, %v374, %v378
  %v381 = vshrl.u32 %v41, 16
  %v383 = vrot.slane %v381, 4
  %v384 = vshll.u32 %v41, 16
  %v386 = vrot.slane %v384, 5
  %v387 = vor.u32 %v383, %v386
  %v388 = vrot.slane %v387, 4
  %v390 = vshll.u32 %v42, 16
  %v392 = vrot.slane %v390, 5
  %v393 = vsel %vm225, %v388, %v392
  %v395 = vshrl.u32 %v43, 16
  %v397 = vrot.slane %v395, 4
  %v398 = vshll.u32 %v43, 16
  %v400 = vrot.slane %v398, 5
  %v401 = vor.u32 %v397, %v400
  %v402 = vrot.slane %v401, 4
  %v404 = vshll.u32 %v44, 16
  %v406 = vrot.slane %v404, 5
  %v407 = vsel %vm225, %v402, %v406
  %v409 = vshrl.u32 %v45, 16
  %v411 = vrot.slane %v409, 4
  %v412 = vshll.u32 %v45, 16
  %v414 = vrot.slane %v412, 5
  %v415 = vor.u32 %v411, %v414
  %v416 = vrot.slane %v415, 4
  %v418 = vshll.u32 %v46, 16
  %v420 = vrot.slane %v418, 5
  %v421 = vsel %vm225, %v416, %v420
  %v423 = vshrl.u32 %v47, 16
  %v425 = vrot.slane %v423, 4
  %v426 = vshll.u32 %v47, 16
  %v428 = vrot.slane %v426, 5
  %v429 = vor.u32 %v425, %v428
  %v430 = vrot.slane %v429, 4
  %v432 = vshll.u32 %v48, 16
  %v434 = vrot.slane %v432, 5
  %v435 = vsel %vm225, %v430, %v434
  %v437 = vshrl.u32 %v49, 16
  %v439 = vrot.slane %v437, 4
  %v440 = vshll.u32 %v49, 16
  %v442 = vrot.slane %v440, 5
  %v443 = vor.u32 %v439, %v442
  %v444 = vrot.slane %v443, 4
  %v446 = vshll.u32 %v50, 16
  %v448 = vrot.slane %v446, 5
  %v449 = vsel %vm225, %v444, %v448
  %v451 = vshrl.u32 %v55, 16
  %v453 = vrot.slane %v451, 4
  %v454 = vshll.u32 %v55, 16
  %v456 = vrot.slane %v454, 5
  %v457 = vor.u32 %v453, %v456
  %v458 = vrot.slane %v457, 4
  %v460 = vshll.u32 %v56, 16
  %v462 = vrot.slane %v460, 5
  %v463 = vsel %vm225, %v458, %v462
  %v465 = vshrl.u32 %v57, 16
  %v467 = vrot.slane %v465, 4
  %v468 = vshll.u32 %v57, 16
  %v470 = vrot.slane %v468, 5
  %v471 = vor.u32 %v467, %v470
  %v472 = vrot.slane %v471, 4
  %v474 = vshll.u32 %v58, 16
  %v476 = vrot.slane %v474, 5
  %v477 = vsel %vm225, %v472, %v476
  %v479 = vshrl.u32 %v59, 16
  %v481 = vrot.slane %v479, 4
  %v482 = vshll.u32 %v59, 16
  %v484 = vrot.slane %v482, 5
  %v485 = vor.u32 %v481, %v484
  %v486 = vrot.slane %v485, 4
  %v488 = vshll.u32 %v60, 16
  %v490 = vrot.slane %v488, 5
  %v491 = vsel %vm225, %v486, %v490
  %v493 = vshrl.u32 %v61, 16
  %v495 = vrot.slane %v493, 4
  %v496 = vshll.u32 %v61, 16
  %v498 = vrot.slane %v496, 5
  %v499 = vor.u32 %v495, %v498
  %v500 = vrot.slane %v499, 4
  %v502 = vshll.u32 %v62, 16
  %v504 = vrot.slane %v502, 5
  %v505 = vsel %vm225, %v500, %v504
  %v507 = vshrl.u32 %v63, 16
  %v509 = vrot.slane %v507, 4
  %v510 = vshll.u32 %v63, 16
  %v512 = vrot.slane %v510, 5
  %v513 = vor.u32 %v509, %v512
  %v514 = vrot.slane %v513, 4
  %v516 = vshll.u32 %v64, 16
  %v518 = vrot.slane %v516, 5
  %v519 = vsel %vm225, %v514, %v518
  %v521 = vshrl.u32 %v65, 16
  %v523 = vrot.slane %v521, 4
  %v524 = vshll.u32 %v65, 16
  %v526 = vrot.slane %v524, 5
  %v527 = vor.u32 %v523, %v526
  %v528 = vrot.slane %v527, 4
  %v530 = vshll.u32 %v66, 16
  %v532 = vrot.slane %v530, 5
  %v533 = vsel %vm225, %v528, %v532
  %v535 = vshrl.u32 %v67, 16
  %v537 = vrot.slane %v535, 4
  %v538 = vshll.u32 %v67, 16
  %v540 = vrot.slane %v538, 5
  %v541 = vor.u32 %v537, %v540
  %v542 = vrot.slane %v541, 4
  %v544 = vshll.u32 %v68, 16
  %v546 = vrot.slane %v544, 5
  %v547 = vsel %vm225, %v542, %v546
  %v549 = vshrl.u32 %v69, 16
  %v551 = vrot.slane %v549, 4
  %v552 = vshll.u32 %v69, 16
  %v554 = vrot.slane %v552, 5
  %v555 = vor.u32 %v551, %v554
  %v556 = vrot.slane %v555, 4
  %v558 = vshll.u32 %v70, 16
  %v560 = vrot.slane %v558, 5
  %v561 = vsel %vm225, %v556, %v560
  %v563 = vshrl.u32 %v75, 16
  %v565 = vrot.slane %v563, 4
  %v566 = vshll.u32 %v75, 16
  %v568 = vrot.slane %v566, 5
  %v569 = vor.u32 %v565, %v568
  %v570 = vrot.slane %v569, 4
  %v572 = vshll.u32 %v76, 16
  %v574 = vrot.slane %v572, 5
  %v575 = vsel %vm225, %v570, %v574
  %v577 = vshrl.u32 %v77, 16
  %v579 = vrot.slane %v577, 4
  %v580 = vshll.u32 %v77, 16
  %v582 = vrot.slane %v580, 5
  %v583 = vor.u32 %v579, %v582
  %v584 = vrot.slane %v583, 4
  %v586 = vshll.u32 %v78, 16
  %v588 = vrot.slane %v586, 5
  %v589 = vsel %vm225, %v584, %v588
  %v591 = vshrl.u32 %v79, 16
  %v593 = vrot.slane %v591, 4
  %v594 = vshll.u32 %v79, 16
  %v596 = vrot.slane %v594, 5
  %v597 = vor.u32 %v593, %v596
  %v598 = vrot.slane %v597, 4
  %v600 = vshll.u32 %v80, 16
  %v602 = vrot.slane %v600, 5
  %v603 = vsel %vm225, %v598, %v602
  %v605 = vshrl.u32 %v81, 16
  %v607 = vrot.slane %v605, 4
  %v608 = vshll.u32 %v81, 16
  %v610 = vrot.slane %v608, 5
  %v611 = vor.u32 %v607, %v610
  %v612 = vrot.slane %v611, 4
  %v614 = vshll.u32 %v82, 16
  %v616 = vrot.slane %v614, 5
  %v617 = vsel %vm225, %v612, %v616
  %v619 = vshrl.u32 %v83, 16
  %v621 = vrot.slane %v619, 4
  %v622 = vshll.u32 %v83, 16
  %v624 = vrot.slane %v622, 5
  %v625 = vor.u32 %v621, %v624
  %v626 = vrot.slane %v625, 4
  %v628 = vshll.u32 %v84, 16
  %v630 = vrot.slane %v628, 5
  %v631 = vsel %vm225, %v626, %v630
  %v633 = vshrl.u32 %v85, 16
  %v635 = vrot.slane %v633, 4
  %v636 = vshll.u32 %v85, 16
  %v638 = vrot.slane %v636, 5
  %v639 = vor.u32 %v635, %v638
  %v640 = vrot.slane %v639, 4
  %v642 = vshll.u32 %v86, 16
  %v644 = vrot.slane %v642, 5
  %v645 = vsel %vm225, %v640, %v644
  %v647 = vshrl.u32 %v87, 16
  %v649 = vrot.slane %v647, 4
  %v650 = vshll.u32 %v87, 16
  %v652 = vrot.slane %v650, 5
  %v653 = vor.u32 %v649, %v652
  %v654 = vrot.slane %v653, 4
  %v656 = vshll.u32 %v88, 16
  %v658 = vrot.slane %v656, 5
  %v659 = vsel %vm225, %v654, %v658
  %v661 = vshrl.u32 %v89, 16
  %v663 = vrot.slane %v661, 4
  %v664 = vshll.u32 %v89, 16
  %v666 = vrot.slane %v664, 5
  %v667 = vor.u32 %v663, %v666
  %v668 = vrot.slane %v667, 4
  %v670 = vshll.u32 %v90, 16
  %v672 = vrot.slane %v670, 5
  %v673 = vsel %vm225, %v668, %v672
  %v674 = vunpack.c.l.b16 %v239
  %v675 = vunpack.c.l.b16 %v253
  %v676 = vunpack.c.l.b16 %v267
  %v677 = vunpack.c.l.b16 %v281
  %v678 = vunpack.c.l.b16 %v295
  %v679 = vunpack.c.l.b16 %v309
  %v680 = vunpack.c.l.b16 %v323
  %v681 = vunpack.c.l.b16 %v337
  %v682 = vunpack.c.l.b16 %v351
  %v683 = vunpack.c.l.b16 %v365
  %v684 = vunpack.c.l.b16 %v379
  %v685 = vunpack.c.l.b16 %v393
  %v686 = vunpack.c.l.b16 %v407
  %v687 = vunpack.c.l.b16 %v421
  %v688 = vunpack.c.l.b16 %v435
  %v689 = vunpack.c.l.b16 %v449
  %v690 = vunpack.c.l.b16 %v463
  %v691 = vunpack.c.l.b16 %v477
  %v692 = vunpack.c.l.b16 %v491
  %v693 = vunpack.c.l.b16 %v505
  %v694 = vunpack.c.l.b16 %v519
  %v695 = vunpack.c.l.b16 %v533
  %v696 = vunpack.c.l.b16 %v547
  %v697 = vunpack.c.l.b16 %v561
  %v698 = vunpack.c.l.b16 %v575
  %v699 = vunpack.c.l.b16 %v589
  %v700 = vunpack.c.l.b16 %v603
  %v701 = vunpack.c.l.b16 %v617
  %v702 = vunpack.c.l.b16 %v631
  %v703 = vunpack.c.l.b16 %v645
  %v704 = vunpack.c.l.b16 %v659
  %v705 = vunpack.c.l.b16 %v673
  %v706 = vpack.c.b16 %v675, %v674
  %v707 = vpack.c.b16 %v677, %v676
  %v708 = vpack.c.b16 %v679, %v678
  %v709 = vpack.c.b16 %v681, %v680
  %v710 = vpack.c.b16 %v683, %v682
  %v711 = vpack.c.b16 %v685, %v684
  %v712 = vpack.c.b16 %v687, %v686
  %v713 = vpack.c.b16 %v689, %v688
  %v714 = vpack.c.b16 %v691, %v690
  %v715 = vpack.c.b16 %v693, %v692
  %v716 = vpack.c.b16 %v695, %v694
  %v717 = vpack.c.b16 %v697, %v696
  %v718 = vpack.c.b16 %v699, %v698
  %v719 = vpack.c.b16 %v701, %v700
  %v720 = vpack.c.b16 %v703, %v702
  %v721 = vpack.c.b16 %v705, %v704
  %738 = vxpose.xlu0.c.b16.start [1/8] %v706, 128
  %739 = vxpose.xlu0.c.b16.cont [2/8] %v707, 128
  %740 = vxpose.xlu0.c.b16.cont [3/8] %v708, 128
  %741 = vxpose.xlu0.c.b16.cont [4/8] %v709, 128
  %742 = vxpose.xlu0.c.b16.cont [5/8] %v710, 128
  %743 = vxpose.xlu0.c.b16.cont [6/8] %v711, 128
  %744 = vxpose.xlu0.c.b16.cont [7/8] %v712, 128
  %745 = vxpose.xlu0.c.b16.end [8/8] %v713, 128
  %v746 = vpop.trf.xlu0
  %v747 = vpop.trf.xlu0
  %v748 = vpop.trf.xlu0
  %v749 = vpop.trf.xlu0
  %v750 = vpop.trf.xlu0
  %v751 = vpop.trf.xlu0
  %v752 = vpop.trf.xlu0
  %v753 = vpop.trf.xlu0
  %754 = vxpose.xlu0.c.b16.start [1/8] %v714, 128
  %755 = vxpose.xlu0.c.b16.cont [2/8] %v715, 128
  %756 = vxpose.xlu0.c.b16.cont [3/8] %v716, 128
  %757 = vxpose.xlu0.c.b16.cont [4/8] %v717, 128
  %758 = vxpose.xlu0.c.b16.cont [5/8] %v718, 128
  %759 = vxpose.xlu0.c.b16.cont [6/8] %v719, 128
  %760 = vxpose.xlu0.c.b16.cont [7/8] %v720, 128
  %761 = vxpose.xlu0.c.b16.end [8/8] %v721, 128
  %v762 = vpop.trf.xlu0
  %v763 = vpop.trf.xlu0
  %v764 = vpop.trf.xlu0
  %v765 = vpop.trf.xlu0
  %v766 = vpop.trf.xlu0
  %v767 = vpop.trf.xlu0
  %v768 = vpop.trf.xlu0
  %v769 = vpop.trf.xlu0
  %vm802 = vcmask 1042432
  %vm803 = vcmask 1046532
  %vm804 = vmor %vm802, %vm803
  %v805 = vrot.slane %v15, 5
  %v806 = vrot.slane %v805, 4
  %v807 = vrot.slane %v16, 5
  %v808 = vsel %vm804, %v806, %v807
  %v809 = vrot.slane %v17, 5
  %v810 = vrot.slane %v809, 4
  %v811 = vrot.slane %v18, 5
  %v812 = vsel %vm804, %v810, %v811
  %v813 = vrot.slane %v19, 5
  %v814 = vrot.slane %v813, 4
  %v815 = vrot.slane %v20, 5
  %v816 = vsel %vm804, %v814, %v815
  %v817 = vrot.slane %v21, 5
  %v818 = vrot.slane %v817, 4
  %v819 = vrot.slane %v22, 5
  %v820 = vsel %vm804, %v818, %v819
  %v821 = vrot.slane %v23, 5
  %v822 = vrot.slane %v821, 4
  %v823 = vrot.slane %v24, 5
  %v824 = vsel %vm804, %v822, %v823
  %v825 = vrot.slane %v25, 5
  %v826 = vrot.slane %v825, 4
  %v827 = vrot.slane %v26, 5
  %v828 = vsel %vm804, %v826, %v827
  %v829 = vrot.slane %v27, 5
  %v830 = vrot.slane %v829, 4
  %v831 = vrot.slane %v28, 5
  %v832 = vsel %vm804, %v830, %v831
  %v833 = vrot.slane %v29, 5
  %v834 = vrot.slane %v833, 4
  %v835 = vrot.slane %v30, 5
  %v836 = vsel %vm804, %v834, %v835
  %v837 = vrot.slane %v35, 5
  %v838 = vrot.slane %v837, 4
  %v839 = vrot.slane %v36, 5
  %v840 = vsel %vm804, %v838, %v839
  %v841 = vrot.slane %v37, 5
  %v842 = vrot.slane %v841, 4
  %v843 = vrot.slane %v38, 5
  %v844 = vsel %vm804, %v842, %v843
  %v845 = vrot.slane %v39, 5
  %v846 = vrot.slane %v845, 4
  %v847 = vrot.slane %v40, 5
  %v848 = vsel %vm804, %v846, %v847
  %v849 = vrot.slane %v41, 5
  %v850 = vrot.slane %v849, 4
  %v851 = vrot.slane %v42, 5
  %v852 = vsel %vm804, %v850, %v851
  %v853 = vrot.slane %v43, 5
  %v854 = vrot.slane %v853, 4
  %v855 = vrot.slane %v44, 5
  %v856 = vsel %vm804, %v854, %v855
  %v857 = vrot.slane %v45, 5
  %v858 = vrot.slane %v857, 4
  %v859 = vrot.slane %v46, 5
  %v860 = vsel %vm804, %v858, %v859
  %v861 = vrot.slane %v47, 5
  %v862 = vrot.slane %v861, 4
  %v863 = vrot.slane %v48, 5
  %v864 = vsel %vm804, %v862, %v863
  %v865 = vrot.slane %v49, 5
  %v866 = vrot.slane %v865, 4
  %v867 = vrot.slane %v50, 5
  %v868 = vsel %vm804, %v866, %v867
  %v869 = vrot.slane %v55, 5
  %v870 = vrot.slane %v869, 4
  %v871 = vrot.slane %v56, 5
  %v872 = vsel %vm804, %v870, %v871
  %v873 = vrot.slane %v57, 5
  %v874 = vrot.slane %v873, 4
  %v875 = vrot.slane %v58, 5
  %v876 = vsel %vm804, %v874, %v875
  %v877 = vrot.slane %v59, 5
  %v878 = vrot.slane %v877, 4
  %v879 = vrot.slane %v60, 5
  %v880 = vsel %vm804, %v878, %v879
  %v881 = vrot.slane %v61, 5
  %v882 = vrot.slane %v881, 4
  %v883 = vrot.slane %v62, 5
  %v884 = vsel %vm804, %v882, %v883
  %v885 = vrot.slane %v63, 5
  %v886 = vrot.slane %v885, 4
  %v887 = vrot.slane %v64, 5
  %v888 = vsel %vm804, %v886, %v887
  %v889 = vrot.slane %v65, 5
  %v890 = vrot.slane %v889, 4
  %v891 = vrot.slane %v66, 5
  %v892 = vsel %vm804, %v890, %v891
  %v893 = vrot.slane %v67, 5
  %v894 = vrot.slane %v893, 4
  %v895 = vrot.slane %v68, 5
  %v896 = vsel %vm804, %v894, %v895
  %v897 = vrot.slane %v69, 5
  %v898 = vrot.slane %v897, 4
  %v899 = vrot.slane %v70, 5
  %v900 = vsel %vm804, %v898, %v899
  %v901 = vrot.slane %v75, 5
  %v902 = vrot.slane %v901, 4
  %v903 = vrot.slane %v76, 5
  %v904 = vsel %vm804, %v902, %v903
  %v905 = vrot.slane %v77, 5
  %v906 = vrot.slane %v905, 4
  %v907 = vrot.slane %v78, 5
  %v908 = vsel %vm804, %v906, %v907
  %v909 = vrot.slane %v79, 5
  %v910 = vrot.slane %v909, 4
  %v911 = vrot.slane %v80, 5
  %v912 = vsel %vm804, %v910, %v911
  %v913 = vrot.slane %v81, 5
  %v914 = vrot.slane %v913, 4
  %v915 = vrot.slane %v82, 5
  %v916 = vsel %vm804, %v914, %v915
  %v917 = vrot.slane %v83, 5
  %v918 = vrot.slane %v917, 4
  %v919 = vrot.slane %v84, 5
  %v920 = vsel %vm804, %v918, %v919
  %v921 = vrot.slane %v85, 5
  %v922 = vrot.slane %v921, 4
  %v923 = vrot.slane %v86, 5
  %v924 = vsel %vm804, %v922, %v923
  %v925 = vrot.slane %v87, 5
  %v926 = vrot.slane %v925, 4
  %v927 = vrot.slane %v88, 5
  %v928 = vsel %vm804, %v926, %v927
  %v929 = vrot.slane %v89, 5
  %v930 = vrot.slane %v929, 4
  %v931 = vrot.slane %v90, 5
  %v932 = vsel %vm804, %v930, %v931
  %v933 = vunpack.c.l.b16 %v808
  %v934 = vunpack.c.l.b16 %v812
  %v935 = vunpack.c.l.b16 %v816
  %v936 = vunpack.c.l.b16 %v820
  %v937 = vunpack.c.l.b16 %v824
  %v938 = vunpack.c.l.b16 %v828
  %v939 = vunpack.c.l.b16 %v832
  %v940 = vunpack.c.l.b16 %v836
  %v941 = vunpack.c.l.b16 %v840
  %v942 = vunpack.c.l.b16 %v844
  %v943 = vunpack.c.l.b16 %v848
  %v944 = vunpack.c.l.b16 %v852
  %v945 = vunpack.c.l.b16 %v856
  %v946 = vunpack.c.l.b16 %v860
  %v947 = vunpack.c.l.b16 %v864
  %v948 = vunpack.c.l.b16 %v868
  %v949 = vunpack.c.l.b16 %v872
  %v950 = vunpack.c.l.b16 %v876
  %v951 = vunpack.c.l.b16 %v880
  %v952 = vunpack.c.l.b16 %v884
  %v953 = vunpack.c.l.b16 %v888
  %v954 = vunpack.c.l.b16 %v892
  %v955 = vunpack.c.l.b16 %v896
  %v956 = vunpack.c.l.b16 %v900
  %v957 = vunpack.c.l.b16 %v904
  %v958 = vunpack.c.l.b16 %v908
  %v959 = vunpack.c.l.b16 %v912
  %v960 = vunpack.c.l.b16 %v916
  %v961 = vunpack.c.l.b16 %v920
  %v962 = vunpack.c.l.b16 %v924
  %v963 = vunpack.c.l.b16 %v928
  %v964 = vunpack.c.l.b16 %v932
  %v965 = vpack.c.b16 %v934, %v933
  %v966 = vpack.c.b16 %v936, %v935
  %v967 = vpack.c.b16 %v938, %v937
  %v968 = vpack.c.b16 %v940, %v939
  %v969 = vpack.c.b16 %v942, %v941
  %v970 = vpack.c.b16 %v944, %v943
  %v971 = vpack.c.b16 %v946, %v945
  %v972 = vpack.c.b16 %v948, %v947
  %v973 = vpack.c.b16 %v950, %v949
  %v974 = vpack.c.b16 %v952, %v951
  %v975 = vpack.c.b16 %v954, %v953
  %v976 = vpack.c.b16 %v956, %v955
  %v977 = vpack.c.b16 %v958, %v957
  %v978 = vpack.c.b16 %v960, %v959
  %v979 = vpack.c.b16 %v962, %v961
  %v980 = vpack.c.b16 %v964, %v963
  %997 = vxpose.xlu0.c.b16.start [1/8] %v965, 128
  %998 = vxpose.xlu0.c.b16.cont [2/8] %v966, 128
  %999 = vxpose.xlu0.c.b16.cont [3/8] %v967, 128
  %1000 = vxpose.xlu0.c.b16.cont [4/8] %v968, 128
  %1001 = vxpose.xlu0.c.b16.cont [5/8] %v969, 128
  %1002 = vxpose.xlu0.c.b16.cont [6/8] %v970, 128
  %1003 = vxpose.xlu0.c.b16.cont [7/8] %v971, 128
  %1004 = vxpose.xlu0.c.b16.end [8/8] %v972, 128
  %v1005 = vpop.trf.xlu0
  %v1006 = vpop.trf.xlu0
  %v1007 = vpop.trf.xlu0
  %v1008 = vpop.trf.xlu0
  %v1009 = vpop.trf.xlu0
  %v1010 = vpop.trf.xlu0
  %v1011 = vpop.trf.xlu0
  %v1012 = vpop.trf.xlu0
  %1013 = vxpose.xlu0.c.b16.start [1/8] %v973, 128
  %1014 = vxpose.xlu0.c.b16.cont [2/8] %v974, 128
  %1015 = vxpose.xlu0.c.b16.cont [3/8] %v975, 128
  %1016 = vxpose.xlu0.c.b16.cont [4/8] %v976, 128
  %1017 = vxpose.xlu0.c.b16.cont [5/8] %v977, 128
  %1018 = vxpose.xlu0.c.b16.cont [6/8] %v978, 128
  %1019 = vxpose.xlu0.c.b16.cont [7/8] %v979, 128
  %1020 = vxpose.xlu0.c.b16.end [8/8] %v980, 128
  %v1021 = vpop.trf.xlu0
  %v1022 = vpop.trf.xlu0
  %v1023 = vpop.trf.xlu0
  %v1024 = vpop.trf.xlu0
  %v1025 = vpop.trf.xlu0
  %v1026 = vpop.trf.xlu0
  %v1027 = vpop.trf.xlu0
  %v1028 = vpop.trf.xlu0
  %v1033 = vunpack.c.l.b16 %v31
  %v1034 = vunpack.c.l.b16 %v51
  %v1035 = vunpack.c.l.b16 %v71
  %v1036 = vunpack.c.l.b16 %v91
  %v1037 = vpack.c.b16 %v129, %v128
  %v1038 = vpack.c.b16 %v131, %v130
  %v1039 = vpack.c.b16 %v133, %v132
  %v1040 = vpack.c.b16 %v1033, %v134
  %v1041 = vpack.c.b16 %v137, %v136
  %v1042 = vpack.c.b16 %v139, %v138
  %v1043 = vpack.c.b16 %v141, %v140
  %v1044 = vpack.c.b16 %v1034, %v142
  %v1045 = vpack.c.b16 %v145, %v144
  %v1046 = vpack.c.b16 %v147, %v146
  %v1047 = vpack.c.b16 %v149, %v148
  %v1048 = vpack.c.b16 %v1035, %v150
  %v1049 = vpack.c.b16 %v153, %v152
  %v1050 = vpack.c.b16 %v155, %v154
  %v1051 = vpack.c.b16 %v157, %v156
  %v1052 = vpack.c.b16 %v1036, %v158
  %1069 = vxpose.xlu0.c.b16.start [1/8] %v1037, 128
  %1070 = vxpose.xlu0.c.b16.cont [2/8] %v1038, 128
  %1071 = vxpose.xlu0.c.b16.cont [3/8] %v1039, 128
  %1072 = vxpose.xlu0.c.b16.cont [4/8] %v1040, 128
  %1073 = vxpose.xlu0.c.b16.cont [5/8] %v1041, 128
  %1074 = vxpose.xlu0.c.b16.cont [6/8] %v1042, 128
  %1075 = vxpose.xlu0.c.b16.cont [7/8] %v1043, 128
  %1076 = vxpose.xlu0.c.b16.end [8/8] %v1044, 128
  %v1077 = vpop.trf.xlu0
  %v1078 = vpop.trf.xlu0
  %v1079 = vpop.trf.xlu0
  %v1080 = vpop.trf.xlu0
  %v1081 = vpop.trf.xlu0
  %v1082 = vpop.trf.xlu0
  %v1083 = vpop.trf.xlu0
  %v1084 = vpop.trf.xlu0
  %1085 = vxpose.xlu0.c.b16.start [1/8] %v1045, 128
  %1086 = vxpose.xlu0.c.b16.cont [2/8] %v1046, 128
  %1087 = vxpose.xlu0.c.b16.cont [3/8] %v1047, 128
  %1088 = vxpose.xlu0.c.b16.cont [4/8] %v1048, 128
  %1089 = vxpose.xlu0.c.b16.cont [5/8] %v1049, 128
  %1090 = vxpose.xlu0.c.b16.cont [6/8] %v1050, 128
  %1091 = vxpose.xlu0.c.b16.cont [7/8] %v1051, 128
  %1092 = vxpose.xlu0.c.b16.end [8/8] %v1052, 128
  %v1093 = vpop.trf.xlu0
  %v1094 = vpop.trf.xlu0
  %v1095 = vpop.trf.xlu0
  %v1096 = vpop.trf.xlu0
  %v1097 = vpop.trf.xlu0
  %v1098 = vpop.trf.xlu0
  %v1099 = vpop.trf.xlu0
  %v1100 = vpop.trf.xlu0
  %v1102 = vshrl.u32 %v31, 16
  %v1104 = vrot.slane %v1102, 4
  %v1105 = vshll.u32 %v31, 16
  %v1107 = vrot.slane %v1105, 5
  %v1108 = vor.u32 %v1104, %v1107
  %v1109 = vrot.slane %v1108, 4
  %v1111 = vshll.u32 %v32, 16
  %v1113 = vrot.slane %v1111, 5
  %v1114 = vsel %vm225, %v1109, %v1113
  %v1116 = vshrl.u32 %v51, 16
  %v1118 = vrot.slane %v1116, 4
  %v1119 = vshll.u32 %v51, 16
  %v1121 = vrot.slane %v1119, 5
  %v1122 = vor.u32 %v1118, %v1121
  %v1123 = vrot.slane %v1122, 4
  %v1125 = vshll.u32 %v52, 16
  %v1127 = vrot.slane %v1125, 5
  %v1128 = vsel %vm225, %v1123, %v1127
  %v1130 = vshrl.u32 %v71, 16
  %v1132 = vrot.slane %v1130, 4
  %v1133 = vshll.u32 %v71, 16
  %v1135 = vrot.slane %v1133, 5
  %v1136 = vor.u32 %v1132, %v1135
  %v1137 = vrot.slane %v1136, 4
  %v1139 = vshll.u32 %v72, 16
  %v1141 = vrot.slane %v1139, 5
  %v1142 = vsel %vm225, %v1137, %v1141
  %v1144 = vshrl.u32 %v91, 16
  %v1146 = vrot.slane %v1144, 4
  %v1147 = vshll.u32 %v91, 16
  %v1149 = vrot.slane %v1147, 5
  %v1150 = vor.u32 %v1146, %v1149
  %v1151 = vrot.slane %v1150, 4
  %v1153 = vshll.u32 %v92, 16
  %v1155 = vrot.slane %v1153, 5
  %v1156 = vsel %vm225, %v1151, %v1155
  %v1157 = vunpack.c.l.b16 %v1114
  %v1158 = vunpack.c.l.b16 %v1128
  %v1159 = vunpack.c.l.b16 %v1142
  %v1160 = vunpack.c.l.b16 %v1156
  %v1161 = vpack.c.b16 %v676, %v675
  %v1162 = vpack.c.b16 %v678, %v677
  %v1163 = vpack.c.b16 %v680, %v679
  %v1164 = vpack.c.b16 %v1157, %v681
  %v1165 = vpack.c.b16 %v684, %v683
  %v1166 = vpack.c.b16 %v686, %v685
  %v1167 = vpack.c.b16 %v688, %v687
  %v1168 = vpack.c.b16 %v1158, %v689
  %v1169 = vpack.c.b16 %v692, %v691
  %v1170 = vpack.c.b16 %v694, %v693
  %v1171 = vpack.c.b16 %v696, %v695
  %v1172 = vpack.c.b16 %v1159, %v697
  %v1173 = vpack.c.b16 %v700, %v699
  %v1174 = vpack.c.b16 %v702, %v701
  %v1175 = vpack.c.b16 %v704, %v703
  %v1176 = vpack.c.b16 %v1160, %v705
  %1193 = vxpose.xlu0.c.b16.start [1/8] %v1161, 128
  %1194 = vxpose.xlu0.c.b16.cont [2/8] %v1162, 128
  %1195 = vxpose.xlu0.c.b16.cont [3/8] %v1163, 128
  %1196 = vxpose.xlu0.c.b16.cont [4/8] %v1164, 128
  %1197 = vxpose.xlu0.c.b16.cont [5/8] %v1165, 128
  %1198 = vxpose.xlu0.c.b16.cont [6/8] %v1166, 128
  %1199 = vxpose.xlu0.c.b16.cont [7/8] %v1167, 128
  %1200 = vxpose.xlu0.c.b16.end [8/8] %v1168, 128
  %v1201 = vpop.trf.xlu0
  %v1202 = vpop.trf.xlu0
  %v1203 = vpop.trf.xlu0
  %v1204 = vpop.trf.xlu0
  %v1205 = vpop.trf.xlu0
  %v1206 = vpop.trf.xlu0
  %v1207 = vpop.trf.xlu0
  %v1208 = vpop.trf.xlu0
  %1209 = vxpose.xlu0.c.b16.start [1/8] %v1169, 128
  %1210 = vxpose.xlu0.c.b16.cont [2/8] %v1170, 128
  %1211 = vxpose.xlu0.c.b16.cont [3/8] %v1171, 128
  %1212 = vxpose.xlu0.c.b16.cont [4/8] %v1172, 128
  %1213 = vxpose.xlu0.c.b16.cont [5/8] %v1173, 128
  %1214 = vxpose.xlu0.c.b16.cont [6/8] %v1174, 128
  %1215 = vxpose.xlu0.c.b16.cont [7/8] %v1175, 128
  %1216 = vxpose.xlu0.c.b16.end [8/8] %v1176, 128
  %v1217 = vpop.trf.xlu0
  %v1218 = vpop.trf.xlu0
  %v1219 = vpop.trf.xlu0
  %v1220 = vpop.trf.xlu0
  %v1221 = vpop.trf.xlu0
  %v1222 = vpop.trf.xlu0
  %v1223 = vpop.trf.xlu0
  %v1224 = vpop.trf.xlu0
  %v1229 = vrot.slane %v31, 5
  %v1230 = vrot.slane %v1229, 4
  %v1231 = vrot.slane %v32, 5
  %v1232 = vsel %vm804, %v1230, %v1231
  %v1233 = vrot.slane %v51, 5
  %v1234 = vrot.slane %v1233, 4
  %v1235 = vrot.slane %v52, 5
  %v1236 = vsel %vm804, %v1234, %v1235
  %v1237 = vrot.slane %v71, 5
  %v1238 = vrot.slane %v1237, 4
  %v1239 = vrot.slane %v72, 5
  %v1240 = vsel %vm804, %v1238, %v1239
  %v1241 = vrot.slane %v91, 5
  %v1242 = vrot.slane %v1241, 4
  %v1243 = vrot.slane %v92, 5
  %v1244 = vsel %vm804, %v1242, %v1243
  %v1245 = vunpack.c.l.b16 %v1232
  %v1246 = vunpack.c.l.b16 %v1236
  %v1247 = vunpack.c.l.b16 %v1240
  %v1248 = vunpack.c.l.b16 %v1244
  %v1249 = vpack.c.b16 %v935, %v934
  %v1250 = vpack.c.b16 %v937, %v936
  %v1251 = vpack.c.b16 %v939, %v938
  %v1252 = vpack.c.b16 %v1245, %v940
  %v1253 = vpack.c.b16 %v943, %v942
  %v1254 = vpack.c.b16 %v945, %v944
  %v1255 = vpack.c.b16 %v947, %v946
  %v1256 = vpack.c.b16 %v1246, %v948
  %v1257 = vpack.c.b16 %v951, %v950
  %v1258 = vpack.c.b16 %v953, %v952
  %v1259 = vpack.c.b16 %v955, %v954
  %v1260 = vpack.c.b16 %v1247, %v956
  %v1261 = vpack.c.b16 %v959, %v958
  %v1262 = vpack.c.b16 %v961, %v960
  %v1263 = vpack.c.b16 %v963, %v962
  %v1264 = vpack.c.b16 %v1248, %v964
  %1281 = vxpose.xlu0.c.b16.start [1/8] %v1249, 128
  %1282 = vxpose.xlu0.c.b16.cont [2/8] %v1250, 128
  %1283 = vxpose.xlu0.c.b16.cont [3/8] %v1251, 128
  %1284 = vxpose.xlu0.c.b16.cont [4/8] %v1252, 128
  %1285 = vxpose.xlu0.c.b16.cont [5/8] %v1253, 128
  %1286 = vxpose.xlu0.c.b16.cont [6/8] %v1254, 128
  %1287 = vxpose.xlu0.c.b16.cont [7/8] %v1255, 128
  %1288 = vxpose.xlu0.c.b16.end [8/8] %v1256, 128
  %v1289 = vpop.trf.xlu0
  %v1290 = vpop.trf.xlu0
  %v1291 = vpop.trf.xlu0
  %v1292 = vpop.trf.xlu0
  %v1293 = vpop.trf.xlu0
  %v1294 = vpop.trf.xlu0
  %v1295 = vpop.trf.xlu0
  %v1296 = vpop.trf.xlu0
  %1297 = vxpose.xlu0.c.b16.start [1/8] %v1257, 128
  %1298 = vxpose.xlu0.c.b16.cont [2/8] %v1258, 128
  %1299 = vxpose.xlu0.c.b16.cont [3/8] %v1259, 128
  %1300 = vxpose.xlu0.c.b16.cont [4/8] %v1260, 128
  %1301 = vxpose.xlu0.c.b16.cont [5/8] %v1261, 128
  %1302 = vxpose.xlu0.c.b16.cont [6/8] %v1262, 128
  %1303 = vxpose.xlu0.c.b16.cont [7/8] %v1263, 128
  %1304 = vxpose.xlu0.c.b16.end [8/8] %v1264, 128
  %v1305 = vpop.trf.xlu0
  %v1306 = vpop.trf.xlu0
  %v1307 = vpop.trf.xlu0
  %v1308 = vpop.trf.xlu0
  %v1309 = vpop.trf.xlu0
  %v1310 = vpop.trf.xlu0
  %v1311 = vpop.trf.xlu0
  %v1312 = vpop.trf.xlu0
  %v1317 = vunpack.c.l.b16 %v33
  %v1318 = vunpack.c.l.b16 %v53
  %v1319 = vunpack.c.l.b16 %v73
  %v1320 = vunpack.c.l.b16 %v93
  %v1321 = vpack.c.b16 %v1317, %v1033
  %v1322 = vpack.c.b16 %v1318, %v1034
  %v1323 = vpack.c.b16 %v1319, %v1035
  %v1324 = vpack.c.b16 %v1320, %v1036
  %1329 = vxpose.xlu0.c.b16.start [1/8] %v160, 128
  %1330 = vxpose.xlu0.c.b16.cont [2/8] %v161, 128
  %1331 = vxpose.xlu0.c.b16.cont [3/8] %v162, 128
  %1332 = vxpose.xlu0.c.b16.cont [4/8] %v1321, 128
  %1333 = vxpose.xlu0.c.b16.cont [5/8] %v164, 128
  %1334 = vxpose.xlu0.c.b16.cont [6/8] %v165, 128
  %1335 = vxpose.xlu0.c.b16.cont [7/8] %v166, 128
  %1336 = vxpose.xlu0.c.b16.end [8/8] %v1322, 128
  %v1337 = vpop.trf.xlu0
  %v1338 = vpop.trf.xlu0
  %v1339 = vpop.trf.xlu0
  %v1340 = vpop.trf.xlu0
  %v1341 = vpop.trf.xlu0
  %v1342 = vpop.trf.xlu0
  %v1343 = vpop.trf.xlu0
  %v1344 = vpop.trf.xlu0
  %1345 = vxpose.xlu0.c.b16.start [1/8] %v168, 128
  %1346 = vxpose.xlu0.c.b16.cont [2/8] %v169, 128
  %1347 = vxpose.xlu0.c.b16.cont [3/8] %v170, 128
  %1348 = vxpose.xlu0.c.b16.cont [4/8] %v1323, 128
  %1349 = vxpose.xlu0.c.b16.cont [5/8] %v172, 128
  %1350 = vxpose.xlu0.c.b16.cont [6/8] %v173, 128
  %1351 = vxpose.xlu0.c.b16.cont [7/8] %v174, 128
  %1352 = vxpose.xlu0.c.b16.end [8/8] %v1324, 128
  %v1353 = vpop.trf.xlu0
  %v1354 = vpop.trf.xlu0
  %v1355 = vpop.trf.xlu0
  %v1356 = vpop.trf.xlu0
  %v1357 = vpop.trf.xlu0
  %v1358 = vpop.trf.xlu0
  %v1359 = vpop.trf.xlu0
  %v1360 = vpop.trf.xlu0
  %v1362 = vshrl.u32 %v33, 16
  %v1364 = vrot.slane %v1362, 4
  %v1365 = vshll.u32 %v33, 16
  %v1367 = vrot.slane %v1365, 5
  %v1368 = vor.u32 %v1364, %v1367
  %v1369 = vrot.slane %v1368, 4
  %v1371 = vshll.u32 %v34, 16
  %v1373 = vrot.slane %v1371, 5
  %v1374 = vsel %vm225, %v1369, %v1373
  %v1376 = vshrl.u32 %v53, 16
  %v1378 = vrot.slane %v1376, 4
  %v1379 = vshll.u32 %v53, 16
  %v1381 = vrot.slane %v1379, 5
  %v1382 = vor.u32 %v1378, %v1381
  %v1383 = vrot.slane %v1382, 4
  %v1385 = vshll.u32 %v54, 16
  %v1387 = vrot.slane %v1385, 5
  %v1388 = vsel %vm225, %v1383, %v1387
  %v1390 = vshrl.u32 %v73, 16
  %v1392 = vrot.slane %v1390, 4
  %v1393 = vshll.u32 %v73, 16
  %v1395 = vrot.slane %v1393, 5
  %v1396 = vor.u32 %v1392, %v1395
  %v1397 = vrot.slane %v1396, 4
  %v1399 = vshll.u32 %v74, 16
  %v1401 = vrot.slane %v1399, 5
  %v1402 = vsel %vm225, %v1397, %v1401
  %v1404 = vshrl.u32 %v93, 16
  %v1406 = vrot.slane %v1404, 4
  %v1407 = vshll.u32 %v93, 16
  %v1409 = vrot.slane %v1407, 5
  %v1410 = vor.u32 %v1406, %v1409
  %v1411 = vrot.slane %v1410, 4
  %v1413 = vshll.u32 %v94, 16
  %v1415 = vrot.slane %v1413, 5
  %v1416 = vsel %vm225, %v1411, %v1415
  %v1417 = vunpack.c.l.b16 %v1374
  %v1418 = vunpack.c.l.b16 %v1388
  %v1419 = vunpack.c.l.b16 %v1402
  %v1420 = vunpack.c.l.b16 %v1416
  %v1421 = vpack.c.b16 %v1417, %v1157
  %v1422 = vpack.c.b16 %v1418, %v1158
  %v1423 = vpack.c.b16 %v1419, %v1159
  %v1424 = vpack.c.b16 %v1420, %v1160
  %1429 = vxpose.xlu0.c.b16.start [1/8] %v707, 128
  %1430 = vxpose.xlu0.c.b16.cont [2/8] %v708, 128
  %1431 = vxpose.xlu0.c.b16.cont [3/8] %v709, 128
  %1432 = vxpose.xlu0.c.b16.cont [4/8] %v1421, 128
  %1433 = vxpose.xlu0.c.b16.cont [5/8] %v711, 128
  %1434 = vxpose.xlu0.c.b16.cont [6/8] %v712, 128
  %1435 = vxpose.xlu0.c.b16.cont [7/8] %v713, 128
  %1436 = vxpose.xlu0.c.b16.end [8/8] %v1422, 128
  %v1437 = vpop.trf.xlu0
  %v1438 = vpop.trf.xlu0
  %v1439 = vpop.trf.xlu0
  %v1440 = vpop.trf.xlu0
  %v1441 = vpop.trf.xlu0
  %v1442 = vpop.trf.xlu0
  %v1443 = vpop.trf.xlu0
  %v1444 = vpop.trf.xlu0
  %1445 = vxpose.xlu0.c.b16.start [1/8] %v715, 128
  %1446 = vxpose.xlu0.c.b16.cont [2/8] %v716, 128
  %1447 = vxpose.xlu0.c.b16.cont [3/8] %v717, 128
  %1448 = vxpose.xlu0.c.b16.cont [4/8] %v1423, 128
  %1449 = vxpose.xlu0.c.b16.cont [5/8] %v719, 128
  %1450 = vxpose.xlu0.c.b16.cont [6/8] %v720, 128
  %1451 = vxpose.xlu0.c.b16.cont [7/8] %v721, 128
  %1452 = vxpose.xlu0.c.b16.end [8/8] %v1424, 128
  %v1453 = vpop.trf.xlu0
  %v1454 = vpop.trf.xlu0
  %v1455 = vpop.trf.xlu0
  %v1456 = vpop.trf.xlu0
  %v1457 = vpop.trf.xlu0
  %v1458 = vpop.trf.xlu0
  %v1459 = vpop.trf.xlu0
  %v1460 = vpop.trf.xlu0
  %v1465 = vrot.slane %v33, 5
  %v1466 = vrot.slane %v1465, 4
  %v1467 = vrot.slane %v34, 5
  %v1468 = vsel %vm804, %v1466, %v1467
  %v1469 = vrot.slane %v53, 5
  %v1470 = vrot.slane %v1469, 4
  %v1471 = vrot.slane %v54, 5
  %v1472 = vsel %vm804, %v1470, %v1471
  %v1473 = vrot.slane %v73, 5
  %v1474 = vrot.slane %v1473, 4
  %v1475 = vrot.slane %v74, 5
  %v1476 = vsel %vm804, %v1474, %v1475
  %v1477 = vrot.slane %v93, 5
  %v1478 = vrot.slane %v1477, 4
  %v1479 = vrot.slane %v94, 5
  %v1480 = vsel %vm804, %v1478, %v1479
  %v1481 = vunpack.c.l.b16 %v1468
  %v1482 = vunpack.c.l.b16 %v1472
  %v1483 = vunpack.c.l.b16 %v1476
  %v1484 = vunpack.c.l.b16 %v1480
  %v1485 = vpack.c.b16 %v1481, %v1245
  %v1486 = vpack.c.b16 %v1482, %v1246
  %v1487 = vpack.c.b16 %v1483, %v1247
  %v1488 = vpack.c.b16 %v1484, %v1248
  %1493 = vxpose.xlu0.c.b16.start [1/8] %v966, 128
  %1494 = vxpose.xlu0.c.b16.cont [2/8] %v967, 128
  %1495 = vxpose.xlu0.c.b16.cont [3/8] %v968, 128
  %1496 = vxpose.xlu0.c.b16.cont [4/8] %v1485, 128
  %1497 = vxpose.xlu0.c.b16.cont [5/8] %v970, 128
  %1498 = vxpose.xlu0.c.b16.cont [6/8] %v971, 128
  %1499 = vxpose.xlu0.c.b16.cont [7/8] %v972, 128
  %1500 = vxpose.xlu0.c.b16.end [8/8] %v1486, 128
  %v1501 = vpop.trf.xlu0
  %v1502 = vpop.trf.xlu0
  %v1503 = vpop.trf.xlu0
  %v1504 = vpop.trf.xlu0
  %v1505 = vpop.trf.xlu0
  %v1506 = vpop.trf.xlu0
  %v1507 = vpop.trf.xlu0
  %v1508 = vpop.trf.xlu0
  %1509 = vxpose.xlu0.c.b16.start [1/8] %v974, 128
  %1510 = vxpose.xlu0.c.b16.cont [2/8] %v975, 128
  %1511 = vxpose.xlu0.c.b16.cont [3/8] %v976, 128
  %1512 = vxpose.xlu0.c.b16.cont [4/8] %v1487, 128
  %1513 = vxpose.xlu0.c.b16.cont [5/8] %v978, 128
  %1514 = vxpose.xlu0.c.b16.cont [6/8] %v979, 128
  %1515 = vxpose.xlu0.c.b16.cont [7/8] %v980, 128
  %1516 = vxpose.xlu0.c.b16.end [8/8] %v1488, 128
  %v1517 = vpop.trf.xlu0
  %v1518 = vpop.trf.xlu0
  %v1519 = vpop.trf.xlu0
  %v1520 = vpop.trf.xlu0
  %v1521 = vpop.trf.xlu0
  %v1522 = vpop.trf.xlu0
  %v1523 = vpop.trf.xlu0
  %v1524 = vpop.trf.xlu0
  %v1525 = vld [vmem:[%s1] sm:$0xff]
  %v1526 = vld [vmem:[%s1 + $0x8] sm:$0x3]
  %v1527 = vld [vmem:[%s2] sm:$0xf]
  %1529 = vset.pattern.permute.xlu0 0
  %1530 = vperm.xlu0 %1529, %v1527
  %v1531 = vpop.permute.xlu0 %1530
  %v1535 = vcombine.high %v1525, %v1525
  %v1537 = vunpack.c.l.s4 1983009808
  %v1538 = vunpack.c.0.s8 %v1537
  %v1539 = vlaneseq
  %v1540 = vshrl.u32 %v1539, 7
  %v1541 = vsub.s32 %v1538, %v1540
  %v1542 = vrot.slane %v1525, %v1541
  %v1544 = vunpack.c.l.s4 1983009808
  %v1545 = vunpack.c.0.s8 %v1544
  %v1546 = vlaneseq
  %v1547 = vshrl.u32 %v1546, 7
  %v1548 = vsub.s32 %v1545, %v1547
  %v1549 = vrot.slane %v1535, %v1548
  %v1550 = vcombine.high %v1542, %v1542
  %v1551 = vcombine.high %v1549, %v1549
  %v1553 = vunpack.c.l.s4 1983009808
  %v1554 = vunpack.c.0.s8 %v1553
  %v1555 = vlaneseq
  %v1556 = vshrl.u32 %v1555, 7
  %v1557 = vsub.s32 %v1554, %v1556
  %v1558 = vrot.slane %v1526, %v1557
  %vm1563 = vcmask 523264
  %v1565 = vsel %vm1563, %v1558, 0
  %1567 = vmatprep.subr.bf16.mxu0 %v215
  %1568 = vmatpush1.bf16.msra.mxu0 %v199
  %1569 = vmatprep.subr.bf16.mxu0 %v216
  %1570 = vmatpush1.bf16.msra.mxu0 %v200
  %1571 = vmatprep.subr.bf16.mxu0 %v217
  %1572 = vmatpush1.bf16.msra.mxu0 %v201
  %1573 = vmatprep.subr.bf16.mxu0 %v218
  %1574 = vmatpush1.bf16.msra.mxu0 %v202
  %1575 = vmatprep.subr.bf16.mxu0 %v762
  %1576 = vmatpush1.bf16.msra.mxu0 %v746
  %1577 = vmatprep.subr.bf16.mxu0 %v763
  %1578 = vmatpush1.bf16.msra.mxu0 %v747
  %1579 = vmatprep.subr.bf16.mxu0 %v764
  %1580 = vmatpush1.bf16.msra.mxu0 %v748
  %1581 = vmatprep.subr.bf16.mxu0 %v765
  %1582 = vmatpush1.bf16.msra.mxu0 %v749
  %1583 = vmatprep.subr.bf16.mxu0 %v1021
  %1584 = vmatpush1.bf16.msra.mxu0 %v1005
  %1585 = vmatprep.subr.bf16.mxu0 %v1022
  %1586 = vmatpush1.bf16.msra.mxu0 %v1006
  %1587 = vmatprep.subr.bf16.mxu0 %v1023
  %1588 = vmatpush1.bf16.msra.mxu0 %v1007
  %1589 = vmatprep.subr.bf16.mxu0 %v1024
  %1590 = vmatpush1.bf16.msra.mxu0 %v1008
  %1591 = vmatprep.subr.bf16.mxu0 %v1093
  %1592 = vmatpush1.bf16.msra.mxu0 %v1077
  %1593 = vmatprep.subr.bf16.mxu0 %v1094
  %1594 = vmatpush1.bf16.msra.mxu0 %v1078
  %1595 = vmatprep.subr.bf16.mxu0 %v1095
  %1596 = vmatpush1.bf16.msra.mxu0 %v1079
  %1597 = vmatprep.subr.bf16.mxu0 %v1096
  %1598 = vmatpush1.bf16.msra.mxu0 %v1080
  %1599 = vmatprep.mubr.bf16.mxu0 %v1550
  %1600 = vmatmul.mubr.bf16.gmra.mrb[0].mxu0 %v1542
  %v1601 = vpop.f32.mrb[0].mxu0
  %v1602 = vadd.f32 %v1531, %v1601
  %v1603 = vpop.f32.mrb[0].mxu0
  %v1604 = vadd.f32 %v1531, %v1603
  %v1605 = vpop.f32.mrb[0].mxu0
  %v1606 = vpop.f32.mrb[0].mxu0
  %1607 = vdwg.mxu0
  %1608 = vmatprep.subr.bf16.mxu0 %v1217
  %1609 = vmatpush1.bf16.msra.mxu0 %v1201
  %1610 = vmatprep.subr.bf16.mxu0 %v1218
  %1611 = vmatpush1.bf16.msra.mxu0 %v1202
  %1612 = vmatprep.subr.bf16.mxu0 %v1219
  %1613 = vmatpush1.bf16.msra.mxu0 %v1203
  %1614 = vmatprep.subr.bf16.mxu0 %v1220
  %1615 = vmatpush1.bf16.msra.mxu0 %v1204
  %1616 = vmatprep.subr.bf16.mxu0 %v1305
  %1617 = vmatpush1.bf16.msra.mxu0 %v1289
  %1618 = vmatprep.subr.bf16.mxu0 %v1306
  %1619 = vmatpush1.bf16.msra.mxu0 %v1290
  %1620 = vmatprep.subr.bf16.mxu0 %v1307
  %1621 = vmatpush1.bf16.msra.mxu0 %v1291
  %1622 = vmatprep.subr.bf16.mxu0 %v1308
  %1623 = vmatpush1.bf16.msra.mxu0 %v1292
  %1624 = vmatprep.subr.bf16.mxu0 %v1353
  %1625 = vmatpush1.bf16.msra.mxu0 %v1337
  %1626 = vmatprep.subr.bf16.mxu0 %v1354
  %1627 = vmatpush1.bf16.msra.mxu0 %v1338
  %1628 = vmatprep.subr.bf16.mxu0 %v1355
  %1629 = vmatpush1.bf16.msra.mxu0 %v1339
  %1630 = vmatprep.subr.bf16.mxu0 %v1356
  %1631 = vmatpush1.bf16.msra.mxu0 %v1340
  %1632 = vmatprep.subr.bf16.mxu0 %v1453
  %1633 = vmatpush1.bf16.msra.mxu0 %v1437
  %1634 = vmatprep.subr.bf16.mxu0 %v1454
  %1635 = vmatpush1.bf16.msra.mxu0 %v1438
  %1636 = vmatprep.subr.bf16.mxu0 %v1455
  %1637 = vmatpush1.bf16.msra.mxu0 %v1439
  %1638 = vmatprep.subr.bf16.mxu0 %v1456
  %1639 = vmatpush1.bf16.msra.mxu0 %v1440
  %1640 = vmatprep.mubr.bf16.mxu0 %v1551
  %1641 = vmatmul.mubr.bf16.gmra.mrb[0].mxu0 %v1549
  %v1642 = vpop.f32.mrb[0].mxu0
  %v1643 = vadd.f32 %v1602, %v1642
  %v1644 = vpop.f32.mrb[0].mxu0
  %v1645 = vadd.f32 %v1604, %v1644
  %v1646 = vpop.f32.mrb[0].mxu0
  %v1647 = vpop.f32.mrb[0].mxu0
  %1648 = vdwg.mxu0
  %1649 = vmatprep.subr.bf16.mxu0 %v1517
  %1650 = vmatpush1.bf16.msra.mxu0 %v1501
  %1651 = vmatprep.subr.bf16.mxu0 %v1518
  %1652 = vmatpush1.bf16.msra.mxu0 %v1502
  %1653 = vmatprep.subr.bf16.mxu0 %v1519
  %1654 = vmatpush1.bf16.msra.mxu0 %v1503
  %1655 = vmatprep.subr.bf16.mxu0 %v1520
  %1656 = vmatpush1.bf16.msra.mxu0 %v1504
  %1657 = vmatprep.subr.bf16.mxu0 0
  %1658 = vmatpush1.bf16.msra.mxu0 0
  %1659 = vmatprep.subr.bf16.mxu0 0
  %1660 = vmatpush1.bf16.msra.mxu0 0
  %1661 = vmatprep.subr.bf16.mxu0 0
  %1662 = vmatpush1.bf16.msra.mxu0 0
  %1663 = vmatprep.subr.bf16.mxu0 0
  %1664 = vmatpush1.bf16.msra.mxu0 0
  %1665 = vmatprep.subr.bf16.mxu0 0
  %1666 = vmatpush1.bf16.msra.mxu0 0
  %1667 = vmatprep.subr.bf16.mxu0 0
  %1668 = vmatpush1.bf16.msra.mxu0 0
  %1669 = vmatprep.subr.bf16.mxu0 0
  %1670 = vmatpush1.bf16.msra.mxu0 0
  %1671 = vmatprep.subr.bf16.mxu0 0
  %1672 = vmatpush1.bf16.msra.mxu0 0
  %1673 = vmatprep.subr.bf16.mxu0 0
  %1674 = vmatpush1.bf16.msra.mxu0 0
  %1675 = vmatprep.subr.bf16.mxu0 0
  %1676 = vmatpush1.bf16.msra.mxu0 0
  %1677 = vmatprep.subr.bf16.mxu0 0
  %1678 = vmatpush1.bf16.msra.mxu0 0
  %1679 = vmatprep.subr.bf16.mxu0 0
  %1680 = vmatpush1.bf16.msra.mxu0 0
  %1681 = vmatprep.mubr.bf16.mxu0 0
  %1682 = vmatmul.mubr.bf16.gmra.mrb[0].mxu0 %v1565
  %v1683 = vpop.f32.mrb[0].mxu0
  %v1684 = vadd.f32 %v1643, %v1683
  %v1685 = vpop.f32.mrb[0].mxu0
  %v1686 = vadd.f32 %v1645, %v1685
  %v1687 = vpop.f32.mrb[0].mxu0
  %v1688 = vpop.f32.mrb[0].mxu0
  %1689 = vdwg.mxu0
  %v1690 = vtanh.pop %v1684
  %v1691 = vtanh.pop %v1686
  %v1694 = vcombine.low %v1690, %v1691
  %1696 = vst [vmem:[%s3] sm:$0xff] %v1694
  // Predicated region
  $region14: #{generator_forward.5} parent=0 // pred_check
    _
  $region15: #{generator_forward.5} parent=0 // pred_check_branch
    %1698 = sbr.rel (0) target = $region17
  $region16: #{generator_forward.5} parent=0 // pred_region
    _
  $region17: #{generator_forward.5} parent=0 // pred_fallthru
    _
  // Predicated region
  $region18: #{generator_forward.5} parent=0 // pred_check
    _
  $region19: #{generator_forward.5} parent=0 // pred_check_branch
    %1700 = sbr.rel (0) target = $region21
  $region20: #{generator_forward.5} parent=0 // pred_region
    _
  $region21: #{generator_forward.5} parent=0 // pred_fallthru
    _

// kernel: generator_forward.3
$region0: #{generator_forward.3}
  #allocation0 [shape = 'u32[]', space=smem, size = 0x4, offset = 0x4, fixed_abs, tag = 'smem constant byte address 0x4 - core index']
  #allocation1 [shape = 'u32[144,128]{1,0:T(1,128)}', space=vmem, size = 0x12000, scoped, tag = 'internal scratch']
  %s0 = inlined_call_operand.vmem [shape: f32[4,44], index: 0, kind: input, shape index: {}]
  %s1 = inlined_call_operand.hbm [shape: bf16[44,1024], index: 1, kind: input, shape index: {}]
  %s2 = inlined_call_operand.hbm [shape: f32[1,1024], index: 2, kind: input, shape index: {}]
  %s3 = inlined_call_operand.hbm [shape: f32[1,1024], index: 3, kind: input, shape index: {}]
  %s4 = inlined_call_operand.hbm [shape: bf16[1024,2048], index: 4, kind: input, shape index: {}]
  %s5 = inlined_call_operand.hbm [shape: f32[1,2048], index: 5, kind: input, shape index: {}]
  %s6 = inlined_call_operand.hbm [shape: f32[1,2048], index: 6, kind: input, shape index: {}]
  %s7 = inlined_call_operand.vmem [shape: bf16[4,2048], index: 7, kind: output, shape index: {}]
  %s8 = sld [smem:[#allocation0]]
  $region85: #{generator_forward.3} parent=0
    _
  %s10 = ssub.s32 1, %s8
  %s11 = scalar_select 0, %s10, %s8
  $region1: #{generator_forward.3} parent=0
    #allocation2 [shape = 'u8[98304]{0}', space=vmem, size = 0x18000, scoped, tag = 'input window, operand 1, single buffered']
    #allocation3 [shape = 's32[2]{0}', space=sflag, size = 0x8, scoped, tag = 'scoped memory for generator_forward.3']
    #allocation4 [shape = 'u8[4096]{0}', space=vmem, size = 0x1000, scoped, tag = 'input window, operand 2, single buffered']
    #allocation5 [shape = 's32[1]{0}', space=sflag, size = 0x4, scoped, tag = 'scoped memory for generator_forward.3']
    #allocation6 [shape = 'u8[4096]{0}', space=vmem, size = 0x1000, scoped, tag = 'input window, operand 3, single buffered']
    #allocation7 [shape = 'u8[4194304]{0}', space=vmem, size = 0x400000, scoped, tag = 'input window, operand 4']
    #allocation8 [shape = 's32[2]{0}', space=sflag, size = 0x8, scoped, tag = 'scoped memory for generator_forward.3']
    #allocation9 [shape = 'u8[8192]{0}', space=vmem, size = 0x2000, scoped, tag = 'input window, operand 5']
    #allocation10 [shape = 'u8[8192]{0}', space=vmem, size = 0x2000, scoped, tag = 'input window, operand 6']
    #allocation11 [shape = 's32[2]{0}', space=sflag, size = 0x8, scoped, tag = 'scoped memory for generator_forward.3']
    %12 = vsyncpa [#allocation3], 0
    %13 = vsyncpa [#allocation5], 0
    %14 = vsyncpa [#allocation8], 0
    %s15 = scalar_lea.sflag [#allocation8], 1
    %16 = vsyncpa %s15, 0
    %17 = vsyncpa [#allocation11], 0
    %s18 = scalar_lea.sflag [#allocation11], 1
    %19 = vsyncpa %s18, 0
    loop: start=0, step=1, limit=4
    $region2: #{generator_forward.3} parent=1 // loop_pre_header
      _
    $region3: #{generator_forward.3} parent=1 // loop_header
      %s21 = sphi 0, %s25
      %p22 = scmp.ge.s32.totalorder %s21, 4
      %s29 = sphi 0, %s29
      %s31 = sphi 0, %s29
      %s32 = sphi 0, %s31
      %s46 = sphi 0, %s32
      %s50 = sphi 0, %s50
      %s52 = sphi 0, %s50
      %s53 = sphi 0, %s52
      %s67 = sphi 0, %s53
      %s71 = sphi 0, %s71
      %s73 = sphi 0, %s71
      %s74 = sphi 0, %s73
      %s88 = sphi 0, %s74
      %s92 = sphi 0, %s92
      %s94 = sphi 0, %s92
      %s95 = sphi 0, %s94
      %s109 = sphi 0, %s95
      %s115 = sphi 0, %s117
      %s118 = sphi 0, %s115
      %s119 = sphi 0, %s118
      %s135 = sphi 0, %s119
      %s141 = sphi 0, %s143
      %s144 = sphi 0, %s141
      %s145 = sphi 0, %s144
      %s161 = sphi 0, %s145
      %s167 = sphi 0, %s169
      %s170 = sphi 0, %s167
      %s171 = sphi 0, %s170
      %s187 = sphi 0, %s171
      %s193 = sphi 0, %s195
      %s196 = sphi 0, %s193
      %s197 = sphi 0, %s196
      %s213 = sphi 0, %s197
    $region4: #{generator_forward.3} parent=1 // loop_header_branch
      %24 = sbr.rel (%p22) target = $region8
    $region5: #{generator_forward.3} parent=1 // loop_body
      %s26 = ssub.s32 %s21, 1
      %s27 = ssub.s32 %s21, 2
      %s28 = sadd.s32 %s21, 1
      %s30 = sadd.s32 %s29, 1
      %p33 = scmp.eq.s32.totalorder %s21, 1
      %p34 = scmp.ne.s32.totalorder %s29, %s31
      %p35 = scmp.eq.s32.totalorder %s21, 0
      %p36 = por %p34, %p35
      %p37 = scmp.ne.s32.totalorder %s29, %s31
      %p38 = scmp.eq.s32.totalorder %s26, 1
      %p39 = por %p37, %p38
      %p40 = scmp.ne.s32.totalorder %s31, %s32
      %p41 = scmp.eq.s32.totalorder %s26, 0
      %p42 = por %p40, %p41
      %p43 = scmp.ne.s32.totalorder %s31, %s32
      %p44 = scmp.eq.s32.totalorder %s27, 1
      %p45 = por %p43, %p44
      %p47 = scmp.ne.s32.totalorder %s32, %s46
      %p48 = scmp.eq.s32.totalorder %s27, 0
      %p49 = por %p47, %p48
      %s51 = sadd.s32 %s50, 1
      %p54 = scmp.eq.s32.totalorder %s21, 1
      %p55 = scmp.ne.s32.totalorder %s50, %s52
      %p56 = scmp.eq.s32.totalorder %s21, 0
      %p57 = por %p55, %p56
      %p58 = scmp.ne.s32.totalorder %s50, %s52
      %p59 = scmp.eq.s32.totalorder %s26, 1
      %p60 = por %p58, %p59
      %p61 = scmp.ne.s32.totalorder %s52, %s53
      %p62 = scmp.eq.s32.totalorder %s26, 0
      %p63 = por %p61, %p62
      %p64 = scmp.ne.s32.totalorder %s52, %s53
      %p65 = scmp.eq.s32.totalorder %s27, 1
      %p66 = por %p64, %p65
      %p68 = scmp.ne.s32.totalorder %s53, %s67
      %p69 = scmp.eq.s32.totalorder %s27, 0
      %p70 = por %p68, %p69
      %s72 = sadd.s32 %s71, 1
      %p75 = scmp.eq.s32.totalorder %s21, 1
      %p76 = scmp.ne.s32.totalorder %s71, %s73
      %p77 = scmp.eq.s32.totalorder %s21, 0
      %p78 = por %p76, %p77
      %p79 = scmp.ne.s32.totalorder %s71, %s73
      %p80 = scmp.eq.s32.totalorder %s26, 1
      %p81 = por %p79, %p80
      %p82 = scmp.ne.s32.totalorder %s73, %s74
      %p83 = scmp.eq.s32.totalorder %s26, 0
      %p84 = por %p82, %p83
      %p85 = scmp.ne.s32.totalorder %s73, %s74
      %p86 = scmp.eq.s32.totalorder %s27, 1
      %p87 = por %p85, %p86
      %p89 = scmp.ne.s32.totalorder %s74, %s88
      %p90 = scmp.eq.s32.totalorder %s27, 0
      %p91 = por %p89, %p90
      %s93 = sadd.s32 %s92, 1
      %p96 = scmp.eq.s32.totalorder %s21, 1
      %p97 = scmp.ne.s32.totalorder %s92, %s94
      %p98 = scmp.eq.s32.totalorder %s21, 0
      %p99 = por %p97, %p98
      %p100 = scmp.ne.s32.totalorder %s92, %s94
      %p101 = scmp.eq.s32.totalorder %s26, 1
      %p102 = por %p100, %p101
      %p103 = scmp.ne.s32.totalorder %s94, %s95
      %p104 = scmp.eq.s32.totalorder %s26, 0
      %p105 = por %p103, %p104
      %p106 = scmp.ne.s32.totalorder %s94, %s95
      %p107 = scmp.eq.s32.totalorder %s27, 1
      %p108 = por %p106, %p107
      %p110 = scmp.ne.s32.totalorder %s95, %s109
      %p111 = scmp.eq.s32.totalorder %s27, 0
      %p112 = por %p110, %p111
      %s113 = ssub.s32 %s21, %s28
      %p114 = scmp.eq.s32.totalorder %s113, 0
      %s116 = sadd.s32 %s115, 1
      %s117 = scalar_select %p114, %s115, %s116
      %p120 = pneg %p114
      %p121 = scmp.eq.s32.totalorder %s21, 1
      %p122 = por %p120, %p121
      %p123 = scmp.ne.s32.totalorder %s115, %s118
      %p124 = scmp.eq.s32.totalorder %s21, 0
      %p125 = por %p123, %p124
      %p126 = scmp.ne.s32.totalorder %s115, %s118
      %p127 = scmp.eq.s32.totalorder %s26, 1
      %p128 = por %p126, %p127
      %p129 = scmp.ne.s32.totalorder %s118, %s119
      %p130 = scmp.eq.s32.totalorder %s26, 0
      %p131 = por %p129, %p130
      %p132 = scmp.ne.s32.totalorder %s118, %s119
      %p133 = scmp.eq.s32.totalorder %s27, 1
      %p134 = por %p132, %p133
      %p136 = scmp.ne.s32.totalorder %s119, %s135
      %p137 = scmp.eq.s32.totalorder %s27, 0
      %p138 = por %p136, %p137
      %s139 = ssub.s32 %s21, %s28
      %p140 = scmp.eq.s32.totalorder %s139, 0
      %s142 = sadd.s32 %s141, 1
      %s143 = scalar_select %p140, %s141, %s142
      %p146 = pneg %p140
      %p147 = scmp.eq.s32.totalorder %s21, 1
      %p148 = por %p146, %p147
      %p149 = scmp.ne.s32.totalorder %s141, %s144
      %p150 = scmp.eq.s32.totalorder %s21, 0
      %p151 = por %p149, %p150
      %p152 = scmp.ne.s32.totalorder %s141, %s144
      %p153 = scmp.eq.s32.totalorder %s26, 1
      %p154 = por %p152, %p153
      %p155 = scmp.ne.s32.totalorder %s144, %s145
      %p156 = scmp.eq.s32.totalorder %s26, 0
      %p157 = por %p155, %p156
      %p158 = scmp.ne.s32.totalorder %s144, %s145
      %p159 = scmp.eq.s32.totalorder %s27, 1
      %p160 = por %p158, %p159
      %p162 = scmp.ne.s32.totalorder %s145, %s161
      %p163 = scmp.eq.s32.totalorder %s27, 0
      %p164 = por %p162, %p163
      %s165 = ssub.s32 %s21, %s28
      %p166 = scmp.eq.s32.totalorder %s165, 0
      %s168 = sadd.s32 %s167, 1
      %s169 = scalar_select %p166, %s167, %s168
      %p172 = pneg %p166
      %p173 = scmp.eq.s32.totalorder %s21, 1
      %p174 = por %p172, %p173
      %p175 = scmp.ne.s32.totalorder %s167, %s170
      %p176 = scmp.eq.s32.totalorder %s21, 0
      %p177 = por %p175, %p176
      %p178 = scmp.ne.s32.totalorder %s167, %s170
      %p179 = scmp.eq.s32.totalorder %s26, 1
      %p180 = por %p178, %p179
      %p181 = scmp.ne.s32.totalorder %s170, %s171
      %p182 = scmp.eq.s32.totalorder %s26, 0
      %p183 = por %p181, %p182
      %p184 = scmp.ne.s32.totalorder %s170, %s171
      %p185 = scmp.eq.s32.totalorder %s27, 1
      %p186 = por %p184, %p185
      %p188 = scmp.ne.s32.totalorder %s171, %s187
      %p189 = scmp.eq.s32.totalorder %s27, 0
      %p190 = por %p188, %p189
      %s191 = ssub.s32 %s21, %s28
      %p192 = scmp.eq.s32.totalorder %s191, 0
      %s194 = sadd.s32 %s193, 1
      %s195 = scalar_select %p192, %s193, %s194
      %p198 = pneg %p192
      %p199 = scmp.eq.s32.totalorder %s21, 1
      %p200 = por %p198, %p199
      %p201 = scmp.ne.s32.totalorder %s193, %s196
      %p202 = scmp.eq.s32.totalorder %s21, 0
      %p203 = por %p201, %p202
      %p204 = scmp.ne.s32.totalorder %s193, %s196
      %p205 = scmp.eq.s32.totalorder %s26, 1
      %p206 = por %p204, %p205
      %p207 = scmp.ne.s32.totalorder %s196, %s197
      %p208 = scmp.eq.s32.totalorder %s26, 0
      %p209 = por %p207, %p208
      %p210 = scmp.ne.s32.totalorder %s196, %s197
      %p211 = scmp.eq.s32.totalorder %s27, 1
      %p212 = por %p210, %p211
      %p214 = scmp.ne.s32.totalorder %s197, %s213
      %p215 = scmp.eq.s32.totalorder %s27, 0
      %p216 = por %p214, %p215
      %p217 = scmp.le.s32.totalorder 1, %s21
      %p218 = scmp.lt.s32.totalorder %s21, 3
      %p219 = pnand %p217, %p218
      %p220 = pneg %p219
      // Predicated region
      $region9: #{generator_forward.3} parent=5 // pred_check
        _
      $region10: #{generator_forward.3} parent=5 // pred_check_branch
        %222 = sbr.rel (%p219) target = $region12
      $region11: #{generator_forward.3} parent=5 // pred_region
        %s223 = ssub.s32 %s21, 1
        // Predicated region
        $region13: #{generator_forward.3} parent=11 // pred_check
          %p224 = pneg %p42
        $region14: #{generator_forward.3} parent=11 // pred_check_branch
          %226 = sbr.rel (%p224) target = $region16
        $region15: #{generator_forward.3} parent=11 // pred_region
          _
        $region16: #{generator_forward.3} parent=11 // pred_fallthru
          _
        // Predicated region
        $region17: #{generator_forward.3} parent=11 // pred_check
          %p227 = pneg %p63
        $region18: #{generator_forward.3} parent=11 // pred_check_branch
          %229 = sbr.rel (%p227) target = $region20
        $region19: #{generator_forward.3} parent=11 // pred_region
          %s231 = ssub.s32 3072, 3072
          %232 = vsyncadd [#allocation3], %s231
          %s233 = sshll.u32 [#allocation2], 4
          %s234 = int_to_ptr.vmem [resolvable:$true] %s233
          %239 = dma.hbm_to_vmem [thread:$0]  %s1, 3072, %s234, [#allocation3], 512, 512, 32
        $region20: #{generator_forward.3} parent=11 // pred_fallthru
          _
        // Predicated region
        $region21: #{generator_forward.3} parent=11 // pred_check
          %p240 = pneg %p84
        $region22: #{generator_forward.3} parent=11 // pred_check_branch
          %242 = sbr.rel (%p240) target = $region24
        $region23: #{generator_forward.3} parent=11 // pred_region
          %s244 = ssub.s32 128, 128
          %245 = vsyncadd [#allocation5], %s244
          %s247 = sshll.u32 [#allocation4], 4
          %s248 = int_to_ptr.vmem [resolvable:$true] %s247
          %250 = dma.hbm_to_vmem [thread:$0]  %s2, 128, %s248, [#allocation5]
        $region24: #{generator_forward.3} parent=11 // pred_fallthru
          _
        // Predicated region
        $region25: #{generator_forward.3} parent=11 // pred_check
          %p251 = pneg %p105
        $region26: #{generator_forward.3} parent=11 // pred_check_branch
          %253 = sbr.rel (%p251) target = $region28
        $region27: #{generator_forward.3} parent=11 // pred_region
          %s255 = ssub.s32 128, 128
          %256 = vsyncadd [#allocation5], %s255
          %s258 = sshll.u32 [#allocation6], 4
          %s259 = int_to_ptr.vmem [resolvable:$true] %s258
          %261 = dma.hbm_to_vmem [thread:$0]  %s3, 128, %s259, [#allocation5]
        $region28: #{generator_forward.3} parent=11 // pred_fallthru
          _
      $region12: #{generator_forward.3} parent=5 // pred_fallthru
        _
      %p262 = scmp.lt.s32.totalorder %s21, 2
      // Predicated region
      $region29: #{generator_forward.3} parent=5 // pred_check
        %p263 = pneg %p262
      $region30: #{generator_forward.3} parent=5 // pred_check_branch
        %265 = sbr.rel (%p263) target = $region32
      $region31: #{generator_forward.3} parent=5 // pred_region
        // Predicated region
        $region33: #{generator_forward.3} parent=31 // pred_check
          %p266 = pneg %p125
        $region34: #{generator_forward.3} parent=31 // pred_check_branch
          %268 = sbr.rel (%p266) target = $region36
        $region35: #{generator_forward.3} parent=31 // pred_region
          %s269 = sand.u32 %s21, 1
          %s270 = scalar_lea.sflag [#allocation8], %s269
          %s271 = sand.u32 %s115, 1
          %s272 = smul.addr %s271, 4096
          %s273 = scalar_lea.vmem [#allocation7], %s272
          %s274 = smul.u32 8, %s21
          %s276 = ssub.s32 65536, 65536
          %277 = vsyncadd %s270, %s276
          %s278 = smul.addr %s274, 64
          %s279 = scalar_lea.hbm %s4, %s278
          %s280 = sshll.u32 %s273, 4
          %s281 = int_to_ptr.vmem [resolvable:$true] %s280
          %286 = dma.hbm_to_vmem [thread:$0]  %s279, 65536, %s281, %s270, 1024, 512, 32
        $region36: #{generator_forward.3} parent=31 // pred_fallthru
          _
        // Predicated region
        $region37: #{generator_forward.3} parent=31 // pred_check
          %p287 = pneg %p151
        $region38: #{generator_forward.3} parent=31 // pred_check_branch
          %289 = sbr.rel (%p287) target = $region40
        $region39: #{generator_forward.3} parent=31 // pred_region
          %s290 = sand.u32 %s21, 1
          %s291 = scalar_lea.sflag [#allocation8], %s290
          %s292 = sand.u32 %s141, 1
          %s293 = smul.addr %s292, 8
          %s294 = scalar_lea.vmem [#allocation9], %s293
          %s295 = smul.u32 8, %s21
          %s297 = ssub.s32 128, 128
          %298 = vsyncadd %s291, %s297
          %s299 = smul.addr %s295, 16
          %s300 = scalar_lea.hbm %s5, %s299
          %s302 = sshll.u32 %s294, 4
          %s303 = int_to_ptr.vmem [resolvable:$true] %s302
          %305 = dma.hbm_to_vmem [thread:$0]  %s300, 128, %s303, %s291
        $region40: #{generator_forward.3} parent=31 // pred_fallthru
          _
        // Predicated region
        $region41: #{generator_forward.3} parent=31 // pred_check
          %p306 = pneg %p177
        $region42: #{generator_forward.3} parent=31 // pred_check_branch
          %308 = sbr.rel (%p306) target = $region44
        $region43: #{generator_forward.3} parent=31 // pred_region
          %s309 = sand.u32 %s167, 1
          %s310 = scalar_lea.sflag [#allocation11], %s309
          %s311 = sand.u32 %s167, 1
          %s312 = smul.addr %s311, 8
          %s313 = scalar_lea.vmem [#allocation10], %s312
          %s314 = smul.u32 8, %s21
          %s316 = ssub.s32 128, 128
          %317 = vsyncadd %s310, %s316
          %s318 = smul.addr %s314, 16
          %s319 = scalar_lea.hbm %s6, %s318
          %s321 = sshll.u32 %s313, 4
          %s322 = int_to_ptr.vmem [resolvable:$true] %s321
          %324 = dma.hbm_to_vmem [thread:$0]  %s319, 128, %s322, %s310
        $region44: #{generator_forward.3} parent=31 // pred_fallthru
          _
      $region32: #{generator_forward.3} parent=5 // pred_fallthru
        _
      %p325 = scmp.le.s32.totalorder 1, %s21
      %p326 = scmp.lt.s32.totalorder %s21, 3
      %p327 = pnand %p325, %p326
      %p328 = pneg %p327
      // Predicated region
      $region45: #{generator_forward.3} parent=5 // pred_check
        _
      $region46: #{generator_forward.3} parent=5 // pred_check_branch
        %330 = sbr.rel (%p327) target = $region48
      $region47: #{generator_forward.3} parent=5 // pred_region
        %s331 = ssub.s32 %s21, 1
        // Predicated region
        $region49: #{generator_forward.3} parent=47 // pred_check
          %p332 = pneg %p63
        $region50: #{generator_forward.3} parent=47 // pred_check_branch
          %334 = sbr.rel (%p332) target = $region52
        $region51: #{generator_forward.3} parent=47 // pred_region
          %335 = dma.done [#allocation3], 3072
        $region52: #{generator_forward.3} parent=47 // pred_fallthru
          _
        // Predicated region
        $region53: #{generator_forward.3} parent=47 // pred_check
          %p336 = pneg %p84
        $region54: #{generator_forward.3} parent=47 // pred_check_branch
          %338 = sbr.rel (%p336) target = $region56
        $region55: #{generator_forward.3} parent=47 // pred_region
          %339 = dma.done [#allocation5], 128
        $region56: #{generator_forward.3} parent=47 // pred_fallthru
          _
        // Predicated region
        $region57: #{generator_forward.3} parent=47 // pred_check
          %p340 = pneg %p105
        $region58: #{generator_forward.3} parent=47 // pred_check_branch
          %342 = sbr.rel (%p340) target = $region60
        $region59: #{generator_forward.3} parent=47 // pred_region
          %343 = dma.done [#allocation5], 128
        $region60: #{generator_forward.3} parent=47 // pred_fallthru
          _
        %s344 = sand.u32 %s26, 1
        %s345 = scalar_lea.sflag [#allocation8], %s344
        %s346 = sand.u32 %s118, 1
        %s347 = smul.addr %s346, 4096
        %s348 = scalar_lea.vmem [#allocation7], %s347
        // Predicated region
        $region61: #{generator_forward.3} parent=47 // pred_check
          %p349 = pneg %p131
        $region62: #{generator_forward.3} parent=47 // pred_check_branch
          %351 = sbr.rel (%p349) target = $region64
        $region63: #{generator_forward.3} parent=47 // pred_region
          %352 = dma.done %s345, 65536
        $region64: #{generator_forward.3} parent=47 // pred_fallthru
          _
        %s353 = sand.u32 %s26, 1
        %s354 = scalar_lea.sflag [#allocation8], %s353
        %s355 = sand.u32 %s144, 1
        %s356 = smul.addr %s355, 8
        %s357 = scalar_lea.vmem [#allocation9], %s356
        // Predicated region
        $region65: #{generator_forward.3} parent=47 // pred_check
          %p358 = pneg %p157
        $region66: #{generator_forward.3} parent=47 // pred_check_branch
          %360 = sbr.rel (%p358) target = $region68
        $region67: #{generator_forward.3} parent=47 // pred_region
          %361 = dma.done %s354, 128
        $region68: #{generator_forward.3} parent=47 // pred_fallthru
          _
        %s362 = sand.u32 %s170, 1
        %s363 = scalar_lea.sflag [#allocation11], %s362
        %s364 = sand.u32 %s170, 1
        %s365 = smul.addr %s364, 8
        %s366 = scalar_lea.vmem [#allocation10], %s365
        // Predicated region
        $region69: #{generator_forward.3} parent=47 // pred_check
          %p367 = pneg %p183
        $region70: #{generator_forward.3} parent=47 // pred_check_branch
          %369 = sbr.rel (%p367) target = $region72
        $region71: #{generator_forward.3} parent=47 // pred_region
          %370 = dma.done %s363, 128
        $region72: #{generator_forward.3} parent=47 // pred_fallthru
          _
        %p371 = pneg %p42
        %p372 = pneg %p39
        %p373 = pneg %p63
        %p374 = pneg %p60
        %p375 = pneg %p84
        %p376 = pneg %p81
        %p377 = pneg %p105
        %p378 = pneg %p102
        %s379 = sand.u32 %s26, 1
        %s380 = scalar_lea.sflag [#allocation8], %s379
        %s381 = sand.u32 %s118, 1
        %s382 = smul.addr %s381, 4096
        %s383 = scalar_lea.vmem [#allocation7], %s382
        %p384 = pneg %p131
        %p385 = pneg %p128
        %s386 = sand.u32 %s26, 1
        %s387 = scalar_lea.sflag [#allocation8], %s386
        %s388 = sand.u32 %s144, 1
        %s389 = smul.addr %s388, 8
        %s390 = scalar_lea.vmem [#allocation9], %s389
        %p391 = pneg %p157
        %p392 = pneg %p154
        %s393 = sand.u32 %s170, 1
        %s394 = scalar_lea.sflag [#allocation11], %s393
        %s395 = sand.u32 %s170, 1
        %s396 = smul.addr %s395, 8
        %s397 = scalar_lea.vmem [#allocation10], %s396
        %p398 = pneg %p183
        %p399 = pneg %p180
        %p400 = pneg %p209
        %p401 = pneg %p206
        %s402 = smul.u32 8, %s26
        %p403 = scmp.lt.s32.totalorder %s402, 15
        %s404 = scalar_select %p403, %s402, 15
        %s405 = smul.addr %s404, 2
        %s406 = scalar_lea.vmem %s7, %s405
        %s407 = smul.u32 8, %s26
        %s408 = smul.u32 8, %s26
        %s409 = smul.u32 8, %s26
        %s410 = smul.u32 8, %s26
        %p411 = scmp.lt.s32.totalorder %s410, 15
        %s412 = scalar_select %p411, %s410, 15
        %s413 = smul.addr %s412, 2
        %s414 = scalar_lea.vmem %s7, %s413
        %s415 = smul.u32 8, %s26
        %v417 = vld [vmem:[%s0] sm:$0xf]
        %v418 = vpack.c.bf16 %v417, %v417
        %v419 = vld [vmem:[#allocation2] sm:$0xff]
        %v420 = vld [vmem:[#allocation2 + $0x8] sm:$0xff]
        %v421 = vld [vmem:[#allocation2 + $0x10] sm:$0xff]
        %v422 = vld [vmem:[#allocation2 + $0x18] sm:$0xff]
        %v423 = vld [vmem:[#allocation2 + $0x20] sm:$0xff]
        %v424 = vld [vmem:[#allocation2 + $0x28] sm:$0xff]
        %v425 = vld [vmem:[#allocation2 + $0x30] sm:$0xff]
        %v426 = vld [vmem:[#allocation2 + $0x38] sm:$0xff]
        %v427 = vld [vmem:[#allocation2 + $0x40] sm:$0xff]
        %v428 = vld [vmem:[#allocation2 + $0x48] sm:$0xff]
        %v429 = vld [vmem:[#allocation2 + $0x50] sm:$0xff]
        %v430 = vld [vmem:[#allocation2 + $0x58] sm:$0xff]
        %v431 = vld [vmem:[#allocation2 + $0x60] sm:$0xff]
        %v432 = vld [vmem:[#allocation2 + $0x68] sm:$0xff]
        %v433 = vld [vmem:[#allocation2 + $0x70] sm:$0xff]
        %v434 = vld [vmem:[#allocation2 + $0x78] sm:$0xff]
        %v435 = vld [vmem:[#allocation2 + $0x80] sm:$0xff]
        %v436 = vld [vmem:[#allocation2 + $0x88] sm:$0xff]
        %v437 = vld [vmem:[#allocation2 + $0x90] sm:$0xff]
        %v438 = vld [vmem:[#allocation2 + $0x98] sm:$0xff]
        %v439 = vld [vmem:[#allocation2 + $0xa0] sm:$0x33]
        %v440 = vld [vmem:[#allocation2 + $0xa8] sm:$0x33]
        %v441 = vld [vmem:[#allocation2 + $0xb0] sm:$0x33]
        %v442 = vld [vmem:[#allocation2 + $0xb8] sm:$0x33]
        %v467 = vunpack.c.l.b16 %v419
        %v468 = vunpack.c.h.b16 %v419
        %v469 = vunpack.c.l.b16 %v420
        %v470 = vunpack.c.h.b16 %v420
        %v471 = vunpack.c.l.b16 %v421
        %v472 = vunpack.c.h.b16 %v421
        %v473 = vunpack.c.l.b16 %v422
        %v474 = vunpack.c.h.b16 %v422
        %v475 = vunpack.c.l.b16 %v423
        %v476 = vunpack.c.h.b16 %v423
        %v477 = vunpack.c.l.b16 %v424
        %v478 = vunpack.c.h.b16 %v424
        %v479 = vunpack.c.l.b16 %v425
        %v480 = vunpack.c.h.b16 %v425
        %v481 = vunpack.c.l.b16 %v426
        %v482 = vunpack.c.h.b16 %v426
        %v483 = vunpack.c.l.b16 %v427
        %v484 = vunpack.c.h.b16 %v427
        %v485 = vunpack.c.l.b16 %v428
        %v486 = vunpack.c.h.b16 %v428
        %v487 = vunpack.c.l.b16 %v429
        %v488 = vunpack.c.h.b16 %v429
        %v489 = vunpack.c.l.b16 %v430
        %v490 = vunpack.c.h.b16 %v430
        %v491 = vunpack.c.l.b16 %v431
        %v492 = vunpack.c.h.b16 %v431
        %v493 = vunpack.c.l.b16 %v432
        %v494 = vunpack.c.h.b16 %v432
        %v495 = vunpack.c.l.b16 %v433
        %v496 = vunpack.c.h.b16 %v433
        %v497 = vunpack.c.l.b16 %v434
        %v498 = vunpack.c.h.b16 %v434
        %v499 = vunpack.c.l.b16 %v435
        %v500 = vunpack.c.h.b16 %v435
        %v501 = vunpack.c.l.b16 %v436
        %v502 = vunpack.c.h.b16 %v436
        %v503 = vunpack.c.l.b16 %v437
        %v504 = vunpack.c.h.b16 %v437
        %v505 = vunpack.c.l.b16 %v438
        %v506 = vunpack.c.h.b16 %v438
        %v507 = vunpack.c.l.b16 %v439
        %v508 = vunpack.c.h.b16 %v439
        %v509 = vunpack.c.l.b16 %v440
        %v510 = vunpack.c.h.b16 %v440
        %v511 = vunpack.c.l.b16 %v441
        %v512 = vunpack.c.h.b16 %v441
        %v513 = vunpack.c.l.b16 %v442
        %v514 = vunpack.c.h.b16 %v442
        %v515 = vpack.c.b16 %v475, %v467
        %v516 = vpack.c.b16 %v476, %v468
        %v517 = vpack.c.b16 %v477, %v469
        %v518 = vpack.c.b16 %v478, %v470
        %v519 = vpack.c.b16 %v479, %v471
        %v520 = vpack.c.b16 %v480, %v472
        %v521 = vpack.c.b16 %v481, %v473
        %v522 = vpack.c.b16 %v482, %v474
        %v523 = vpack.c.b16 %v491, %v483
        %v524 = vpack.c.b16 %v492, %v484
        %v525 = vpack.c.b16 %v493, %v485
        %v526 = vpack.c.b16 %v494, %v486
        %v527 = vpack.c.b16 %v495, %v487
        %v528 = vpack.c.b16 %v496, %v488
        %v529 = vpack.c.b16 %v497, %v489
        %v530 = vpack.c.b16 %v498, %v490
        %v531 = vpack.c.b16 %v507, %v499
        %v532 = vpack.c.b16 %v508, %v500
        %v533 = vpack.c.b16 %v509, %v501
        %v534 = vpack.c.b16 %v510, %v502
        %v535 = vpack.c.b16 %v511, %v503
        %v536 = vpack.c.b16 %v512, %v504
        %v537 = vpack.c.b16 %v513, %v505
        %v538 = vpack.c.b16 %v514, %v506
        %vm555 = vcmask 359424
        %v557 = vsel %vm555, %v418, 0
        %vm559 = vcmask 1045504
        %v561 = vsel %vm559, %v531, 0
        %v564 = vsel %vm559, %v532, 0
        %v567 = vsel %vm559, %v533, 0
        %v570 = vsel %vm559, %v534, 0
        %v573 = vsel %vm559, %v535, 0
        %v576 = vsel %vm559, %v536, 0
        %v579 = vsel %vm559, %v537, 0
        %v582 = vsel %vm559, %v538, 0
        %584 = vmatprep.subr.bf16.mxu0 %v516
        %585 = vmatpush1.bf16.msra.mxu0 %v515
        %586 = vmatprep.subr.bf16.mxu0 %v524
        %587 = vmatpush1.bf16.msra.mxu0 %v523
        %588 = vmatprep.subr.bf16.mxu0 %v564
        %589 = vmatpush1.bf16.msra.mxu0 %v561
        %590 = vmatprep.subr.bf16.mxu0 0
        %591 = vmatpush1.bf16.msra.mxu0 0
        %592 = vmatprep.subr.bf16.mxu0 0
        %593 = vmatpush1.bf16.msra.mxu0 0
        %594 = vmatprep.subr.bf16.mxu0 0
        %595 = vmatpush1.bf16.msra.mxu0 0
        %596 = vmatprep.subr.bf16.mxu0 0
        %597 = vmatpush1.bf16.msra.mxu0 0
        %598 = vmatprep.subr.bf16.mxu0 0
        %599 = vmatpush1.bf16.msra.mxu0 0
        %600 = vmatprep.subr.bf16.mxu0 0
        %601 = vmatpush1.bf16.msra.mxu0 0
        %602 = vmatprep.subr.bf16.mxu0 0
        %603 = vmatpush1.bf16.msra.mxu0 0
        %604 = vmatprep.subr.bf16.mxu0 0
        %605 = vmatpush1.bf16.msra.mxu0 0
        %606 = vmatprep.subr.bf16.mxu0 0
        %607 = vmatpush1.bf16.msra.mxu0 0
        %608 = vmatprep.subr.bf16.mxu0 0
        %609 = vmatpush1.bf16.msra.mxu0 0
        %610 = vmatprep.subr.bf16.mxu0 0
        %611 = vmatpush1.bf16.msra.mxu0 0
        %612 = vmatprep.subr.bf16.mxu0 0
        %613 = vmatpush1.bf16.msra.mxu0 0
        %614 = vmatprep.subr.bf16.mxu0 0
        %615 = vmatpush1.bf16.msra.mxu0 0
        %616 = vmatprep.mubr.bf16.mxu0 0
        %617 = vmatmul.mubr.bf16.gmra.mrb[0].mxu0 %v557
        %v618 = vpop.f32.mrb[0].mxu0
        %v619 = vadd.f32 0.0, %v618
        %v620 = vpop.f32.mrb[0].mxu0
        %v621 = vadd.f32 0.0, %v620
        %v622 = vpop.f32.mrb[0].mxu0
        %v623 = vpop.f32.mrb[0].mxu0
        %624 = vdwg.mxu0
        %625 = vmatprep.subr.bf16.mxu0 %v518
        %626 = vmatpush1.bf16.msra.mxu0 %v517
        %627 = vmatprep.subr.bf16.mxu0 %v526
        %628 = vmatpush1.bf16.msra.mxu0 %v525
        %629 = vmatprep.subr.bf16.mxu0 %v570
        %630 = vmatpush1.bf16.msra.mxu0 %v567
        %631 = vmatprep.subr.bf16.mxu0 0
        %632 = vmatpush1.bf16.msra.mxu0 0
        %633 = vmatprep.subr.bf16.mxu0 0
        %634 = vmatpush1.bf16.msra.mxu0 0
        %635 = vmatprep.subr.bf16.mxu0 0
        %636 = vmatpush1.bf16.msra.mxu0 0
        %637 = vmatprep.subr.bf16.mxu0 0
        %638 = vmatpush1.bf16.msra.mxu0 0
        %639 = vmatprep.subr.bf16.mxu0 0
        %640 = vmatpush1.bf16.msra.mxu0 0
        %641 = vmatprep.subr.bf16.mxu0 0
        %642 = vmatpush1.bf16.msra.mxu0 0
        %643 = vmatprep.subr.bf16.mxu0 0
        %644 = vmatpush1.bf16.msra.mxu0 0
        %645 = vmatprep.subr.bf16.mxu0 0
        %646 = vmatpush1.bf16.msra.mxu0 0
        %647 = vmatprep.subr.bf16.mxu0 0
        %648 = vmatpush1.bf16.msra.mxu0 0
        %649 = vmatprep.subr.bf16.mxu0 0
        %650 = vmatpush1.bf16.msra.mxu0 0
        %651 = vmatprep.subr.bf16.mxu0 0
        %652 = vmatpush1.bf16.msra.mxu0 0
        %653 = vmatprep.subr.bf16.mxu0 0
        %654 = vmatpush1.bf16.msra.mxu0 0
        %655 = vmatprep.subr.bf16.mxu0 0
        %656 = vmatpush1.bf16.msra.mxu0 0
        %657 = vmatprep.mubr.bf16.mxu0 0
        %658 = vmatmul.mubr.bf16.gmra.mrb[0].mxu0 %v557
        %v659 = vpop.f32.mrb[0].mxu0
        %v660 = vadd.f32 0.0, %v659
        %v661 = vpop.f32.mrb[0].mxu0
        %v662 = vadd.f32 0.0, %v661
        %v663 = vpop.f32.mrb[0].mxu0
        %v664 = vpop.f32.mrb[0].mxu0
        %665 = vdwg.mxu0
        %666 = vmatprep.subr.bf16.mxu0 %v520
        %667 = vmatpush1.bf16.msra.mxu0 %v519
        %668 = vmatprep.subr.bf16.mxu0 %v528
        %669 = vmatpush1.bf16.msra.mxu0 %v527
        %670 = vmatprep.subr.bf16.mxu0 %v576
        %671 = vmatpush1.bf16.msra.mxu0 %v573
        %672 = vmatprep.subr.bf16.mxu0 0
        %673 = vmatpush1.bf16.msra.mxu0 0
        %674 = vmatprep.subr.bf16.mxu0 0
        %675 = vmatpush1.bf16.msra.mxu0 0
        %676 = vmatprep.subr.bf16.mxu0 0
        %677 = vmatpush1.bf16.msra.mxu0 0
        %678 = vmatprep.subr.bf16.mxu0 0
        %679 = vmatpush1.bf16.msra.mxu0 0
        %680 = vmatprep.subr.bf16.mxu0 0
        %681 = vmatpush1.bf16.msra.mxu0 0
        %682 = vmatprep.subr.bf16.mxu0 0
        %683 = vmatpush1.bf16.msra.mxu0 0
        %684 = vmatprep.subr.bf16.mxu0 0
        %685 = vmatpush1.bf16.msra.mxu0 0
        %686 = vmatprep.subr.bf16.mxu0 0
        %687 = vmatpush1.bf16.msra.mxu0 0
        %688 = vmatprep.subr.bf16.mxu0 0
        %689 = vmatpush1.bf16.msra.mxu0 0
        %690 = vmatprep.subr.bf16.mxu0 0
        %691 = vmatpush1.bf16.msra.mxu0 0
        %692 = vmatprep.subr.bf16.mxu0 0
        %693 = vmatpush1.bf16.msra.mxu0 0
        %694 = vmatprep.subr.bf16.mxu0 0
        %695 = vmatpush1.bf16.msra.mxu0 0
        %696 = vmatprep.subr.bf16.mxu0 0
        %697 = vmatpush1.bf16.msra.mxu0 0
        %698 = vmatprep.mubr.bf16.mxu0 0
        %699 = vmatmul.mubr.bf16.gmra.mrb[0].mxu0 %v557
        %v700 = vpop.f32.mrb[0].mxu0
        %v701 = vadd.f32 0.0, %v700
        %v702 = vpop.f32.mrb[0].mxu0
        %v703 = vadd.f32 0.0, %v702
        %v704 = vpop.f32.mrb[0].mxu0
        %v705 = vpop.f32.mrb[0].mxu0
        %706 = vdwg.mxu0
        %707 = vmatprep.subr.bf16.mxu0 %v522
        %708 = vmatpush1.bf16.msra.mxu0 %v521
        %709 = vmatprep.subr.bf16.mxu0 %v530
        %710 = vmatpush1.bf16.msra.mxu0 %v529
        %711 = vmatprep.subr.bf16.mxu0 %v582
        %712 = vmatpush1.bf16.msra.mxu0 %v579
        %713 = vmatprep.subr.bf16.mxu0 0
        %714 = vmatpush1.bf16.msra.mxu0 0
        %715 = vmatprep.subr.bf16.mxu0 0
        %716 = vmatpush1.bf16.msra.mxu0 0
        %717 = vmatprep.subr.bf16.mxu0 0
        %718 = vmatpush1.bf16.msra.mxu0 0
        %719 = vmatprep.subr.bf16.mxu0 0
        %720 = vmatpush1.bf16.msra.mxu0 0
        %721 = vmatprep.subr.bf16.mxu0 0
        %722 = vmatpush1.bf16.msra.mxu0 0
        %723 = vmatprep.subr.bf16.mxu0 0
        %724 = vmatpush1.bf16.msra.mxu0 0
        %725 = vmatprep.subr.bf16.mxu0 0
        %726 = vmatpush1.bf16.msra.mxu0 0
        %727 = vmatprep.subr.bf16.mxu0 0
        %728 = vmatpush1.bf16.msra.mxu0 0
        %729 = vmatprep.subr.bf16.mxu0 0
        %730 = vmatpush1.bf16.msra.mxu0 0
        %731 = vmatprep.subr.bf16.mxu0 0
        %732 = vmatpush1.bf16.msra.mxu0 0
        %733 = vmatprep.subr.bf16.mxu0 0
        %734 = vmatpush1.bf16.msra.mxu0 0
        %735 = vmatprep.subr.bf16.mxu0 0
        %736 = vmatpush1.bf16.msra.mxu0 0
        %737 = vmatprep.subr.bf16.mxu0 0
        %738 = vmatpush1.bf16.msra.mxu0 0
        %739 = vmatprep.mubr.bf16.mxu0 0
        %740 = vmatmul.mubr.bf16.gmra.mrb[0].mxu0 %v557
        %v741 = vpop.f32.mrb[0].mxu0
        %v742 = vadd.f32 0.0, %v741
        %v743 = vpop.f32.mrb[0].mxu0
        %v744 = vadd.f32 0.0, %v743
        %v745 = vpop.f32.mrb[0].mxu0
        %v746 = vpop.f32.mrb[0].mxu0
        %747 = vdwg.mxu0
        %v748 = vld [vmem:[#allocation4] sm:$0xff]
        %v749 = vld [vmem:[#allocation6] sm:$0xff]
        %vm750 = vcmask 1043456
        %v751 = vsel %vm750, %v619, 0.0
        %v752 = vrot.slane %v751, 4
        %v753 = vadd.f32 %v751, %v752
        %v754 = vrot.slane %v753, 2
        %v755 = vadd.f32 %v753, %v754
        %v756 = vrot.slane %v755, 1
        %v757 = vadd.f32 %v755, %v756
        %v758 = vsel %vm750, %v621, 0.0
        %v759 = vrot.slane %v758, 4
        %v760 = vadd.f32 %v758, %v759
        %v761 = vrot.slane %v760, 2
        %v762 = vadd.f32 %v760, %v761
        %v763 = vrot.slane %v762, 1
        %v764 = vadd.f32 %v762, %v763
        %v765 = vsel %vm750, %v660, 0.0
        %v766 = vrot.slane %v765, 4
        %v767 = vadd.f32 %v765, %v766
        %v768 = vrot.slane %v767, 2
        %v769 = vadd.f32 %v767, %v768
        %v770 = vrot.slane %v769, 1
        %v771 = vadd.f32 %v769, %v770
        %v772 = vsel %vm750, %v662, 0.0
        %v773 = vrot.slane %v772, 4
        %v774 = vadd.f32 %v772, %v773
        %v775 = vrot.slane %v774, 2
        %v776 = vadd.f32 %v774, %v775
        %v777 = vrot.slane %v776, 1
        %v778 = vadd.f32 %v776, %v777
        %v779 = vsel %vm750, %v701, 0.0
        %v780 = vrot.slane %v779, 4
        %v781 = vadd.f32 %v779, %v780
        %v782 = vrot.slane %v781, 2
        %v783 = vadd.f32 %v781, %v782
        %v784 = vrot.slane %v783, 1
        %v785 = vadd.f32 %v783, %v784
        %v786 = vsel %vm750, %v703, 0.0
        %v787 = vrot.slane %v786, 4
        %v788 = vadd.f32 %v786, %v787
        %v789 = vrot.slane %v788, 2
        %v790 = vadd.f32 %v788, %v789
        %v791 = vrot.slane %v790, 1
        %v792 = vadd.f32 %v790, %v791
        %v793 = vsel %vm750, %v742, 0.0
        %v794 = vrot.slane %v793, 4
        %v795 = vadd.f32 %v793, %v794
        %v796 = vrot.slane %v795, 2
        %v797 = vadd.f32 %v795, %v796
        %v798 = vrot.slane %v797, 1
        %v799 = vadd.f32 %v797, %v798
        %v800 = vsel %vm750, %v744, 0.0
        %v801 = vrot.slane %v800, 4
        %v802 = vadd.f32 %v800, %v801
        %v803 = vrot.slane %v802, 2
        %v804 = vadd.f32 %v802, %v803
        %v805 = vrot.slane %v804, 1
        %v806 = vadd.f32 %v804, %v805
        %v807 = vrcp.pop 4.0
        %v808 = vmul.f32 %v757, %v807
        %v809 = vmul.f32 %v764, %v807
        %v810 = vmul.f32 %v771, %v807
        %v811 = vmul.f32 %v778, %v807
        %v812 = vmul.f32 %v785, %v807
        %v813 = vmul.f32 %v792, %v807
        %v814 = vmul.f32 %v799, %v807
        %v815 = vmul.f32 %v806, %v807
        %v816 = vmul.f32 %v619, %v619
        %v817 = vmul.f32 %v621, %v621
        %v818 = vmul.f32 %v660, %v660
        %v819 = vmul.f32 %v662, %v662
        %v820 = vmul.f32 %v701, %v701
        %v821 = vmul.f32 %v703, %v703
        %v822 = vmul.f32 %v742, %v742
        %v823 = vmul.f32 %v744, %v744
        %v824 = vsel %vm750, %v816, 0.0
        %v825 = vrot.slane %v824, 4
        %v826 = vadd.f32 %v824, %v825
        %v827 = vrot.slane %v826, 2
        %v828 = vadd.f32 %v826, %v827
        %v829 = vrot.slane %v828, 1
        %v830 = vadd.f32 %v828, %v829
        %v831 = vsel %vm750, %v817, 0.0
        %v832 = vrot.slane %v831, 4
        %v833 = vadd.f32 %v831, %v832
        %v834 = vrot.slane %v833, 2
        %v835 = vadd.f32 %v833, %v834
        %v836 = vrot.slane %v835, 1
        %v837 = vadd.f32 %v835, %v836
        %v838 = vsel %vm750, %v818, 0.0
        %v839 = vrot.slane %v838, 4
        %v840 = vadd.f32 %v838, %v839
        %v841 = vrot.slane %v840, 2
        %v842 = vadd.f32 %v840, %v841
        %v843 = vrot.slane %v842, 1
        %v844 = vadd.f32 %v842, %v843
        %v845 = vsel %vm750, %v819, 0.0
        %v846 = vrot.slane %v845, 4
        %v847 = vadd.f32 %v845, %v846
        %v848 = vrot.slane %v847, 2
        %v849 = vadd.f32 %v847, %v848
        %v850 = vrot.slane %v849, 1
        %v851 = vadd.f32 %v849, %v850
        %v852 = vsel %vm750, %v820, 0.0
        %v853 = vrot.slane %v852, 4
        %v854 = vadd.f32 %v852, %v853
        %v855 = vrot.slane %v854, 2
        %v856 = vadd.f32 %v854, %v855
        %v857 = vrot.slane %v856, 1
        %v858 = vadd.f32 %v856, %v857
        %v859 = vsel %vm750, %v821, 0.0
        %v860 = vrot.slane %v859, 4
        %v861 = vadd.f32 %v859, %v860
        %v862 = vrot.slane %v861, 2
        %v863 = vadd.f32 %v861, %v862
        %v864 = vrot.slane %v863, 1
        %v865 = vadd.f32 %v863, %v864
        %v866 = vsel %vm750, %v822, 0.0
        %v867 = vrot.slane %v866, 4
        %v868 = vadd.f32 %v866, %v867
        %v869 = vrot.slane %v868, 2
        %v870 = vadd.f32 %v868, %v869
        %v871 = vrot.slane %v870, 1
        %v872 = vadd.f32 %v870, %v871
        %v873 = vsel %vm750, %v823, 0.0
        %v874 = vrot.slane %v873, 4
        %v875 = vadd.f32 %v873, %v874
        %v876 = vrot.slane %v875, 2
        %v877 = vadd.f32 %v875, %v876
        %v878 = vrot.slane %v877, 1
        %v879 = vadd.f32 %v877, %v878
        %v880 = vmul.f32 %v830, %v807
        %v881 = vmul.f32 %v837, %v807
        %v882 = vmul.f32 %v844, %v807
        %v883 = vmul.f32 %v851, %v807
        %v884 = vmul.f32 %v858, %v807
        %v885 = vmul.f32 %v865, %v807
        %v886 = vmul.f32 %v872, %v807
        %v887 = vmul.f32 %v879, %v807
        %v888 = vmul.f32 %v808, %v808
        %v889 = vmul.f32 %v809, %v809
        %v890 = vmul.f32 %v810, %v810
        %v891 = vmul.f32 %v811, %v811
        %v892 = vmul.f32 %v812, %v812
        %v893 = vmul.f32 %v813, %v813
        %v894 = vmul.f32 %v814, %v814
        %v895 = vmul.f32 %v815, %v815
        %v896 = vsub.f32 %v880, %v888
        %v897 = vsub.f32 %v881, %v889
        %v898 = vsub.f32 %v882, %v890
        %v899 = vsub.f32 %v883, %v891
        %v900 = vsub.f32 %v884, %v892
        %v901 = vsub.f32 %v885, %v893
        %v902 = vsub.f32 %v886, %v894
        %v903 = vsub.f32 %v887, %v895
        %v904 = vmax.f32 %v896, 0.0
        %v905 = vmax.f32 %v897, 0.0
        %v906 = vmax.f32 %v898, 0.0
        %v907 = vmax.f32 %v899, 0.0
        %v908 = vmax.f32 %v900, 0.0
        %v909 = vmax.f32 %v901, 0.0
        %v910 = vmax.f32 %v902, 0.0
        %v911 = vmax.f32 %v903, 0.0
        %v912 = vsub.f32 %v619, %v808
        %v913 = vsub.f32 %v621, %v809
        %v914 = vsub.f32 %v660, %v810
        %v915 = vsub.f32 %v662, %v811
        %v916 = vsub.f32 %v701, %v812
        %v917 = vsub.f32 %v703, %v813
        %v918 = vsub.f32 %v742, %v814
        %v919 = vsub.f32 %v744, %v815
        %v920 = vadd.f32 %v904, 1e-05
        %v921 = vadd.f32 %v905, 1e-05
        %v922 = vadd.f32 %v906, 1e-05
        %v923 = vadd.f32 %v907, 1e-05
        %v924 = vadd.f32 %v908, 1e-05
        %v925 = vadd.f32 %v909, 1e-05
        %v926 = vadd.f32 %v910, 1e-05
        %v927 = vadd.f32 %v911, 1e-05
        %v928 = vrsqrt.pop %v920
        %v929 = vrsqrt.pop %v921
        %v930 = vrsqrt.pop %v922
        %v931 = vrsqrt.pop %v923
        %v932 = vrsqrt.pop %v924
        %v933 = vrsqrt.pop %v925
        %v934 = vrsqrt.pop %v926
        %v935 = vrsqrt.pop %v927
        %v936 = vmul.f32 %v912, %v928
        %v937 = vmul.f32 %v913, %v929
        %v938 = vmul.f32 %v914, %v930
        %v939 = vmul.f32 %v915, %v931
        %v940 = vmul.f32 %v916, %v932
        %v941 = vmul.f32 %v917, %v933
        %v942 = vmul.f32 %v918, %v934
        %v943 = vmul.f32 %v919, %v935
        %v945 = vlaneseq
        %v946 = vshrl.u32 %v945, 7
        %v947 = vsub.s32 0, %v946
        %v948 = vrot.slane %v748, %v947
        %v949 = vlaneseq
        %v950 = vshrl.u32 %v949, 7
        %v951 = vsub.s32 1, %v950
        %v952 = vrot.slane %v748, %v951
        %v953 = vlaneseq
        %v954 = vshrl.u32 %v953, 7
        %v955 = vsub.s32 2, %v954
        %v956 = vrot.slane %v748, %v955
        %v957 = vlaneseq
        %v958 = vshrl.u32 %v957, 7
        %v959 = vsub.s32 3, %v958
        %v960 = vrot.slane %v748, %v959
        %v961 = vlaneseq
        %v962 = vshrl.u32 %v961, 7
        %v963 = vsub.s32 4, %v962
        %v964 = vrot.slane %v748, %v963
        %v965 = vlaneseq
        %v966 = vshrl.u32 %v965, 7
        %v967 = vsub.s32 5, %v966
        %v968 = vrot.slane %v748, %v967
        %v969 = vlaneseq
        %v970 = vshrl.u32 %v969, 7
        %v971 = vsub.s32 6, %v970
        %v972 = vrot.slane %v748, %v971
        %v973 = vlaneseq
        %v974 = vshrl.u32 %v973, 7
        %v975 = vsub.s32 7, %v974
        %v976 = vrot.slane %v748, %v975
        %v985 = vmul.f32 %v936, %v948
        %v986 = vmul.f32 %v937, %v952
        %v987 = vmul.f32 %v938, %v956
        %v988 = vmul.f32 %v939, %v960
        %v989 = vmul.f32 %v940, %v964
        %v990 = vmul.f32 %v941, %v968
        %v991 = vmul.f32 %v942, %v972
        %v992 = vmul.f32 %v943, %v976
        %v994 = vlaneseq
        %v995 = vshrl.u32 %v994, 7
        %v996 = vsub.s32 0, %v995
        %v997 = vrot.slane %v749, %v996
        %v998 = vlaneseq
        %v999 = vshrl.u32 %v998, 7
        %v1000 = vsub.s32 1, %v999
        %v1001 = vrot.slane %v749, %v1000
        %v1002 = vlaneseq
        %v1003 = vshrl.u32 %v1002, 7
        %v1004 = vsub.s32 2, %v1003
        %v1005 = vrot.slane %v749, %v1004
        %v1006 = vlaneseq
        %v1007 = vshrl.u32 %v1006, 7
        %v1008 = vsub.s32 3, %v1007
        %v1009 = vrot.slane %v749, %v1008
        %v1010 = vlaneseq
        %v1011 = vshrl.u32 %v1010, 7
        %v1012 = vsub.s32 4, %v1011
        %v1013 = vrot.slane %v749, %v1012
        %v1014 = vlaneseq
        %v1015 = vshrl.u32 %v1014, 7
        %v1016 = vsub.s32 5, %v1015
        %v1017 = vrot.slane %v749, %v1016
        %v1018 = vlaneseq
        %v1019 = vshrl.u32 %v1018, 7
        %v1020 = vsub.s32 6, %v1019
        %v1021 = vrot.slane %v749, %v1020
        %v1022 = vlaneseq
        %v1023 = vshrl.u32 %v1022, 7
        %v1024 = vsub.s32 7, %v1023
        %v1025 = vrot.slane %v749, %v1024
        %v1034 = vadd.f32 %v985, %v997
        %v1035 = vadd.f32 %v986, %v1001
        %v1036 = vadd.f32 %v987, %v1005
        %v1037 = vadd.f32 %v988, %v1009
        %v1038 = vadd.f32 %v989, %v1013
        %v1039 = vadd.f32 %v990, %v1017
        %v1040 = vadd.f32 %v991, %v1021
        %v1041 = vadd.f32 %v992, %v1025
        %v1042 = vmax.f32 %v1034, 0.0
        %v1043 = vmax.f32 %v1035, 0.0
        %v1044 = vmax.f32 %v1036, 0.0
        %v1045 = vmax.f32 %v1037, 0.0
        %v1046 = vmax.f32 %v1038, 0.0
        %v1047 = vmax.f32 %v1039, 0.0
        %v1048 = vmax.f32 %v1040, 0.0
        %v1049 = vmax.f32 %v1041, 0.0
        %v1050 = vpack.c.bf16 %v1042, %v1042
        %v1051 = vpack.c.bf16 %v1043, %v1043
        %v1052 = vpack.c.bf16 %v1044, %v1044
        %v1053 = vpack.c.bf16 %v1045, %v1045
        %v1054 = vpack.c.bf16 %v1046, %v1046
        %v1055 = vpack.c.bf16 %v1047, %v1047
        %v1056 = vpack.c.bf16 %v1048, %v1048
        %v1057 = vpack.c.bf16 %v1049, %v1049
        %v1058 = vld [vmem:[%s348] sm:$0xff]
        %v1059 = vld [vmem:[%s348 + $0x8] sm:$0xff]
        %v1060 = vld [vmem:[%s348 + $0x10] sm:$0xff]
        %v1061 = vld [vmem:[%s348 + $0x18] sm:$0xff]
        %v1062 = vld [vmem:[%s348 + $0x20] sm:$0xff]
        %v1063 = vld [vmem:[%s348 + $0x28] sm:$0xff]
        %v1064 = vld [vmem:[%s348 + $0x30] sm:$0xff]
        %v1065 = vld [vmem:[%s348 + $0x38] sm:$0xff]
        %v1066 = vld [vmem:[%s348 + $0x40] sm:$0xff]
        %v1067 = vld [vmem:[%s348 + $0x48] sm:$0xff]
        %v1068 = vld [vmem:[%s348 + $0x50] sm:$0xff]
        %v1069 = vld [vmem:[%s348 + $0x58] sm:$0xff]
        %v1070 = vld [vmem:[%s348 + $0x60] sm:$0xff]
        %v1071 = vld [vmem:[%s348 + $0x68] sm:$0xff]
        %v1072 = vld [vmem:[%s348 + $0x70] sm:$0xff]
        %v1073 = vld [vmem:[%s348 + $0x78] sm:$0xff]
        %v1074 = vld [vmem:[%s348 + $0x80] sm:$0xff]
        %v1075 = vld [vmem:[%s348 + $0x88] sm:$0xff]
        %v1076 = vld [vmem:[%s348 + $0x90] sm:$0xff]
        %v1077 = vld [vmem:[%s348 + $0x98] sm:$0xff]
        %v1078 = vld [vmem:[%s348 + $0xa0] sm:$0xff]
        %v1079 = vld [vmem:[%s348 + $0xa8] sm:$0xff]
        %v1080 = vld [vmem:[%s348 + $0xb0] sm:$0xff]
        %v1081 = vld [vmem:[%s348 + $0xb8] sm:$0xff]
        %v1082 = vld [vmem:[%s348 + $0xc0] sm:$0xff]
        %v1083 = vld [vmem:[%s348 + $0xc8] sm:$0xff]
        %v1084 = vld [vmem:[%s348 + $0xd0] sm:$0xff]
        %v1085 = vld [vmem:[%s348 + $0xd8] sm:$0xff]
        %v1086 = vld [vmem:[%s348 + $0xe0] sm:$0xff]
        %v1087 = vld [vmem:[%s348 + $0xe8] sm:$0xff]
        %v1088 = vld [vmem:[%s348 + $0xf0] sm:$0xff]
        %v1089 = vld [vmem:[%s348 + $0xf8] sm:$0xff]
        %v1090 = vld [vmem:[%s348 + $0x100] sm:$0xff]
        %v1091 = vld [vmem:[%s348 + $0x108] sm:$0xff]
        %v1092 = vld [vmem:[%s348 + $0x110] sm:$0xff]
        %v1093 = vld [vmem:[%s348 + $0x118] sm:$0xff]
        %v1094 = vld [vmem:[%s348 + $0x120] sm:$0xff]
        %v1095 = vld [vmem:[%s348 + $0x128] sm:$0xff]
        %v1096 = vld [vmem:[%s348 + $0x130] sm:$0xff]
        %v1097 = vld [vmem:[%s348 + $0x138] sm:$0xff]
        %v1098 = vld [vmem:[%s348 + $0x140] sm:$0xff]
        %v1099 = vld [vmem:[%s348 + $0x148] sm:$0xff]
        %v1100 = vld [vmem:[%s348 + $0x150] sm:$0xff]
        %v1101 = vld [vmem:[%s348 + $0x158] sm:$0xff]
        %v1102 = vld [vmem:[%s348 + $0x160] sm:$0xff]
        %v1103 = vld [vmem:[%s348 + $0x168] sm:$0xff]
        %v1104 = vld [vmem:[%s348 + $0x170] sm:$0xff]
        %v1105 = vld [vmem:[%s348 + $0x178] sm:$0xff]
        %v1106 = vld [vmem:[%s348 + $0x180] sm:$0xff]
        %v1107 = vld [vmem:[%s348 + $0x188] sm:$0xff]
        %v1108 = vld [vmem:[%s348 + $0x190] sm:$0xff]
        %v1109 = vld [vmem:[%s348 + $0x198] sm:$0xff]
        %v1110 = vld [vmem:[%s348 + $0x1a0] sm:$0xff]
        %v1111 = vld [vmem:[%s348 + $0x1a8] sm:$0xff]
        %v1112 = vld [vmem:[%s348 + $0x1b0] sm:$0xff]
        %v1113 = vld [vmem:[%s348 + $0x1b8] sm:$0xff]
        %v1114 = vld [vmem:[%s348 + $0x1c0] sm:$0xff]
        %v1115 = vld [vmem:[%s348 + $0x1c8] sm:$0xff]
        %v1116 = vld [vmem:[%s348 + $0x1d0] sm:$0xff]
        %v1117 = vld [vmem:[%s348 + $0x1d8] sm:$0xff]
        %v1118 = vld [vmem:[%s348 + $0x1e0] sm:$0xff]
        %v1119 = vld [vmem:[%s348 + $0x1e8] sm:$0xff]
        %v1120 = vld [vmem:[%s348 + $0x1f0] sm:$0xff]
        %v1121 = vld [vmem:[%s348 + $0x1f8] sm:$0xff]
        %v1122 = vld [vmem:[%s348 + $0x200] sm:$0xff]
        %v1123 = vld [vmem:[%s348 + $0x208] sm:$0xff]
        %v1124 = vld [vmem:[%s348 + $0x210] sm:$0xff]
        %v1125 = vld [vmem:[%s348 + $0x218] sm:$0xff]
        %v1126 = vld [vmem:[%s348 + $0x220] sm:$0xff]
        %v1127 = vld [vmem:[%s348 + $0x228] sm:$0xff]
        %v1128 = vld [vmem:[%s348 + $0x230] sm:$0xff]
        %v1129 = vld [vmem:[%s348 + $0x238] sm:$0xff]
        %v1130 = vld [vmem:[%s348 + $0x240] sm:$0xff]
        %v1131 = vld [vmem:[%s348 + $0x248] sm:$0xff]
        %v1132 = vld [vmem:[%s348 + $0x250] sm:$0xff]
        %v1133 = vld [vmem:[%s348 + $0x258] sm:$0xff]
        %v1134 = vld [vmem:[%s348 + $0x260] sm:$0xff]
        %v1135 = vld [vmem:[%s348 + $0x268] sm:$0xff]
        %v1136 = vld [vmem:[%s348 + $0x270] sm:$0xff]
        %v1137 = vld [vmem:[%s348 + $0x278] sm:$0xff]
        %v1138 = vld [vmem:[%s348 + $0x280] sm:$0xff]
        %v1139 = vld [vmem:[%s348 + $0x288] sm:$0xff]
        %v1140 = vld [vmem:[%s348 + $0x290] sm:$0xff]
        %v1141 = vld [vmem:[%s348 + $0x298] sm:$0xff]
        %v1142 = vld [vmem:[%s348 + $0x2a0] sm:$0xff]
        %v1143 = vld [vmem:[%s348 + $0x2a8] sm:$0xff]
        %v1144 = vld [vmem:[%s348 + $0x2b0] sm:$0xff]
        %v1145 = vld [vmem:[%s348 + $0x2b8] sm:$0xff]
        %v1146 = vld [vmem:[%s348 + $0x2c0] sm:$0xff]
        %v1147 = vld [vmem:[%s348 + $0x2c8] sm:$0xff]
        %v1148 = vld [vmem:[%s348 + $0x2d0] sm:$0xff]
        %v1149 = vld [vmem:[%s348 + $0x2d8] sm:$0xff]
        %v1150 = vld [vmem:[%s348 + $0x2e0] sm:$0xff]
        %v1151 = vld [vmem:[%s348 + $0x2e8] sm:$0xff]
        %v1152 = vld [vmem:[%s348 + $0x2f0] sm:$0xff]
        %v1153 = vld [vmem:[%s348 + $0x2f8] sm:$0xff]
        %v1154 = vld [vmem:[%s348 + $0x300] sm:$0xff]
        %v1155 = vld [vmem:[%s348 + $0x308] sm:$0xff]
        %v1156 = vld [vmem:[%s348 + $0x310] sm:$0xff]
        %v1157 = vld [vmem:[%s348 + $0x318] sm:$0xff]
        %v1158 = vld [vmem:[%s348 + $0x320] sm:$0xff]
        %v1159 = vld [vmem:[%s348 + $0x328] sm:$0xff]
        %v1160 = vld [vmem:[%s348 + $0x330] sm:$0xff]
        %v1161 = vld [vmem:[%s348 + $0x338] sm:$0xff]
        %v1162 = vld [vmem:[%s348 + $0x340] sm:$0xff]
        %v1163 = vld [vmem:[%s348 + $0x348] sm:$0xff]
        %v1164 = vld [vmem:[%s348 + $0x350] sm:$0xff]
        %v1165 = vld [vmem:[%s348 + $0x358] sm:$0xff]
        %v1166 = vld [vmem:[%s348 + $0x360] sm:$0xff]
        %v1167 = vld [vmem:[%s348 + $0x368] sm:$0xff]
        %v1168 = vld [vmem:[%s348 + $0x370] sm:$0xff]
        %v1169 = vld [vmem:[%s348 + $0x378] sm:$0xff]
        %v1170 = vld [vmem:[%s348 + $0x380] sm:$0xff]
        %v1171 = vld [vmem:[%s348 + $0x388] sm:$0xff]
        %v1172 = vld [vmem:[%s348 + $0x390] sm:$0xff]
        %v1173 = vld [vmem:[%s348 + $0x398] sm:$0xff]
        %v1174 = vld [vmem:[%s348 + $0x3a0] sm:$0xff]
        %v1175 = vld [vmem:[%s348 + $0x3a8] sm:$0xff]
        %v1176 = vld [vmem:[%s348 + $0x3b0] sm:$0xff]
        %v1177 = vld [vmem:[%s348 + $0x3b8] sm:$0xff]
        %v1178 = vld [vmem:[%s348 + $0x3c0] sm:$0xff]
        %v1179 = vld [vmem:[%s348 + $0x3c8] sm:$0xff]
        %v1180 = vld [vmem:[%s348 + $0x3d0] sm:$0xff]
        %v1181 = vld [vmem:[%s348 + $0x3d8] sm:$0xff]
        %v1182 = vld [vmem:[%s348 + $0x3e0] sm:$0xff]
        %v1183 = vld [vmem:[%s348 + $0x3e8] sm:$0xff]
        %v1184 = vld [vmem:[%s348 + $0x3f0] sm:$0xff]
        %v1185 = vld [vmem:[%s348 + $0x3f8] sm:$0xff]
        %v1186 = vld [vmem:[%s348 + $0x400] sm:$0xff]
        %v1187 = vld [vmem:[%s348 + $0x408] sm:$0xff]
        %v1188 = vld [vmem:[%s348 + $0x410] sm:$0xff]
        %v1189 = vld [vmem:[%s348 + $0x418] sm:$0xff]
        %v1190 = vld [vmem:[%s348 + $0x420] sm:$0xff]
        %v1191 = vld [vmem:[%s348 + $0x428] sm:$0xff]
        %v1192 = vld [vmem:[%s348 + $0x430] sm:$0xff]
        %v1193 = vld [vmem:[%s348 + $0x438] sm:$0xff]
        %v1194 = vld [vmem:[%s348 + $0x440] sm:$0xff]
        %v1195 = vld [vmem:[%s348 + $0x448] sm:$0xff]
        %v1196 = vld [vmem:[%s348 + $0x450] sm:$0xff]
        %v1197 = vld [vmem:[%s348 + $0x458] sm:$0xff]
        %v1198 = vld [vmem:[%s348 + $0x460] sm:$0xff]
        %v1199 = vld [vmem:[%s348 + $0x468] sm:$0xff]
        %v1200 = vld [vmem:[%s348 + $0x470] sm:$0xff]
        %v1201 = vld [vmem:[%s348 + $0x478] sm:$0xff]
        %v1202 = vld [vmem:[%s348 + $0x480] sm:$0xff]
        %v1203 = vld [vmem:[%s348 + $0x488] sm:$0xff]
        %v1204 = vld [vmem:[%s348 + $0x490] sm:$0xff]
        %v1205 = vld [vmem:[%s348 + $0x498] sm:$0xff]
        %v1206 = vld [vmem:[%s348 + $0x4a0] sm:$0xff]
        %v1207 = vld [vmem:[%s348 + $0x4a8] sm:$0xff]
        %v1208 = vld [vmem:[%s348 + $0x4b0] sm:$0xff]
        %v1209 = vld [vmem:[%s348 + $0x4b8] sm:$0xff]
        %v1210 = vld [vmem:[%s348 + $0x4c0] sm:$0xff]
        %v1211 = vld [vmem:[%s348 + $0x4c8] sm:$0xff]
        %v1212 = vld [vmem:[%s348 + $0x4d0] sm:$0xff]
        %v1213 = vld [vmem:[%s348 + $0x4d8] sm:$0xff]
        %v1214 = vld [vmem:[%s348 + $0x4e0] sm:$0xff]
        %v1215 = vld [vmem:[%s348 + $0x4e8] sm:$0xff]
        %v1216 = vld [vmem:[%s348 + $0x4f0] sm:$0xff]
        %v1217 = vld [vmem:[%s348 + $0x4f8] sm:$0xff]
        %v1218 = vld [vmem:[%s348 + $0x500] sm:$0xff]
        %v1219 = vld [vmem:[%s348 + $0x508] sm:$0xff]
        %v1220 = vld [vmem:[%s348 + $0x510] sm:$0xff]
        %v1221 = vld [vmem:[%s348 + $0x518] sm:$0xff]
        %v1222 = vld [vmem:[%s348 + $0x520] sm:$0xff]
        %v1223 = vld [vmem:[%s348 + $0x528] sm:$0xff]
        %v1224 = vld [vmem:[%s348 + $0x530] sm:$0xff]
        %v1225 = vld [vmem:[%s348 + $0x538] sm:$0xff]
        %v1226 = vld [vmem:[%s348 + $0x540] sm:$0xff]
        %v1227 = vld [vmem:[%s348 + $0x548] sm:$0xff]
        %v1228 = vld [vmem:[%s348 + $0x550] sm:$0xff]
        %v1229 = vld [vmem:[%s348 + $0x558] sm:$0xff]
        %v1230 = vld [vmem:[%s348 + $0x560] sm:$0xff]
        %v1231 = vld [vmem:[%s348 + $0x568] sm:$0xff]
        %v1232 = vld [vmem:[%s348 + $0x570] sm:$0xff]
        %v1233 = vld [vmem:[%s348 + $0x578] sm:$0xff]
        %v1234 = vld [vmem:[%s348 + $0x580] sm:$0xff]
        %v1235 = vld [vmem:[%s348 + $0x588] sm:$0xff]
        %v1236 = vld [vmem:[%s348 + $0x590] sm:$0xff]
        %v1237 = vld [vmem:[%s348 + $0x598] sm:$0xff]
        %v1238 = vld [vmem:[%s348 + $0x5a0] sm:$0xff]
        %v1239 = vld [vmem:[%s348 + $0x5a8] sm:$0xff]
        %v1240 = vld [vmem:[%s348 + $0x5b0] sm:$0xff]
        %v1241 = vld [vmem:[%s348 + $0x5b8] sm:$0xff]
        %v1242 = vld [vmem:[%s348 + $0x5c0] sm:$0xff]
        %v1243 = vld [vmem:[%s348 + $0x5c8] sm:$0xff]
        %v1244 = vld [vmem:[%s348 + $0x5d0] sm:$0xff]
        %v1245 = vld [vmem:[%s348 + $0x5d8] sm:$0xff]
        %v1246 = vld [vmem:[%s348 + $0x5e0] sm:$0xff]
        %v1247 = vld [vmem:[%s348 + $0x5e8] sm:$0xff]
        %v1248 = vld [vmem:[%s348 + $0x5f0] sm:$0xff]
        %v1249 = vld [vmem:[%s348 + $0x5f8] sm:$0xff]
        %v1250 = vld [vmem:[%s348 + $0x600] sm:$0xff]
        %v1251 = vld [vmem:[%s348 + $0x608] sm:$0xff]
        %v1252 = vld [vmem:[%s348 + $0x610] sm:$0xff]
        %v1253 = vld [vmem:[%s348 + $0x618] sm:$0xff]
        %v1254 = vld [vmem:[%s348 + $0x620] sm:$0xff]
        %v1255 = vld [vmem:[%s348 + $0x628] sm:$0xff]
        %v1256 = vld [vmem:[%s348 + $0x630] sm:$0xff]
        %v1257 = vld [vmem:[%s348 + $0x638] sm:$0xff]
        %v1258 = vld [vmem:[%s348 + $0x640] sm:$0xff]
        %v1259 = vld [vmem:[%s348 + $0x648] sm:$0xff]
        %v1260 = vld [vmem:[%s348 + $0x650] sm:$0xff]
        %v1261 = vld [vmem:[%s348 + $0x658] sm:$0xff]
        %v1262 = vld [vmem:[%s348 + $0x660] sm:$0xff]
        %v1263 = vld [vmem:[%s348 + $0x668] sm:$0xff]
        %v1264 = vld [vmem:[%s348 + $0x670] sm:$0xff]
        %v1265 = vld [vmem:[%s348 + $0x678] sm:$0xff]
        %v1266 = vld [vmem:[%s348 + $0x680] sm:$0xff]
        %v1267 = vld [vmem:[%s348 + $0x688] sm:$0xff]
        %v1268 = vld [vmem:[%s348 + $0x690] sm:$0xff]
        %v1269 = vld [vmem:[%s348 + $0x698] sm:$0xff]
        %v1270 = vld [vmem:[%s348 + $0x6a0] sm:$0xff]
        %v1271 = vld [vmem:[%s348 + $0x6a8] sm:$0xff]
        %v1272 = vld [vmem:[%s348 + $0x6b0] sm:$0xff]
        %v1273 = vld [vmem:[%s348 + $0x6b8] sm:$0xff]
        %v1274 = vld [vmem:[%s348 + $0x6c0] sm:$0xff]
        %v1275 = vld [vmem:[%s348 + $0x6c8] sm:$0xff]
        %v1276 = vld [vmem:[%s348 + $0x6d0] sm:$0xff]
        %v1277 = vld [vmem:[%s348 + $0x6d8] sm:$0xff]
        %v1278 = vld [vmem:[%s348 + $0x6e0] sm:$0xff]
        %v1279 = vld [vmem:[%s348 + $0x6e8] sm:$0xff]
        %v1280 = vld [vmem:[%s348 + $0x6f0] sm:$0xff]
        %v1281 = vld [vmem:[%s348 + $0x6f8] sm:$0xff]
        %v1282 = vld [vmem:[%s348 + $0x700] sm:$0xff]
        %v1283 = vld [vmem:[%s348 + $0x708] sm:$0xff]
        %v1284 = vld [vmem:[%s348 + $0x710] sm:$0xff]
        %v1285 = vld [vmem:[%s348 + $0x718] sm:$0xff]
        %v1286 = vld [vmem:[%s348 + $0x720] sm:$0xff]
        %v1287 = vld [vmem:[%s348 + $0x728] sm:$0xff]
        %v1288 = vld [vmem:[%s348 + $0x730] sm:$0xff]
        %v1289 = vld [vmem:[%s348 + $0x738] sm:$0xff]
        %v1290 = vld [vmem:[%s348 + $0x740] sm:$0xff]
        %v1291 = vld [vmem:[%s348 + $0x748] sm:$0xff]
        %v1292 = vld [vmem:[%s348 + $0x750] sm:$0xff]
        %v1293 = vld [vmem:[%s348 + $0x758] sm:$0xff]
        %v1294 = vld [vmem:[%s348 + $0x760] sm:$0xff]
        %v1295 = vld [vmem:[%s348 + $0x768] sm:$0xff]
        %v1296 = vld [vmem:[%s348 + $0x770] sm:$0xff]
        %v1297 = vld [vmem:[%s348 + $0x778] sm:$0xff]
        %v1298 = vld [vmem:[%s348 + $0x780] sm:$0xff]
        %v1299 = vld [vmem:[%s348 + $0x788] sm:$0xff]
        %v1300 = vld [vmem:[%s348 + $0x790] sm:$0xff]
        %v1301 = vld [vmem:[%s348 + $0x798] sm:$0xff]
        %v1302 = vld [vmem:[%s348 + $0x7a0] sm:$0xff]
        %v1303 = vld [vmem:[%s348 + $0x7a8] sm:$0xff]
        %v1304 = vld [vmem:[%s348 + $0x7b0] sm:$0xff]
        %v1305 = vld [vmem:[%s348 + $0x7b8] sm:$0xff]
        %v1306 = vld [vmem:[%s348 + $0x7c0] sm:$0xff]
        %v1307 = vld [vmem:[%s348 + $0x7c8] sm:$0xff]
        %v1308 = vld [vmem:[%s348 + $0x7d0] sm:$0xff]
        %v1309 = vld [vmem:[%s348 + $0x7d8] sm:$0xff]
        %v1310 = vld [vmem:[%s348 + $0x7e0] sm:$0xff]
        %v1311 = vld [vmem:[%s348 + $0x7e8] sm:$0xff]
        %v1312 = vld [vmem:[%s348 + $0x7f0] sm:$0xff]
        %v1313 = vld [vmem:[%s348 + $0x7f8] sm:$0xff]
        %v1314 = vld [vmem:[%s348 + $0x800] sm:$0xff]
        %v1315 = vld [vmem:[%s348 + $0x808] sm:$0xff]
        %v1316 = vld [vmem:[%s348 + $0x810] sm:$0xff]
        %v1317 = vld [vmem:[%s348 + $0x818] sm:$0xff]
        %v1318 = vld [vmem:[%s348 + $0x820] sm:$0xff]
        %v1319 = vld [vmem:[%s348 + $0x828] sm:$0xff]
        %v1320 = vld [vmem:[%s348 + $0x830] sm:$0xff]
        %v1321 = vld [vmem:[%s348 + $0x838] sm:$0xff]
        %v1322 = vld [vmem:[%s348 + $0x840] sm:$0xff]
        %v1323 = vld [vmem:[%s348 + $0x848] sm:$0xff]
        %v1324 = vld [vmem:[%s348 + $0x850] sm:$0xff]
        %v1325 = vld [vmem:[%s348 + $0x858] sm:$0xff]
        %v1326 = vld [vmem:[%s348 + $0x860] sm:$0xff]
        %v1327 = vld [vmem:[%s348 + $0x868] sm:$0xff]
        %v1328 = vld [vmem:[%s348 + $0x870] sm:$0xff]
        %v1329 = vld [vmem:[%s348 + $0x878] sm:$0xff]
        %v1330 = vld [vmem:[%s348 + $0x880] sm:$0xff]
        %v1331 = vld [vmem:[%s348 + $0x888] sm:$0xff]
        %v1332 = vld [vmem:[%s348 + $0x890] sm:$0xff]
        %v1333 = vld [vmem:[%s348 + $0x898] sm:$0xff]
        %v1334 = vld [vmem:[%s348 + $0x8a0] sm:$0xff]
        %v1335 = vld [vmem:[%s348 + $0x8a8] sm:$0xff]
        %v1336 = vld [vmem:[%s348 + $0x8b0] sm:$0xff]
        %v1337 = vld [vmem:[%s348 + $0x8b8] sm:$0xff]
        %v1338 = vld [vmem:[%s348 + $0x8c0] sm:$0xff]
        %v1339 = vld [vmem:[%s348 + $0x8c8] sm:$0xff]
        %v1340 = vld [vmem:[%s348 + $0x8d0] sm:$0xff]
        %v1341 = vld [vmem:[%s348 + $0x8d8] sm:$0xff]
        %v1342 = vld [vmem:[%s348 + $0x8e0] sm:$0xff]
        %v1343 = vld [vmem:[%s348 + $0x8e8] sm:$0xff]
        %v1344 = vld [vmem:[%s348 + $0x8f0] sm:$0xff]
        %v1345 = vld [vmem:[%s348 + $0x8f8] sm:$0xff]
        %v1346 = vld [vmem:[%s348 + $0x900] sm:$0xff]
        %v1347 = vld [vmem:[%s348 + $0x908] sm:$0xff]
        %v1348 = vld [vmem:[%s348 + $0x910] sm:$0xff]
        %v1349 = vld [vmem:[%s348 + $0x918] sm:$0xff]
        %v1350 = vld [vmem:[%s348 + $0x920] sm:$0xff]
        %v1351 = vld [vmem:[%s348 + $0x928] sm:$0xff]
        %v1352 = vld [vmem:[%s348 + $0x930] sm:$0xff]
        %v1353 = vld [vmem:[%s348 + $0x938] sm:$0xff]
        %v1354 = vld [vmem:[%s348 + $0x940] sm:$0xff]
        %v1355 = vld [vmem:[%s348 + $0x948] sm:$0xff]
        %v1356 = vld [vmem:[%s348 + $0x950] sm:$0xff]
        %v1357 = vld [vmem:[%s348 + $0x958] sm:$0xff]
        %v1358 = vld [vmem:[%s348 + $0x960] sm:$0xff]
        %v1359 = vld [vmem:[%s348 + $0x968] sm:$0xff]
        %v1360 = vld [vmem:[%s348 + $0x970] sm:$0xff]
        %v1361 = vld [vmem:[%s348 + $0x978] sm:$0xff]
        %v1362 = vld [vmem:[%s348 + $0x980] sm:$0xff]
        %v1363 = vld [vmem:[%s348 + $0x988] sm:$0xff]
        %v1364 = vld [vmem:[%s348 + $0x990] sm:$0xff]
        %v1365 = vld [vmem:[%s348 + $0x998] sm:$0xff]
        %v1366 = vld [vmem:[%s348 + $0x9a0] sm:$0xff]
        %v1367 = vld [vmem:[%s348 + $0x9a8] sm:$0xff]
        %v1368 = vld [vmem:[%s348 + $0x9b0] sm:$0xff]
        %v1369 = vld [vmem:[%s348 + $0x9b8] sm:$0xff]
        %v1370 = vld [vmem:[%s348 + $0x9c0] sm:$0xff]
        %v1371 = vld [vmem:[%s348 + $0x9c8] sm:$0xff]
        %v1372 = vld [vmem:[%s348 + $0x9d0] sm:$0xff]
        %v1373 = vld [vmem:[%s348 + $0x9d8] sm:$0xff]
        %v1374 = vld [vmem:[%s348 + $0x9e0] sm:$0xff]
        %v1375 = vld [vmem:[%s348 + $0x9e8] sm:$0xff]
        %v1376 = vld [vmem:[%s348 + $0x9f0] sm:$0xff]
        %v1377 = vld [vmem:[%s348 + $0x9f8] sm:$0xff]
        %v1378 = vld [vmem:[%s348 + $0xa00] sm:$0xff]
        %v1379 = vld [vmem:[%s348 + $0xa08] sm:$0xff]
        %v1380 = vld [vmem:[%s348 + $0xa10] sm:$0xff]
        %v1381 = vld [vmem:[%s348 + $0xa18] sm:$0xff]
        %v1382 = vld [vmem:[%s348 + $0xa20] sm:$0xff]
        %v1383 = vld [vmem:[%s348 + $0xa28] sm:$0xff]
        %v1384 = vld [vmem:[%s348 + $0xa30] sm:$0xff]
        %v1385 = vld [vmem:[%s348 + $0xa38] sm:$0xff]
        %v1386 = vld [vmem:[%s348 + $0xa40] sm:$0xff]
        %v1387 = vld [vmem:[%s348 + $0xa48] sm:$0xff]
        %v1388 = vld [vmem:[%s348 + $0xa50] sm:$0xff]
        %v1389 = vld [vmem:[%s348 + $0xa58] sm:$0xff]
        %v1390 = vld [vmem:[%s348 + $0xa60] sm:$0xff]
        %v1391 = vld [vmem:[%s348 + $0xa68] sm:$0xff]
        %v1392 = vld [vmem:[%s348 + $0xa70] sm:$0xff]
        %v1393 = vld [vmem:[%s348 + $0xa78] sm:$0xff]
        %v1394 = vld [vmem:[%s348 + $0xa80] sm:$0xff]
        %v1395 = vld [vmem:[%s348 + $0xa88] sm:$0xff]
        %v1396 = vld [vmem:[%s348 + $0xa90] sm:$0xff]
        %v1397 = vld [vmem:[%s348 + $0xa98] sm:$0xff]
        %v1398 = vld [vmem:[%s348 + $0xaa0] sm:$0xff]
        %v1399 = vld [vmem:[%s348 + $0xaa8] sm:$0xff]
        %v1400 = vld [vmem:[%s348 + $0xab0] sm:$0xff]
        %v1401 = vld [vmem:[%s348 + $0xab8] sm:$0xff]
        %v1402 = vld [vmem:[%s348 + $0xac0] sm:$0xff]
        %v1403 = vld [vmem:[%s348 + $0xac8] sm:$0xff]
        %v1404 = vld [vmem:[%s348 + $0xad0] sm:$0xff]
        %v1405 = vld [vmem:[%s348 + $0xad8] sm:$0xff]
        %v1406 = vld [vmem:[%s348 + $0xae0] sm:$0xff]
        %v1407 = vld [vmem:[%s348 + $0xae8] sm:$0xff]
        %v1408 = vld [vmem:[%s348 + $0xaf0] sm:$0xff]
        %v1409 = vld [vmem:[%s348 + $0xaf8] sm:$0xff]
        %v1410 = vld [vmem:[%s348 + $0xb00] sm:$0xff]
        %v1411 = vld [vmem:[%s348 + $0xb08] sm:$0xff]
        %v1412 = vld [vmem:[%s348 + $0xb10] sm:$0xff]
        %v1413 = vld [vmem:[%s348 + $0xb18] sm:$0xff]
        %v1414 = vld [vmem:[%s348 + $0xb20] sm:$0xff]
        %v1415 = vld [vmem:[%s348 + $0xb28] sm:$0xff]
        %v1416 = vld [vmem:[%s348 + $0xb30] sm:$0xff]
        %v1417 = vld [vmem:[%s348 + $0xb38] sm:$0xff]
        %v1418 = vld [vmem:[%s348 + $0xb40] sm:$0xff]
        %v1419 = vld [vmem:[%s348 + $0xb48] sm:$0xff]
        %v1420 = vld [vmem:[%s348 + $0xb50] sm:$0xff]
        %v1421 = vld [vmem:[%s348 + $0xb58] sm:$0xff]
        %v1422 = vld [vmem:[%s348 + $0xb60] sm:$0xff]
        %v1423 = vld [vmem:[%s348 + $0xb68] sm:$0xff]
        %v1424 = vld [vmem:[%s348 + $0xb70] sm:$0xff]
        %v1425 = vld [vmem:[%s348 + $0xb78] sm:$0xff]
        %v1426 = vld [vmem:[%s348 + $0xb80] sm:$0xff]
        %v1427 = vld [vmem:[%s348 + $0xb88] sm:$0xff]
        %v1428 = vld [vmem:[%s348 + $0xb90] sm:$0xff]
        %v1429 = vld [vmem:[%s348 + $0xb98] sm:$0xff]
        %v1430 = vld [vmem:[%s348 + $0xba0] sm:$0xff]
        %v1431 = vld [vmem:[%s348 + $0xba8] sm:$0xff]
        %v1432 = vld [vmem:[%s348 + $0xbb0] sm:$0xff]
        %v1433 = vld [vmem:[%s348 + $0xbb8] sm:$0xff]
        %v1434 = vld [vmem:[%s348 + $0xbc0] sm:$0xff]
        %v1435 = vld [vmem:[%s348 + $0xbc8] sm:$0xff]
        %v1436 = vld [vmem:[%s348 + $0xbd0] sm:$0xff]
        %v1437 = vld [vmem:[%s348 + $0xbd8] sm:$0xff]
        %v1438 = vld [vmem:[%s348 + $0xbe0] sm:$0xff]
        %v1439 = vld [vmem:[%s348 + $0xbe8] sm:$0xff]
        %v1440 = vld [vmem:[%s348 + $0xbf0] sm:$0xff]
        %v1441 = vld [vmem:[%s348 + $0xbf8] sm:$0xff]
        %v1442 = vld [vmem:[%s348 + $0xc00] sm:$0xff]
        %v1443 = vld [vmem:[%s348 + $0xc08] sm:$0xff]
        %v1444 = vld [vmem:[%s348 + $0xc10] sm:$0xff]
        %v1445 = vld [vmem:[%s348 + $0xc18] sm:$0xff]
        %v1446 = vld [vmem:[%s348 + $0xc20] sm:$0xff]
        %v1447 = vld [vmem:[%s348 + $0xc28] sm:$0xff]
        %v1448 = vld [vmem:[%s348 + $0xc30] sm:$0xff]
        %v1449 = vld [vmem:[%s348 + $0xc38] sm:$0xff]
        %v1450 = vld [vmem:[%s348 + $0xc40] sm:$0xff]
        %v1451 = vld [vmem:[%s348 + $0xc48] sm:$0xff]
        %v1452 = vld [vmem:[%s348 + $0xc50] sm:$0xff]
        %v1453 = vld [vmem:[%s348 + $0xc58] sm:$0xff]
        %v1454 = vld [vmem:[%s348 + $0xc60] sm:$0xff]
        %v1455 = vld [vmem:[%s348 + $0xc68] sm:$0xff]
        %v1456 = vld [vmem:[%s348 + $0xc70] sm:$0xff]
        %v1457 = vld [vmem:[%s348 + $0xc78] sm:$0xff]
        %v1458 = vld [vmem:[%s348 + $0xc80] sm:$0xff]
        %v1459 = vld [vmem:[%s348 + $0xc88] sm:$0xff]
        %v1460 = vld [vmem:[%s348 + $0xc90] sm:$0xff]
        %v1461 = vld [vmem:[%s348 + $0xc98] sm:$0xff]
        %v1462 = vld [vmem:[%s348 + $0xca0] sm:$0xff]
        %v1463 = vld [vmem:[%s348 + $0xca8] sm:$0xff]
        %v1464 = vld [vmem:[%s348 + $0xcb0] sm:$0xff]
        %v1465 = vld [vmem:[%s348 + $0xcb8] sm:$0xff]
        %v1466 = vld [vmem:[%s348 + $0xcc0] sm:$0xff]
        %v1467 = vld [vmem:[%s348 + $0xcc8] sm:$0xff]
        %v1468 = vld [vmem:[%s348 + $0xcd0] sm:$0xff]
        %v1469 = vld [vmem:[%s348 + $0xcd8] sm:$0xff]
        %v1470 = vld [vmem:[%s348 + $0xce0] sm:$0xff]
        %v1471 = vld [vmem:[%s348 + $0xce8] sm:$0xff]
        %v1472 = vld [vmem:[%s348 + $0xcf0] sm:$0xff]
        %v1473 = vld [vmem:[%s348 + $0xcf8] sm:$0xff]
        %v1474 = vld [vmem:[%s348 + $0xd00] sm:$0xff]
        %v1475 = vld [vmem:[%s348 + $0xd08] sm:$0xff]
        %v1476 = vld [vmem:[%s348 + $0xd10] sm:$0xff]
        %v1477 = vld [vmem:[%s348 + $0xd18] sm:$0xff]
        %v1478 = vld [vmem:[%s348 + $0xd20] sm:$0xff]
        %v1479 = vld [vmem:[%s348 + $0xd28] sm:$0xff]
        %v1480 = vld [vmem:[%s348 + $0xd30] sm:$0xff]
        %v1481 = vld [vmem:[%s348 + $0xd38] sm:$0xff]
        %v1482 = vld [vmem:[%s348 + $0xd40] sm:$0xff]
        %v1483 = vld [vmem:[%s348 + $0xd48] sm:$0xff]
        %v1484 = vld [vmem:[%s348 + $0xd50] sm:$0xff]
        %v1485 = vld [vmem:[%s348 + $0xd58] sm:$0xff]
        %v1486 = vld [vmem:[%s348 + $0xd60] sm:$0xff]
        %v1487 = vld [vmem:[%s348 + $0xd68] sm:$0xff]
        %v1488 = vld [vmem:[%s348 + $0xd70] sm:$0xff]
        %v1489 = vld [vmem:[%s348 + $0xd78] sm:$0xff]
        %v1490 = vld [vmem:[%s348 + $0xd80] sm:$0xff]
        %v1491 = vld [vmem:[%s348 + $0xd88] sm:$0xff]
        %v1492 = vld [vmem:[%s348 + $0xd90] sm:$0xff]
        %v1493 = vld [vmem:[%s348 + $0xd98] sm:$0xff]
        %v1494 = vld [vmem:[%s348 + $0xda0] sm:$0xff]
        %v1495 = vld [vmem:[%s348 + $0xda8] sm:$0xff]
        %v1496 = vld [vmem:[%s348 + $0xdb0] sm:$0xff]
        %v1497 = vld [vmem:[%s348 + $0xdb8] sm:$0xff]
        %v1498 = vld [vmem:[%s348 + $0xdc0] sm:$0xff]
        %v1499 = vld [vmem:[%s348 + $0xdc8] sm:$0xff]
        %v1500 = vld [vmem:[%s348 + $0xdd0] sm:$0xff]
        %v1501 = vld [vmem:[%s348 + $0xdd8] sm:$0xff]
        %v1502 = vld [vmem:[%s348 + $0xde0] sm:$0xff]
        %v1503 = vld [vmem:[%s348 + $0xde8] sm:$0xff]
        %v1504 = vld [vmem:[%s348 + $0xdf0] sm:$0xff]
        %v1505 = vld [vmem:[%s348 + $0xdf8] sm:$0xff]
        %v1506 = vld [vmem:[%s348 + $0xe00] sm:$0xff]
        %v1507 = vld [vmem:[%s348 + $0xe08] sm:$0xff]
        %v1508 = vld [vmem:[%s348 + $0xe10] sm:$0xff]
        %v1509 = vld [vmem:[%s348 + $0xe18] sm:$0xff]
        %v1510 = vld [vmem:[%s348 + $0xe20] sm:$0xff]
        %v1511 = vld [vmem:[%s348 + $0xe28] sm:$0xff]
        %v1512 = vld [vmem:[%s348 + $0xe30] sm:$0xff]
        %v1513 = vld [vmem:[%s348 + $0xe38] sm:$0xff]
        %v1514 = vld [vmem:[%s348 + $0xe40] sm:$0xff]
        %v1515 = vld [vmem:[%s348 + $0xe48] sm:$0xff]
        %v1516 = vld [vmem:[%s348 + $0xe50] sm:$0xff]
        %v1517 = vld [vmem:[%s348 + $0xe58] sm:$0xff]
        %v1518 = vld [vmem:[%s348 + $0xe60] sm:$0xff]
        %v1519 = vld [vmem:[%s348 + $0xe68] sm:$0xff]
        %v1520 = vld [vmem:[%s348 + $0xe70] sm:$0xff]
        %v1521 = vld [vmem:[%s348 + $0xe78] sm:$0xff]
        %v1522 = vld [vmem:[%s348 + $0xe80] sm:$0xff]
        %v1523 = vld [vmem:[%s348 + $0xe88] sm:$0xff]
        %v1524 = vld [vmem:[%s348 + $0xe90] sm:$0xff]
        %v1525 = vld [vmem:[%s348 + $0xe98] sm:$0xff]
        %v1526 = vld [vmem:[%s348 + $0xea0] sm:$0xff]
        %v1527 = vld [vmem:[%s348 + $0xea8] sm:$0xff]
        %v1528 = vld [vmem:[%s348 + $0xeb0] sm:$0xff]
        %v1529 = vld [vmem:[%s348 + $0xeb8] sm:$0xff]
        %v1530 = vld [vmem:[%s348 + $0xec0] sm:$0xff]
        %v1531 = vld [vmem:[%s348 + $0xec8] sm:$0xff]
        %v1532 = vld [vmem:[%s348 + $0xed0] sm:$0xff]
        %v1533 = vld [vmem:[%s348 + $0xed8] sm:$0xff]
        %v1534 = vld [vmem:[%s348 + $0xee0] sm:$0xff]
        %v1535 = vld [vmem:[%s348 + $0xee8] sm:$0xff]
        %v1536 = vld [vmem:[%s348 + $0xef0] sm:$0xff]
        %v1537 = vld [vmem:[%s348 + $0xef8] sm:$0xff]
        %v1538 = vld [vmem:[%s348 + $0xf00] sm:$0xff]
        %v1539 = vld [vmem:[%s348 + $0xf08] sm:$0xff]
        %v1540 = vld [vmem:[%s348 + $0xf10] sm:$0xff]
        %v1541 = vld [vmem:[%s348 + $0xf18] sm:$0xff]
        %v1542 = vld [vmem:[%s348 + $0xf20] sm:$0xff]
        %v1543 = vld [vmem:[%s348 + $0xf28] sm:$0xff]
        %v1544 = vld [vmem:[%s348 + $0xf30] sm:$0xff]
        %v1545 = vld [vmem:[%s348 + $0xf38] sm:$0xff]
        %v1546 = vld [vmem:[%s348 + $0xf40] sm:$0xff]
        %v1547 = vld [vmem:[%s348 + $0xf48] sm:$0xff]
        %v1548 = vld [vmem:[%s348 + $0xf50] sm:$0xff]
        %v1549 = vld [vmem:[%s348 + $0xf58] sm:$0xff]
        %v1550 = vld [vmem:[%s348 + $0xf60] sm:$0xff]
        %v1551 = vld [vmem:[%s348 + $0xf68] sm:$0xff]
        %v1552 = vld [vmem:[%s348 + $0xf70] sm:$0xff]
        %v1553 = vld [vmem:[%s348 + $0xf78] sm:$0xff]
        %v1554 = vld [vmem:[%s348 + $0xf80] sm:$0xff]
        %v1555 = vld [vmem:[%s348 + $0xf88] sm:$0xff]
        %v1556 = vld [vmem:[%s348 + $0xf90] sm:$0xff]
        %v1557 = vld [vmem:[%s348 + $0xf98] sm:$0xff]
        %v1558 = vld [vmem:[%s348 + $0xfa0] sm:$0xff]
        %v1559 = vld [vmem:[%s348 + $0xfa8] sm:$0xff]
        %v1560 = vld [vmem:[%s348 + $0xfb0] sm:$0xff]
        %v1561 = vld [vmem:[%s348 + $0xfb8] sm:$0xff]
        %v1562 = vld [vmem:[%s348 + $0xfc0] sm:$0xff]
        %v1563 = vld [vmem:[%s348 + $0xfc8] sm:$0xff]
        %v1564 = vld [vmem:[%s348 + $0xfd0] sm:$0xff]
        %v1565 = vld [vmem:[%s348 + $0xfd8] sm:$0xff]
        %v1566 = vld [vmem:[%s348 + $0xfe0] sm:$0xff]
        %v1567 = vld [vmem:[%s348 + $0xfe8] sm:$0xff]
        %v1568 = vld [vmem:[%s348 + $0xff0] sm:$0xff]
        %v1569 = vld [vmem:[%s348 + $0xff8] sm:$0xff]
        %v2082 = vunpack.c.l.b16 %v1058
        %v2083 = vunpack.c.h.b16 %v1058
        %v2084 = vunpack.c.l.b16 %v1059
        %v2085 = vunpack.c.h.b16 %v1059
        %v2086 = vunpack.c.l.b16 %v1060
        %v2087 = vunpack.c.h.b16 %v1060
        %v2088 = vunpack.c.l.b16 %v1061
        %v2089 = vunpack.c.h.b16 %v1061
        %v2090 = vunpack.c.l.b16 %v1062
        %v2091 = vunpack.c.h.b16 %v1062
        %v2092 = vunpack.c.l.b16 %v1063
        %v2093 = vunpack.c.h.b16 %v1063
        %v2094 = vunpack.c.l.b16 %v1064
        %v2095 = vunpack.c.h.b16 %v1064
        %v2096 = vunpack.c.l.b16 %v1065
        %v2097 = vunpack.c.h.b16 %v1065
        %v2098 = vunpack.c.l.b16 %v1066
        %v2099 = vunpack.c.h.b16 %v1066
        %v2100 = vunpack.c.l.b16 %v1067
        %v2101 = vunpack.c.h.b16 %v1067
        %v2102 = vunpack.c.l.b16 %v1068
        %v2103 = vunpack.c.h.b16 %v1068
        %v2104 = vunpack.c.l.b16 %v1069
        %v2105 = vunpack.c.h.b16 %v1069
        %v2106 = vunpack.c.l.b16 %v1070
        %v2107 = vunpack.c.h.b16 %v1070
        %v2108 = vunpack.c.l.b16 %v1071
        %v2109 = vunpack.c.h.b16 %v1071
        %v2110 = vunpack.c.l.b16 %v1072
        %v2111 = vunpack.c.h.b16 %v1072
        %v2112 = vunpack.c.l.b16 %v1073
        %v2113 = vunpack.c.h.b16 %v1073
        %v2114 = vunpack.c.l.b16 %v1074
        %v2115 = vunpack.c.h.b16 %v1074
        %v2116 = vunpack.c.l.b16 %v1075
        %v2117 = vunpack.c.h.b16 %v1075
        %v2118 = vunpack.c.l.b16 %v1076
        %v2119 = vunpack.c.h.b16 %v1076
        %v2120 = vunpack.c.l.b16 %v1077
        %v2121 = vunpack.c.h.b16 %v1077
        %v2122 = vunpack.c.l.b16 %v1078
        %v2123 = vunpack.c.h.b16 %v1078
        %v2124 = vunpack.c.l.b16 %v1079
        %v2125 = vunpack.c.h.b16 %v1079
        %v2126 = vunpack.c.l.b16 %v1080
        %v2127 = vunpack.c.h.b16 %v1080
        %v2128 = vunpack.c.l.b16 %v1081
        %v2129 = vunpack.c.h.b16 %v1081
        %v2130 = vunpack.c.l.b16 %v1082
        %v2131 = vunpack.c.h.b16 %v1082
        %v2132 = vunpack.c.l.b16 %v1083
        %v2133 = vunpack.c.h.b16 %v1083
        %v2134 = vunpack.c.l.b16 %v1084
        %v2135 = vunpack.c.h.b16 %v1084
        %v2136 = vunpack.c.l.b16 %v1085
        %v2137 = vunpack.c.h.b16 %v1085
        %v2138 = vunpack.c.l.b16 %v1086
        %v2139 = vunpack.c.h.b16 %v1086
        %v2140 = vunpack.c.l.b16 %v1087
        %v2141 = vunpack.c.h.b16 %v1087
        %v2142 = vunpack.c.l.b16 %v1088
        %v2143 = vunpack.c.h.b16 %v1088
        %v2144 = vunpack.c.l.b16 %v1089
        %v2145 = vunpack.c.h.b16 %v1089
        %v2146 = vunpack.c.l.b16 %v1090
        %v2147 = vunpack.c.h.b16 %v1090
        %v2148 = vunpack.c.l.b16 %v1091
        %v2149 = vunpack.c.h.b16 %v1091
        %v2150 = vunpack.c.l.b16 %v1092
        %v2151 = vunpack.c.h.b16 %v1092
        %v2152 = vunpack.c.l.b16 %v1093
        %v2153 = vunpack.c.h.b16 %v1093
        %v2154 = vunpack.c.l.b16 %v1094
        %v2155 = vunpack.c.h.b16 %v1094
        %v2156 = vunpack.c.l.b16 %v1095
        %v2157 = vunpack.c.h.b16 %v1095
        %v2158 = vunpack.c.l.b16 %v1096
        %v2159 = vunpack.c.h.b16 %v1096
        %v2160 = vunpack.c.l.b16 %v1097
        %v2161 = vunpack.c.h.b16 %v1097
        %v2162 = vunpack.c.l.b16 %v1098
        %v2163 = vunpack.c.h.b16 %v1098
        %v2164 = vunpack.c.l.b16 %v1099
        %v2165 = vunpack.c.h.b16 %v1099
        %v2166 = vunpack.c.l.b16 %v1100
        %v2167 = vunpack.c.h.b16 %v1100
        %v2168 = vunpack.c.l.b16 %v1101
        %v2169 = vunpack.c.h.b16 %v1101
        %v2170 = vunpack.c.l.b16 %v1102
        %v2171 = vunpack.c.h.b16 %v1102
        %v2172 = vunpack.c.l.b16 %v1103
        %v2173 = vunpack.c.h.b16 %v1103
        %v2174 = vunpack.c.l.b16 %v1104
        %v2175 = vunpack.c.h.b16 %v1104
        %v2176 = vunpack.c.l.b16 %v1105
        %v2177 = vunpack.c.h.b16 %v1105
        %v2178 = vunpack.c.l.b16 %v1106
        %v2179 = vunpack.c.h.b16 %v1106
        %v2180 = vunpack.c.l.b16 %v1107
        %v2181 = vunpack.c.h.b16 %v1107
        %v2182 = vunpack.c.l.b16 %v1108
        %v2183 = vunpack.c.h.b16 %v1108
        %v2184 = vunpack.c.l.b16 %v1109
        %v2185 = vunpack.c.h.b16 %v1109
        %v2186 = vunpack.c.l.b16 %v1110
        %v2187 = vunpack.c.h.b16 %v1110
        %v2188 = vunpack.c.l.b16 %v1111
        %v2189 = vunpack.c.h.b16 %v1111
        %v2190 = vunpack.c.l.b16 %v1112
        %v2191 = vunpack.c.h.b16 %v1112
        %v2192 = vunpack.c.l.b16 %v1113
        %v2193 = vunpack.c.h.b16 %v1113
        %v2194 = vunpack.c.l.b16 %v1114
        %v2195 = vunpack.c.h.b16 %v1114
        %v2196 = vunpack.c.l.b16 %v1115
        %v2197 = vunpack.c.h.b16 %v1115
        %v2198 = vunpack.c.l.b16 %v1116
        %v2199 = vunpack.c.h.b16 %v1116
        %v2200 = vunpack.c.l.b16 %v1117
        %v2201 = vunpack.c.h.b16 %v1117
        %v2202 = vunpack.c.l.b16 %v1118
        %v2203 = vunpack.c.h.b16 %v1118
        %v2204 = vunpack.c.l.b16 %v1119
        %v2205 = vunpack.c.h.b16 %v1119
        %v2206 = vunpack.c.l.b16 %v1120
        %v2207 = vunpack.c.h.b16 %v1120
        %v2208 = vunpack.c.l.b16 %v1121
        %v2209 = vunpack.c.h.b16 %v1121
        %v2210 = vunpack.c.l.b16 %v1122
        %v2211 = vunpack.c.h.b16 %v1122
        %v2212 = vunpack.c.l.b16 %v1123
        %v2213 = vunpack.c.h.b16 %v1123
        %v2214 = vunpack.c.l.b16 %v1124
        %v2215 = vunpack.c.h.b16 %v1124
        %v2216 = vunpack.c.l.b16 %v1125
        %v2217 = vunpack.c.h.b16 %v1125
        %v2218 = vunpack.c.l.b16 %v1126
        %v2219 = vunpack.c.h.b16 %v1126
        %v2220 = vunpack.c.l.b16 %v1127
        %v2221 = vunpack.c.h.b16 %v1127
        %v2222 = vunpack.c.l.b16 %v1128
        %v2223 = vunpack.c.h.b16 %v1128
        %v2224 = vunpack.c.l.b16 %v1129
        %v2225 = vunpack.c.h.b16 %v1129
        %v2226 = vunpack.c.l.b16 %v1130
        %v2227 = vunpack.c.h.b16 %v1130
        %v2228 = vunpack.c.l.b16 %v1131
        %v2229 = vunpack.c.h.b16 %v1131
        %v2230 = vunpack.c.l.b16 %v1132
        %v2231 = vunpack.c.h.b16 %v1132
        %v2232 = vunpack.c.l.b16 %v1133
        %v2233 = vunpack.c.h.b16 %v1133
        %v2234 = vunpack.c.l.b16 %v1134
        %v2235 = vunpack.c.h.b16 %v1134
        %v2236 = vunpack.c.l.b16 %v1135
        %v2237 = vunpack.c.h.b16 %v1135
        %v2238 = vunpack.c.l.b16 %v1136
        %v2239 = vunpack.c.h.b16 %v1136
        %v2240 = vunpack.c.l.b16 %v1137
        %v2241 = vunpack.c.h.b16 %v1137
        %v2242 = vunpack.c.l.b16 %v1138
        %v2243 = vunpack.c.h.b16 %v1138
        %v2244 = vunpack.c.l.b16 %v1139
        %v2245 = vunpack.c.h.b16 %v1139
        %v2246 = vunpack.c.l.b16 %v1140
        %v2247 = vunpack.c.h.b16 %v1140
        %v2248 = vunpack.c.l.b16 %v1141
        %v2249 = vunpack.c.h.b16 %v1141
        %v2250 = vunpack.c.l.b16 %v1142
        %v2251 = vunpack.c.h.b16 %v1142
        %v2252 = vunpack.c.l.b16 %v1143
        %v2253 = vunpack.c.h.b16 %v1143
        %v2254 = vunpack.c.l.b16 %v1144
        %v2255 = vunpack.c.h.b16 %v1144
        %v2256 = vunpack.c.l.b16 %v1145
        %v2257 = vunpack.c.h.b16 %v1145
        %v2258 = vunpack.c.l.b16 %v1146
        %v2259 = vunpack.c.h.b16 %v1146
        %v2260 = vunpack.c.l.b16 %v1147
        %v2261 = vunpack.c.h.b16 %v1147
        %v2262 = vunpack.c.l.b16 %v1148
        %v2263 = vunpack.c.h.b16 %v1148
        %v2264 = vunpack.c.l.b16 %v1149
        %v2265 = vunpack.c.h.b16 %v1149
        %v2266 = vunpack.c.l.b16 %v1150
        %v2267 = vunpack.c.h.b16 %v1150
        %v2268 = vunpack.c.l.b16 %v1151
        %v2269 = vunpack.c.h.b16 %v1151
        %v2270 = vunpack.c.l.b16 %v1152
        %v2271 = vunpack.c.h.b16 %v1152
        %v2272 = vunpack.c.l.b16 %v1153
        %v2273 = vunpack.c.h.b16 %v1153
        %v2274 = vunpack.c.l.b16 %v1154
        %v2275 = vunpack.c.h.b16 %v1154
        %v2276 = vunpack.c.l.b16 %v1155
        %v2277 = vunpack.c.h.b16 %v1155
        %v2278 = vunpack.c.l.b16 %v1156
        %v2279 = vunpack.c.h.b16 %v1156
        %v2280 = vunpack.c.l.b16 %v1157
        %v2281 = vunpack.c.h.b16 %v1157
        %v2282 = vunpack.c.l.b16 %v1158
        %v2283 = vunpack.c.h.b16 %v1158
        %v2284 = vunpack.c.l.b16 %v1159
        %v2285 = vunpack.c.h.b16 %v1159
        %v2286 = vunpack.c.l.b16 %v1160
        %v2287 = vunpack.c.h.b16 %v1160
        %v2288 = vunpack.c.l.b16 %v1161
        %v2289 = vunpack.c.h.b16 %v1161
        %v2290 = vunpack.c.l.b16 %v1162
        %v2291 = vunpack.c.h.b16 %v1162
        %v2292 = vunpack.c.l.b16 %v1163
        %v2293 = vunpack.c.h.b16 %v1163
        %v2294 = vunpack.c.l.b16 %v1164
        %v2295 = vunpack.c.h.b16 %v1164
        %v2296 = vunpack.c.l.b16 %v1165
        %v2297 = vunpack.c.h.b16 %v1165
        %v2298 = vunpack.c.l.b16 %v1166
        %v2299 = vunpack.c.h.b16 %v1166
        %v2300 = vunpack.c.l.b16 %v1167
        %v2301 = vunpack.c.h.b16 %v1167
        %v2302 = vunpack.c.l.b16 %v1168
        %v2303 = vunpack.c.h.b16 %v1168
        %v2304 = vunpack.c.l.b16 %v1169
        %v2305 = vunpack.c.h.b16 %v1169
        %v2306 = vunpack.c.l.b16 %v1170
        %v2307 = vunpack.c.h.b16 %v1170
        %v2308 = vunpack.c.l.b16 %v1171
        %v2309 = vunpack.c.h.b16 %v1171
        %v2310 = vunpack.c.l.b16 %v1172
        %v2311 = vunpack.c.h.b16 %v1172
        %v2312 = vunpack.c.l.b16 %v1173
        %v2313 = vunpack.c.h.b16 %v1173
        %v2314 = vunpack.c.l.b16 %v1174
        %v2315 = vunpack.c.h.b16 %v1174
        %v2316 = vunpack.c.l.b16 %v1175
        %v2317 = vunpack.c.h.b16 %v1175
        %v2318 = vunpack.c.l.b16 %v1176
        %v2319 = vunpack.c.h.b16 %v1176
        %v2320 = vunpack.c.l.b16 %v1177
        %v2321 = vunpack.c.h.b16 %v1177
        %v2322 = vunpack.c.l.b16 %v1178
        %v2323 = vunpack.c.h.b16 %v1178
        %v2324 = vunpack.c.l.b16 %v1179
        %v2325 = vunpack.c.h.b16 %v1179
        %v2326 = vunpack.c.l.b16 %v1180
        %v2327 = vunpack.c.h.b16 %v1180
        %v2328 = vunpack.c.l.b16 %v1181
        %v2329 = vunpack.c.h.b16 %v1181
        %v2330 = vunpack.c.l.b16 %v1182
        %v2331 = vunpack.c.h.b16 %v1182
        %v2332 = vunpack.c.l.b16 %v1183
        %v2333 = vunpack.c.h.b16 %v1183
        %v2334 = vunpack.c.l.b16 %v1184
        %v2335 = vunpack.c.h.b16 %v1184
        %v2336 = vunpack.c.l.b16 %v1185
        %v2337 = vunpack.c.h.b16 %v1185
        %v2338 = vunpack.c.l.b16 %v1186
        %v2339 = vunpack.c.h.b16 %v1186
        %v2340 = vunpack.c.l.b16 %v1187
        %v2341 = vunpack.c.h.b16 %v1187
        %v2342 = vunpack.c.l.b16 %v1188
        %v2343 = vunpack.c.h.b16 %v1188
        %v2344 = vunpack.c.l.b16 %v1189
        %v2345 = vunpack.c.h.b16 %v1189
        %v2346 = vunpack.c.l.b16 %v1190
        %v2347 = vunpack.c.h.b16 %v1190
        %v2348 = vunpack.c.l.b16 %v1191
        %v2349 = vunpack.c.h.b16 %v1191
        %v2350 = vunpack.c.l.b16 %v1192
        %v2351 = vunpack.c.h.b16 %v1192
        %v2352 = vunpack.c.l.b16 %v1193
        %v2353 = vunpack.c.h.b16 %v1193
        %v2354 = vunpack.c.l.b16 %v1194
        %v2355 = vunpack.c.h.b16 %v1194
        %v2356 = vunpack.c.l.b16 %v1195
        %v2357 = vunpack.c.h.b16 %v1195
        %v2358 = vunpack.c.l.b16 %v1196
        %v2359 = vunpack.c.h.b16 %v1196
        %v2360 = vunpack.c.l.b16 %v1197
        %v2361 = vunpack.c.h.b16 %v1197
        %v2362 = vunpack.c.l.b16 %v1198
        %v2363 = vunpack.c.h.b16 %v1198
        %v2364 = vunpack.c.l.b16 %v1199
        %v2365 = vunpack.c.h.b16 %v1199
        %v2366 = vunpack.c.l.b16 %v1200
        %v2367 = vunpack.c.h.b16 %v1200
        %v2368 = vunpack.c.l.b16 %v1201
        %v2369 = vunpack.c.h.b16 %v1201
        %v2370 = vunpack.c.l.b16 %v1202
        %v2371 = vunpack.c.h.b16 %v1202
        %v2372 = vunpack.c.l.b16 %v1203
        %v2373 = vunpack.c.h.b16 %v1203
        %v2374 = vunpack.c.l.b16 %v1204
        %v2375 = vunpack.c.h.b16 %v1204
        %v2376 = vunpack.c.l.b16 %v1205
        %v2377 = vunpack.c.h.b16 %v1205
        %v2378 = vunpack.c.l.b16 %v1206
        %v2379 = vunpack.c.h.b16 %v1206
        %v2380 = vunpack.c.l.b16 %v1207
        %v2381 = vunpack.c.h.b16 %v1207
        %v2382 = vunpack.c.l.b16 %v1208
        %v2383 = vunpack.c.h.b16 %v1208
        %v2384 = vunpack.c.l.b16 %v1209
        %v2385 = vunpack.c.h.b16 %v1209
        %v2386 = vunpack.c.l.b16 %v1210
        %v2387 = vunpack.c.h.b16 %v1210
        %v2388 = vunpack.c.l.b16 %v1211
        %v2389 = vunpack.c.h.b16 %v1211
        %v2390 = vunpack.c.l.b16 %v1212
        %v2391 = vunpack.c.h.b16 %v1212
        %v2392 = vunpack.c.l.b16 %v1213
        %v2393 = vunpack.c.h.b16 %v1213
        %v2394 = vunpack.c.l.b16 %v1214
        %v2395 = vunpack.c.h.b16 %v1214
        %v2396 = vunpack.c.l.b16 %v1215
        %v2397 = vunpack.c.h.b16 %v1215
        %v2398 = vunpack.c.l.b16 %v1216
        %v2399 = vunpack.c.h.b16 %v1216
        %v2400 = vunpack.c.l.b16 %v1217
        %v2401 = vunpack.c.h.b16 %v1217
        %v2402 = vunpack.c.l.b16 %v1218
        %v2403 = vunpack.c.h.b16 %v1218
        %v2404 = vunpack.c.l.b16 %v1219
        %v2405 = vunpack.c.h.b16 %v1219
        %v2406 = vunpack.c.l.b16 %v1220
        %v2407 = vunpack.c.h.b16 %v1220
        %v2408 = vunpack.c.l.b16 %v1221
        %v2409 = vunpack.c.h.b16 %v1221
        %v2410 = vunpack.c.l.b16 %v1222
        %v2411 = vunpack.c.h.b16 %v1222
        %v2412 = vunpack.c.l.b16 %v1223
        %v2413 = vunpack.c.h.b16 %v1223
        %v2414 = vunpack.c.l.b16 %v1224
        %v2415 = vunpack.c.h.b16 %v1224
        %v2416 = vunpack.c.l.b16 %v1225
        %v2417 = vunpack.c.h.b16 %v1225
        %v2418 = vunpack.c.l.b16 %v1226
        %v2419 = vunpack.c.h.b16 %v1226
        %v2420 = vunpack.c.l.b16 %v1227
        %v2421 = vunpack.c.h.b16 %v1227
        %v2422 = vunpack.c.l.b16 %v1228
        %v2423 = vunpack.c.h.b16 %v1228
        %v2424 = vunpack.c.l.b16 %v1229
        %v2425 = vunpack.c.h.b16 %v1229
        %v2426 = vunpack.c.l.b16 %v1230
        %v2427 = vunpack.c.h.b16 %v1230
        %v2428 = vunpack.c.l.b16 %v1231
        %v2429 = vunpack.c.h.b16 %v1231
        %v2430 = vunpack.c.l.b16 %v1232
        %v2431 = vunpack.c.h.b16 %v1232
        %v2432 = vunpack.c.l.b16 %v1233
        %v2433 = vunpack.c.h.b16 %v1233
        %v2434 = vunpack.c.l.b16 %v1234
        %v2435 = vunpack.c.h.b16 %v1234
        %v2436 = vunpack.c.l.b16 %v1235
        %v2437 = vunpack.c.h.b16 %v1235
        %v2438 = vunpack.c.l.b16 %v1236
        %v2439 = vunpack.c.h.b16 %v1236
        %v2440 = vunpack.c.l.b16 %v1237
        %v2441 = vunpack.c.h.b16 %v1237
        %v2442 = vunpack.c.l.b16 %v1238
        %v2443 = vunpack.c.h.b16 %v1238
        %v2444 = vunpack.c.l.b16 %v1239
        %v2445 = vunpack.c.h.b16 %v1239
        %v2446 = vunpack.c.l.b16 %v1240
        %v2447 = vunpack.c.h.b16 %v1240
        %v2448 = vunpack.c.l.b16 %v1241
        %v2449 = vunpack.c.h.b16 %v1241
        %v2450 = vunpack.c.l.b16 %v1242
        %v2451 = vunpack.c.h.b16 %v1242
        %v2452 = vunpack.c.l.b16 %v1243
        %v2453 = vunpack.c.h.b16 %v1243
        %v2454 = vunpack.c.l.b16 %v1244
        %v2455 = vunpack.c.h.b16 %v1244
        %v2456 = vunpack.c.l.b16 %v1245
        %v2457 = vunpack.c.h.b16 %v1245
        %v2458 = vunpack.c.l.b16 %v1246
        %v2459 = vunpack.c.h.b16 %v1246
        %v2460 = vunpack.c.l.b16 %v1247
        %v2461 = vunpack.c.h.b16 %v1247
        %v2462 = vunpack.c.l.b16 %v1248
        %v2463 = vunpack.c.h.b16 %v1248
        %v2464 = vunpack.c.l.b16 %v1249
        %v2465 = vunpack.c.h.b16 %v1249
        %v2466 = vunpack.c.l.b16 %v1250
        %v2467 = vunpack.c.h.b16 %v1250
        %v2468 = vunpack.c.l.b16 %v1251
        %v2469 = vunpack.c.h.b16 %v1251
        %v2470 = vunpack.c.l.b16 %v1252
        %v2471 = vunpack.c.h.b16 %v1252
        %v2472 = vunpack.c.l.b16 %v1253
        %v2473 = vunpack.c.h.b16 %v1253
        %v2474 = vunpack.c.l.b16 %v1254
        %v2475 = vunpack.c.h.b16 %v1254
        %v2476 = vunpack.c.l.b16 %v1255
        %v2477 = vunpack.c.h.b16 %v1255
        %v2478 = vunpack.c.l.b16 %v1256
        %v2479 = vunpack.c.h.b16 %v1256
        %v2480 = vunpack.c.l.b16 %v1257
        %v2481 = vunpack.c.h.b16 %v1257
        %v2482 = vunpack.c.l.b16 %v1258
        %v2483 = vunpack.c.h.b16 %v1258
        %v2484 = vunpack.c.l.b16 %v1259
        %v2485 = vunpack.c.h.b16 %v1259
        %v2486 = vunpack.c.l.b16 %v1260
        %v2487 = vunpack.c.h.b16 %v1260
        %v2488 = vunpack.c.l.b16 %v1261
        %v2489 = vunpack.c.h.b16 %v1261
        %v2490 = vunpack.c.l.b16 %v1262
        %v2491 = vunpack.c.h.b16 %v1262
        %v2492 = vunpack.c.l.b16 %v1263
        %v2493 = vunpack.c.h.b16 %v1263
        %v2494 = vunpack.c.l.b16 %v1264
        %v2495 = vunpack.c.h.b16 %v1264
        %v2496 = vunpack.c.l.b16 %v1265
        %v2497 = vunpack.c.h.b16 %v1265
        %v2498 = vunpack.c.l.b16 %v1266
        %v2499 = vunpack.c.h.b16 %v1266
        %v2500 = vunpack.c.l.b16 %v1267
        %v2501 = vunpack.c.h.b16 %v1267
        %v2502 = vunpack.c.l.b16 %v1268
        %v2503 = vunpack.c.h.b16 %v1268
        %v2504 = vunpack.c.l.b16 %v1269
        %v2505 = vunpack.c.h.b16 %v1269
        %v2506 = vunpack.c.l.b16 %v1270
        %v2507 = vunpack.c.h.b16 %v1270
        %v2508 = vunpack.c.l.b16 %v1271
        %v2509 = vunpack.c.h.b16 %v1271
        %v2510 = vunpack.c.l.b16 %v1272
        %v2511 = vunpack.c.h.b16 %v1272
        %v2512 = vunpack.c.l.b16 %v1273
        %v2513 = vunpack.c.h.b16 %v1273
        %v2514 = vunpack.c.l.b16 %v1274
        %v2515 = vunpack.c.h.b16 %v1274
        %v2516 = vunpack.c.l.b16 %v1275
        %v2517 = vunpack.c.h.b16 %v1275
        %v2518 = vunpack.c.l.b16 %v1276
        %v2519 = vunpack.c.h.b16 %v1276
        %v2520 = vunpack.c.l.b16 %v1277
        %v2521 = vunpack.c.h.b16 %v1277
        %v2522 = vunpack.c.l.b16 %v1278
        %v2523 = vunpack.c.h.b16 %v1278
        %v2524 = vunpack.c.l.b16 %v1279
        %v2525 = vunpack.c.h.b16 %v1279
        %v2526 = vunpack.c.l.b16 %v1280
        %v2527 = vunpack.c.h.b16 %v1280
        %v2528 = vunpack.c.l.b16 %v1281
        %v2529 = vunpack.c.h.b16 %v1281
        %v2530 = vunpack.c.l.b16 %v1282
        %v2531 = vunpack.c.h.b16 %v1282
        %v2532 = vunpack.c.l.b16 %v1283
        %v2533 = vunpack.c.h.b16 %v1283
        %v2534 = vunpack.c.l.b16 %v1284
        %v2535 = vunpack.c.h.b16 %v1284
        %v2536 = vunpack.c.l.b16 %v1285
        %v2537 = vunpack.c.h.b16 %v1285
        %v2538 = vunpack.c.l.b16 %v1286
        %v2539 = vunpack.c.h.b16 %v1286
        %v2540 = vunpack.c.l.b16 %v1287
        %v2541 = vunpack.c.h.b16 %v1287
        %v2542 = vunpack.c.l.b16 %v1288
        %v2543 = vunpack.c.h.b16 %v1288
        %v2544 = vunpack.c.l.b16 %v1289
        %v2545 = vunpack.c.h.b16 %v1289
        %v2546 = vunpack.c.l.b16 %v1290
        %v2547 = vunpack.c.h.b16 %v1290
        %v2548 = vunpack.c.l.b16 %v1291
        %v2549 = vunpack.c.h.b16 %v1291
        %v2550 = vunpack.c.l.b16 %v1292
        %v2551 = vunpack.c.h.b16 %v1292
        %v2552 = vunpack.c.l.b16 %v1293
        %v2553 = vunpack.c.h.b16 %v1293
        %v2554 = vunpack.c.l.b16 %v1294
        %v2555 = vunpack.c.h.b16 %v1294
        %v2556 = vunpack.c.l.b16 %v1295
        %v2557 = vunpack.c.h.b16 %v1295
        %v2558 = vunpack.c.l.b16 %v1296
        %v2559 = vunpack.c.h.b16 %v1296
        %v2560 = vunpack.c.l.b16 %v1297
        %v2561 = vunpack.c.h.b16 %v1297
        %v2562 = vunpack.c.l.b16 %v1298
        %v2563 = vunpack.c.h.b16 %v1298
        %v2564 = vunpack.c.l.b16 %v1299
        %v2565 = vunpack.c.h.b16 %v1299
        %v2566 = vunpack.c.l.b16 %v1300
        %v2567 = vunpack.c.h.b16 %v1300
        %v2568 = vunpack.c.l.b16 %v1301
        %v2569 = vunpack.c.h.b16 %v1301
        %v2570 = vunpack.c.l.b16 %v1302
        %v2571 = vunpack.c.h.b16 %v1302
        %v2572 = vunpack.c.l.b16 %v1303
        %v2573 = vunpack.c.h.b16 %v1303
        %v2574 = vunpack.c.l.b16 %v1304
        %v2575 = vunpack.c.h.b16 %v1304
        %v2576 = vunpack.c.l.b16 %v1305
        %v2577 = vunpack.c.h.b16 %v1305
        %v2578 = vunpack.c.l.b16 %v1306
        %v2579 = vunpack.c.h.b16 %v1306
        %v2580 = vunpack.c.l.b16 %v1307
        %v2581 = vunpack.c.h.b16 %v1307
        %v2582 = vunpack.c.l.b16 %v1308
        %v2583 = vunpack.c.h.b16 %v1308
        %v2584 = vunpack.c.l.b16 %v1309
        %v2585 = vunpack.c.h.b16 %v1309
        %v2586 = vunpack.c.l.b16 %v1310
        %v2587 = vunpack.c.h.b16 %v1310
        %v2588 = vunpack.c.l.b16 %v1311
        %v2589 = vunpack.c.h.b16 %v1311
        %v2590 = vunpack.c.l.b16 %v1312
        %v2591 = vunpack.c.h.b16 %v1312
        %v2592 = vunpack.c.l.b16 %v1313
        %v2593 = vunpack.c.h.b16 %v1313
        %v2594 = vunpack.c.l.b16 %v1314
        %v2595 = vunpack.c.h.b16 %v1314
        %v2596 = vunpack.c.l.b16 %v1315
        %v2597 = vunpack.c.h.b16 %v1315
        %v2598 = vunpack.c.l.b16 %v1316
        %v2599 = vunpack.c.h.b16 %v1316
        %v2600 = vunpack.c.l.b16 %v1317
        %v2601 = vunpack.c.h.b16 %v1317
        %v2602 = vunpack.c.l.b16 %v1318
        %v2603 = vunpack.c.h.b16 %v1318
        %v2604 = vunpack.c.l.b16 %v1319
        %v2605 = vunpack.c.h.b16 %v1319
        %v2606 = vunpack.c.l.b16 %v1320
        %v2607 = vunpack.c.h.b16 %v1320
        %v2608 = vunpack.c.l.b16 %v1321
        %v2609 = vunpack.c.h.b16 %v1321
        %v2610 = vunpack.c.l.b16 %v1322
        %v2611 = vunpack.c.h.b16 %v1322
        %v2612 = vunpack.c.l.b16 %v1323
        %v2613 = vunpack.c.h.b16 %v1323
        %v2614 = vunpack.c.l.b16 %v1324
        %v2615 = vunpack.c.h.b16 %v1324
        %v2616 = vunpack.c.l.b16 %v1325
        %v2617 = vunpack.c.h.b16 %v1325
        %v2618 = vunpack.c.l.b16 %v1326
        %v2619 = vunpack.c.h.b16 %v1326
        %v2620 = vunpack.c.l.b16 %v1327
        %v2621 = vunpack.c.h.b16 %v1327
        %v2622 = vunpack.c.l.b16 %v1328
        %v2623 = vunpack.c.h.b16 %v1328
        %v2624 = vunpack.c.l.b16 %v1329
        %v2625 = vunpack.c.h.b16 %v1329
        %v2626 = vunpack.c.l.b16 %v1330
        %v2627 = vunpack.c.h.b16 %v1330
        %v2628 = vunpack.c.l.b16 %v1331
        %v2629 = vunpack.c.h.b16 %v1331
        %v2630 = vunpack.c.l.b16 %v1332
        %v2631 = vunpack.c.h.b16 %v1332
        %v2632 = vunpack.c.l.b16 %v1333
        %v2633 = vunpack.c.h.b16 %v1333
        %v2634 = vunpack.c.l.b16 %v1334
        %v2635 = vunpack.c.h.b16 %v1334
        %v2636 = vunpack.c.l.b16 %v1335
        %v2637 = vunpack.c.h.b16 %v1335
        %v2638 = vunpack.c.l.b16 %v1336
        %v2639 = vunpack.c.h.b16 %v1336
        %v2640 = vunpack.c.l.b16 %v1337
        %v2641 = vunpack.c.h.b16 %v1337
        %v2642 = vunpack.c.l.b16 %v1338
        %v2643 = vunpack.c.h.b16 %v1338
        %v2644 = vunpack.c.l.b16 %v1339
        %v2645 = vunpack.c.h.b16 %v1339
        %v2646 = vunpack.c.l.b16 %v1340
        %v2647 = vunpack.c.h.b16 %v1340
        %v2648 = vunpack.c.l.b16 %v1341
        %v2649 = vunpack.c.h.b16 %v1341
        %v2650 = vunpack.c.l.b16 %v1342
        %v2651 = vunpack.c.h.b16 %v1342
        %v2652 = vunpack.c.l.b16 %v1343
        %v2653 = vunpack.c.h.b16 %v1343
        %v2654 = vunpack.c.l.b16 %v1344
        %v2655 = vunpack.c.h.b16 %v1344
        %v2656 = vunpack.c.l.b16 %v1345
        %v2657 = vunpack.c.h.b16 %v1345
        %v2658 = vunpack.c.l.b16 %v1346
        %v2659 = vunpack.c.h.b16 %v1346
        %v2660 = vunpack.c.l.b16 %v1347
        %v2661 = vunpack.c.h.b16 %v1347
        %v2662 = vunpack.c.l.b16 %v1348
        %v2663 = vunpack.c.h.b16 %v1348
        %v2664 = vunpack.c.l.b16 %v1349
        %v2665 = vunpack.c.h.b16 %v1349
        %v2666 = vunpack.c.l.b16 %v1350
        %v2667 = vunpack.c.h.b16 %v1350
        %v2668 = vunpack.c.l.b16 %v1351
        %v2669 = vunpack.c.h.b16 %v1351
        %v2670 = vunpack.c.l.b16 %v1352
        %v2671 = vunpack.c.h.b16 %v1352
        %v2672 = vunpack.c.l.b16 %v1353
        %v2673 = vunpack.c.h.b16 %v1353
        %v2674 = vunpack.c.l.b16 %v1354
        %v2675 = vunpack.c.h.b16 %v1354
        %v2676 = vunpack.c.l.b16 %v1355
        %v2677 = vunpack.c.h.b16 %v1355
        %v2678 = vunpack.c.l.b16 %v1356
        %v2679 = vunpack.c.h.b16 %v1356
        %v2680 = vunpack.c.l.b16 %v1357
        %v2681 = vunpack.c.h.b16 %v1357
        %v2682 = vunpack.c.l.b16 %v1358
        %v2683 = vunpack.c.h.b16 %v1358
        %v2684 = vunpack.c.l.b16 %v1359
        %v2685 = vunpack.c.h.b16 %v1359
        %v2686 = vunpack.c.l.b16 %v1360
        %v2687 = vunpack.c.h.b16 %v1360
        %v2688 = vunpack.c.l.b16 %v1361
        %v2689 = vunpack.c.h.b16 %v1361
        %v2690 = vunpack.c.l.b16 %v1362
        %v2691 = vunpack.c.h.b16 %v1362
        %v2692 = vunpack.c.l.b16 %v1363
        %v2693 = vunpack.c.h.b16 %v1363
        %v2694 = vunpack.c.l.b16 %v1364
        %v2695 = vunpack.c.h.b16 %v1364
        %v2696 = vunpack.c.l.b16 %v1365
        %v2697 = vunpack.c.h.b16 %v1365
        %v2698 = vunpack.c.l.b16 %v1366
        %v2699 = vunpack.c.h.b16 %v1366
        %v2700 = vunpack.c.l.b16 %v1367
        %v2701 = vunpack.c.h.b16 %v1367
        %v2702 = vunpack.c.l.b16 %v1368
        %v2703 = vunpack.c.h.b16 %v1368
        %v2704 = vunpack.c.l.b16 %v1369
        %v2705 = vunpack.c.h.b16 %v1369
        %v2706 = vunpack.c.l.b16 %v1370
        %v2707 = vunpack.c.h.b16 %v1370
        %v2708 = vunpack.c.l.b16 %v1371
        %v2709 = vunpack.c.h.b16 %v1371
        %v2710 = vunpack.c.l.b16 %v1372
        %v2711 = vunpack.c.h.b16 %v1372
        %v2712 = vunpack.c.l.b16 %v1373
        %v2713 = vunpack.c.h.b16 %v1373
        %v2714 = vunpack.c.l.b16 %v1374
        %v2715 = vunpack.c.h.b16 %v1374
        %v2716 = vunpack.c.l.b16 %v1375
        %v2717 = vunpack.c.h.b16 %v1375
        %v2718 = vunpack.c.l.b16 %v1376
        %v2719 = vunpack.c.h.b16 %v1376
        %v2720 = vunpack.c.l.b16 %v1377
        %v2721 = vunpack.c.h.b16 %v1377
        %v2722 = vunpack.c.l.b16 %v1378
        %v2723 = vunpack.c.h.b16 %v1378
        %v2724 = vunpack.c.l.b16 %v1379
        %v2725 = vunpack.c.h.b16 %v1379
        %v2726 = vunpack.c.l.b16 %v1380
        %v2727 = vunpack.c.h.b16 %v1380
        %v2728 = vunpack.c.l.b16 %v1381
        %v2729 = vunpack.c.h.b16 %v1381
        %v2730 = vunpack.c.l.b16 %v1382
        %v2731 = vunpack.c.h.b16 %v1382
        %v2732 = vunpack.c.l.b16 %v1383
        %v2733 = vunpack.c.h.b16 %v1383
        %v2734 = vunpack.c.l.b16 %v1384
        %v2735 = vunpack.c.h.b16 %v1384
        %v2736 = vunpack.c.l.b16 %v1385
        %v2737 = vunpack.c.h.b16 %v1385
        %v2738 = vunpack.c.l.b16 %v1386
        %v2739 = vunpack.c.h.b16 %v1386
        %v2740 = vunpack.c.l.b16 %v1387
        %v2741 = vunpack.c.h.b16 %v1387
        %v2742 = vunpack.c.l.b16 %v1388
        %v2743 = vunpack.c.h.b16 %v1388
        %v2744 = vunpack.c.l.b16 %v1389
        %v2745 = vunpack.c.h.b16 %v1389
        %v2746 = vunpack.c.l.b16 %v1390
        %v2747 = vunpack.c.h.b16 %v1390
        %v2748 = vunpack.c.l.b16 %v1391
        %v2749 = vunpack.c.h.b16 %v1391
        %v2750 = vunpack.c.l.b16 %v1392
        %v2751 = vunpack.c.h.b16 %v1392
        %v2752 = vunpack.c.l.b16 %v1393
        %v2753 = vunpack.c.h.b16 %v1393
        %v2754 = vunpack.c.l.b16 %v1394
        %v2755 = vunpack.c.h.b16 %v1394
        %v2756 = vunpack.c.l.b16 %v1395
        %v2757 = vunpack.c.h.b16 %v1395
        %v2758 = vunpack.c.l.b16 %v1396
        %v2759 = vunpack.c.h.b16 %v1396
        %v2760 = vunpack.c.l.b16 %v1397
        %v2761 = vunpack.c.h.b16 %v1397
        %v2762 = vunpack.c.l.b16 %v1398
        %v2763 = vunpack.c.h.b16 %v1398
        %v2764 = vunpack.c.l.b16 %v1399
        %v2765 = vunpack.c.h.b16 %v1399
        %v2766 = vunpack.c.l.b16 %v1400
        %v2767 = vunpack.c.h.b16 %v1400
        %v2768 = vunpack.c.l.b16 %v1401
        %v2769 = vunpack.c.h.b16 %v1401
        %v2770 = vunpack.c.l.b16 %v1402
        %v2771 = vunpack.c.h.b16 %v1402
        %v2772 = vunpack.c.l.b16 %v1403
        %v2773 = vunpack.c.h.b16 %v1403
        %v2774 = vunpack.c.l.b16 %v1404
        %v2775 = vunpack.c.h.b16 %v1404
        %v2776 = vunpack.c.l.b16 %v1405
        %v2777 = vunpack.c.h.b16 %v1405
        %v2778 = vunpack.c.l.b16 %v1406
        %v2779 = vunpack.c.h.b16 %v1406
        %v2780 = vunpack.c.l.b16 %v1407
        %v2781 = vunpack.c.h.b16 %v1407
        %v2782 = vunpack.c.l.b16 %v1408
        %v2783 = vunpack.c.h.b16 %v1408
        %v2784 = vunpack.c.l.b16 %v1409
        %v2785 = vunpack.c.h.b16 %v1409
        %v2786 = vunpack.c.l.b16 %v1410
        %v2787 = vunpack.c.h.b16 %v1410
        %v2788 = vunpack.c.l.b16 %v1411
        %v2789 = vunpack.c.h.b16 %v1411
        %v2790 = vunpack.c.l.b16 %v1412
        %v2791 = vunpack.c.h.b16 %v1412
        %v2792 = vunpack.c.l.b16 %v1413
        %v2793 = vunpack.c.h.b16 %v1413
        %v2794 = vunpack.c.l.b16 %v1414
        %v2795 = vunpack.c.h.b16 %v1414
        %v2796 = vunpack.c.l.b16 %v1415
        %v2797 = vunpack.c.h.b16 %v1415
        %v2798 = vunpack.c.l.b16 %v1416
        %v2799 = vunpack.c.h.b16 %v1416
        %v2800 = vunpack.c.l.b16 %v1417
        %v2801 = vunpack.c.h.b16 %v1417
        %v2802 = vunpack.c.l.b16 %v1418
        %v2803 = vunpack.c.h.b16 %v1418
        %v2804 = vunpack.c.l.b16 %v1419
        %v2805 = vunpack.c.h.b16 %v1419
        %v2806 = vunpack.c.l.b16 %v1420
        %v2807 = vunpack.c.h.b16 %v1420
        %v2808 = vunpack.c.l.b16 %v1421
        %v2809 = vunpack.c.h.b16 %v1421
        %v2810 = vunpack.c.l.b16 %v1422
        %v2811 = vunpack.c.h.b16 %v1422
        %v2812 = vunpack.c.l.b16 %v1423
        %v2813 = vunpack.c.h.b16 %v1423
        %v2814 = vunpack.c.l.b16 %v1424
        %v2815 = vunpack.c.h.b16 %v1424
        %v2816 = vunpack.c.l.b16 %v1425
        %v2817 = vunpack.c.h.b16 %v1425
        %v2818 = vunpack.c.l.b16 %v1426
        %v2819 = vunpack.c.h.b16 %v1426
        %v2820 = vunpack.c.l.b16 %v1427
        %v2821 = vunpack.c.h.b16 %v1427
        %v2822 = vunpack.c.l.b16 %v1428
        %v2823 = vunpack.c.h.b16 %v1428
        %v2824 = vunpack.c.l.b16 %v1429
        %v2825 = vunpack.c.h.b16 %v1429
        %v2826 = vunpack.c.l.b16 %v1430
        %v2827 = vunpack.c.h.b16 %v1430
        %v2828 = vunpack.c.l.b16 %v1431
        %v2829 = vunpack.c.h.b16 %v1431
        %v2830 = vunpack.c.l.b16 %v1432
        %v2831 = vunpack.c.h.b16 %v1432
        %v2832 = vunpack.c.l.b16 %v1433
        %v2833 = vunpack.c.h.b16 %v1433
        %v2834 = vunpack.c.l.b16 %v1434
        %v2835 = vunpack.c.h.b16 %v1434
        %v2836 = vunpack.c.l.b16 %v1435
        %v2837 = vunpack.c.h.b16 %v1435
        %v2838 = vunpack.c.l.b16 %v1436
        %v2839 = vunpack.c.h.b16 %v1436
        %v2840 = vunpack.c.l.b16 %v1437
        %v2841 = vunpack.c.h.b16 %v1437
        %v2842 = vunpack.c.l.b16 %v1438
        %v2843 = vunpack.c.h.b16 %v1438
        %v2844 = vunpack.c.l.b16 %v1439
        %v2845 = vunpack.c.h.b16 %v1439
        %v2846 = vunpack.c.l.b16 %v1440
        %v2847 = vunpack.c.h.b16 %v1440
        %v2848 = vunpack.c.l.b16 %v1441
        %v2849 = vunpack.c.h.b16 %v1441
        %v2850 = vunpack.c.l.b16 %v1442
        %v2851 = vunpack.c.h.b16 %v1442
        %v2852 = vunpack.c.l.b16 %v1443
        %v2853 = vunpack.c.h.b16 %v1443
        %v2854 = vunpack.c.l.b16 %v1444
        %v2855 = vunpack.c.h.b16 %v1444
        %v2856 = vunpack.c.l.b16 %v1445
        %v2857 = vunpack.c.h.b16 %v1445
        %v2858 = vunpack.c.l.b16 %v1446
        %v2859 = vunpack.c.h.b16 %v1446
        %v2860 = vunpack.c.l.b16 %v1447
        %v2861 = vunpack.c.h.b16 %v1447
        %v2862 = vunpack.c.l.b16 %v1448
        %v2863 = vunpack.c.h.b16 %v1448
        %v2864 = vunpack.c.l.b16 %v1449
        %v2865 = vunpack.c.h.b16 %v1449
        %v2866 = vunpack.c.l.b16 %v1450
        %v2867 = vunpack.c.h.b16 %v1450
        %v2868 = vunpack.c.l.b16 %v1451
        %v2869 = vunpack.c.h.b16 %v1451
        %v2870 = vunpack.c.l.b16 %v1452
        %v2871 = vunpack.c.h.b16 %v1452
        %v2872 = vunpack.c.l.b16 %v1453
        %v2873 = vunpack.c.h.b16 %v1453
        %v2874 = vunpack.c.l.b16 %v1454
        %v2875 = vunpack.c.h.b16 %v1454
        %v2876 = vunpack.c.l.b16 %v1455
        %v2877 = vunpack.c.h.b16 %v1455
        %v2878 = vunpack.c.l.b16 %v1456
        %v2879 = vunpack.c.h.b16 %v1456
        %v2880 = vunpack.c.l.b16 %v1457
        %v2881 = vunpack.c.h.b16 %v1457
        %v2882 = vunpack.c.l.b16 %v1458
        %v2883 = vunpack.c.h.b16 %v1458
        %v2884 = vunpack.c.l.b16 %v1459
        %v2885 = vunpack.c.h.b16 %v1459
        %v2886 = vunpack.c.l.b16 %v1460
        %v2887 = vunpack.c.h.b16 %v1460
        %v2888 = vunpack.c.l.b16 %v1461
        %v2889 = vunpack.c.h.b16 %v1461
        %v2890 = vunpack.c.l.b16 %v1462
        %v2891 = vunpack.c.h.b16 %v1462
        %v2892 = vunpack.c.l.b16 %v1463
        %v2893 = vunpack.c.h.b16 %v1463
        %v2894 = vunpack.c.l.b16 %v1464
        %v2895 = vunpack.c.h.b16 %v1464
        %v2896 = vunpack.c.l.b16 %v1465
        %v2897 = vunpack.c.h.b16 %v1465
        %v2898 = vunpack.c.l.b16 %v1466
        %v2899 = vunpack.c.h.b16 %v1466
        %v2900 = vunpack.c.l.b16 %v1467
        %v2901 = vunpack.c.h.b16 %v1467
        %v2902 = vunpack.c.l.b16 %v1468
        %v2903 = vunpack.c.h.b16 %v1468
        %v2904 = vunpack.c.l.b16 %v1469
        %v2905 = vunpack.c.h.b16 %v1469
        %v2906 = vunpack.c.l.b16 %v1470
        %v2907 = vunpack.c.h.b16 %v1470
        %v2908 = vunpack.c.l.b16 %v1471
        %v2909 = vunpack.c.h.b16 %v1471
        %v2910 = vunpack.c.l.b16 %v1472
        %v2911 = vunpack.c.h.b16 %v1472
        %v2912 = vunpack.c.l.b16 %v1473
        %v2913 = vunpack.c.h.b16 %v1473
        %v2914 = vunpack.c.l.b16 %v1474
        %v2915 = vunpack.c.h.b16 %v1474
        %v2916 = vunpack.c.l.b16 %v1475
        %v2917 = vunpack.c.h.b16 %v1475
        %v2918 = vunpack.c.l.b16 %v1476
        %v2919 = vunpack.c.h.b16 %v1476
        %v2920 = vunpack.c.l.b16 %v1477
        %v2921 = vunpack.c.h.b16 %v1477
        %v2922 = vunpack.c.l.b16 %v1478
        %v2923 = vunpack.c.h.b16 %v1478
        %v2924 = vunpack.c.l.b16 %v1479
        %v2925 = vunpack.c.h.b16 %v1479
        %v2926 = vunpack.c.l.b16 %v1480
        %v2927 = vunpack.c.h.b16 %v1480
        %v2928 = vunpack.c.l.b16 %v1481
        %v2929 = vunpack.c.h.b16 %v1481
        %v2930 = vunpack.c.l.b16 %v1482
        %v2931 = vunpack.c.h.b16 %v1482
        %v2932 = vunpack.c.l.b16 %v1483
        %v2933 = vunpack.c.h.b16 %v1483
        %v2934 = vunpack.c.l.b16 %v1484
        %v2935 = vunpack.c.h.b16 %v1484
        %v2936 = vunpack.c.l.b16 %v1485
        %v2937 = vunpack.c.h.b16 %v1485
        %v2938 = vunpack.c.l.b16 %v1486
        %v2939 = vunpack.c.h.b16 %v1486
        %v2940 = vunpack.c.l.b16 %v1487
        %v2941 = vunpack.c.h.b16 %v1487
        %v2942 = vunpack.c.l.b16 %v1488
        %v2943 = vunpack.c.h.b16 %v1488
        %v2944 = vunpack.c.l.b16 %v1489
        %v2945 = vunpack.c.h.b16 %v1489
        %v2946 = vunpack.c.l.b16 %v1490
        %v2947 = vunpack.c.h.b16 %v1490
        %v2948 = vunpack.c.l.b16 %v1491
        %v2949 = vunpack.c.h.b16 %v1491
        %v2950 = vunpack.c.l.b16 %v1492
        %v2951 = vunpack.c.h.b16 %v1492
        %v2952 = vunpack.c.l.b16 %v1493
        %v2953 = vunpack.c.h.b16 %v1493
        %v2954 = vunpack.c.l.b16 %v1494
        %v2955 = vunpack.c.h.b16 %v1494
        %v2956 = vunpack.c.l.b16 %v1495
        %v2957 = vunpack.c.h.b16 %v1495
        %v2958 = vunpack.c.l.b16 %v1496
        %v2959 = vunpack.c.h.b16 %v1496
        %v2960 = vunpack.c.l.b16 %v1497
        %v2961 = vunpack.c.h.b16 %v1497
        %v2962 = vunpack.c.l.b16 %v1498
        %v2963 = vunpack.c.h.b16 %v1498
        %v2964 = vunpack.c.l.b16 %v1499
        %v2965 = vunpack.c.h.b16 %v1499
        %v2966 = vunpack.c.l.b16 %v1500
        %v2967 = vunpack.c.h.b16 %v1500
        %v2968 = vunpack.c.l.b16 %v1501
        %v2969 = vunpack.c.h.b16 %v1501
        %v2970 = vunpack.c.l.b16 %v1502
        %v2971 = vunpack.c.h.b16 %v1502
        %v2972 = vunpack.c.l.b16 %v1503
        %v2973 = vunpack.c.h.b16 %v1503
        %v2974 = vunpack.c.l.b16 %v1504
        %v2975 = vunpack.c.h.b16 %v1504
        %v2976 = vunpack.c.l.b16 %v1505
        %v2977 = vunpack.c.h.b16 %v1505
        %v2978 = vunpack.c.l.b16 %v1506
        %v2979 = vunpack.c.h.b16 %v1506
        %v2980 = vunpack.c.l.b16 %v1507
        %v2981 = vunpack.c.h.b16 %v1507
        %v2982 = vunpack.c.l.b16 %v1508
        %v2983 = vunpack.c.h.b16 %v1508
        %v2984 = vunpack.c.l.b16 %v1509
        %v2985 = vunpack.c.h.b16 %v1509
        %v2986 = vunpack.c.l.b16 %v1510
        %v2987 = vunpack.c.h.b16 %v1510
        %v2988 = vunpack.c.l.b16 %v1511
        %v2989 = vunpack.c.h.b16 %v1511
        %v2990 = vunpack.c.l.b16 %v1512
        %v2991 = vunpack.c.h.b16 %v1512
        %v2992 = vunpack.c.l.b16 %v1513
        %v2993 = vunpack.c.h.b16 %v1513
        %v2994 = vunpack.c.l.b16 %v1514
        %v2995 = vunpack.c.h.b16 %v1514
        %v2996 = vunpack.c.l.b16 %v1515
        %v2997 = vunpack.c.h.b16 %v1515
        %v2998 = vunpack.c.l.b16 %v1516
        %v2999 = vunpack.c.h.b16 %v1516
        %v3000 = vunpack.c.l.b16 %v1517
        %v3001 = vunpack.c.h.b16 %v1517
        %v3002 = vunpack.c.l.b16 %v1518
        %v3003 = vunpack.c.h.b16 %v1518
        %v3004 = vunpack.c.l.b16 %v1519
        %v3005 = vunpack.c.h.b16 %v1519
        %v3006 = vunpack.c.l.b16 %v1520
        %v3007 = vunpack.c.h.b16 %v1520
        %v3008 = vunpack.c.l.b16 %v1521
        %v3009 = vunpack.c.h.b16 %v1521
        %v3010 = vunpack.c.l.b16 %v1522
        %v3011 = vunpack.c.h.b16 %v1522
        %v3012 = vunpack.c.l.b16 %v1523
        %v3013 = vunpack.c.h.b16 %v1523
        %v3014 = vunpack.c.l.b16 %v1524
        %v3015 = vunpack.c.h.b16 %v1524
        %v3016 = vunpack.c.l.b16 %v1525
        %v3017 = vunpack.c.h.b16 %v1525
        %v3018 = vunpack.c.l.b16 %v1526
        %v3019 = vunpack.c.h.b16 %v1526
        %v3020 = vunpack.c.l.b16 %v1527
        %v3021 = vunpack.c.h.b16 %v1527
        %v3022 = vunpack.c.l.b16 %v1528
        %v3023 = vunpack.c.h.b16 %v1528
        %v3024 = vunpack.c.l.b16 %v1529
        %v3025 = vunpack.c.h.b16 %v1529
        %v3026 = vunpack.c.l.b16 %v1530
        %v3027 = vunpack.c.h.b16 %v1530
        %v3028 = vunpack.c.l.b16 %v1531
        %v3029 = vunpack.c.h.b16 %v1531
        %v3030 = vunpack.c.l.b16 %v1532
        %v3031 = vunpack.c.h.b16 %v1532
        %v3032 = vunpack.c.l.b16 %v1533
        %v3033 = vunpack.c.h.b16 %v1533
        %v3034 = vunpack.c.l.b16 %v1534
        %v3035 = vunpack.c.h.b16 %v1534
        %v3036 = vunpack.c.l.b16 %v1535
        %v3037 = vunpack.c.h.b16 %v1535
        %v3038 = vunpack.c.l.b16 %v1536
        %v3039 = vunpack.c.h.b16 %v1536
        %v3040 = vunpack.c.l.b16 %v1537
        %v3041 = vunpack.c.h.b16 %v1537
        %v3042 = vunpack.c.l.b16 %v1538
        %v3043 = vunpack.c.h.b16 %v1538
        %v3044 = vunpack.c.l.b16 %v1539
        %v3045 = vunpack.c.h.b16 %v1539
        %v3046 = vunpack.c.l.b16 %v1540
        %v3047 = vunpack.c.h.b16 %v1540
        %v3048 = vunpack.c.l.b16 %v1541
        %v3049 = vunpack.c.h.b16 %v1541
        %v3050 = vunpack.c.l.b16 %v1542
        %v3051 = vunpack.c.h.b16 %v1542
        %v3052 = vunpack.c.l.b16 %v1543
        %v3053 = vunpack.c.h.b16 %v1543
        %v3054 = vunpack.c.l.b16 %v1544
        %v3055 = vunpack.c.h.b16 %v1544
        %v3056 = vunpack.c.l.b16 %v1545
        %v3057 = vunpack.c.h.b16 %v1545
        %v3058 = vunpack.c.l.b16 %v1546
        %v3059 = vunpack.c.h.b16 %v1546
        %v3060 = vunpack.c.l.b16 %v1547
        %v3061 = vunpack.c.h.b16 %v1547
        %v3062 = vunpack.c.l.b16 %v1548
        %v3063 = vunpack.c.h.b16 %v1548
        %v3064 = vunpack.c.l.b16 %v1549
        %v3065 = vunpack.c.h.b16 %v1549
        %v3066 = vunpack.c.l.b16 %v1550
        %v3067 = vunpack.c.h.b16 %v1550
        %v3068 = vunpack.c.l.b16 %v1551
        %v3069 = vunpack.c.h.b16 %v1551
        %v3070 = vunpack.c.l.b16 %v1552
        %v3071 = vunpack.c.h.b16 %v1552
        %v3072 = vunpack.c.l.b16 %v1553
        %v3073 = vunpack.c.h.b16 %v1553
        %v3074 = vunpack.c.l.b16 %v1554
        %v3075 = vunpack.c.h.b16 %v1554
        %v3076 = vunpack.c.l.b16 %v1555
        %v3077 = vunpack.c.h.b16 %v1555
        %v3078 = vunpack.c.l.b16 %v1556
        %v3079 = vunpack.c.h.b16 %v1556
        %v3080 = vunpack.c.l.b16 %v1557
        %v3081 = vunpack.c.h.b16 %v1557
        %v3082 = vunpack.c.l.b16 %v1558
        %v3083 = vunpack.c.h.b16 %v1558
        %v3084 = vunpack.c.l.b16 %v1559
        %v3085 = vunpack.c.h.b16 %v1559
        %v3086 = vunpack.c.l.b16 %v1560
        %v3087 = vunpack.c.h.b16 %v1560
        %v3088 = vunpack.c.l.b16 %v1561
        %v3089 = vunpack.c.h.b16 %v1561
        %v3090 = vunpack.c.l.b16 %v1562
        %v3091 = vunpack.c.h.b16 %v1562
        %v3092 = vunpack.c.l.b16 %v1563
        %v3093 = vunpack.c.h.b16 %v1563
        %v3094 = vunpack.c.l.b16 %v1564
        %v3095 = vunpack.c.h.b16 %v1564
        %v3096 = vunpack.c.l.b16 %v1565
        %v3097 = vunpack.c.h.b16 %v1565
        %v3098 = vunpack.c.l.b16 %v1566
        %v3099 = vunpack.c.h.b16 %v1566
        %v3100 = vunpack.c.l.b16 %v1567
        %v3101 = vunpack.c.h.b16 %v1567
        %v3102 = vunpack.c.l.b16 %v1568
        %v3103 = vunpack.c.h.b16 %v1568
        %v3104 = vunpack.c.l.b16 %v1569
        %v3105 = vunpack.c.h.b16 %v1569
        %v3106 = vpack.c.b16 %v2090, %v2082
        %v3107 = vpack.c.b16 %v2091, %v2083
        %v3108 = vpack.c.b16 %v2092, %v2084
        %v3109 = vpack.c.b16 %v2093, %v2085
        %v3110 = vpack.c.b16 %v2094, %v2086
        %v3111 = vpack.c.b16 %v2095, %v2087
        %v3112 = vpack.c.b16 %v2096, %v2088
        %v3113 = vpack.c.b16 %v2097, %v2089
        %v3114 = vpack.c.b16 %v2106, %v2098
        %v3115 = vpack.c.b16 %v2107, %v2099
        %v3116 = vpack.c.b16 %v2108, %v2100
        %v3117 = vpack.c.b16 %v2109, %v2101
        %v3118 = vpack.c.b16 %v2110, %v2102
        %v3119 = vpack.c.b16 %v2111, %v2103
        %v3120 = vpack.c.b16 %v2112, %v2104
        %v3121 = vpack.c.b16 %v2113, %v2105
        %v3122 = vpack.c.b16 %v2122, %v2114
        %v3123 = vpack.c.b16 %v2123, %v2115
        %v3124 = vpack.c.b16 %v2124, %v2116
        %v3125 = vpack.c.b16 %v2125, %v2117
        %v3126 = vpack.c.b16 %v2126, %v2118
        %v3127 = vpack.c.b16 %v2127, %v2119
        %v3128 = vpack.c.b16 %v2128, %v2120
        %v3129 = vpack.c.b16 %v2129, %v2121
        %v3130 = vpack.c.b16 %v2138, %v2130
        %v3131 = vpack.c.b16 %v2139, %v2131
        %v3132 = vpack.c.b16 %v2140, %v2132
        %v3133 = vpack.c.b16 %v2141, %v2133
        %v3134 = vpack.c.b16 %v2142, %v2134
        %v3135 = vpack.c.b16 %v2143, %v2135
        %v3136 = vpack.c.b16 %v2144, %v2136
        %v3137 = vpack.c.b16 %v2145, %v2137
        %v3138 = vpack.c.b16 %v2154, %v2146
        %v3139 = vpack.c.b16 %v2155, %v2147
        %v3140 = vpack.c.b16 %v2156, %v2148
        %v3141 = vpack.c.b16 %v2157, %v2149
        %v3142 = vpack.c.b16 %v2158, %v2150
        %v3143 = vpack.c.b16 %v2159, %v2151
        %v3144 = vpack.c.b16 %v2160, %v2152
        %v3145 = vpack.c.b16 %v2161, %v2153
        %v3146 = vpack.c.b16 %v2170, %v2162
        %v3147 = vpack.c.b16 %v2171, %v2163
        %v3148 = vpack.c.b16 %v2172, %v2164
        %v3149 = vpack.c.b16 %v2173, %v2165
        %v3150 = vpack.c.b16 %v2174, %v2166
        %v3151 = vpack.c.b16 %v2175, %v2167
        %v3152 = vpack.c.b16 %v2176, %v2168
        %v3153 = vpack.c.b16 %v2177, %v2169
        %v3154 = vpack.c.b16 %v2186, %v2178
        %v3155 = vpack.c.b16 %v2187, %v2179
        %v3156 = vpack.c.b16 %v2188, %v2180
        %v3157 = vpack.c.b16 %v2189, %v2181
        %v3158 = vpack.c.b16 %v2190, %v2182
        %v3159 = vpack.c.b16 %v2191, %v2183
        %v3160 = vpack.c.b16 %v2192, %v2184
        %v3161 = vpack.c.b16 %v2193, %v2185
        %v3162 = vpack.c.b16 %v2202, %v2194
        %v3163 = vpack.c.b16 %v2203, %v2195
        %v3164 = vpack.c.b16 %v2204, %v2196
        %v3165 = vpack.c.b16 %v2205, %v2197
        %v3166 = vpack.c.b16 %v2206, %v2198
        %v3167 = vpack.c.b16 %v2207, %v2199
        %v3168 = vpack.c.b16 %v2208, %v2200
        %v3169 = vpack.c.b16 %v2209, %v2201
        %v3170 = vpack.c.b16 %v2218, %v2210
        %v3171 = vpack.c.b16 %v2219, %v2211
        %v3172 = vpack.c.b16 %v2220, %v2212
        %v3173 = vpack.c.b16 %v2221, %v2213
        %v3174 = vpack.c.b16 %v2222, %v2214
        %v3175 = vpack.c.b16 %v2223, %v2215
        %v3176 = vpack.c.b16 %v2224, %v2216
        %v3177 = vpack.c.b16 %v2225, %v2217
        %v3178 = vpack.c.b16 %v2234, %v2226
        %v3179 = vpack.c.b16 %v2235, %v2227
        %v3180 = vpack.c.b16 %v2236, %v2228
        %v3181 = vpack.c.b16 %v2237, %v2229
        %v3182 = vpack.c.b16 %v2238, %v2230
        %v3183 = vpack.c.b16 %v2239, %v2231
        %v3184 = vpack.c.b16 %v2240, %v2232
        %v3185 = vpack.c.b16 %v2241, %v2233
        %v3186 = vpack.c.b16 %v2250, %v2242
        %v3187 = vpack.c.b16 %v2251, %v2243
        %v3188 = vpack.c.b16 %v2252, %v2244
        %v3189 = vpack.c.b16 %v2253, %v2245
        %v3190 = vpack.c.b16 %v2254, %v2246
        %v3191 = vpack.c.b16 %v2255, %v2247
        %v3192 = vpack.c.b16 %v2256, %v2248
        %v3193 = vpack.c.b16 %v2257, %v2249
        %v3194 = vpack.c.b16 %v2266, %v2258
        %v3195 = vpack.c.b16 %v2267, %v2259
        %v3196 = vpack.c.b16 %v2268, %v2260
        %v3197 = vpack.c.b16 %v2269, %v2261
        %v3198 = vpack.c.b16 %v2270, %v2262
        %v3199 = vpack.c.b16 %v2271, %v2263
        %v3200 = vpack.c.b16 %v2272, %v2264
        %v3201 = vpack.c.b16 %v2273, %v2265
        %v3202 = vpack.c.b16 %v2282, %v2274
        %v3203 = vpack.c.b16 %v2283, %v2275
        %v3204 = vpack.c.b16 %v2284, %v2276
        %v3205 = vpack.c.b16 %v2285, %v2277
        %v3206 = vpack.c.b16 %v2286, %v2278
        %v3207 = vpack.c.b16 %v2287, %v2279
        %v3208 = vpack.c.b16 %v2288, %v2280
        %v3209 = vpack.c.b16 %v2289, %v2281
        %v3210 = vpack.c.b16 %v2298, %v2290
        %v3211 = vpack.c.b16 %v2299, %v2291
        %v3212 = vpack.c.b16 %v2300, %v2292
        %v3213 = vpack.c.b16 %v2301, %v2293
        %v3214 = vpack.c.b16 %v2302, %v2294
        %v3215 = vpack.c.b16 %v2303, %v2295
        %v3216 = vpack.c.b16 %v2304, %v2296
        %v3217 = vpack.c.b16 %v2305, %v2297
        %v3218 = vpack.c.b16 %v2314, %v2306
        %v3219 = vpack.c.b16 %v2315, %v2307
        %v3220 = vpack.c.b16 %v2316, %v2308
        %v3221 = vpack.c.b16 %v2317, %v2309
        %v3222 = vpack.c.b16 %v2318, %v2310
        %v3223 = vpack.c.b16 %v2319, %v2311
        %v3224 = vpack.c.b16 %v2320, %v2312
        %v3225 = vpack.c.b16 %v2321, %v2313
        %v3226 = vpack.c.b16 %v2330, %v2322
        %v3227 = vpack.c.b16 %v2331, %v2323
        %v3228 = vpack.c.b16 %v2332, %v2324
        %v3229 = vpack.c.b16 %v2333, %v2325
        %v3230 = vpack.c.b16 %v2334, %v2326
        %v3231 = vpack.c.b16 %v2335, %v2327
        %v3232 = vpack.c.b16 %v2336, %v2328
        %v3233 = vpack.c.b16 %v2337, %v2329
        %v3234 = vpack.c.b16 %v2346, %v2338
        %v3235 = vpack.c.b16 %v2347, %v2339
        %v3236 = vpack.c.b16 %v2348, %v2340
        %v3237 = vpack.c.b16 %v2349, %v2341
        %v3238 = vpack.c.b16 %v2350, %v2342
        %v3239 = vpack.c.b16 %v2351, %v2343
        %v3240 = vpack.c.b16 %v2352, %v2344
        %v3241 = vpack.c.b16 %v2353, %v2345
        %v3242 = vpack.c.b16 %v2362, %v2354
        %v3243 = vpack.c.b16 %v2363, %v2355
        %v3244 = vpack.c.b16 %v2364, %v2356
        %v3245 = vpack.c.b16 %v2365, %v2357
        %v3246 = vpack.c.b16 %v2366, %v2358
        %v3247 = vpack.c.b16 %v2367, %v2359
        %v3248 = vpack.c.b16 %v2368, %v2360
        %v3249 = vpack.c.b16 %v2369, %v2361
        %v3250 = vpack.c.b16 %v2378, %v2370
        %v3251 = vpack.c.b16 %v2379, %v2371
        %v3252 = vpack.c.b16 %v2380, %v2372
        %v3253 = vpack.c.b16 %v2381, %v2373
        %v3254 = vpack.c.b16 %v2382, %v2374
        %v3255 = vpack.c.b16 %v2383, %v2375
        %v3256 = vpack.c.b16 %v2384, %v2376
        %v3257 = vpack.c.b16 %v2385, %v2377
        %v3258 = vpack.c.b16 %v2394, %v2386
        %v3259 = vpack.c.b16 %v2395, %v2387
        %v3260 = vpack.c.b16 %v2396, %v2388
        %v3261 = vpack.c.b16 %v2397, %v2389
        %v3262 = vpack.c.b16 %v2398, %v2390
        %v3263 = vpack.c.b16 %v2399, %v2391
        %v3264 = vpack.c.b16 %v2400, %v2392
        %v3265 = vpack.c.b16 %v2401, %v2393
        %v3266 = vpack.c.b16 %v2410, %v2402
        %v3267 = vpack.c.b16 %v2411, %v2403
        %v3268 = vpack.c.b16 %v2412, %v2404
        %v3269 = vpack.c.b16 %v2413, %v2405
        %v3270 = vpack.c.b16 %v2414, %v2406
        %v3271 = vpack.c.b16 %v2415, %v2407
        %v3272 = vpack.c.b16 %v2416, %v2408
        %v3273 = vpack.c.b16 %v2417, %v2409
        %v3274 = vpack.c.b16 %v2426, %v2418
        %v3275 = vpack.c.b16 %v2427, %v2419
        %v3276 = vpack.c.b16 %v2428, %v2420
        %v3277 = vpack.c.b16 %v2429, %v2421
        %v3278 = vpack.c.b16 %v2430, %v2422
        %v3279 = vpack.c.b16 %v2431, %v2423
        %v3280 = vpack.c.b16 %v2432, %v2424
        %v3281 = vpack.c.b16 %v2433, %v2425
        %v3282 = vpack.c.b16 %v2442, %v2434
        %v3283 = vpack.c.b16 %v2443, %v2435
        %v3284 = vpack.c.b16 %v2444, %v2436
        %v3285 = vpack.c.b16 %v2445, %v2437
        %v3286 = vpack.c.b16 %v2446, %v2438
        %v3287 = vpack.c.b16 %v2447, %v2439
        %v3288 = vpack.c.b16 %v2448, %v2440
        %v3289 = vpack.c.b16 %v2449, %v2441
        %v3290 = vpack.c.b16 %v2458, %v2450
        %v3291 = vpack.c.b16 %v2459, %v2451
        %v3292 = vpack.c.b16 %v2460, %v2452
        %v3293 = vpack.c.b16 %v2461, %v2453
        %v3294 = vpack.c.b16 %v2462, %v2454
        %v3295 = vpack.c.b16 %v2463, %v2455
        %v3296 = vpack.c.b16 %v2464, %v2456
        %v3297 = vpack.c.b16 %v2465, %v2457
        %v3298 = vpack.c.b16 %v2474, %v2466
        %v3299 = vpack.c.b16 %v2475, %v2467
        %v3300 = vpack.c.b16 %v2476, %v2468
        %v3301 = vpack.c.b16 %v2477, %v2469
        %v3302 = vpack.c.b16 %v2478, %v2470
        %v3303 = vpack.c.b16 %v2479, %v2471
        %v3304 = vpack.c.b16 %v2480, %v2472
        %v3305 = vpack.c.b16 %v2481, %v2473
        %v3306 = vpack.c.b16 %v2490, %v2482
        %v3307 = vpack.c.b16 %v2491, %v2483
        %v3308 = vpack.c.b16 %v2492, %v2484
        %v3309 = vpack.c.b16 %v2493, %v2485
        %v3310 = vpack.c.b16 %v2494, %v2486
        %v3311 = vpack.c.b16 %v2495, %v2487
        %v3312 = vpack.c.b16 %v2496, %v2488
        %v3313 = vpack.c.b16 %v2497, %v2489
        %v3314 = vpack.c.b16 %v2506, %v2498
        %v3315 = vpack.c.b16 %v2507, %v2499
        %v3316 = vpack.c.b16 %v2508, %v2500
        %v3317 = vpack.c.b16 %v2509, %v2501
        %v3318 = vpack.c.b16 %v2510, %v2502
        %v3319 = vpack.c.b16 %v2511, %v2503
        %v3320 = vpack.c.b16 %v2512, %v2504
        %v3321 = vpack.c.b16 %v2513, %v2505
        %v3322 = vpack.c.b16 %v2522, %v2514
        %v3323 = vpack.c.b16 %v2523, %v2515
        %v3324 = vpack.c.b16 %v2524, %v2516
        %v3325 = vpack.c.b16 %v2525, %v2517
        %v3326 = vpack.c.b16 %v2526, %v2518
        %v3327 = vpack.c.b16 %v2527, %v2519
        %v3328 = vpack.c.b16 %v2528, %v2520
        %v3329 = vpack.c.b16 %v2529, %v2521
        %v3330 = vpack.c.b16 %v2538, %v2530
        %v3331 = vpack.c.b16 %v2539, %v2531
        %v3332 = vpack.c.b16 %v2540, %v2532
        %v3333 = vpack.c.b16 %v2541, %v2533
        %v3334 = vpack.c.b16 %v2542, %v2534
        %v3335 = vpack.c.b16 %v2543, %v2535
        %v3336 = vpack.c.b16 %v2544, %v2536
        %v3337 = vpack.c.b16 %v2545, %v2537
        %v3338 = vpack.c.b16 %v2554, %v2546
        %v3339 = vpack.c.b16 %v2555, %v2547
        %v3340 = vpack.c.b16 %v2556, %v2548
        %v3341 = vpack.c.b16 %v2557, %v2549
        %v3342 = vpack.c.b16 %v2558, %v2550
        %v3343 = vpack.c.b16 %v2559, %v2551
        %v3344 = vpack.c.b16 %v2560, %v2552
        %v3345 = vpack.c.b16 %v2561, %v2553
        %v3346 = vpack.c.b16 %v2570, %v2562
        %v3347 = vpack.c.b16 %v2571, %v2563
        %v3348 = vpack.c.b16 %v2572, %v2564
        %v3349 = vpack.c.b16 %v2573, %v2565
        %v3350 = vpack.c.b16 %v2574, %v2566
        %v3351 = vpack.c.b16 %v2575, %v2567
        %v3352 = vpack.c.b16 %v2576, %v2568
        %v3353 = vpack.c.b16 %v2577, %v2569
        %v3354 = vpack.c.b16 %v2586, %v2578
        %v3355 = vpack.c.b16 %v2587, %v2579
        %v3356 = vpack.c.b16 %v2588, %v2580
        %v3357 = vpack.c.b16 %v2589, %v2581
        %v3358 = vpack.c.b16 %v2590, %v2582
        %v3359 = vpack.c.b16 %v2591, %v2583
        %v3360 = vpack.c.b16 %v2592, %v2584
        %v3361 = vpack.c.b16 %v2593, %v2585
        %v3362 = vpack.c.b16 %v2602, %v2594
        %v3363 = vpack.c.b16 %v2603, %v2595
        %v3364 = vpack.c.b16 %v2604, %v2596
        %v3365 = vpack.c.b16 %v2605, %v2597
        %v3366 = vpack.c.b16 %v2606, %v2598
        %v3367 = vpack.c.b16 %v2607, %v2599
        %v3368 = vpack.c.b16 %v2608, %v2600
        %v3369 = vpack.c.b16 %v2609, %v2601
        %v3370 = vpack.c.b16 %v2618, %v2610
        %v3371 = vpack.c.b16 %v2619, %v2611
        %v3372 = vpack.c.b16 %v2620, %v2612
        %v3373 = vpack.c.b16 %v2621, %v2613
        %v3374 = vpack.c.b16 %v2622, %v2614
        %v3375 = vpack.c.b16 %v2623, %v2615
        %v3376 = vpack.c.b16 %v2624, %v2616
        %v3377 = vpack.c.b16 %v2625, %v2617
        %v3378 = vpack.c.b16 %v2634, %v2626
        %v3379 = vpack.c.b16 %v2635, %v2627
        %v3380 = vpack.c.b16 %v2636, %v2628
        %v3381 = vpack.c.b16 %v2637, %v2629
        %v3382 = vpack.c.b16 %v2638, %v2630
        %v3383 = vpack.c.b16 %v2639, %v2631
        %v3384 = vpack.c.b16 %v2640, %v2632
        %v3385 = vpack.c.b16 %v2641, %v2633
        %v3386 = vpack.c.b16 %v2650, %v2642
        %v3387 = vpack.c.b16 %v2651, %v2643
        %v3388 = vpack.c.b16 %v2652, %v2644
        %v3389 = vpack.c.b16 %v2653, %v2645
        %v3390 = vpack.c.b16 %v2654, %v2646
        %v3391 = vpack.c.b16 %v2655, %v2647
        %v3392 = vpack.c.b16 %v2656, %v2648
        %v3393 = vpack.c.b16 %v2657, %v2649
        %v3394 = vpack.c.b16 %v2666, %v2658
        %v3395 = vpack.c.b16 %v2667, %v2659
        %v3396 = vpack.c.b16 %v2668, %v2660
        %v3397 = vpack.c.b16 %v2669, %v2661
        %v3398 = vpack.c.b16 %v2670, %v2662
        %v3399 = vpack.c.b16 %v2671, %v2663
        %v3400 = vpack.c.b16 %v2672, %v2664
        %v3401 = vpack.c.b16 %v2673, %v2665
        %v3402 = vpack.c.b16 %v2682, %v2674
        %v3403 = vpack.c.b16 %v2683, %v2675
        %v3404 = vpack.c.b16 %v2684, %v2676
        %v3405 = vpack.c.b16 %v2685, %v2677
        %v3406 = vpack.c.b16 %v2686, %v2678
        %v3407 = vpack.c.b16 %v2687, %v2679
        %v3408 = vpack.c.b16 %v2688, %v2680
        %v3409 = vpack.c.b16 %v2689, %v2681
        %v3410 = vpack.c.b16 %v2698, %v2690
        %v3411 = vpack.c.b16 %v2699, %v2691
        %v3412 = vpack.c.b16 %v2700, %v2692
        %v3413 = vpack.c.b16 %v2701, %v2693
        %v3414 = vpack.c.b16 %v2702, %v2694
        %v3415 = vpack.c.b16 %v2703, %v2695
        %v3416 = vpack.c.b16 %v2704, %v2696
        %v3417 = vpack.c.b16 %v2705, %v2697
        %v3418 = vpack.c.b16 %v2714, %v2706
        %v3419 = vpack.c.b16 %v2715, %v2707
        %v3420 = vpack.c.b16 %v2716, %v2708
        %v3421 = vpack.c.b16 %v2717, %v2709
        %v3422 = vpack.c.b16 %v2718, %v2710
        %v3423 = vpack.c.b16 %v2719, %v2711
        %v3424 = vpack.c.b16 %v2720, %v2712
        %v3425 = vpack.c.b16 %v2721, %v2713
        %v3426 = vpack.c.b16 %v2730, %v2722
        %v3427 = vpack.c.b16 %v2731, %v2723
        %v3428 = vpack.c.b16 %v2732, %v2724
        %v3429 = vpack.c.b16 %v2733, %v2725
        %v3430 = vpack.c.b16 %v2734, %v2726
        %v3431 = vpack.c.b16 %v2735, %v2727
        %v3432 = vpack.c.b16 %v2736, %v2728
        %v3433 = vpack.c.b16 %v2737, %v2729
        %v3434 = vpack.c.b16 %v2746, %v2738
        %v3435 = vpack.c.b16 %v2747, %v2739
        %v3436 = vpack.c.b16 %v2748, %v2740
        %v3437 = vpack.c.b16 %v2749, %v2741
        %v3438 = vpack.c.b16 %v2750, %v2742
        %v3439 = vpack.c.b16 %v2751, %v2743
        %v3440 = vpack.c.b16 %v2752, %v2744
        %v3441 = vpack.c.b16 %v2753, %v2745
        %v3442 = vpack.c.b16 %v2762, %v2754
        %v3443 = vpack.c.b16 %v2763, %v2755
        %v3444 = vpack.c.b16 %v2764, %v2756
        %v3445 = vpack.c.b16 %v2765, %v2757
        %v3446 = vpack.c.b16 %v2766, %v2758
        %v3447 = vpack.c.b16 %v2767, %v2759
        %v3448 = vpack.c.b16 %v2768, %v2760
        %v3449 = vpack.c.b16 %v2769, %v2761
        %v3450 = vpack.c.b16 %v2778, %v2770
        %v3451 = vpack.c.b16 %v2779, %v2771
        %v3452 = vpack.c.b16 %v2780, %v2772
        %v3453 = vpack.c.b16 %v2781, %v2773
        %v3454 = vpack.c.b16 %v2782, %v2774
        %v3455 = vpack.c.b16 %v2783, %v2775
        %v3456 = vpack.c.b16 %v2784, %v2776
        %v3457 = vpack.c.b16 %v2785, %v2777
        %v3458 = vpack.c.b16 %v2794, %v2786
        %v3459 = vpack.c.b16 %v2795, %v2787
        %v3460 = vpack.c.b16 %v2796, %v2788
        %v3461 = vpack.c.b16 %v2797, %v2789
        %v3462 = vpack.c.b16 %v2798, %v2790
        %v3463 = vpack.c.b16 %v2799, %v2791
        %v3464 = vpack.c.b16 %v2800, %v2792
        %v3465 = vpack.c.b16 %v2801, %v2793
        %v3466 = vpack.c.b16 %v2810, %v2802
        %v3467 = vpack.c.b16 %v2811, %v2803
        %v3468 = vpack.c.b16 %v2812, %v2804
        %v3469 = vpack.c.b16 %v2813, %v2805
        %v3470 = vpack.c.b16 %v2814, %v2806
        %v3471 = vpack.c.b16 %v2815, %v2807
        %v3472 = vpack.c.b16 %v2816, %v2808
        %v3473 = vpack.c.b16 %v2817, %v2809
        %v3474 = vpack.c.b16 %v2826, %v2818
        %v3475 = vpack.c.b16 %v2827, %v2819
        %v3476 = vpack.c.b16 %v2828, %v2820
        %v3477 = vpack.c.b16 %v2829, %v2821
        %v3478 = vpack.c.b16 %v2830, %v2822
        %v3479 = vpack.c.b16 %v2831, %v2823
        %v3480 = vpack.c.b16 %v2832, %v2824
        %v3481 = vpack.c.b16 %v2833, %v2825
        %v3482 = vpack.c.b16 %v2842, %v2834
        %v3483 = vpack.c.b16 %v2843, %v2835
        %v3484 = vpack.c.b16 %v2844, %v2836
        %v3485 = vpack.c.b16 %v2845, %v2837
        %v3486 = vpack.c.b16 %v2846, %v2838
        %v3487 = vpack.c.b16 %v2847, %v2839
        %v3488 = vpack.c.b16 %v2848, %v2840
        %v3489 = vpack.c.b16 %v2849, %v2841
        %v3490 = vpack.c.b16 %v2858, %v2850
        %v3491 = vpack.c.b16 %v2859, %v2851
        %v3492 = vpack.c.b16 %v2860, %v2852
        %v3493 = vpack.c.b16 %v2861, %v2853
        %v3494 = vpack.c.b16 %v2862, %v2854
        %v3495 = vpack.c.b16 %v2863, %v2855
        %v3496 = vpack.c.b16 %v2864, %v2856
        %v3497 = vpack.c.b16 %v2865, %v2857
        %v3498 = vpack.c.b16 %v2874, %v2866
        %v3499 = vpack.c.b16 %v2875, %v2867
        %v3500 = vpack.c.b16 %v2876, %v2868
        %v3501 = vpack.c.b16 %v2877, %v2869
        %v3502 = vpack.c.b16 %v2878, %v2870
        %v3503 = vpack.c.b16 %v2879, %v2871
        %v3504 = vpack.c.b16 %v2880, %v2872
        %v3505 = vpack.c.b16 %v2881, %v2873
        %v3506 = vpack.c.b16 %v2890, %v2882
        %v3507 = vpack.c.b16 %v2891, %v2883
        %v3508 = vpack.c.b16 %v2892, %v2884
        %v3509 = vpack.c.b16 %v2893, %v2885
        %v3510 = vpack.c.b16 %v2894, %v2886
        %v3511 = vpack.c.b16 %v2895, %v2887
        %v3512 = vpack.c.b16 %v2896, %v2888
        %v3513 = vpack.c.b16 %v2897, %v2889
        %v3514 = vpack.c.b16 %v2906, %v2898
        %v3515 = vpack.c.b16 %v2907, %v2899
        %v3516 = vpack.c.b16 %v2908, %v2900
        %v3517 = vpack.c.b16 %v2909, %v2901
        %v3518 = vpack.c.b16 %v2910, %v2902
        %v3519 = vpack.c.b16 %v2911, %v2903
        %v3520 = vpack.c.b16 %v2912, %v2904
        %v3521 = vpack.c.b16 %v2913, %v2905
        %v3522 = vpack.c.b16 %v2922, %v2914
        %v3523 = vpack.c.b16 %v2923, %v2915
        %v3524 = vpack.c.b16 %v2924, %v2916
        %v3525 = vpack.c.b16 %v2925, %v2917
        %v3526 = vpack.c.b16 %v2926, %v2918
        %v3527 = vpack.c.b16 %v2927, %v2919
        %v3528 = vpack.c.b16 %v2928, %v2920
        %v3529 = vpack.c.b16 %v2929, %v2921
        %v3530 = vpack.c.b16 %v2938, %v2930
        %v3531 = vpack.c.b16 %v2939, %v2931
        %v3532 = vpack.c.b16 %v2940, %v2932
        %v3533 = vpack.c.b16 %v2941, %v2933
        %v3534 = vpack.c.b16 %v2942, %v2934
        %v3535 = vpack.c.b16 %v2943, %v2935
        %v3536 = vpack.c.b16 %v2944, %v2936
        %v3537 = vpack.c.b16 %v2945, %v2937
        %v3538 = vpack.c.b16 %v2954, %v2946
        %v3539 = vpack.c.b16 %v2955, %v2947
        %v3540 = vpack.c.b16 %v2956, %v2948
        %v3541 = vpack.c.b16 %v2957, %v2949
        %v3542 = vpack.c.b16 %v2958, %v2950
        %v3543 = vpack.c.b16 %v2959, %v2951
        %v3544 = vpack.c.b16 %v2960, %v2952
        %v3545 = vpack.c.b16 %v2961, %v2953
        %v3546 = vpack.c.b16 %v2970, %v2962
        %v3547 = vpack.c.b16 %v2971, %v2963
        %v3548 = vpack.c.b16 %v2972, %v2964
        %v3549 = vpack.c.b16 %v2973, %v2965
        %v3550 = vpack.c.b16 %v2974, %v2966
        %v3551 = vpack.c.b16 %v2975, %v2967
        %v3552 = vpack.c.b16 %v2976, %v2968
        %v3553 = vpack.c.b16 %v2977, %v2969
        %v3554 = vpack.c.b16 %v2986, %v2978
        %v3555 = vpack.c.b16 %v2987, %v2979
        %v3556 = vpack.c.b16 %v2988, %v2980
        %v3557 = vpack.c.b16 %v2989, %v2981
        %v3558 = vpack.c.b16 %v2990, %v2982
        %v3559 = vpack.c.b16 %v2991, %v2983
        %v3560 = vpack.c.b16 %v2992, %v2984
        %v3561 = vpack.c.b16 %v2993, %v2985
        %v3562 = vpack.c.b16 %v3002, %v2994
        %v3563 = vpack.c.b16 %v3003, %v2995
        %v3564 = vpack.c.b16 %v3004, %v2996
        %v3565 = vpack.c.b16 %v3005, %v2997
        %v3566 = vpack.c.b16 %v3006, %v2998
        %v3567 = vpack.c.b16 %v3007, %v2999
        %v3568 = vpack.c.b16 %v3008, %v3000
        %v3569 = vpack.c.b16 %v3009, %v3001
        %v3570 = vpack.c.b16 %v3018, %v3010
        %v3571 = vpack.c.b16 %v3019, %v3011
        %v3572 = vpack.c.b16 %v3020, %v3012
        %v3573 = vpack.c.b16 %v3021, %v3013
        %v3574 = vpack.c.b16 %v3022, %v3014
        %v3575 = vpack.c.b16 %v3023, %v3015
        %v3576 = vpack.c.b16 %v3024, %v3016
        %v3577 = vpack.c.b16 %v3025, %v3017
        %v3578 = vpack.c.b16 %v3034, %v3026
        %v3579 = vpack.c.b16 %v3035, %v3027
        %v3580 = vpack.c.b16 %v3036, %v3028
        %v3581 = vpack.c.b16 %v3037, %v3029
        %v3582 = vpack.c.b16 %v3038, %v3030
        %v3583 = vpack.c.b16 %v3039, %v3031
        %v3584 = vpack.c.b16 %v3040, %v3032
        %v3585 = vpack.c.b16 %v3041, %v3033
        %v3586 = vpack.c.b16 %v3050, %v3042
        %v3587 = vpack.c.b16 %v3051, %v3043
        %v3588 = vpack.c.b16 %v3052, %v3044
        %v3589 = vpack.c.b16 %v3053, %v3045
        %v3590 = vpack.c.b16 %v3054, %v3046
        %v3591 = vpack.c.b16 %v3055, %v3047
        %v3592 = vpack.c.b16 %v3056, %v3048
        %v3593 = vpack.c.b16 %v3057, %v3049
        %v3594 = vpack.c.b16 %v3066, %v3058
        %v3595 = vpack.c.b16 %v3067, %v3059
        %v3596 = vpack.c.b16 %v3068, %v3060
        %v3597 = vpack.c.b16 %v3069, %v3061
        %v3598 = vpack.c.b16 %v3070, %v3062
        %v3599 = vpack.c.b16 %v3071, %v3063
        %v3600 = vpack.c.b16 %v3072, %v3064
        %v3601 = vpack.c.b16 %v3073, %v3065
        %v3602 = vpack.c.b16 %v3082, %v3074
        %v3603 = vpack.c.b16 %v3083, %v3075
        %v3604 = vpack.c.b16 %v3084, %v3076
        %v3605 = vpack.c.b16 %v3085, %v3077
        %v3606 = vpack.c.b16 %v3086, %v3078
        %v3607 = vpack.c.b16 %v3087, %v3079
        %v3608 = vpack.c.b16 %v3088, %v3080
        %v3609 = vpack.c.b16 %v3089, %v3081
        %v3610 = vpack.c.b16 %v3098, %v3090
        %v3611 = vpack.c.b16 %v3099, %v3091
        %v3612 = vpack.c.b16 %v3100, %v3092
        %v3613 = vpack.c.b16 %v3101, %v3093
        %v3614 = vpack.c.b16 %v3102, %v3094
        %v3615 = vpack.c.b16 %v3103, %v3095
        %v3616 = vpack.c.b16 %v3104, %v3096
        %v3617 = vpack.c.b16 %v3105, %v3097
        %4130 = vmatprep.subr.bf16.mxu0 %v3107
        %4131 = vmatpush1.bf16.msra.mxu0 %v3106
        %4132 = vmatprep.subr.bf16.mxu0 %v3115
        %4133 = vmatpush1.bf16.msra.mxu0 %v3114
        %4134 = vmatprep.subr.bf16.mxu0 %v3123
        %4135 = vmatpush1.bf16.msra.mxu0 %v3122
        %4136 = vmatprep.subr.bf16.mxu0 %v3131
        %4137 = vmatpush1.bf16.msra.mxu0 %v3130
        %4138 = vmatprep.subr.bf16.mxu0 %v3139
        %4139 = vmatpush1.bf16.msra.mxu0 %v3138
        %4140 = vmatprep.subr.bf16.mxu0 %v3147
        %4141 = vmatpush1.bf16.msra.mxu0 %v3146
        %4142 = vmatprep.subr.bf16.mxu0 %v3155
        %4143 = vmatpush1.bf16.msra.mxu0 %v3154
        %4144 = vmatprep.subr.bf16.mxu0 %v3163
        %4145 = vmatpush1.bf16.msra.mxu0 %v3162
        %4146 = vmatprep.subr.bf16.mxu0 %v3171
        %4147 = vmatpush1.bf16.msra.mxu0 %v3170
        %4148 = vmatprep.subr.bf16.mxu0 %v3179
        %4149 = vmatpush1.bf16.msra.mxu0 %v3178
        %4150 = vmatprep.subr.bf16.mxu0 %v3187
        %4151 = vmatpush1.bf16.msra.mxu0 %v3186
        %4152 = vmatprep.subr.bf16.mxu0 %v3195
        %4153 = vmatpush1.bf16.msra.mxu0 %v3194
        %4154 = vmatprep.subr.bf16.mxu0 %v3203
        %4155 = vmatpush1.bf16.msra.mxu0 %v3202
        %4156 = vmatprep.subr.bf16.mxu0 %v3211
        %4157 = vmatpush1.bf16.msra.mxu0 %v3210
        %4158 = vmatprep.subr.bf16.mxu0 %v3219
        %4159 = vmatpush1.bf16.msra.mxu0 %v3218
        %4160 = vmatprep.subr.bf16.mxu0 %v3227
        %4161 = vmatpush1.bf16.msra.mxu0 %v3226
        %4162 = vmatprep.mubr.bf16.mxu0 %v1051
        %4163 = vmatmul.mubr.bf16.gmra.mrb[0].mxu0 %v1050
        %v4164 = vpop.f32.mrb[0].mxu0
        %v4165 = vadd.f32 0.0, %v4164
        %v4166 = vpop.f32.mrb[0].mxu0
        %v4167 = vadd.f32 0.0, %v4166
        %v4168 = vpop.f32.mrb[0].mxu0
        %v4169 = vpop.f32.mrb[0].mxu0
        %4170 = vdwg.mxu0
        %4171 = vmatprep.subr.bf16.mxu0 %v3235
        %4172 = vmatpush1.bf16.msra.mxu0 %v3234
        %4173 = vmatprep.subr.bf16.mxu0 %v3243
        %4174 = vmatpush1.bf16.msra.mxu0 %v3242
        %4175 = vmatprep.subr.bf16.mxu0 %v3251
        %4176 = vmatpush1.bf16.msra.mxu0 %v3250
        %4177 = vmatprep.subr.bf16.mxu0 %v3259
        %4178 = vmatpush1.bf16.msra.mxu0 %v3258
        %4179 = vmatprep.subr.bf16.mxu0 %v3267
        %4180 = vmatpush1.bf16.msra.mxu0 %v3266
        %4181 = vmatprep.subr.bf16.mxu0 %v3275
        %4182 = vmatpush1.bf16.msra.mxu0 %v3274
        %4183 = vmatprep.subr.bf16.mxu0 %v3283
        %4184 = vmatpush1.bf16.msra.mxu0 %v3282
        %4185 = vmatprep.subr.bf16.mxu0 %v3291
        %4186 = vmatpush1.bf16.msra.mxu0 %v3290
        %4187 = vmatprep.subr.bf16.mxu0 %v3299
        %4188 = vmatpush1.bf16.msra.mxu0 %v3298
        %4189 = vmatprep.subr.bf16.mxu0 %v3307
        %4190 = vmatpush1.bf16.msra.mxu0 %v3306
        %4191 = vmatprep.subr.bf16.mxu0 %v3315
        %4192 = vmatpush1.bf16.msra.mxu0 %v3314
        %4193 = vmatprep.subr.bf16.mxu0 %v3323
        %4194 = vmatpush1.bf16.msra.mxu0 %v3322
        %4195 = vmatprep.subr.bf16.mxu0 %v3331
        %4196 = vmatpush1.bf16.msra.mxu0 %v3330
        %4197 = vmatprep.subr.bf16.mxu0 %v3339
        %4198 = vmatpush1.bf16.msra.mxu0 %v3338
        %4199 = vmatprep.subr.bf16.mxu0 %v3347
        %4200 = vmatpush1.bf16.msra.mxu0 %v3346
        %4201 = vmatprep.subr.bf16.mxu0 %v3355
        %4202 = vmatpush1.bf16.msra.mxu0 %v3354
        %4203 = vmatprep.mubr.bf16.mxu0 %v1053
        %4204 = vmatmul.mubr.bf16.gmra.mrb[0].mxu0 %v1052
        %v4205 = vpop.f32.mrb[0].mxu0
        %v4206 = vadd.f32 %v4165, %v4205
        %v4207 = vpop.f32.mrb[0].mxu0
        %v4208 = vadd.f32 %v4167, %v4207
        %v4209 = vpop.f32.mrb[0].mxu0
        %v4210 = vpop.f32.mrb[0].mxu0
        %4211 = vdwg.mxu0
        %4212 = vmatprep.subr.bf16.mxu0 %v3363
        %4213 = vmatpush1.bf16.msra.mxu0 %v3362
        %4214 = vmatprep.subr.bf16.mxu0 %v3371
        %4215 = vmatpush1.bf16.msra.mxu0 %v3370
        %4216 = vmatprep.subr.bf16.mxu0 %v3379
        %4217 = vmatpush1.bf16.msra.mxu0 %v3378
        %4218 = vmatprep.subr.bf16.mxu0 %v3387
        %4219 = vmatpush1.bf16.msra.mxu0 %v3386
        %4220 = vmatprep.subr.bf16.mxu0 %v3395
        %4221 = vmatpush1.bf16.msra.mxu0 %v3394
        %4222 = vmatprep.subr.bf16.mxu0 %v3403
        %4223 = vmatpush1.bf16.msra.mxu0 %v3402
        %4224 = vmatprep.subr.bf16.mxu0 %v3411
        %4225 = vmatpush1.bf16.msra.mxu0 %v3410
        %4226 = vmatprep.subr.bf16.mxu0 %v3419
        %4227 = vmatpush1.bf16.msra.mxu0 %v3418
        %4228 = vmatprep.subr.bf16.mxu0 %v3427
        %4229 = vmatpush1.bf16.msra.mxu0 %v3426
        %4230 = vmatprep.subr.bf16.mxu0 %v3435
        %4231 = vmatpush1.bf16.msra.mxu0 %v3434
        %4232 = vmatprep.subr.bf16.mxu0 %v3443
        %4233 = vmatpush1.bf16.msra.mxu0 %v3442
        %4234 = vmatprep.subr.bf16.mxu0 %v3451
        %4235 = vmatpush1.bf16.msra.mxu0 %v3450
        %4236 = vmatprep.subr.bf16.mxu0 %v3459
        %4237 = vmatpush1.bf16.msra.mxu0 %v3458
        %4238 = vmatprep.subr.bf16.mxu0 %v3467
        %4239 = vmatpush1.bf16.msra.mxu0 %v3466
        %4240 = vmatprep.subr.bf16.mxu0 %v3475
        %4241 = vmatpush1.bf16.msra.mxu0 %v3474
        %4242 = vmatprep.subr.bf16.mxu0 %v3483
        %4243 = vmatpush1.bf16.msra.mxu0 %v3482
        %4244 = vmatprep.mubr.bf16.mxu0 %v1055
        %4245 = vmatmul.mubr.bf16.gmra.mrb[0].mxu0 %v1054
        %v4246 = vpop.f32.mrb[0].mxu0
        %v4247 = vadd.f32 %v4206, %v4246
        %v4248 = vpop.f32.mrb[0].mxu0
        %v4249 = vadd.f32 %v4208, %v4248
        %v4250 = vpop.f32.mrb[0].mxu0
        %v4251 = vpop.f32.mrb[0].mxu0
        %4252 = vdwg.mxu0
        %4253 = vmatprep.subr.bf16.mxu0 %v3491
        %4254 = vmatpush1.bf16.msra.mxu0 %v3490
        %4255 = vmatprep.subr.bf16.mxu0 %v3499
        %4256 = vmatpush1.bf16.msra.mxu0 %v3498
        %4257 = vmatprep.subr.bf16.mxu0 %v3507
        %4258 = vmatpush1.bf16.msra.mxu0 %v3506
        %4259 = vmatprep.subr.bf16.mxu0 %v3515
        %4260 = vmatpush1.bf16.msra.mxu0 %v3514
        %4261 = vmatprep.subr.bf16.mxu0 %v3523
        %4262 = vmatpush1.bf16.msra.mxu0 %v3522
        %4263 = vmatprep.subr.bf16.mxu0 %v3531
        %4264 = vmatpush1.bf16.msra.mxu0 %v3530
        %4265 = vmatprep.subr.bf16.mxu0 %v3539
        %4266 = vmatpush1.bf16.msra.mxu0 %v3538
        %4267 = vmatprep.subr.bf16.mxu0 %v3547
        %4268 = vmatpush1.bf16.msra.mxu0 %v3546
        %4269 = vmatprep.subr.bf16.mxu0 %v3555
        %4270 = vmatpush1.bf16.msra.mxu0 %v3554
        %4271 = vmatprep.subr.bf16.mxu0 %v3563
        %4272 = vmatpush1.bf16.msra.mxu0 %v3562
        %4273 = vmatprep.subr.bf16.mxu0 %v3571
        %4274 = vmatpush1.bf16.msra.mxu0 %v3570
        %4275 = vmatprep.subr.bf16.mxu0 %v3579
        %4276 = vmatpush1.bf16.msra.mxu0 %v3578
        %4277 = vmatprep.subr.bf16.mxu0 %v3587
        %4278 = vmatpush1.bf16.msra.mxu0 %v3586
        %4279 = vmatprep.subr.bf16.mxu0 %v3595
        %4280 = vmatpush1.bf16.msra.mxu0 %v3594
        %4281 = vmatprep.subr.bf16.mxu0 %v3603
        %4282 = vmatpush1.bf16.msra.mxu0 %v3602
        %4283 = vmatprep.subr.bf16.mxu0 %v3611
        %4284 = vmatpush1.bf16.msra.mxu0 %v3610
        %4285 = vmatprep.mubr.bf16.mxu0 %v1057
        %4286 = vmatmul.mubr.bf16.gmra.mrb[0].mxu0 %v1056
        %v4287 = vpop.f32.mrb[0].mxu0
        %v4288 = vadd.f32 %v4247, %v4287
        %v4289 = vpop.f32.mrb[0].mxu0
        %v4290 = vadd.f32 %v4249, %v4289
        %v4291 = vpop.f32.mrb[0].mxu0
        %v4292 = vpop.f32.mrb[0].mxu0
        %4293 = vdwg.mxu0
        %4294 = vmatprep.subr.bf16.mxu0 %v3109
        %4295 = vmatpush1.bf16.msra.mxu0 %v3108
        %4296 = vmatprep.subr.bf16.mxu0 %v3117
        %4297 = vmatpush1.bf16.msra.mxu0 %v3116
        %4298 = vmatprep.subr.bf16.mxu0 %v3125
        %4299 = vmatpush1.bf16.msra.mxu0 %v3124
        %4300 = vmatprep.subr.bf16.mxu0 %v3133
        %4301 = vmatpush1.bf16.msra.mxu0 %v3132
        %4302 = vmatprep.subr.bf16.mxu0 %v3141
        %4303 = vmatpush1.bf16.msra.mxu0 %v3140
        %4304 = vmatprep.subr.bf16.mxu0 %v3149
        %4305 = vmatpush1.bf16.msra.mxu0 %v3148
        %4306 = vmatprep.subr.bf16.mxu0 %v3157
        %4307 = vmatpush1.bf16.msra.mxu0 %v3156
        %4308 = vmatprep.subr.bf16.mxu0 %v3165
        %4309 = vmatpush1.bf16.msra.mxu0 %v3164
        %4310 = vmatprep.subr.bf16.mxu0 %v3173
        %4311 = vmatpush1.bf16.msra.mxu0 %v3172
        %4312 = vmatprep.subr.bf16.mxu0 %v3181
        %4313 = vmatpush1.bf16.msra.mxu0 %v3180
        %4314 = vmatprep.subr.bf16.mxu0 %v3189
        %4315 = vmatpush1.bf16.msra.mxu0 %v3188
        %4316 = vmatprep.subr.bf16.mxu0 %v3197
        %4317 = vmatpush1.bf16.msra.mxu0 %v3196
        %4318 = vmatprep.subr.bf16.mxu0 %v3205
        %4319 = vmatpush1.bf16.msra.mxu0 %v3204
        %4320 = vmatprep.subr.bf16.mxu0 %v3213
        %4321 = vmatpush1.bf16.msra.mxu0 %v3212
        %4322 = vmatprep.subr.bf16.mxu0 %v3221
        %4323 = vmatpush1.bf16.msra.mxu0 %v3220
        %4324 = vmatprep.subr.bf16.mxu0 %v3229
        %4325 = vmatpush1.bf16.msra.mxu0 %v3228
        %4326 = vmatprep.mubr.bf16.mxu0 %v1051
        %4327 = vmatmul.mubr.bf16.gmra.mrb[0].mxu0 %v1050
        %v4328 = vpop.f32.mrb[0].mxu0
        %v4329 = vadd.f32 0.0, %v4328
        %v4330 = vpop.f32.mrb[0].mxu0
        %v4331 = vadd.f32 0.0, %v4330
        %v4332 = vpop.f32.mrb[0].mxu0
        %v4333 = vpop.f32.mrb[0].mxu0
        %4334 = vdwg.mxu0
        %4335 = vmatprep.subr.bf16.mxu0 %v3237
        %4336 = vmatpush1.bf16.msra.mxu0 %v3236
        %4337 = vmatprep.subr.bf16.mxu0 %v3245
        %4338 = vmatpush1.bf16.msra.mxu0 %v3244
        %4339 = vmatprep.subr.bf16.mxu0 %v3253
        %4340 = vmatpush1.bf16.msra.mxu0 %v3252
        %4341 = vmatprep.subr.bf16.mxu0 %v3261
        %4342 = vmatpush1.bf16.msra.mxu0 %v3260
        %4343 = vmatprep.subr.bf16.mxu0 %v3269
        %4344 = vmatpush1.bf16.msra.mxu0 %v3268
        %4345 = vmatprep.subr.bf16.mxu0 %v3277
        %4346 = vmatpush1.bf16.msra.mxu0 %v3276
        %4347 = vmatprep.subr.bf16.mxu0 %v3285
        %4348 = vmatpush1.bf16.msra.mxu0 %v3284
        %4349 = vmatprep.subr.bf16.mxu0 %v3293
        %4350 = vmatpush1.bf16.msra.mxu0 %v3292
        %4351 = vmatprep.subr.bf16.mxu0 %v3301
        %4352 = vmatpush1.bf16.msra.mxu0 %v3300
        %4353 = vmatprep.subr.bf16.mxu0 %v3309
        %4354 = vmatpush1.bf16.msra.mxu0 %v3308
        %4355 = vmatprep.subr.bf16.mxu0 %v3317
        %4356 = vmatpush1.bf16.msra.mxu0 %v3316
        %4357 = vmatprep.subr.bf16.mxu0 %v3325
        %4358 = vmatpush1.bf16.msra.mxu0 %v3324
        %4359 = vmatprep.subr.bf16.mxu0 %v3333
        %4360 = vmatpush1.bf16.msra.mxu0 %v3332
        %4361 = vmatprep.subr.bf16.mxu0 %v3341
        %4362 = vmatpush1.bf16.msra.mxu0 %v3340
        %4363 = vmatprep.subr.bf16.mxu0 %v3349
        %4364 = vmatpush1.bf16.msra.mxu0 %v3348
        %4365 = vmatprep.subr.bf16.mxu0 %v3357
        %4366 = vmatpush1.bf16.msra.mxu0 %v3356
        %4367 = vmatprep.mubr.bf16.mxu0 %v1053
        %4368 = vmatmul.mubr.bf16.gmra.mrb[0].mxu0 %v1052
        %v4369 = vpop.f32.mrb[0].mxu0
        %v4370 = vadd.f32 %v4329, %v4369
        %v4371 = vpop.f32.mrb[0].mxu0
        %v4372 = vadd.f32 %v4331, %v4371
        %v4373 = vpop.f32.mrb[0].mxu0
        %v4374 = vpop.f32.mrb[0].mxu0
        %4375 = vdwg.mxu0
        %4376 = vmatprep.subr.bf16.mxu0 %v3365
        %4377 = vmatpush1.bf16.msra.mxu0 %v3364
        %4378 = vmatprep.subr.bf16.mxu0 %v3373
        %4379 = vmatpush1.bf16.msra.mxu0 %v3372
        %4380 = vmatprep.subr.bf16.mxu0 %v3381
        %4381 = vmatpush1.bf16.msra.mxu0 %v3380
        %4382 = vmatprep.subr.bf16.mxu0 %v3389
        %4383 = vmatpush1.bf16.msra.mxu0 %v3388
        %4384 = vmatprep.subr.bf16.mxu0 %v3397
        %4385 = vmatpush1.bf16.msra.mxu0 %v3396
        %4386 = vmatprep.subr.bf16.mxu0 %v3405
        %4387 = vmatpush1.bf16.msra.mxu0 %v3404
        %4388 = vmatprep.subr.bf16.mxu0 %v3413
        %4389 = vmatpush1.bf16.msra.mxu0 %v3412
        %4390 = vmatprep.subr.bf16.mxu0 %v3421
        %4391 = vmatpush1.bf16.msra.mxu0 %v3420
        %4392 = vmatprep.subr.bf16.mxu0 %v3429
        %4393 = vmatpush1.bf16.msra.mxu0 %v3428
        %4394 = vmatprep.subr.bf16.mxu0 %v3437
        %4395 = vmatpush1.bf16.msra.mxu0 %v3436
        %4396 = vmatprep.subr.bf16.mxu0 %v3445
        %4397 = vmatpush1.bf16.msra.mxu0 %v3444
        %4398 = vmatprep.subr.bf16.mxu0 %v3453
        %4399 = vmatpush1.bf16.msra.mxu0 %v3452
        %4400 = vmatprep.subr.bf16.mxu0 %v3461
        %4401 = vmatpush1.bf16.msra.mxu0 %v3460
        %4402 = vmatprep.subr.bf16.mxu0 %v3469
        %4403 = vmatpush1.bf16.msra.mxu0 %v3468
        %4404 = vmatprep.subr.bf16.mxu0 %v3477
        %4405 = vmatpush1.bf16.msra.mxu0 %v3476
        %4406 = vmatprep.subr.bf16.mxu0 %v3485
        %4407 = vmatpush1.bf16.msra.mxu0 %v3484
        %4408 = vmatprep.mubr.bf16.mxu0 %v1055
        %4409 = vmatmul.mubr.bf16.gmra.mrb[0].mxu0 %v1054
        %v4410 = vpop.f32.mrb[0].mxu0
        %v4411 = vadd.f32 %v4370, %v4410
        %v4412 = vpop.f32.mrb[0].mxu0
        %v4413 = vadd.f32 %v4372, %v4412
        %v4414 = vpop.f32.mrb[0].mxu0
        %v4415 = vpop.f32.mrb[0].mxu0
        %4416 = vdwg.mxu0
        %4417 = vmatprep.subr.bf16.mxu0 %v3493
        %4418 = vmatpush1.bf16.msra.mxu0 %v3492
        %4419 = vmatprep.subr.bf16.mxu0 %v3501
        %4420 = vmatpush1.bf16.msra.mxu0 %v3500
        %4421 = vmatprep.subr.bf16.mxu0 %v3509
        %4422 = vmatpush1.bf16.msra.mxu0 %v3508
        %4423 = vmatprep.subr.bf16.mxu0 %v3517
        %4424 = vmatpush1.bf16.msra.mxu0 %v3516
        %4425 = vmatprep.subr.bf16.mxu0 %v3525
        %4426 = vmatpush1.bf16.msra.mxu0 %v3524
        %4427 = vmatprep.subr.bf16.mxu0 %v3533
        %4428 = vmatpush1.bf16.msra.mxu0 %v3532
        %4429 = vmatprep.subr.bf16.mxu0 %v3541
        %4430 = vmatpush1.bf16.msra.mxu0 %v3540
        %4431 = vmatprep.subr.bf16.mxu0 %v3549
        %4432 = vmatpush1.bf16.msra.mxu0 %v3548
        %4433 = vmatprep.subr.bf16.mxu0 %v3557
        %4434 = vmatpush1.bf16.msra.mxu0 %v3556
        %4435 = vmatprep.subr.bf16.mxu0 %v3565
        %4436 = vmatpush1.bf16.msra.mxu0 %v3564
        %4437 = vmatprep.subr.bf16.mxu0 %v3573
        %4438 = vmatpush1.bf16.msra.mxu0 %v3572
        %4439 = vmatprep.subr.bf16.mxu0 %v3581
        %4440 = vmatpush1.bf16.msra.mxu0 %v3580
        %4441 = vmatprep.subr.bf16.mxu0 %v3589
        %4442 = vmatpush1.bf16.msra.mxu0 %v3588
        %4443 = vmatprep.subr.bf16.mxu0 %v3597
        %4444 = vmatpush1.bf16.msra.mxu0 %v3596
        %4445 = vmatprep.subr.bf16.mxu0 %v3605
        %4446 = vmatpush1.bf16.msra.mxu0 %v3604
        %4447 = vmatprep.subr.bf16.mxu0 %v3613
        %4448 = vmatpush1.bf16.msra.mxu0 %v3612
        %4449 = vmatprep.mubr.bf16.mxu0 %v1057
        %4450 = vmatmul.mubr.bf16.gmra.mrb[0].mxu0 %v1056
        %v4451 = vpop.f32.mrb[0].mxu0
        %v4452 = vadd.f32 %v4411, %v4451
        %v4453 = vpop.f32.mrb[0].mxu0
        %v4454 = vadd.f32 %v4413, %v4453
        %v4455 = vpop.f32.mrb[0].mxu0
        %v4456 = vpop.f32.mrb[0].mxu0
        %4457 = vdwg.mxu0
        %4458 = vmatprep.subr.bf16.mxu0 %v3111
        %4459 = vmatpush1.bf16.msra.mxu0 %v3110
        %4460 = vmatprep.subr.bf16.mxu0 %v3119
        %4461 = vmatpush1.bf16.msra.mxu0 %v3118
        %4462 = vmatprep.subr.bf16.mxu0 %v3127
        %4463 = vmatpush1.bf16.msra.mxu0 %v3126
        %4464 = vmatprep.subr.bf16.mxu0 %v3135
        %4465 = vmatpush1.bf16.msra.mxu0 %v3134
        %4466 = vmatprep.subr.bf16.mxu0 %v3143
        %4467 = vmatpush1.bf16.msra.mxu0 %v3142
        %4468 = vmatprep.subr.bf16.mxu0 %v3151
        %4469 = vmatpush1.bf16.msra.mxu0 %v3150
        %4470 = vmatprep.subr.bf16.mxu0 %v3159
        %4471 = vmatpush1.bf16.msra.mxu0 %v3158
        %4472 = vmatprep.subr.bf16.mxu0 %v3167
        %4473 = vmatpush1.bf16.msra.mxu0 %v3166
        %4474 = vmatprep.subr.bf16.mxu0 %v3175
        %4475 = vmatpush1.bf16.msra.mxu0 %v3174
        %4476 = vmatprep.subr.bf16.mxu0 %v3183
        %4477 = vmatpush1.bf16.msra.mxu0 %v3182
        %4478 = vmatprep.subr.bf16.mxu0 %v3191
        %4479 = vmatpush1.bf16.msra.mxu0 %v3190
        %4480 = vmatprep.subr.bf16.mxu0 %v3199
        %4481 = vmatpush1.bf16.msra.mxu0 %v3198
        %4482 = vmatprep.subr.bf16.mxu0 %v3207
        %4483 = vmatpush1.bf16.msra.mxu0 %v3206
        %4484 = vmatprep.subr.bf16.mxu0 %v3215
        %4485 = vmatpush1.bf16.msra.mxu0 %v3214
        %4486 = vmatprep.subr.bf16.mxu0 %v3223
        %4487 = vmatpush1.bf16.msra.mxu0 %v3222
        %4488 = vmatprep.subr.bf16.mxu0 %v3231
        %4489 = vmatpush1.bf16.msra.mxu0 %v3230
        %4490 = vmatprep.mubr.bf16.mxu0 %v1051
        %4491 = vmatmul.mubr.bf16.gmra.mrb[0].mxu0 %v1050
        %v4492 = vpop.f32.mrb[0].mxu0
        %v4493 = vadd.f32 0.0, %v4492
        %v4494 = vpop.f32.mrb[0].mxu0
        %v4495 = vadd.f32 0.0, %v4494
        %v4496 = vpop.f32.mrb[0].mxu0
        %v4497 = vpop.f32.mrb[0].mxu0
        %4498 = vdwg.mxu0
        %4499 = vmatprep.subr.bf16.mxu0 %v3239
        %4500 = vmatpush1.bf16.msra.mxu0 %v3238
        %4501 = vmatprep.subr.bf16.mxu0 %v3247
        %4502 = vmatpush1.bf16.msra.mxu0 %v3246
        %4503 = vmatprep.subr.bf16.mxu0 %v3255
        %4504 = vmatpush1.bf16.msra.mxu0 %v3254
        %4505 = vmatprep.subr.bf16.mxu0 %v3263
        %4506 = vmatpush1.bf16.msra.mxu0 %v3262
        %4507 = vmatprep.subr.bf16.mxu0 %v3271
        %4508 = vmatpush1.bf16.msra.mxu0 %v3270
        %4509 = vmatprep.subr.bf16.mxu0 %v3279
        %4510 = vmatpush1.bf16.msra.mxu0 %v3278
        %4511 = vmatprep.subr.bf16.mxu0 %v3287
        %4512 = vmatpush1.bf16.msra.mxu0 %v3286
        %4513 = vmatprep.subr.bf16.mxu0 %v3295
        %4514 = vmatpush1.bf16.msra.mxu0 %v3294
        %4515 = vmatprep.subr.bf16.mxu0 %v3303
        %4516 = vmatpush1.bf16.msra.mxu0 %v3302
        %4517 = vmatprep.subr.bf16.mxu0 %v3311
        %4518 = vmatpush1.bf16.msra.mxu0 %v3310
        %4519 = vmatprep.subr.bf16.mxu0 %v3319
        %4520 = vmatpush1.bf16.msra.mxu0 %v3318
        %4521 = vmatprep.subr.bf16.mxu0 %v3327
        %4522 = vmatpush1.bf16.msra.mxu0 %v3326
        %4523 = vmatprep.subr.bf16.mxu0 %v3335
        %4524 = vmatpush1.bf16.msra.mxu0 %v3334
        %4525 = vmatprep.subr.bf16.mxu0 %v3343
        %4526 = vmatpush1.bf16.msra.mxu0 %v3342
        %4527 = vmatprep.subr.bf16.mxu0 %v3351
        %4528 = vmatpush1.bf16.msra.mxu0 %v3350
        %4529 = vmatprep.subr.bf16.mxu0 %v3359
        %4530 = vmatpush1.bf16.msra.mxu0 %v3358
        %4531 = vmatprep.mubr.bf16.mxu0 %v1053
        %4532 = vmatmul.mubr.bf16.gmra.mrb[0].mxu0 %v1052
        %v4533 = vpop.f32.mrb[0].mxu0
        %v4534 = vadd.f32 %v4493, %v4533
        %v4535 = vpop.f32.mrb[0].mxu0
        %v4536 = vadd.f32 %v4495, %v4535
        %v4537 = vpop.f32.mrb[0].mxu0
        %v4538 = vpop.f32.mrb[0].mxu0
        %4539 = vdwg.mxu0
        %4540 = vmatprep.subr.bf16.mxu0 %v3367
        %4541 = vmatpush1.bf16.msra.mxu0 %v3366
        %4542 = vmatprep.subr.bf16.mxu0 %v3375
        %4543 = vmatpush1.bf16.msra.mxu0 %v3374
        %4544 = vmatprep.subr.bf16.mxu0 %v3383
        %4545 = vmatpush1.bf16.msra.mxu0 %v3382
        %4546 = vmatprep.subr.bf16.mxu0 %v3391
        %4547 = vmatpush1.bf16.msra.mxu0 %v3390
        %4548 = vmatprep.subr.bf16.mxu0 %v3399
        %4549 = vmatpush1.bf16.msra.mxu0 %v3398
        %4550 = vmatprep.subr.bf16.mxu0 %v3407
        %4551 = vmatpush1.bf16.msra.mxu0 %v3406
        %4552 = vmatprep.subr.bf16.mxu0 %v3415
        %4553 = vmatpush1.bf16.msra.mxu0 %v3414
        %4554 = vmatprep.subr.bf16.mxu0 %v3423
        %4555 = vmatpush1.bf16.msra.mxu0 %v3422
        %4556 = vmatprep.subr.bf16.mxu0 %v3431
        %4557 = vmatpush1.bf16.msra.mxu0 %v3430
        %4558 = vmatprep.subr.bf16.mxu0 %v3439
        %4559 = vmatpush1.bf16.msra.mxu0 %v3438
        %4560 = vmatprep.subr.bf16.mxu0 %v3447
        %4561 = vmatpush1.bf16.msra.mxu0 %v3446
        %4562 = vmatprep.subr.bf16.mxu0 %v3455
        %4563 = vmatpush1.bf16.msra.mxu0 %v3454
        %4564 = vmatprep.subr.bf16.mxu0 %v3463
        %4565 = vmatpush1.bf16.msra.mxu0 %v3462
        %4566 = vmatprep.subr.bf16.mxu0 %v3471
        %4567 = vmatpush1.bf16.msra.mxu0 %v3470
        %4568 = vmatprep.subr.bf16.mxu0 %v3479
        %4569 = vmatpush1.bf16.msra.mxu0 %v3478
        %4570 = vmatprep.subr.bf16.mxu0 %v3487
        %4571 = vmatpush1.bf16.msra.mxu0 %v3486
        %4572 = vmatprep.mubr.bf16.mxu0 %v1055
        %4573 = vmatmul.mubr.bf16.gmra.mrb[0].mxu0 %v1054
        %v4574 = vpop.f32.mrb[0].mxu0
        %v4575 = vadd.f32 %v4534, %v4574
        %v4576 = vpop.f32.mrb[0].mxu0
        %v4577 = vadd.f32 %v4536, %v4576
        %v4578 = vpop.f32.mrb[0].mxu0
        %v4579 = vpop.f32.mrb[0].mxu0
        %4580 = vdwg.mxu0
        %4581 = vmatprep.subr.bf16.mxu0 %v3495
        %4582 = vmatpush1.bf16.msra.mxu0 %v3494
        %4583 = vmatprep.subr.bf16.mxu0 %v3503
        %4584 = vmatpush1.bf16.msra.mxu0 %v3502
        %4585 = vmatprep.subr.bf16.mxu0 %v3511
        %4586 = vmatpush1.bf16.msra.mxu0 %v3510
        %4587 = vmatprep.subr.bf16.mxu0 %v3519
        %4588 = vmatpush1.bf16.msra.mxu0 %v3518
        %4589 = vmatprep.subr.bf16.mxu0 %v3527
        %4590 = vmatpush1.bf16.msra.mxu0 %v3526
        %4591 = vmatprep.subr.bf16.mxu0 %v3535
        %4592 = vmatpush1.bf16.msra.mxu0 %v3534
        %4593 = vmatprep.subr.bf16.mxu0 %v3543
        %4594 = vmatpush1.bf16.msra.mxu0 %v3542
        %4595 = vmatprep.subr.bf16.mxu0 %v3551
        %4596 = vmatpush1.bf16.msra.mxu0 %v3550
        %4597 = vmatprep.subr.bf16.mxu0 %v3559
        %4598 = vmatpush1.bf16.msra.mxu0 %v3558
        %4599 = vmatprep.subr.bf16.mxu0 %v3567
        %4600 = vmatpush1.bf16.msra.mxu0 %v3566
        %4601 = vmatprep.subr.bf16.mxu0 %v3575
        %4602 = vmatpush1.bf16.msra.mxu0 %v3574
        %4603 = vmatprep.subr.bf16.mxu0 %v3583
        %4604 = vmatpush1.bf16.msra.mxu0 %v3582
        %4605 = vmatprep.subr.bf16.mxu0 %v3591
        %4606 = vmatpush1.bf16.msra.mxu0 %v3590
        %4607 = vmatprep.subr.bf16.mxu0 %v3599
        %4608 = vmatpush1.bf16.msra.mxu0 %v3598
        %4609 = vmatprep.subr.bf16.mxu0 %v3607
        %4610 = vmatpush1.bf16.msra.mxu0 %v3606
        %4611 = vmatprep.subr.bf16.mxu0 %v3615
        %4612 = vmatpush1.bf16.msra.mxu0 %v3614
        %4613 = vmatprep.mubr.bf16.mxu0 %v1057
        %4614 = vmatmul.mubr.bf16.gmra.mrb[0].mxu0 %v1056
        %v4615 = vpop.f32.mrb[0].mxu0
        %v4616 = vadd.f32 %v4575, %v4615
        %v4617 = vpop.f32.mrb[0].mxu0
        %v4618 = vadd.f32 %v4577, %v4617
        %v4619 = vpop.f32.mrb[0].mxu0
        %v4620 = vpop.f32.mrb[0].mxu0
        %4621 = vdwg.mxu0
        %4622 = vmatprep.subr.bf16.mxu0 %v3113
        %4623 = vmatpush1.bf16.msra.mxu0 %v3112
        %4624 = vmatprep.subr.bf16.mxu0 %v3121
        %4625 = vmatpush1.bf16.msra.mxu0 %v3120
        %4626 = vmatprep.subr.bf16.mxu0 %v3129
        %4627 = vmatpush1.bf16.msra.mxu0 %v3128
        %4628 = vmatprep.subr.bf16.mxu0 %v3137
        %4629 = vmatpush1.bf16.msra.mxu0 %v3136
        %4630 = vmatprep.subr.bf16.mxu0 %v3145
        %4631 = vmatpush1.bf16.msra.mxu0 %v3144
        %4632 = vmatprep.subr.bf16.mxu0 %v3153
        %4633 = vmatpush1.bf16.msra.mxu0 %v3152
        %4634 = vmatprep.subr.bf16.mxu0 %v3161
        %4635 = vmatpush1.bf16.msra.mxu0 %v3160
        %4636 = vmatprep.subr.bf16.mxu0 %v3169
        %4637 = vmatpush1.bf16.msra.mxu0 %v3168
        %4638 = vmatprep.subr.bf16.mxu0 %v3177
        %4639 = vmatpush1.bf16.msra.mxu0 %v3176
        %4640 = vmatprep.subr.bf16.mxu0 %v3185
        %4641 = vmatpush1.bf16.msra.mxu0 %v3184
        %4642 = vmatprep.subr.bf16.mxu0 %v3193
        %4643 = vmatpush1.bf16.msra.mxu0 %v3192
        %4644 = vmatprep.subr.bf16.mxu0 %v3201
        %4645 = vmatpush1.bf16.msra.mxu0 %v3200
        %4646 = vmatprep.subr.bf16.mxu0 %v3209
        %4647 = vmatpush1.bf16.msra.mxu0 %v3208
        %4648 = vmatprep.subr.bf16.mxu0 %v3217
        %4649 = vmatpush1.bf16.msra.mxu0 %v3216
        %4650 = vmatprep.subr.bf16.mxu0 %v3225
        %4651 = vmatpush1.bf16.msra.mxu0 %v3224
        %4652 = vmatprep.subr.bf16.mxu0 %v3233
        %4653 = vmatpush1.bf16.msra.mxu0 %v3232
        %4654 = vmatprep.mubr.bf16.mxu0 %v1051
        %4655 = vmatmul.mubr.bf16.gmra.mrb[0].mxu0 %v1050
        %v4656 = vpop.f32.mrb[0].mxu0
        %v4657 = vadd.f32 0.0, %v4656
        %v4658 = vpop.f32.mrb[0].mxu0
        %v4659 = vadd.f32 0.0, %v4658
        %v4660 = vpop.f32.mrb[0].mxu0
        %v4661 = vpop.f32.mrb[0].mxu0
        %4662 = vdwg.mxu0
        %4663 = vmatprep.subr.bf16.mxu0 %v3241
        %4664 = vmatpush1.bf16.msra.mxu0 %v3240
        %4665 = vmatprep.subr.bf16.mxu0 %v3249
        %4666 = vmatpush1.bf16.msra.mxu0 %v3248
        %4667 = vmatprep.subr.bf16.mxu0 %v3257
        %4668 = vmatpush1.bf16.msra.mxu0 %v3256
        %4669 = vmatprep.subr.bf16.mxu0 %v3265
        %4670 = vmatpush1.bf16.msra.mxu0 %v3264
        %4671 = vmatprep.subr.bf16.mxu0 %v3273
        %4672 = vmatpush1.bf16.msra.mxu0 %v3272
        %4673 = vmatprep.subr.bf16.mxu0 %v3281
        %4674 = vmatpush1.bf16.msra.mxu0 %v3280
        %4675 = vmatprep.subr.bf16.mxu0 %v3289
        %4676 = vmatpush1.bf16.msra.mxu0 %v3288
        %4677 = vmatprep.subr.bf16.mxu0 %v3297
        %4678 = vmatpush1.bf16.msra.mxu0 %v3296
        %4679 = vmatprep.subr.bf16.mxu0 %v3305
        %4680 = vmatpush1.bf16.msra.mxu0 %v3304
        %4681 = vmatprep.subr.bf16.mxu0 %v3313
        %4682 = vmatpush1.bf16.msra.mxu0 %v3312
        %4683 = vmatprep.subr.bf16.mxu0 %v3321
        %4684 = vmatpush1.bf16.msra.mxu0 %v3320
        %4685 = vmatprep.subr.bf16.mxu0 %v3329
        %4686 = vmatpush1.bf16.msra.mxu0 %v3328
        %4687 = vmatprep.subr.bf16.mxu0 %v3337
        %4688 = vmatpush1.bf16.msra.mxu0 %v3336
        %4689 = vmatprep.subr.bf16.mxu0 %v3345
        %4690 = vmatpush1.bf16.msra.mxu0 %v3344
        %4691 = vmatprep.subr.bf16.mxu0 %v3353
        %4692 = vmatpush1.bf16.msra.mxu0 %v3352
        %4693 = vmatprep.subr.bf16.mxu0 %v3361
        %4694 = vmatpush1.bf16.msra.mxu0 %v3360
        %4695 = vmatprep.mubr.bf16.mxu0 %v1053
        %4696 = vmatmul.mubr.bf16.gmra.mrb[0].mxu0 %v1052
        %v4697 = vpop.f32.mrb[0].mxu0
        %v4698 = vadd.f32 %v4657, %v4697
        %v4699 = vpop.f32.mrb[0].mxu0
        %v4700 = vadd.f32 %v4659, %v4699
        %v4701 = vpop.f32.mrb[0].mxu0
        %v4702 = vpop.f32.mrb[0].mxu0
        %4703 = vdwg.mxu0
        %4704 = vmatprep.subr.bf16.mxu0 %v3369
        %4705 = vmatpush1.bf16.msra.mxu0 %v3368
        %4706 = vmatprep.subr.bf16.mxu0 %v3377
        %4707 = vmatpush1.bf16.msra.mxu0 %v3376
        %4708 = vmatprep.subr.bf16.mxu0 %v3385
        %4709 = vmatpush1.bf16.msra.mxu0 %v3384
        %4710 = vmatprep.subr.bf16.mxu0 %v3393
        %4711 = vmatpush1.bf16.msra.mxu0 %v3392
        %4712 = vmatprep.subr.bf16.mxu0 %v3401
        %4713 = vmatpush1.bf16.msra.mxu0 %v3400
        %4714 = vmatprep.subr.bf16.mxu0 %v3409
        %4715 = vmatpush1.bf16.msra.mxu0 %v3408
        %4716 = vmatprep.subr.bf16.mxu0 %v3417
        %4717 = vmatpush1.bf16.msra.mxu0 %v3416
        %4718 = vmatprep.subr.bf16.mxu0 %v3425
        %4719 = vmatpush1.bf16.msra.mxu0 %v3424
        %4720 = vmatprep.subr.bf16.mxu0 %v3433
        %4721 = vmatpush1.bf16.msra.mxu0 %v3432
        %4722 = vmatprep.subr.bf16.mxu0 %v3441
        %4723 = vmatpush1.bf16.msra.mxu0 %v3440
        %4724 = vmatprep.subr.bf16.mxu0 %v3449
        %4725 = vmatpush1.bf16.msra.mxu0 %v3448
        %4726 = vmatprep.subr.bf16.mxu0 %v3457
        %4727 = vmatpush1.bf16.msra.mxu0 %v3456
        %4728 = vmatprep.subr.bf16.mxu0 %v3465
        %4729 = vmatpush1.bf16.msra.mxu0 %v3464
        %4730 = vmatprep.subr.bf16.mxu0 %v3473
        %4731 = vmatpush1.bf16.msra.mxu0 %v3472
        %4732 = vmatprep.subr.bf16.mxu0 %v3481
        %4733 = vmatpush1.bf16.msra.mxu0 %v3480
        %4734 = vmatprep.subr.bf16.mxu0 %v3489
        %4735 = vmatpush1.bf16.msra.mxu0 %v3488
        %4736 = vmatprep.mubr.bf16.mxu0 %v1055
        %4737 = vmatmul.mubr.bf16.gmra.mrb[0].mxu0 %v1054
        %v4738 = vpop.f32.mrb[0].mxu0
        %v4739 = vadd.f32 %v4698, %v4738
        %v4740 = vpop.f32.mrb[0].mxu0
        %v4741 = vadd.f32 %v4700, %v4740
        %v4742 = vpop.f32.mrb[0].mxu0
        %v4743 = vpop.f32.mrb[0].mxu0
        %4744 = vdwg.mxu0
        %4745 = vmatprep.subr.bf16.mxu0 %v3497
        %4746 = vmatpush1.bf16.msra.mxu0 %v3496
        %4747 = vmatprep.subr.bf16.mxu0 %v3505
        %4748 = vmatpush1.bf16.msra.mxu0 %v3504
        %4749 = vmatprep.subr.bf16.mxu0 %v3513
        %4750 = vmatpush1.bf16.msra.mxu0 %v3512
        %4751 = vmatprep.subr.bf16.mxu0 %v3521
        %4752 = vmatpush1.bf16.msra.mxu0 %v3520
        %4753 = vmatprep.subr.bf16.mxu0 %v3529
        %4754 = vmatpush1.bf16.msra.mxu0 %v3528
        %4755 = vmatprep.subr.bf16.mxu0 %v3537
        %4756 = vmatpush1.bf16.msra.mxu0 %v3536
        %4757 = vmatprep.subr.bf16.mxu0 %v3545
        %4758 = vmatpush1.bf16.msra.mxu0 %v3544
        %4759 = vmatprep.subr.bf16.mxu0 %v3553
        %4760 = vmatpush1.bf16.msra.mxu0 %v3552
        %4761 = vmatprep.subr.bf16.mxu0 %v3561
        %4762 = vmatpush1.bf16.msra.mxu0 %v3560
        %4763 = vmatprep.subr.bf16.mxu0 %v3569
        %4764 = vmatpush1.bf16.msra.mxu0 %v3568
        %4765 = vmatprep.subr.bf16.mxu0 %v3577
        %4766 = vmatpush1.bf16.msra.mxu0 %v3576
        %4767 = vmatprep.subr.bf16.mxu0 %v3585
        %4768 = vmatpush1.bf16.msra.mxu0 %v3584
        %4769 = vmatprep.subr.bf16.mxu0 %v3593
        %4770 = vmatpush1.bf16.msra.mxu0 %v3592
        %4771 = vmatprep.subr.bf16.mxu0 %v3601
        %4772 = vmatpush1.bf16.msra.mxu0 %v3600
        %4773 = vmatprep.subr.bf16.mxu0 %v3609
        %4774 = vmatpush1.bf16.msra.mxu0 %v3608
        %4775 = vmatprep.subr.bf16.mxu0 %v3617
        %4776 = vmatpush1.bf16.msra.mxu0 %v3616
        %4777 = vmatprep.mubr.bf16.mxu0 %v1057
        %4778 = vmatmul.mubr.bf16.gmra.mrb[0].mxu0 %v1056
        %v4779 = vpop.f32.mrb[0].mxu0
        %v4780 = vadd.f32 %v4739, %v4779
        %v4781 = vpop.f32.mrb[0].mxu0
        %v4782 = vadd.f32 %v4741, %v4781
        %v4783 = vpop.f32.mrb[0].mxu0
        %v4784 = vpop.f32.mrb[0].mxu0
        %4785 = vdwg.mxu0
        %v4786 = vld [vmem:[%s357] sm:$0xff]
        %v4787 = vld [vmem:[%s366] sm:$0xff]
        %v4788 = vsel %vm750, %v4288, 0.0
        %v4789 = vrot.slane %v4788, 4
        %v4790 = vadd.f32 %v4788, %v4789
        %v4791 = vrot.slane %v4790, 2
        %v4792 = vadd.f32 %v4790, %v4791
        %v4793 = vrot.slane %v4792, 1
        %v4794 = vadd.f32 %v4792, %v4793
        %v4795 = vsel %vm750, %v4290, 0.0
        %v4796 = vrot.slane %v4795, 4
        %v4797 = vadd.f32 %v4795, %v4796
        %v4798 = vrot.slane %v4797, 2
        %v4799 = vadd.f32 %v4797, %v4798
        %v4800 = vrot.slane %v4799, 1
        %v4801 = vadd.f32 %v4799, %v4800
        %v4802 = vsel %vm750, %v4452, 0.0
        %v4803 = vrot.slane %v4802, 4
        %v4804 = vadd.f32 %v4802, %v4803
        %v4805 = vrot.slane %v4804, 2
        %v4806 = vadd.f32 %v4804, %v4805
        %v4807 = vrot.slane %v4806, 1
        %v4808 = vadd.f32 %v4806, %v4807
        %v4809 = vsel %vm750, %v4454, 0.0
        %v4810 = vrot.slane %v4809, 4
        %v4811 = vadd.f32 %v4809, %v4810
        %v4812 = vrot.slane %v4811, 2
        %v4813 = vadd.f32 %v4811, %v4812
        %v4814 = vrot.slane %v4813, 1
        %v4815 = vadd.f32 %v4813, %v4814
        %v4816 = vsel %vm750, %v4616, 0.0
        %v4817 = vrot.slane %v4816, 4
        %v4818 = vadd.f32 %v4816, %v4817
        %v4819 = vrot.slane %v4818, 2
        %v4820 = vadd.f32 %v4818, %v4819
        %v4821 = vrot.slane %v4820, 1
        %v4822 = vadd.f32 %v4820, %v4821
        %v4823 = vsel %vm750, %v4618, 0.0
        %v4824 = vrot.slane %v4823, 4
        %v4825 = vadd.f32 %v4823, %v4824
        %v4826 = vrot.slane %v4825, 2
        %v4827 = vadd.f32 %v4825, %v4826
        %v4828 = vrot.slane %v4827, 1
        %v4829 = vadd.f32 %v4827, %v4828
        %v4830 = vsel %vm750, %v4780, 0.0
        %v4831 = vrot.slane %v4830, 4
        %v4832 = vadd.f32 %v4830, %v4831
        %v4833 = vrot.slane %v4832, 2
        %v4834 = vadd.f32 %v4832, %v4833
        %v4835 = vrot.slane %v4834, 1
        %v4836 = vadd.f32 %v4834, %v4835
        %v4837 = vsel %vm750, %v4782, 0.0
        %v4838 = vrot.slane %v4837, 4
        %v4839 = vadd.f32 %v4837, %v4838
        %v4840 = vrot.slane %v4839, 2
        %v4841 = vadd.f32 %v4839, %v4840
        %v4842 = vrot.slane %v4841, 1
        %v4843 = vadd.f32 %v4841, %v4842
        %v4844 = vmul.f32 %v4794, %v807
        %v4845 = vmul.f32 %v4801, %v807
        %v4846 = vmul.f32 %v4808, %v807
        %v4847 = vmul.f32 %v4815, %v807
        %v4848 = vmul.f32 %v4822, %v807
        %v4849 = vmul.f32 %v4829, %v807
        %v4850 = vmul.f32 %v4836, %v807
        %v4851 = vmul.f32 %v4843, %v807
        %v4852 = vmul.f32 %v4288, %v4288
        %v4853 = vmul.f32 %v4290, %v4290
        %v4854 = vmul.f32 %v4452, %v4452
        %v4855 = vmul.f32 %v4454, %v4454
        %v4856 = vmul.f32 %v4616, %v4616
        %v4857 = vmul.f32 %v4618, %v4618
        %v4858 = vmul.f32 %v4780, %v4780
        %v4859 = vmul.f32 %v4782, %v4782
        %v4860 = vsel %vm750, %v4852, 0.0
        %v4861 = vrot.slane %v4860, 4
        %v4862 = vadd.f32 %v4860, %v4861
        %v4863 = vrot.slane %v4862, 2
        %v4864 = vadd.f32 %v4862, %v4863
        %v4865 = vrot.slane %v4864, 1
        %v4866 = vadd.f32 %v4864, %v4865
        %v4867 = vsel %vm750, %v4853, 0.0
        %v4868 = vrot.slane %v4867, 4
        %v4869 = vadd.f32 %v4867, %v4868
        %v4870 = vrot.slane %v4869, 2
        %v4871 = vadd.f32 %v4869, %v4870
        %v4872 = vrot.slane %v4871, 1
        %v4873 = vadd.f32 %v4871, %v4872
        %v4874 = vsel %vm750, %v4854, 0.0
        %v4875 = vrot.slane %v4874, 4
        %v4876 = vadd.f32 %v4874, %v4875
        %v4877 = vrot.slane %v4876, 2
        %v4878 = vadd.f32 %v4876, %v4877
        %v4879 = vrot.slane %v4878, 1
        %v4880 = vadd.f32 %v4878, %v4879
        %v4881 = vsel %vm750, %v4855, 0.0
        %v4882 = vrot.slane %v4881, 4
        %v4883 = vadd.f32 %v4881, %v4882
        %v4884 = vrot.slane %v4883, 2
        %v4885 = vadd.f32 %v4883, %v4884
        %v4886 = vrot.slane %v4885, 1
        %v4887 = vadd.f32 %v4885, %v4886
        %v4888 = vsel %vm750, %v4856, 0.0
        %v4889 = vrot.slane %v4888, 4
        %v4890 = vadd.f32 %v4888, %v4889
        %v4891 = vrot.slane %v4890, 2
        %v4892 = vadd.f32 %v4890, %v4891
        %v4893 = vrot.slane %v4892, 1
        %v4894 = vadd.f32 %v4892, %v4893
        %v4895 = vsel %vm750, %v4857, 0.0
        %v4896 = vrot.slane %v4895, 4
        %v4897 = vadd.f32 %v4895, %v4896
        %v4898 = vrot.slane %v4897, 2
        %v4899 = vadd.f32 %v4897, %v4898
        %v4900 = vrot.slane %v4899, 1
        %v4901 = vadd.f32 %v4899, %v4900
        %v4902 = vsel %vm750, %v4858, 0.0
        %v4903 = vrot.slane %v4902, 4
        %v4904 = vadd.f32 %v4902, %v4903
        %v4905 = vrot.slane %v4904, 2
        %v4906 = vadd.f32 %v4904, %v4905
        %v4907 = vrot.slane %v4906, 1
        %v4908 = vadd.f32 %v4906, %v4907
        %v4909 = vsel %vm750, %v4859, 0.0
        %v4910 = vrot.slane %v4909, 4
        %v4911 = vadd.f32 %v4909, %v4910
        %v4912 = vrot.slane %v4911, 2
        %v4913 = vadd.f32 %v4911, %v4912
        %v4914 = vrot.slane %v4913, 1
        %v4915 = vadd.f32 %v4913, %v4914
        %v4916 = vmul.f32 %v4866, %v807
        %v4917 = vmul.f32 %v4873, %v807
        %v4918 = vmul.f32 %v4880, %v807
        %v4919 = vmul.f32 %v4887, %v807
        %v4920 = vmul.f32 %v4894, %v807
        %v4921 = vmul.f32 %v4901, %v807
        %v4922 = vmul.f32 %v4908, %v807
        %v4923 = vmul.f32 %v4915, %v807
        %v4924 = vmul.f32 %v4844, %v4844
        %v4925 = vmul.f32 %v4845, %v4845
        %v4926 = vmul.f32 %v4846, %v4846
        %v4927 = vmul.f32 %v4847, %v4847
        %v4928 = vmul.f32 %v4848, %v4848
        %v4929 = vmul.f32 %v4849, %v4849
        %v4930 = vmul.f32 %v4850, %v4850
        %v4931 = vmul.f32 %v4851, %v4851
        %v4932 = vsub.f32 %v4916, %v4924
        %v4933 = vsub.f32 %v4917, %v4925
        %v4934 = vsub.f32 %v4918, %v4926
        %v4935 = vsub.f32 %v4919, %v4927
        %v4936 = vsub.f32 %v4920, %v4928
        %v4937 = vsub.f32 %v4921, %v4929
        %v4938 = vsub.f32 %v4922, %v4930
        %v4939 = vsub.f32 %v4923, %v4931
        %v4940 = vmax.f32 %v4932, 0.0
        %v4941 = vmax.f32 %v4933, 0.0
        %v4942 = vmax.f32 %v4934, 0.0
        %v4943 = vmax.f32 %v4935, 0.0
        %v4944 = vmax.f32 %v4936, 0.0
        %v4945 = vmax.f32 %v4937, 0.0
        %v4946 = vmax.f32 %v4938, 0.0
        %v4947 = vmax.f32 %v4939, 0.0
        %v4948 = vsub.f32 %v4288, %v4844
        %v4949 = vsub.f32 %v4290, %v4845
        %v4950 = vsub.f32 %v4452, %v4846
        %v4951 = vsub.f32 %v4454, %v4847
        %v4952 = vsub.f32 %v4616, %v4848
        %v4953 = vsub.f32 %v4618, %v4849
        %v4954 = vsub.f32 %v4780, %v4850
        %v4955 = vsub.f32 %v4782, %v4851
        %v4956 = vadd.f32 %v4940, 1e-05
        %v4957 = vadd.f32 %v4941, 1e-05
        %v4958 = vadd.f32 %v4942, 1e-05
        %v4959 = vadd.f32 %v4943, 1e-05
        %v4960 = vadd.f32 %v4944, 1e-05
        %v4961 = vadd.f32 %v4945, 1e-05
        %v4962 = vadd.f32 %v4946, 1e-05
        %v4963 = vadd.f32 %v4947, 1e-05
        %v4964 = vrsqrt.pop %v4956
        %v4965 = vrsqrt.pop %v4957
        %v4966 = vrsqrt.pop %v4958
        %v4967 = vrsqrt.pop %v4959
        %v4968 = vrsqrt.pop %v4960
        %v4969 = vrsqrt.pop %v4961
        %v4970 = vrsqrt.pop %v4962
        %v4971 = vrsqrt.pop %v4963
        %v4972 = vmul.f32 %v4948, %v4964
        %v4973 = vmul.f32 %v4949, %v4965
        %v4974 = vmul.f32 %v4950, %v4966
        %v4975 = vmul.f32 %v4951, %v4967
        %v4976 = vmul.f32 %v4952, %v4968
        %v4977 = vmul.f32 %v4953, %v4969
        %v4978 = vmul.f32 %v4954, %v4970
        %v4979 = vmul.f32 %v4955, %v4971
        %v4981 = vlaneseq
        %v4982 = vshrl.u32 %v4981, 7
        %v4983 = vsub.s32 0, %v4982
        %v4984 = vrot.slane %v4786, %v4983
        %v4985 = vlaneseq
        %v4986 = vshrl.u32 %v4985, 7
        %v4987 = vsub.s32 1, %v4986
        %v4988 = vrot.slane %v4786, %v4987
        %v4989 = vlaneseq
        %v4990 = vshrl.u32 %v4989, 7
        %v4991 = vsub.s32 2, %v4990
        %v4992 = vrot.slane %v4786, %v4991
        %v4993 = vlaneseq
        %v4994 = vshrl.u32 %v4993, 7
        %v4995 = vsub.s32 3, %v4994
        %v4996 = vrot.slane %v4786, %v4995
        %v4997 = vlaneseq
        %v4998 = vshrl.u32 %v4997, 7
        %v4999 = vsub.s32 4, %v4998
        %v5000 = vrot.slane %v4786, %v4999
        %v5001 = vlaneseq
        %v5002 = vshrl.u32 %v5001, 7
        %v5003 = vsub.s32 5, %v5002
        %v5004 = vrot.slane %v4786, %v5003
        %v5005 = vlaneseq
        %v5006 = vshrl.u32 %v5005, 7
        %v5007 = vsub.s32 6, %v5006
        %v5008 = vrot.slane %v4786, %v5007
        %v5009 = vlaneseq
        %v5010 = vshrl.u32 %v5009, 7
        %v5011 = vsub.s32 7, %v5010
        %v5012 = vrot.slane %v4786, %v5011
        %v5021 = vmul.f32 %v4972, %v4984
        %v5022 = vmul.f32 %v4973, %v4988
        %v5023 = vmul.f32 %v4974, %v4992
        %v5024 = vmul.f32 %v4975, %v4996
        %v5025 = vmul.f32 %v4976, %v5000
        %v5026 = vmul.f32 %v4977, %v5004
        %v5027 = vmul.f32 %v4978, %v5008
        %v5028 = vmul.f32 %v4979, %v5012
        %v5030 = vlaneseq
        %v5031 = vshrl.u32 %v5030, 7
        %v5032 = vsub.s32 0, %v5031
        %v5033 = vrot.slane %v4787, %v5032
        %v5034 = vlaneseq
        %v5035 = vshrl.u32 %v5034, 7
        %v5036 = vsub.s32 1, %v5035
        %v5037 = vrot.slane %v4787, %v5036
        %v5038 = vlaneseq
        %v5039 = vshrl.u32 %v5038, 7
        %v5040 = vsub.s32 2, %v5039
        %v5041 = vrot.slane %v4787, %v5040
        %v5042 = vlaneseq
        %v5043 = vshrl.u32 %v5042, 7
        %v5044 = vsub.s32 3, %v5043
        %v5045 = vrot.slane %v4787, %v5044
        %v5046 = vlaneseq
        %v5047 = vshrl.u32 %v5046, 7
        %v5048 = vsub.s32 4, %v5047
        %v5049 = vrot.slane %v4787, %v5048
        %v5050 = vlaneseq
        %v5051 = vshrl.u32 %v5050, 7
        %v5052 = vsub.s32 5, %v5051
        %v5053 = vrot.slane %v4787, %v5052
        %v5054 = vlaneseq
        %v5055 = vshrl.u32 %v5054, 7
        %v5056 = vsub.s32 6, %v5055
        %v5057 = vrot.slane %v4787, %v5056
        %v5058 = vlaneseq
        %v5059 = vshrl.u32 %v5058, 7
        %v5060 = vsub.s32 7, %v5059
        %v5061 = vrot.slane %v4787, %v5060
        %v5070 = vadd.f32 %v5021, %v5033
        %v5071 = vadd.f32 %v5022, %v5037
        %v5072 = vadd.f32 %v5023, %v5041
        %v5073 = vadd.f32 %v5024, %v5045
        %v5074 = vadd.f32 %v5025, %v5049
        %v5075 = vadd.f32 %v5026, %v5053
        %v5076 = vadd.f32 %v5027, %v5057
        %v5077 = vadd.f32 %v5028, %v5061
        %v5078 = vmax.f32 %v5070, 0.0
        %v5079 = vmax.f32 %v5071, 0.0
        %v5080 = vmax.f32 %v5072, 0.0
        %v5081 = vmax.f32 %v5073, 0.0
        %v5082 = vmax.f32 %v5074, 0.0
        %v5083 = vmax.f32 %v5075, 0.0
        %v5084 = vmax.f32 %v5076, 0.0
        %v5085 = vmax.f32 %v5077, 0.0
        %v5086 = vpack.c.bf16 %v5078, %v5078
        %v5087 = vpack.c.bf16 %v5079, %v5079
        %v5088 = vpack.c.bf16 %v5080, %v5080
        %v5089 = vpack.c.bf16 %v5081, %v5081
        %v5090 = vpack.c.bf16 %v5082, %v5082
        %v5091 = vpack.c.bf16 %v5083, %v5083
        %v5092 = vpack.c.bf16 %v5084, %v5084
        %v5093 = vpack.c.bf16 %v5085, %v5085
        %v5102 = vcombine.low %v5086, %v5087
        %v5103 = vcombine.low %v5088, %v5089
        %v5105 = vunpack.c.l.s4 1983009808
        %v5106 = vunpack.c.0.s8 %v5105
        %v5107 = vlaneseq
        %v5108 = vshrl.u32 %v5107, 7
        %v5109 = vsub.s32 %v5106, %v5108
        %v5110 = vrot.slane %v5102, %v5109
        %v5112 = vunpack.c.l.s4 1983009808
        %v5113 = vunpack.c.0.s8 %v5112
        %v5114 = vlaneseq
        %v5115 = vshrl.u32 %v5114, 7
        %v5116 = vsub.s32 %v5113, %v5115
        %v5117 = vrot.slane %v5103, %v5116
        %v5118 = vcombine.low %v5110, %v5117
        %v5119 = vcombine.low %v5090, %v5091
        %v5120 = vcombine.low %v5092, %v5093
        %v5122 = vunpack.c.l.s4 1983009808
        %v5123 = vunpack.c.0.s8 %v5122
        %v5124 = vlaneseq
        %v5125 = vshrl.u32 %v5124, 7
        %v5126 = vsub.s32 %v5123, %v5125
        %v5127 = vrot.slane %v5119, %v5126
        %v5129 = vunpack.c.l.s4 1983009808
        %v5130 = vunpack.c.0.s8 %v5129
        %v5131 = vlaneseq
        %v5132 = vshrl.u32 %v5131, 7
        %v5133 = vsub.s32 %v5130, %v5132
        %v5134 = vrot.slane %v5120, %v5133
        %v5135 = vcombine.low %v5127, %v5134
        %5138 = vst [vmem:[%s414] sm:$0xff] %v5118
        %5139 = vst [vmem:[%s414 + $0x8] sm:$0xff] %v5135
        %s5140 = smul.u32 8, %s26
        %p5141 = scmp.lt.s32.totalorder %s5140, 15
        %s5142 = scalar_select %p5141, %s5140, 15
        %s5143 = smul.addr %s5142, 2
        %s5144 = scalar_lea.vmem %s7, %s5143
        // Predicated region
        $region73: #{generator_forward.3} parent=47 // pred_check
          %p5145 = pneg %p206
        $region74: #{generator_forward.3} parent=47 // pred_check_branch
          %5147 = sbr.rel (%p5145) target = $region76
        $region75: #{generator_forward.3} parent=47 // pred_region
          %s5148 = smul.u32 8, %s26
        $region76: #{generator_forward.3} parent=47 // pred_fallthru
          _
      $region48: #{generator_forward.3} parent=5 // pred_fallthru
        _
      %p5149 = scmp.le.s32.totalorder 2, %s21
      // Predicated region
      $region77: #{generator_forward.3} parent=5 // pred_check
        %p5150 = pneg %p5149
      $region78: #{generator_forward.3} parent=5 // pred_check_branch
        %5152 = sbr.rel (%p5150) target = $region80
      $region79: #{generator_forward.3} parent=5 // pred_region
        %s5153 = ssub.s32 %s21, 2
        // Predicated region
        $region81: #{generator_forward.3} parent=79 // pred_check
          %p5154 = pneg %p212
        $region82: #{generator_forward.3} parent=79 // pred_check_branch
          %5156 = sbr.rel (%p5154) target = $region84
        $region83: #{generator_forward.3} parent=79 // pred_region
          %s5157 = smul.u32 8, %s27
          %p5158 = scmp.lt.s32.totalorder %s5157, 15
          %s5159 = scalar_select %p5158, %s5157, 15
          %s5160 = smul.addr %s5159, 2
          %s5161 = scalar_lea.vmem %s7, %s5160
        $region84: #{generator_forward.3} parent=79 // pred_fallthru
          _
      $region80: #{generator_forward.3} parent=5 // pred_fallthru
        _
    $region6: #{generator_forward.3} parent=1 // loop_footer
      %s25 = sadd.s32 1, %s21
    $region7: #{generator_forward.3} parent=1 // loop_footer_branch
      %20 = sbr.rel target = $region3
    $region8: #{generator_forward.3} parent=1 // loop_exit
      _
    %5162 = vsyncpa [#allocation3], 1
    %s5163 = scalar_lea.sflag [#allocation3], 1
    %5164 = vsyncpa %s5163, 1
    %5165 = vsyncpa [#allocation5], 1
    %5166 = vsyncpa [#allocation8], 1
    %s5167 = scalar_lea.sflag [#allocation8], 1
    %5168 = vsyncpa %s5167, 1
    %5169 = vsyncpa [#allocation11], 1
    %s5170 = scalar_lea.sflag [#allocation11], 1
    %5171 = vsyncpa %s5170, 1

</llo_original>
